<compile_context>
chip_gen: v5e
topology: v5e:2x2
jax: 0.10.0
libtpu: 0.0.40
codegen_flags: <defaults>
</compile_context>

<pallas_src>
import jax
import jax.numpy as jnp
from jax import lax
from jax.experimental import pallas as pl
from jax.experimental.pallas import tpu as pltpu


# ------------------------------- helpers ---------------------------------- #
def _pick_tile_m(M, max_tile=512):
    """Largest M-tile <= max_tile; prefer an exact divisor (multiple of 8)."""
    if M <= max_tile:
        return M                      # single block; full-dim block is allowed
    for t in range(max_tile, 0, -8):  # multiples of 8, descending
        if M % t == 0:
            return t
    return max_tile                   # ragged edge handled by Pallas masking


_COMPILER_PARAMS = pltpu.CompilerParams(
    dimension_semantics=("parallel",),   # shard M tiles across TCs (v7x)
    vmem_limit_bytes=32 << 20,
)


# --------------------------- Pallas kernel bodies -------------------------- #
def _matmul_bias_relu_kernel(a_ref, w_ref, b_ref, o_ref):
    # a: (tm, K) bf16, w: (K, N) bf16 (VMEM-resident), b: (1, N) f32
    acc = jnp.dot(a_ref[...], w_ref[...], preferred_element_type=jnp.float32)
    acc = jnp.maximum(acc + b_ref[...], 0.0)
    o_ref[...] = acc.astype(o_ref.dtype)


def _fc_value_head_kernel(x_ref, wf_ref, bf_ref, wv_ref, bv_ref, v_ref):
    # Fused: h = relu(x @ Wf + bf); v = h @ wv + bv (done as VPU mul + reduce).
    h = jnp.dot(x_ref[...], wf_ref[...], preferred_element_type=jnp.float32)
    h = jnp.maximum(h + bf_ref[...], 0.0)                       # (tm, 512) f32
    v = jnp.sum(h * wv_ref[...], axis=1, keepdims=True)         # (tm, 1)
    v_ref[...] = v + bv_ref[...]


# ------------------------------ Pallas wrappers ----------------------------- #
def pallas_matmul_bias_relu(a, w, b, *, max_tile_m=512, out_dtype=jnp.bfloat16):
    """relu(a @ w + b), M-tiled, weight/bias VMEM-resident, bf16 MXU / f32 acc."""
    M, K = a.shape
    K2, N = w.shape
    assert K == K2
    a = a.astype(jnp.bfloat16)
    w = w.astype(jnp.bfloat16)
    b2 = b.reshape(1, N).astype(jnp.float32)
    tm = _pick_tile_m(M, max_tile_m)
    grid = (pl.cdiv(M, tm),)
    bytes_acc = (a.size * a.dtype.itemsize + w.size * w.dtype.itemsize
                 + b2.size * 4 + M * N * jnp.dtype(out_dtype).itemsize)
    return pl.pallas_call(
        _matmul_bias_relu_kernel,
        grid=grid,
        in_specs=[
            pl.BlockSpec((tm, K), lambda i: (i, 0)),   # streamed A tiles
            pl.BlockSpec((K, N), lambda i: (0, 0)),    # resident weight
            pl.BlockSpec((1, N), lambda i: (0, 0)),    # resident bias
        ],
        out_specs=pl.BlockSpec((tm, N), lambda i: (i, 0)),
        out_shape=jax.ShapeDtypeStruct((M, N), out_dtype),
        compiler_params=_COMPILER_PARAMS,
        cost_estimate=pl.CostEstimate(
            flops=2 * M * K * N, transcendentals=0, bytes_accessed=bytes_acc),
    )(a, w, b2)


def pallas_fc_value_head(x, wf, bf, wv, bv, *, max_tile_m=512):
    """v = relu(x @ wf + bf) @ wv + bv, fused in one kernel. Returns (M,)."""
    M, K = x.shape
    K2, N = wf.shape
    assert K == K2
    x = x.astype(jnp.bfloat16)
    wf = wf.astype(jnp.bfloat16)
    bf2 = bf.reshape(1, N).astype(jnp.float32)
    wv2 = wv.reshape(1, N).astype(jnp.float32)
    bv2 = bv.reshape(1, 1).astype(jnp.float32)
    tm = _pick_tile_m(M, max_tile_m)
    grid = (pl.cdiv(M, tm),)
    bytes_acc = (x.size * x.dtype.itemsize + wf.size * wf.dtype.itemsize
                 + (2 * N + 1) * 4 + M * 4)
    out = pl.pallas_call(
        _fc_value_head_kernel,
        grid=grid,
        in_specs=[
            pl.BlockSpec((tm, K), lambda i: (i, 0)),
            pl.BlockSpec((K, N), lambda i: (0, 0)),
            pl.BlockSpec((1, N), lambda i: (0, 0)),
            pl.BlockSpec((1, N), lambda i: (0, 0)),
            pl.BlockSpec((1, 1), lambda i: (0, 0)),
        ],
        out_specs=pl.BlockSpec((tm, 1), lambda i: (i, 0)),
        out_shape=jax.ShapeDtypeStruct((M, 1), jnp.float32),
        compiler_params=_COMPILER_PARAMS,
        cost_estimate=pl.CostEstimate(
            flops=2 * M * K * N + 2 * M * N, transcendentals=0,
            bytes_accessed=bytes_acc),
    )(x, wf, bf2, wv2, bv2)
    return out[:, 0]


# ------------------------------ Conv via im2col ---------------------------- #
def _im2col_nhwc(x, K, S):
    """x: (B, H, W, C) -> patches (B*OH*OW, K*K*C), flat order (kh, kw, cin)."""
    B, H, W, C = x.shape
    OH = (H - K) // S + 1
    OW = (W - K) // S + 1
    cols = []
    for i in range(K):
        for j in range(K):
            cols.append(
                lax.slice(
                    x,
                    (0, i, j, 0),
                    (B, i + S * (OH - 1) + 1, j + S * (OW - 1) + 1, C),
                    (1, S, S, 1),
                )
            )  # (B, OH, OW, C)
    patches = jnp.stack(cols, axis=3)  # (B, OH, OW, K*K, C)
    return patches.reshape(B * OH * OW, K * K * C), OH, OW


def conv2d_pallas(x_nhwc, wm, b, K, S):
    """wm: pre-flattened (K*K*Cin, Cout) weight (scale already folded in)."""
    B = x_nhwc.shape[0]
    Cout = wm.shape[1]
    a, OH, OW = _im2col_nhwc(x_nhwc, K, S)
    out = pallas_matmul_bias_relu(a, wm, b)
    return out.reshape(B, OH, OW, Cout)


# ------------------------------ Parameters --------------------------------- #
def init_params(key):
    """Parameters in the original PyTorch layout (OIHW conv weights, etc.)."""
    def uniform(k, shape, fan_in):
        bound = 1.0 / jnp.sqrt(jnp.float32(fan_in))
        return jax.random.uniform(k, shape, jnp.float32, -bound, bound)

    ks = jax.random.split(key, 10)
    p = {}
    p["conv1_w"] = uniform(ks[0], (32, 4, 8, 8), 4 * 8 * 8)
    p["conv1_b"] = uniform(ks[1], (32,), 4 * 8 * 8)
    p["conv2_w"] = uniform(ks[2], (64, 32, 4, 4), 32 * 4 * 4)
    p["conv2_b"] = uniform(ks[3], (64,), 32 * 4 * 4)
    p["conv3_w"] = uniform(ks[4], (64, 64, 3, 3), 64 * 3 * 3)
    p["conv3_b"] = uniform(ks[5], (64,), 64 * 3 * 3)
    p["fc_w"] = uniform(ks[6], (512, 64 * 7 * 7), 64 * 7 * 7)
    p["fc_b"] = uniform(ks[7], (512,), 64 * 7 * 7)
    p["v_w"] = uniform(ks[8], (1, 512), 512)
    p["v_b"] = uniform(ks[9], (1,), 512)
    return p


def prepare_params(p):
    """One-time (outside jit) re-layout: fold 1/255 scale into conv1 weights,
    flatten conv weights to (K*K*Cin, Cout), permute fc weight from PyTorch's
    (C,H,W) flatten order to NHWC (H,W,C) order, cast matmul weights to bf16."""
    def conv_wm(w, scale=1.0):
        cout = w.shape[0]
        wm = jnp.transpose(w, (2, 3, 1, 0)).reshape(-1, cout) * scale
        return wm.astype(jnp.bfloat16)

    kp = {}
    kp["conv1_wm"] = conv_wm(p["conv1_w"], 1.0 / 255.0)   # input /255 folded in
    kp["conv1_b"] = p["conv1_b"].astype(jnp.float32)
    kp["conv2_wm"] = conv_wm(p["conv2_w"])
    kp["conv2_b"] = p["conv2_b"].astype(jnp.float32)
    kp["conv3_wm"] = conv_wm(p["conv3_w"])
    kp["conv3_b"] = p["conv3_b"].astype(jnp.float32)
    # (512, 3136) with (C,H,W) input order -> (3136, 512) with (H,W,C) order.
    fw = p["fc_w"].reshape(512, 64, 7, 7).transpose(2, 3, 1, 0).reshape(64 * 7 * 7, 512)
    kp["fc_wm"] = fw.astype(jnp.bfloat16)
    kp["fc_b"] = p["fc_b"].astype(jnp.float32)
    kp["v_wm"] = p["v_w"].reshape(1, 512).astype(jnp.float32)  # used on VPU in f32
    kp["v_b"] = p["v_b"].reshape(1, 1).astype(jnp.float32)
    return kp


# ------------------------------ Forward pass -------------------------------- #
@jax.jit
def value_net_forward(kparams, x_nchw):
    """x_nchw: (B, 4, 84, 84) float32 in [0, 255]. Returns (B,) value estimates."""
    x = jnp.transpose(x_nchw, (0, 2, 3, 1)).astype(jnp.bfloat16)          # NHWC
    h = conv2d_pallas(x, kparams["conv1_wm"], kparams["conv1_b"], 8, 4)   # (B,20,20,32)
    h = conv2d_pallas(h, kparams["conv2_wm"], kparams["conv2_b"], 4, 2)   # (B, 9, 9,64)
    h = conv2d_pallas(h, kparams["conv3_wm"], kparams["conv3_b"], 3, 1)   # (B, 7, 7,64)
    B = h.shape[0]
    h = h.reshape(B, -1)  # NHWC flatten; fc weight was pre-permuted to match
    return pallas_fc_value_head(h, kparams["fc_wm"], kparams["fc_b"],
                                kparams["v_wm"], kparams["v_b"])          # (B,)


# --------------------------- Pure-JAX reference ----------------------------- #
def reference_forward(params, x_nchw):
    x = x_nchw.astype(jnp.float32) / 255.0
    dn = ("NCHW", "OIHW", "NCHW")
    hp = lax.Precision.HIGHEST

    def conv(h, w, b, s):
        h = lax.conv_general_dilated(h, w, (s, s), "VALID",
                                     dimension_numbers=dn, precision=hp)
        return jax.nn.relu(h + b[None, :, None, None])

    h = conv(x, params["conv1_w"], params["conv1_b"], 4)
    h = conv(h, params["conv2_w"], params["conv2_b"], 2)
    h = conv(h, params["conv3_w"], params["conv3_b"], 1)  # (B, 64, 7, 7)
    h = h.reshape(h.shape[0], -1)
    h = jax.nn.relu(h @ params["fc_w"].T + params["fc_b"])
    v = h @ params["v_w"].T + params["v_b"]
    return v.squeeze(-1)


if __name__ == "__main__":
    key = jax.random.PRNGKey(0)
    kp_key, kx_key = jax.random.split(key)
    params = init_params(kp_key)
    kparams = prepare_params(params)

    # Input spatial size is dictated by the module: Linear(64*7*7) => 84x84 frames.
    B = 2
    x = jax.random.uniform(kx_key, (B, 4, 84, 84), jnp.float32, 0.0, 255.0)

    out = value_net_forward(kparams, x)
    out = jax.block_until_ready(out)
    assert out.shape == (B,), out.shape

    ref = reference_forward(params, x)
    # bf16 MXU operands (f32 accumulate) -> slightly looser tolerance than f32.
    assert jnp.allclose(out, ref, rtol=5e-2, atol=5e-2), (out, ref)

    print("KERNEL_OK")
</pallas_src>

<mosaic_0001>
module attributes {stable_mosaic.version = 11 : i64} {
  func.func @_matmul_bias_relu_kernel(%arg0: i32, %arg1: memref<400x256xbf16, #tpu.memory_space<vmem>>, %arg2: memref<256x32xbf16, #tpu.memory_space<vmem>>, %arg3: memref<1x32xf32, #tpu.memory_space<vmem>>, %arg4: memref<400x32xbf16, #tpu.memory_space<vmem>>) attributes {dimension_semantics = [#tpu.dimension_semantics<parallel>], iteration_bounds = array<i64: 2>, scalar_prefetch = 0 : i64, scratch_operands = 0 : i64, tpu.core_type = #tpu.core_type<tc>, window_params = [{transform_indices = @transform_0, window_bounds = array<i64: 400, 256>}, {pipeline_mode = #tpu.pipeline_mode<synchronous>, transform_indices = @transform_1, window_bounds = array<i64: 256, 32>}, {pipeline_mode = #tpu.pipeline_mode<synchronous>, transform_indices = @transform_2, window_bounds = array<i64: 1, 32>}, {transform_indices = @transform_3, window_bounds = array<i64: 400, 32>}]} {
    %c0 = arith.constant 0 : index
    %c0_0 = arith.constant 0 : index
    %0 = vector.load %arg1[%c0, %c0_0] : memref<400x256xbf16, #tpu.memory_space<vmem>>, vector<400x256xbf16>
    %c0_1 = arith.constant 0 : index
    %c0_2 = arith.constant 0 : index
    %1 = vector.load %arg2[%c0_1, %c0_2] : memref<256x32xbf16, #tpu.memory_space<vmem>>, vector<256x32xbf16>
    %cst = arith.constant dense<0.000000e+00> : vector<400x32xf32>
    %2 = tpu.matmul %0, %1, %cst {dimension_numbers = #tpu.dot_dimension_numbers<[1], [0], [0], [1], [0, 0, 1, 1], [], []>} : vector<400x256xbf16>, vector<256x32xbf16>, vector<400x32xf32> -> vector<400x32xf32>
    %c0_3 = arith.constant 0 : index
    %c0_4 = arith.constant 0 : index
    %3 = vector.load %arg3[%c0_3, %c0_4] : memref<1x32xf32, #tpu.memory_space<vmem>>, vector<1x32xf32>
    %4 = vector.broadcast %3 : vector<1x32xf32> to vector<400x32xf32>
    %5 = arith.addf %2, %4 : vector<400x32xf32>
    %cst_5 = arith.constant 0.000000e+00 : f32
    %6 = vector.broadcast %cst_5 : f32 to vector<400x32xf32>
    %7 = arith.maximumf %5, %6 : vector<400x32xf32>
    %8 = arith.truncf %7 : vector<400x32xf32> to vector<400x32xbf16>
    %c0_6 = arith.constant 0 : index
    %c0_7 = arith.constant 0 : index
    %9 = vector.load %arg4[%c0_6, %c0_7] : memref<400x32xbf16, #tpu.memory_space<vmem>>, vector<400x32xbf16>
    tpu.vector_store %arg4[%c0_6, %c0_7], %8 {strides = array<i32>} : memref<400x32xbf16, #tpu.memory_space<vmem>>, vector<400x32xbf16>,
    return
  }
  func.func @transform_0(%arg0: i32) -> (i32, i32) {
    %c0_i32 = arith.constant 0 : i32
    %c0_i32_0 = arith.constant 0 : i32
    return %arg0, %c0_i32 : i32, i32
  }
  func.func @transform_1(%arg0: i32) -> (i32, i32) {
    %c0_i32 = arith.constant 0 : i32
    %c0_i32_0 = arith.constant 0 : i32
    %c0_i32_1 = arith.constant 0 : i32
    return %c0_i32, %c0_i32_0 : i32, i32
  }
  func.func @transform_2(%arg0: i32) -> (i32, i32) {
    %c0_i32 = arith.constant 0 : i32
    %c0_i32_0 = arith.constant 0 : i32
    %c0_i32_1 = arith.constant 0 : i32
    return %c0_i32, %c0_i32_0 : i32, i32
  }
  func.func @transform_3(%arg0: i32) -> (i32, i32) {
    %c0_i32 = arith.constant 0 : i32
    %c0_i32_0 = arith.constant 0 : i32
    return %arg0, %c0_i32 : i32, i32
  }
}

module attributes {stable_mosaic.version = 11 : i64} {
  func.func @_matmul_bias_relu_kernel(%arg0: i32, %arg1: memref<162x512xbf16, #tpu.memory_space<vmem>>, %arg2: memref<512x64xbf16, #tpu.memory_space<vmem>>, %arg3: memref<1x64xf32, #tpu.memory_space<vmem>>, %arg4: memref<162x64xbf16, #tpu.memory_space<vmem>>) attributes {dimension_semantics = [#tpu.dimension_semantics<parallel>], iteration_bounds = array<i64: 1>, scalar_prefetch = 0 : i64, scratch_operands = 0 : i64, tpu.core_type = #tpu.core_type<tc>, window_params = [{transform_indices = @transform_0, window_bounds = array<i64: 162, 512>}, {pipeline_mode = #tpu.pipeline_mode<synchronous>, transform_indices = @transform_1, window_bounds = array<i64: 512, 64>}, {pipeline_mode = #tpu.pipeline_mode<synchronous>, transform_indices = @transform_2, window_bounds = array<i64: 1, 64>}, {transform_indices = @transform_3, window_bounds = array<i64: 162, 64>}]} {
    %c0 = arith.constant 0 : index
    %c0_0 = arith.constant 0 : index
    %0 = vector.load %arg1[%c0, %c0_0] : memref<162x512xbf16, #tpu.memory_space<vmem>>, vector<162x512xbf16>
    %c0_1 = arith.constant 0 : index
    %c0_2 = arith.constant 0 : index
    %1 = vector.load %arg2[%c0_1, %c0_2] : memref<512x64xbf16, #tpu.memory_space<vmem>>, vector<512x64xbf16>
    %cst = arith.constant dense<0.000000e+00> : vector<162x64xf32>
    %2 = tpu.matmul %0, %1, %cst {dimension_numbers = #tpu.dot_dimension_numbers<[1], [0], [0], [1], [0, 0, 1, 1], [], []>} : vector<162x512xbf16>, vector<512x64xbf16>, vector<162x64xf32> -> vector<162x64xf32>
    %c0_3 = arith.constant 0 : index
    %c0_4 = arith.constant 0 : index
    %3 = vector.load %arg3[%c0_3, %c0_4] : memref<1x64xf32, #tpu.memory_space<vmem>>, vector<1x64xf32>
    %4 = vector.broadcast %3 : vector<1x64xf32> to vector<162x64xf32>
    %5 = arith.addf %2, %4 : vector<162x64xf32>
    %cst_5 = arith.constant 0.000000e+00 : f32
    %6 = vector.broadcast %cst_5 : f32 to vector<162x64xf32>
    %7 = arith.maximumf %5, %6 : vector<162x64xf32>
    %8 = arith.truncf %7 : vector<162x64xf32> to vector<162x64xbf16>
    %c0_6 = arith.constant 0 : index
    %c0_7 = arith.constant 0 : index
    %9 = vector.load %arg4[%c0_6, %c0_7] : memref<162x64xbf16, #tpu.memory_space<vmem>>, vector<162x64xbf16>
    tpu.vector_store %arg4[%c0_6, %c0_7], %8 {strides = array<i32>} : memref<162x64xbf16, #tpu.memory_space<vmem>>, vector<162x64xbf16>,
    return
  }
  func.func @transform_0(%arg0: i32) -> (i32, i32) {
    %c0_i32 = arith.constant 0 : i32
    %c0_i32_0 = arith.constant 0 : i32
    return %arg0, %c0_i32 : i32, i32
  }
  func.func @transform_1(%arg0: i32) -> (i32, i32) {
    %c0_i32 = arith.constant 0 : i32
    %c0_i32_0 = arith.constant 0 : i32
    %c0_i32_1 = arith.constant 0 : i32
    return %c0_i32, %c0_i32_0 : i32, i32
  }
  func.func @transform_2(%arg0: i32) -> (i32, i32) {
    %c0_i32 = arith.constant 0 : i32
    %c0_i32_0 = arith.constant 0 : i32
    %c0_i32_1 = arith.constant 0 : i32
    return %c0_i32, %c0_i32_0 : i32, i32
  }
  func.func @transform_3(%arg0: i32) -> (i32, i32) {
    %c0_i32 = arith.constant 0 : i32
    %c0_i32_0 = arith.constant 0 : i32
    return %arg0, %c0_i32 : i32, i32
  }
}

module attributes {stable_mosaic.version = 11 : i64} {
  func.func @_matmul_bias_relu_kernel(%arg0: i32, %arg1: memref<98x576xbf16, #tpu.memory_space<vmem>>, %arg2: memref<576x64xbf16, #tpu.memory_space<vmem>>, %arg3: memref<1x64xf32, #tpu.memory_space<vmem>>, %arg4: memref<98x64xbf16, #tpu.memory_space<vmem>>) attributes {dimension_semantics = [#tpu.dimension_semantics<parallel>], iteration_bounds = array<i64: 1>, scalar_prefetch = 0 : i64, scratch_operands = 0 : i64, tpu.core_type = #tpu.core_type<tc>, window_params = [{transform_indices = @transform_0, window_bounds = array<i64: 98, 576>}, {pipeline_mode = #tpu.pipeline_mode<synchronous>, transform_indices = @transform_1, window_bounds = array<i64: 576, 64>}, {pipeline_mode = #tpu.pipeline_mode<synchronous>, transform_indices = @transform_2, window_bounds = array<i64: 1, 64>}, {transform_indices = @transform_3, window_bounds = array<i64: 98, 64>}]} {
    %c0 = arith.constant 0 : index
    %c0_0 = arith.constant 0 : index
    %0 = vector.load %arg1[%c0, %c0_0] : memref<98x576xbf16, #tpu.memory_space<vmem>>, vector<98x576xbf16>
    %c0_1 = arith.constant 0 : index
    %c0_2 = arith.constant 0 : index
    %1 = vector.load %arg2[%c0_1, %c0_2] : memref<576x64xbf16, #tpu.memory_space<vmem>>, vector<576x64xbf16>
    %cst = arith.constant dense<0.000000e+00> : vector<98x64xf32>
    %2 = tpu.matmul %0, %1, %cst {dimension_numbers = #tpu.dot_dimension_numbers<[1], [0], [0], [1], [0, 0, 1, 1], [], []>} : vector<98x576xbf16>, vector<576x64xbf16>, vector<98x64xf32> -> vector<98x64xf32>
    %c0_3 = arith.constant 0 : index
    %c0_4 = arith.constant 0 : index
    %3 = vector.load %arg3[%c0_3, %c0_4] : memref<1x64xf32, #tpu.memory_space<vmem>>, vector<1x64xf32>
    %4 = vector.broadcast %3 : vector<1x64xf32> to vector<98x64xf32>
    %5 = arith.addf %2, %4 : vector<98x64xf32>
    %cst_5 = arith.constant 0.000000e+00 : f32
    %6 = vector.broadcast %cst_5 : f32 to vector<98x64xf32>
    %7 = arith.maximumf %5, %6 : vector<98x64xf32>
    %8 = arith.truncf %7 : vector<98x64xf32> to vector<98x64xbf16>
    %c0_6 = arith.constant 0 : index
    %c0_7 = arith.constant 0 : index
    %9 = vector.load %arg4[%c0_6, %c0_7] : memref<98x64xbf16, #tpu.memory_space<vmem>>, vector<98x64xbf16>
    tpu.vector_store %arg4[%c0_6, %c0_7], %8 {strides = array<i32>} : memref<98x64xbf16, #tpu.memory_space<vmem>>, vector<98x64xbf16>,
    return
  }
  func.func @transform_0(%arg0: i32) -> (i32, i32) {
    %c0_i32 = arith.constant 0 : i32
    %c0_i32_0 = arith.constant 0 : i32
    return %arg0, %c0_i32 : i32, i32
  }
  func.func @transform_1(%arg0: i32) -> (i32, i32) {
    %c0_i32 = arith.constant 0 : i32
    %c0_i32_0 = arith.constant 0 : i32
    %c0_i32_1 = arith.constant 0 : i32
    return %c0_i32, %c0_i32_0 : i32, i32
  }
  func.func @transform_2(%arg0: i32) -> (i32, i32) {
    %c0_i32 = arith.constant 0 : i32
    %c0_i32_0 = arith.constant 0 : i32
    %c0_i32_1 = arith.constant 0 : i32
    return %c0_i32, %c0_i32_0 : i32, i32
  }
  func.func @transform_3(%arg0: i32) -> (i32, i32) {
    %c0_i32 = arith.constant 0 : i32
    %c0_i32_0 = arith.constant 0 : i32
    return %arg0, %c0_i32 : i32, i32
  }
}

module attributes {stable_mosaic.version = 11 : i64} {
  func.func @_fc_value_head_kernel(%arg0: i32, %arg1: memref<2x3136xbf16, #tpu.memory_space<vmem>>, %arg2: memref<3136x512xbf16, #tpu.memory_space<vmem>>, %arg3: memref<1x512xf32, #tpu.memory_space<vmem>>, %arg4: memref<1x512xf32, #tpu.memory_space<vmem>>, %arg5: memref<1x1xf32, #tpu.memory_space<vmem>>, %arg6: memref<2x1xf32, #tpu.memory_space<vmem>>) attributes {dimension_semantics = [#tpu.dimension_semantics<parallel>], iteration_bounds = array<i64: 1>, scalar_prefetch = 0 : i64, scratch_operands = 0 : i64, tpu.core_type = #tpu.core_type<tc>, window_params = [{transform_indices = @transform_0, window_bounds = array<i64: 2, 3136>}, {pipeline_mode = #tpu.pipeline_mode<synchronous>, transform_indices = @transform_1, window_bounds = array<i64: 3136, 512>}, {pipeline_mode = #tpu.pipeline_mode<synchronous>, transform_indices = @transform_2, window_bounds = array<i64: 1, 512>}, {pipeline_mode = #tpu.pipeline_mode<synchronous>, transform_indices = @transform_3, window_bounds = array<i64: 1, 512>}, {pipeline_mode = #tpu.pipeline_mode<synchronous>, transform_indices = @transform_4, window_bounds = array<i64: 1, 1>}, {transform_indices = @transform_5, window_bounds = array<i64: 2, 1>}]} {
    %c0 = arith.constant 0 : index
    %c0_0 = arith.constant 0 : index
    %0 = vector.load %arg1[%c0, %c0_0] : memref<2x3136xbf16, #tpu.memory_space<vmem>>, vector<2x3136xbf16>
    %c0_1 = arith.constant 0 : index
    %c0_2 = arith.constant 0 : index
    %1 = vector.load %arg2[%c0_1, %c0_2] : memref<3136x512xbf16, #tpu.memory_space<vmem>>, vector<3136x512xbf16>
    %cst = arith.constant dense<0.000000e+00> : vector<2x512xf32>
    %2 = tpu.matmul %0, %1, %cst {dimension_numbers = #tpu.dot_dimension_numbers<[1], [0], [0], [1], [0, 0, 1, 1], [], []>} : vector<2x3136xbf16>, vector<3136x512xbf16>, vector<2x512xf32> -> vector<2x512xf32>
    %c0_3 = arith.constant 0 : index
    %c0_4 = arith.constant 0 : index
    %3 = vector.load %arg3[%c0_3, %c0_4] : memref<1x512xf32, #tpu.memory_space<vmem>>, vector<1x512xf32>
    %4 = vector.broadcast %3 : vector<1x512xf32> to vector<2x512xf32>
    %5 = arith.addf %2, %4 : vector<2x512xf32>
    %cst_5 = arith.constant 0.000000e+00 : f32
    %6 = vector.broadcast %cst_5 : f32 to vector<2x512xf32>
    %7 = arith.maximumf %5, %6 : vector<2x512xf32>
    %c0_6 = arith.constant 0 : index
    %c0_7 = arith.constant 0 : index
    %8 = vector.load %arg4[%c0_6, %c0_7] : memref<1x512xf32, #tpu.memory_space<vmem>>, vector<1x512xf32>
    %9 = vector.broadcast %8 : vector<1x512xf32> to vector<2x512xf32>
    %10 = arith.mulf %7, %9 : vector<2x512xf32>
    %cst_8 = arith.constant dense<0.000000e+00> : vector<2xf32>
    %11 = vector.multi_reduction <add>, %10, %cst_8 [1] : vector<2x512xf32> to vector<2xf32>
    %12 = vector.shape_cast %11 : vector<2xf32> to vector<2x1xf32>
    %c0_9 = arith.constant 0 : index
    %c0_10 = arith.constant 0 : index
    %13 = vector.load %arg5[%c0_9, %c0_10] : memref<1x1xf32, #tpu.memory_space<vmem>>, vector<1x1xf32>
    %14 = vector.broadcast %13 : vector<1x1xf32> to vector<2x1xf32>
    %15 = arith.addf %12, %14 : vector<2x1xf32>
    %c0_11 = arith.constant 0 : index
    %c0_12 = arith.constant 0 : index
    %16 = vector.load %arg6[%c0_11, %c0_12] : memref<2x1xf32, #tpu.memory_space<vmem>>, vector<2x1xf32>
    tpu.vector_store %arg6[%c0_11, %c0_12], %15 {strides = array<i32>} : memref<2x1xf32, #tpu.memory_space<vmem>>, vector<2x1xf32>,
    return
  }
  func.func @transform_0(%arg0: i32) -> (i32, i32) {
    %c0_i32 = arith.constant 0 : i32
    %c0_i32_0 = arith.constant 0 : i32
    return %arg0, %c0_i32 : i32, i32
  }
  func.func @transform_1(%arg0: i32) -> (i32, i32) {
    %c0_i32 = arith.constant 0 : i32
    %c0_i32_0 = arith.constant 0 : i32
    %c0_i32_1 = arith.constant 0 : i32
    return %c0_i32, %c0_i32_0 : i32, i32
  }
  func.func @transform_2(%arg0: i32) -> (i32, i32) {
    %c0_i32 = arith.constant 0 : i32
    %c0_i32_0 = arith.constant 0 : i32
    %c0_i32_1 = arith.constant 0 : i32
    return %c0_i32, %c0_i32_0 : i32, i32
  }
  func.func @transform_3(%arg0: i32) -> (i32, i32) {
    %c0_i32 = arith.constant 0 : i32
    %c0_i32_0 = arith.constant 0 : i32
    %c0_i32_1 = arith.constant 0 : i32
    return %c0_i32, %c0_i32_0 : i32, i32
  }
  func.func @transform_4(%arg0: i32) -> (i32, i32) {
    %c0_i32 = arith.constant 0 : i32
    %c0_i32_0 = arith.constant 0 : i32
    %c0_i32_1 = arith.constant 0 : i32
    return %c0_i32, %c0_i32_0 : i32, i32
  }
  func.func @transform_5(%arg0: i32) -> (i32, i32) {
    %c0_i32 = arith.constant 0 : i32
    %c0_i32_0 = arith.constant 0 : i32
    return %arg0, %c0_i32 : i32, i32
  }
}

</mosaic_0001>

<llo_original>
// kernel: value_net_forward.4
$region0: #{value_net_forward.4}
  #allocation0 [shape = 'u32[]', space=smem, size = 0x4, offset = 0x4, fixed_abs, tag = 'smem constant byte address 0x4 - core index']
  #allocation1 [shape = 'u32[72,128]{1,0:T(1,128)}', space=vmem, size = 0x9000, scoped, tag = 'internal scratch']
  %s0 = inlined_call_operand.vmem [shape: bf16[800,256], index: 0, kind: input, shape index: {}]
  %s1 = inlined_call_operand.vmem [shape: bf16[256,32], index: 1, kind: input, shape index: {}]
  %s2 = inlined_call_operand.vmem [shape: f32[1,32], index: 2, kind: input, shape index: {}]
  %s3 = inlined_call_operand.vmem [shape: bf16[800,32], index: 3, kind: output, shape index: {}]
  %s4 = sld [smem:[#allocation0]]
  $region45: #{value_net_forward.4} parent=0
    _
  %s6 = ssub.s32 1, %s4
  %s7 = scalar_select 0, %s6, %s4
  loop: start=0, step=1, limit=4
  $region2: #{value_net_forward.4} parent=0 // loop_pre_header
    _
  $region3: #{value_net_forward.4} parent=0 // loop_header
    %s9 = sphi 0, %s13
    %p10 = scmp.ge.s32.totalorder %s9, 4
    %s19 = sphi 0, %s21
    %s22 = sphi 0, %s19
    %s23 = sphi 0, %s22
    %s39 = sphi 0, %s23
    %s43 = sphi 0, %s43
    %s45 = sphi 0, %s43
    %s46 = sphi 0, %s45
    %s60 = sphi 0, %s46
    %s64 = sphi 0, %s64
    %s66 = sphi 0, %s64
    %s67 = sphi 0, %s66
    %s81 = sphi 0, %s67
    %s87 = sphi 0, %s89
    %s90 = sphi 0, %s87
    %s91 = sphi 0, %s90
    %s107 = sphi 0, %s91
  $region4: #{value_net_forward.4} parent=0 // loop_header_branch
    %12 = sbr.rel (%p10) target = $region8
  $region5: #{value_net_forward.4} parent=0 // loop_body
    %s14 = ssub.s32 %s9, 1
    %s15 = ssub.s32 %s9, 2
    %s16 = sadd.s32 %s9, 1
    %s17 = ssub.s32 %s9, %s16
    %p18 = scmp.eq.s32.totalorder %s17, 0
    %s20 = sadd.s32 %s19, 1
    %s21 = scalar_select %p18, %s19, %s20
    %p24 = pneg %p18
    %p25 = scmp.eq.s32.totalorder %s9, 1
    %p26 = por %p24, %p25
    %p27 = scmp.ne.s32.totalorder %s19, %s22
    %p28 = scmp.eq.s32.totalorder %s9, 0
    %p29 = por %p27, %p28
    %p30 = scmp.ne.s32.totalorder %s19, %s22
    %p31 = scmp.eq.s32.totalorder %s14, 1
    %p32 = por %p30, %p31
    %p33 = scmp.ne.s32.totalorder %s22, %s23
    %p34 = scmp.eq.s32.totalorder %s14, 0
    %p35 = por %p33, %p34
    %p36 = scmp.ne.s32.totalorder %s22, %s23
    %p37 = scmp.eq.s32.totalorder %s15, 1
    %p38 = por %p36, %p37
    %p40 = scmp.ne.s32.totalorder %s23, %s39
    %p41 = scmp.eq.s32.totalorder %s15, 0
    %p42 = por %p40, %p41
    %s44 = sadd.s32 %s43, 1
    %p47 = scmp.eq.s32.totalorder %s9, 1
    %p48 = scmp.ne.s32.totalorder %s43, %s45
    %p49 = scmp.eq.s32.totalorder %s9, 0
    %p50 = por %p48, %p49
    %p51 = scmp.ne.s32.totalorder %s43, %s45
    %p52 = scmp.eq.s32.totalorder %s14, 1
    %p53 = por %p51, %p52
    %p54 = scmp.ne.s32.totalorder %s45, %s46
    %p55 = scmp.eq.s32.totalorder %s14, 0
    %p56 = por %p54, %p55
    %p57 = scmp.ne.s32.totalorder %s45, %s46
    %p58 = scmp.eq.s32.totalorder %s15, 1
    %p59 = por %p57, %p58
    %p61 = scmp.ne.s32.totalorder %s46, %s60
    %p62 = scmp.eq.s32.totalorder %s15, 0
    %p63 = por %p61, %p62
    %s65 = sadd.s32 %s64, 1
    %p68 = scmp.eq.s32.totalorder %s9, 1
    %p69 = scmp.ne.s32.totalorder %s64, %s66
    %p70 = scmp.eq.s32.totalorder %s9, 0
    %p71 = por %p69, %p70
    %p72 = scmp.ne.s32.totalorder %s64, %s66
    %p73 = scmp.eq.s32.totalorder %s14, 1
    %p74 = por %p72, %p73
    %p75 = scmp.ne.s32.totalorder %s66, %s67
    %p76 = scmp.eq.s32.totalorder %s14, 0
    %p77 = por %p75, %p76
    %p78 = scmp.ne.s32.totalorder %s66, %s67
    %p79 = scmp.eq.s32.totalorder %s15, 1
    %p80 = por %p78, %p79
    %p82 = scmp.ne.s32.totalorder %s67, %s81
    %p83 = scmp.eq.s32.totalorder %s15, 0
    %p84 = por %p82, %p83
    %s85 = ssub.s32 %s9, %s16
    %p86 = scmp.eq.s32.totalorder %s85, 0
    %s88 = sadd.s32 %s87, 1
    %s89 = scalar_select %p86, %s87, %s88
    %p92 = pneg %p86
    %p93 = scmp.eq.s32.totalorder %s9, 1
    %p94 = por %p92, %p93
    %p95 = scmp.ne.s32.totalorder %s87, %s90
    %p96 = scmp.eq.s32.totalorder %s9, 0
    %p97 = por %p95, %p96
    %p98 = scmp.ne.s32.totalorder %s87, %s90
    %p99 = scmp.eq.s32.totalorder %s14, 1
    %p100 = por %p98, %p99
    %p101 = scmp.ne.s32.totalorder %s90, %s91
    %p102 = scmp.eq.s32.totalorder %s14, 0
    %p103 = por %p101, %p102
    %p104 = scmp.ne.s32.totalorder %s90, %s91
    %p105 = scmp.eq.s32.totalorder %s15, 1
    %p106 = por %p104, %p105
    %p108 = scmp.ne.s32.totalorder %s91, %s107
    %p109 = scmp.eq.s32.totalorder %s15, 0
    %p110 = por %p108, %p109
    %p111 = scmp.le.s32.totalorder 1, %s9
    %p112 = scmp.lt.s32.totalorder %s9, 3
    %p113 = pnand %p111, %p112
    %p114 = pneg %p113
    // Predicated region
    $region9: #{value_net_forward.4} parent=5 // pred_check
      _
    $region10: #{value_net_forward.4} parent=5 // pred_check_branch
      %116 = sbr.rel (%p113) target = $region12
    $region11: #{value_net_forward.4} parent=5 // pred_region
      %s117 = ssub.s32 %s9, 1
      // Predicated region
      $region13: #{value_net_forward.4} parent=11 // pred_check
        %p118 = pneg %p56
      $region14: #{value_net_forward.4} parent=11 // pred_check_branch
        %120 = sbr.rel (%p118) target = $region16
      $region15: #{value_net_forward.4} parent=11 // pred_region
        _
      $region16: #{value_net_forward.4} parent=11 // pred_fallthru
        _
      // Predicated region
      $region17: #{value_net_forward.4} parent=11 // pred_check
        %p121 = pneg %p77
      $region18: #{value_net_forward.4} parent=11 // pred_check_branch
        %123 = sbr.rel (%p121) target = $region20
      $region19: #{value_net_forward.4} parent=11 // pred_region
        _
      $region20: #{value_net_forward.4} parent=11 // pred_fallthru
        _
    $region12: #{value_net_forward.4} parent=5 // pred_fallthru
      _
    %p124 = scmp.lt.s32.totalorder %s9, 2
    // Predicated region
    $region21: #{value_net_forward.4} parent=5 // pred_check
      %p125 = pneg %p124
    $region22: #{value_net_forward.4} parent=5 // pred_check_branch
      %127 = sbr.rel (%p125) target = $region24
    $region23: #{value_net_forward.4} parent=5 // pred_region
      // Predicated region
      $region25: #{value_net_forward.4} parent=23 // pred_check
        %p128 = pneg %p29
      $region26: #{value_net_forward.4} parent=23 // pred_check_branch
        %130 = sbr.rel (%p128) target = $region28
      $region27: #{value_net_forward.4} parent=23 // pred_region
        %s131 = smul.u32 50, %s9
        %p132 = scmp.lt.s32.totalorder %s131, 99
        %s133 = scalar_select %p132, %s131, 99
        %s134 = smul.addr %s133, 2
        %s135 = smul.addr %s134, 4
        %s136 = scalar_lea.vmem %s0, %s135
        %s137 = smul.u32 50, %s9
      $region28: #{value_net_forward.4} parent=23 // pred_fallthru
        _
    $region24: #{value_net_forward.4} parent=5 // pred_fallthru
      _
    %p138 = scmp.le.s32.totalorder 1, %s9
    %p139 = scmp.lt.s32.totalorder %s9, 3
    %p140 = pnand %p138, %p139
    %p141 = pneg %p140
    // Predicated region
    $region29: #{value_net_forward.4} parent=5 // pred_check
      _
    $region30: #{value_net_forward.4} parent=5 // pred_check_branch
      %143 = sbr.rel (%p140) target = $region32
    $region31: #{value_net_forward.4} parent=5 // pred_region
      %s144 = ssub.s32 %s9, 1
      %s145 = smul.u32 50, %s14
      %p146 = scmp.lt.s32.totalorder %s145, 99
      %s147 = scalar_select %p146, %s145, 99
      %s148 = smul.addr %s147, 2
      %s149 = smul.addr %s148, 4
      %s150 = scalar_lea.vmem %s0, %s149
      %p151 = pneg %p35
      %p152 = pneg %p32
      %p153 = pneg %p56
      %p154 = pneg %p53
      %p155 = pneg %p77
      %p156 = pneg %p74
      %p157 = pneg %p103
      %p158 = pneg %p100
      %s159 = smul.u32 50, %s14
      %p160 = scmp.lt.s32.totalorder %s159, 99
      %s161 = scalar_select %p160, %s159, 99
      %s162 = smul.addr %s161, 4
      %s163 = scalar_lea.vmem %s3, %s162
      %s164 = smul.u32 50, %s14
      %p165 = scmp.lt.s32.totalorder %s164, 99
      %s166 = scalar_select %p165, %s164, 99
      %s167 = smul.addr %s166, 2
      %s168 = smul.addr %s167, 4
      %s169 = scalar_lea.vmem %s0, %s168
      %s170 = smul.u32 50, %s14
      %s171 = smul.u32 50, %s14
      %p172 = scmp.lt.s32.totalorder %s171, 99
      %s173 = scalar_select %p172, %s171, 99
      %s174 = smul.addr %s173, 4
      %s175 = scalar_lea.vmem %s3, %s174
      %s176 = smul.u32 50, %s14
      %v177 = vld [vmem:[%s169] sm:$0xff]
      %v178 = vld [vmem:[%s169 + $0x8] sm:$0xff]
      %v179 = vld [vmem:[%s169 + $0x10] sm:$0xff]
      %v180 = vld [vmem:[%s169 + $0x18] sm:$0xff]
      %v181 = vld [vmem:[%s169 + $0x20] sm:$0xff]
      %v182 = vld [vmem:[%s169 + $0x28] sm:$0xff]
      %v183 = vld [vmem:[%s169 + $0x30] sm:$0xff]
      %v184 = vld [vmem:[%s169 + $0x38] sm:$0xff]
      %v185 = vld [vmem:[%s169 + $0x40] sm:$0xff]
      %v186 = vld [vmem:[%s169 + $0x48] sm:$0xff]
      %v187 = vld [vmem:[%s169 + $0x50] sm:$0xff]
      %v188 = vld [vmem:[%s169 + $0x58] sm:$0xff]
      %v189 = vld [vmem:[%s169 + $0x60] sm:$0xff]
      %v190 = vld [vmem:[%s169 + $0x68] sm:$0xff]
      %v191 = vld [vmem:[%s169 + $0x70] sm:$0xff]
      %v192 = vld [vmem:[%s169 + $0x78] sm:$0xff]
      %v193 = vld [vmem:[%s169 + $0x80] sm:$0xff]
      %v194 = vld [vmem:[%s169 + $0x88] sm:$0xff]
      %v195 = vld [vmem:[%s169 + $0x90] sm:$0xff]
      %v196 = vld [vmem:[%s169 + $0x98] sm:$0xff]
      %v197 = vld [vmem:[%s169 + $0xa0] sm:$0xff]
      %v198 = vld [vmem:[%s169 + $0xa8] sm:$0xff]
      %v199 = vld [vmem:[%s169 + $0xb0] sm:$0xff]
      %v200 = vld [vmem:[%s169 + $0xb8] sm:$0xff]
      %v201 = vld [vmem:[%s169 + $0xc0] sm:$0xff]
      %v202 = vld [vmem:[%s169 + $0xc8] sm:$0xff]
      %v203 = vld [vmem:[%s169 + $0xd0] sm:$0xff]
      %v204 = vld [vmem:[%s169 + $0xd8] sm:$0xff]
      %v205 = vld [vmem:[%s169 + $0xe0] sm:$0xff]
      %v206 = vld [vmem:[%s169 + $0xe8] sm:$0xff]
      %v207 = vld [vmem:[%s169 + $0xf0] sm:$0xff]
      %v208 = vld [vmem:[%s169 + $0xf8] sm:$0xff]
      %v209 = vld [vmem:[%s169 + $0x100] sm:$0xff]
      %v210 = vld [vmem:[%s169 + $0x108] sm:$0xff]
      %v211 = vld [vmem:[%s169 + $0x110] sm:$0xff]
      %v212 = vld [vmem:[%s169 + $0x118] sm:$0xff]
      %v213 = vld [vmem:[%s169 + $0x120] sm:$0xff]
      %v214 = vld [vmem:[%s169 + $0x128] sm:$0xff]
      %v215 = vld [vmem:[%s169 + $0x130] sm:$0xff]
      %v216 = vld [vmem:[%s169 + $0x138] sm:$0xff]
      %v217 = vld [vmem:[%s169 + $0x140] sm:$0xff]
      %v218 = vld [vmem:[%s169 + $0x148] sm:$0xff]
      %v219 = vld [vmem:[%s169 + $0x150] sm:$0xff]
      %v220 = vld [vmem:[%s169 + $0x158] sm:$0xff]
      %v221 = vld [vmem:[%s169 + $0x160] sm:$0xff]
      %v222 = vld [vmem:[%s169 + $0x168] sm:$0xff]
      %v223 = vld [vmem:[%s169 + $0x170] sm:$0xff]
      %v224 = vld [vmem:[%s169 + $0x178] sm:$0xff]
      %v225 = vld [vmem:[%s169 + $0x180] sm:$0xff]
      %v226 = vld [vmem:[%s169 + $0x188] sm:$0xff]
      %v227 = vld [vmem:[%s1] sm:$0xf]
      %v228 = vld [vmem:[%s1 + $0x4] sm:$0xf]
      %v229 = vld [vmem:[%s1 + $0x8] sm:$0xf]
      %v230 = vld [vmem:[%s1 + $0xc] sm:$0xf]
      %v231 = vld [vmem:[%s1 + $0x10] sm:$0xf]
      %v232 = vld [vmem:[%s1 + $0x14] sm:$0xf]
      %v233 = vld [vmem:[%s1 + $0x18] sm:$0xf]
      %v234 = vld [vmem:[%s1 + $0x1c] sm:$0xf]
      %v235 = vld [vmem:[%s1 + $0x20] sm:$0xf]
      %v236 = vld [vmem:[%s1 + $0x24] sm:$0xf]
      %v237 = vld [vmem:[%s1 + $0x28] sm:$0xf]
      %v238 = vld [vmem:[%s1 + $0x2c] sm:$0xf]
      %v239 = vld [vmem:[%s1 + $0x30] sm:$0xf]
      %v240 = vld [vmem:[%s1 + $0x34] sm:$0xf]
      %v241 = vld [vmem:[%s1 + $0x38] sm:$0xf]
      %v242 = vld [vmem:[%s1 + $0x3c] sm:$0xf]
      %v243 = vld [vmem:[%s1 + $0x40] sm:$0xf]
      %v244 = vld [vmem:[%s1 + $0x44] sm:$0xf]
      %v245 = vld [vmem:[%s1 + $0x48] sm:$0xf]
      %v246 = vld [vmem:[%s1 + $0x4c] sm:$0xf]
      %v247 = vld [vmem:[%s1 + $0x50] sm:$0xf]
      %v248 = vld [vmem:[%s1 + $0x54] sm:$0xf]
      %v249 = vld [vmem:[%s1 + $0x58] sm:$0xf]
      %v250 = vld [vmem:[%s1 + $0x5c] sm:$0xf]
      %v251 = vld [vmem:[%s1 + $0x60] sm:$0xf]
      %v252 = vld [vmem:[%s1 + $0x64] sm:$0xf]
      %v253 = vld [vmem:[%s1 + $0x68] sm:$0xf]
      %v254 = vld [vmem:[%s1 + $0x6c] sm:$0xf]
      %v255 = vld [vmem:[%s1 + $0x70] sm:$0xf]
      %v256 = vld [vmem:[%s1 + $0x74] sm:$0xf]
      %v257 = vld [vmem:[%s1 + $0x78] sm:$0xf]
      %v258 = vld [vmem:[%s1 + $0x7c] sm:$0xf]
      %v259 = vld [vmem:[%s2] sm:$0x1]
      %v261 = vperm.slane %v259, 0
      %v313 = vunpack.c.l.b16 %v177
      %v314 = vunpack.c.h.b16 %v177
      %v315 = vunpack.c.l.b16 %v178
      %v316 = vunpack.c.h.b16 %v178
      %v317 = vunpack.c.l.b16 %v179
      %v318 = vunpack.c.h.b16 %v179
      %v319 = vunpack.c.l.b16 %v180
      %v320 = vunpack.c.h.b16 %v180
      %v321 = vunpack.c.l.b16 %v181
      %v322 = vunpack.c.h.b16 %v181
      %v323 = vunpack.c.l.b16 %v182
      %v324 = vunpack.c.h.b16 %v182
      %v325 = vunpack.c.l.b16 %v183
      %v326 = vunpack.c.h.b16 %v183
      %v327 = vunpack.c.l.b16 %v184
      %v328 = vunpack.c.h.b16 %v184
      %v329 = vunpack.c.l.b16 %v185
      %v330 = vunpack.c.h.b16 %v185
      %v331 = vunpack.c.l.b16 %v186
      %v332 = vunpack.c.h.b16 %v186
      %v333 = vunpack.c.l.b16 %v187
      %v334 = vunpack.c.h.b16 %v187
      %v335 = vunpack.c.l.b16 %v188
      %v336 = vunpack.c.h.b16 %v188
      %v337 = vunpack.c.l.b16 %v189
      %v338 = vunpack.c.h.b16 %v189
      %v339 = vunpack.c.l.b16 %v190
      %v340 = vunpack.c.h.b16 %v190
      %v341 = vunpack.c.l.b16 %v191
      %v342 = vunpack.c.h.b16 %v191
      %v343 = vunpack.c.l.b16 %v192
      %v344 = vunpack.c.h.b16 %v192
      %v345 = vunpack.c.l.b16 %v193
      %v346 = vunpack.c.h.b16 %v193
      %v347 = vunpack.c.l.b16 %v194
      %v348 = vunpack.c.h.b16 %v194
      %v349 = vunpack.c.l.b16 %v195
      %v350 = vunpack.c.h.b16 %v195
      %v351 = vunpack.c.l.b16 %v196
      %v352 = vunpack.c.h.b16 %v196
      %v353 = vunpack.c.l.b16 %v197
      %v354 = vunpack.c.h.b16 %v197
      %v355 = vunpack.c.l.b16 %v198
      %v356 = vunpack.c.h.b16 %v198
      %v357 = vunpack.c.l.b16 %v199
      %v358 = vunpack.c.h.b16 %v199
      %v359 = vunpack.c.l.b16 %v200
      %v360 = vunpack.c.h.b16 %v200
      %v361 = vunpack.c.l.b16 %v201
      %v362 = vunpack.c.h.b16 %v201
      %v363 = vunpack.c.l.b16 %v202
      %v364 = vunpack.c.h.b16 %v202
      %v365 = vunpack.c.l.b16 %v203
      %v366 = vunpack.c.h.b16 %v203
      %v367 = vunpack.c.l.b16 %v204
      %v368 = vunpack.c.h.b16 %v204
      %v369 = vunpack.c.l.b16 %v205
      %v370 = vunpack.c.h.b16 %v205
      %v371 = vunpack.c.l.b16 %v206
      %v372 = vunpack.c.h.b16 %v206
      %v373 = vunpack.c.l.b16 %v207
      %v374 = vunpack.c.h.b16 %v207
      %v375 = vunpack.c.l.b16 %v208
      %v376 = vunpack.c.h.b16 %v208
      %v377 = vunpack.c.l.b16 %v209
      %v378 = vunpack.c.h.b16 %v209
      %v379 = vunpack.c.l.b16 %v210
      %v380 = vunpack.c.h.b16 %v210
      %v381 = vunpack.c.l.b16 %v211
      %v382 = vunpack.c.h.b16 %v211
      %v383 = vunpack.c.l.b16 %v212
      %v384 = vunpack.c.h.b16 %v212
      %v385 = vunpack.c.l.b16 %v213
      %v386 = vunpack.c.h.b16 %v213
      %v387 = vunpack.c.l.b16 %v214
      %v388 = vunpack.c.h.b16 %v214
      %v389 = vunpack.c.l.b16 %v215
      %v390 = vunpack.c.h.b16 %v215
      %v391 = vunpack.c.l.b16 %v216
      %v392 = vunpack.c.h.b16 %v216
      %v393 = vunpack.c.l.b16 %v217
      %v394 = vunpack.c.h.b16 %v217
      %v395 = vunpack.c.l.b16 %v218
      %v396 = vunpack.c.h.b16 %v218
      %v397 = vunpack.c.l.b16 %v219
      %v398 = vunpack.c.h.b16 %v219
      %v399 = vunpack.c.l.b16 %v220
      %v400 = vunpack.c.h.b16 %v220
      %v401 = vunpack.c.l.b16 %v221
      %v402 = vunpack.c.h.b16 %v221
      %v403 = vunpack.c.l.b16 %v222
      %v404 = vunpack.c.h.b16 %v222
      %v405 = vunpack.c.l.b16 %v223
      %v406 = vunpack.c.h.b16 %v223
      %v407 = vunpack.c.l.b16 %v224
      %v408 = vunpack.c.h.b16 %v224
      %v409 = vunpack.c.l.b16 %v225
      %v410 = vunpack.c.h.b16 %v225
      %v411 = vunpack.c.l.b16 %v226
      %v412 = vunpack.c.h.b16 %v226
      %v413 = vpack.c.b16 %v315, %v313
      %v414 = vpack.c.b16 %v316, %v314
      %v415 = vpack.c.b16 %v319, %v317
      %v416 = vpack.c.b16 %v320, %v318
      %v417 = vpack.c.b16 %v323, %v321
      %v418 = vpack.c.b16 %v324, %v322
      %v419 = vpack.c.b16 %v327, %v325
      %v420 = vpack.c.b16 %v328, %v326
      %v421 = vpack.c.b16 %v331, %v329
      %v422 = vpack.c.b16 %v332, %v330
      %v423 = vpack.c.b16 %v335, %v333
      %v424 = vpack.c.b16 %v336, %v334
      %v425 = vpack.c.b16 %v339, %v337
      %v426 = vpack.c.b16 %v340, %v338
      %v427 = vpack.c.b16 %v343, %v341
      %v428 = vpack.c.b16 %v344, %v342
      %v429 = vpack.c.b16 %v347, %v345
      %v430 = vpack.c.b16 %v348, %v346
      %v431 = vpack.c.b16 %v351, %v349
      %v432 = vpack.c.b16 %v352, %v350
      %v433 = vpack.c.b16 %v355, %v353
      %v434 = vpack.c.b16 %v356, %v354
      %v435 = vpack.c.b16 %v359, %v357
      %v436 = vpack.c.b16 %v360, %v358
      %v437 = vpack.c.b16 %v363, %v361
      %v438 = vpack.c.b16 %v364, %v362
      %v439 = vpack.c.b16 %v367, %v365
      %v440 = vpack.c.b16 %v368, %v366
      %v441 = vpack.c.b16 %v371, %v369
      %v442 = vpack.c.b16 %v372, %v370
      %v443 = vpack.c.b16 %v375, %v373
      %v444 = vpack.c.b16 %v376, %v374
      %v445 = vpack.c.b16 %v379, %v377
      %v446 = vpack.c.b16 %v380, %v378
      %v447 = vpack.c.b16 %v383, %v381
      %v448 = vpack.c.b16 %v384, %v382
      %v449 = vpack.c.b16 %v387, %v385
      %v450 = vpack.c.b16 %v388, %v386
      %v451 = vpack.c.b16 %v391, %v389
      %v452 = vpack.c.b16 %v392, %v390
      %v453 = vpack.c.b16 %v395, %v393
      %v454 = vpack.c.b16 %v396, %v394
      %v455 = vpack.c.b16 %v399, %v397
      %v456 = vpack.c.b16 %v400, %v398
      %v457 = vpack.c.b16 %v403, %v401
      %v458 = vpack.c.b16 %v404, %v402
      %v459 = vpack.c.b16 %v407, %v405
      %v460 = vpack.c.b16 %v408, %v406
      %v461 = vpack.c.b16 %v411, %v409
      %v462 = vpack.c.b16 %v412, %v410
      %v545 = vunpack.c.l.b16 %v227
      %v546 = vunpack.c.l.b16 %v228
      %v547 = vunpack.c.l.b16 %v229
      %v548 = vunpack.c.l.b16 %v230
      %v549 = vunpack.c.l.b16 %v231
      %v550 = vunpack.c.l.b16 %v232
      %v551 = vunpack.c.l.b16 %v233
      %v552 = vunpack.c.l.b16 %v234
      %v553 = vunpack.c.l.b16 %v235
      %v554 = vunpack.c.l.b16 %v236
      %v555 = vunpack.c.l.b16 %v237
      %v556 = vunpack.c.l.b16 %v238
      %v557 = vunpack.c.l.b16 %v239
      %v558 = vunpack.c.l.b16 %v240
      %v559 = vunpack.c.l.b16 %v241
      %v560 = vunpack.c.l.b16 %v242
      %v561 = vunpack.c.l.b16 %v243
      %v562 = vunpack.c.l.b16 %v244
      %v563 = vunpack.c.l.b16 %v245
      %v564 = vunpack.c.l.b16 %v246
      %v565 = vunpack.c.l.b16 %v247
      %v566 = vunpack.c.l.b16 %v248
      %v567 = vunpack.c.l.b16 %v249
      %v568 = vunpack.c.l.b16 %v250
      %v569 = vunpack.c.l.b16 %v251
      %v570 = vunpack.c.l.b16 %v252
      %v571 = vunpack.c.l.b16 %v253
      %v572 = vunpack.c.l.b16 %v254
      %v573 = vunpack.c.l.b16 %v255
      %v574 = vunpack.c.l.b16 %v256
      %v575 = vunpack.c.l.b16 %v257
      %v576 = vunpack.c.l.b16 %v258
      %v577 = vpack.c.b16 %v546, %v545
      %v578 = vpack.c.b16 %v548, %v547
      %v579 = vpack.c.b16 %v550, %v549
      %v580 = vpack.c.b16 %v552, %v551
      %v581 = vpack.c.b16 %v554, %v553
      %v582 = vpack.c.b16 %v556, %v555
      %v583 = vpack.c.b16 %v558, %v557
      %v584 = vpack.c.b16 %v560, %v559
      %v585 = vpack.c.b16 %v562, %v561
      %v586 = vpack.c.b16 %v564, %v563
      %v587 = vpack.c.b16 %v566, %v565
      %v588 = vpack.c.b16 %v568, %v567
      %v589 = vpack.c.b16 %v570, %v569
      %v590 = vpack.c.b16 %v572, %v571
      %v591 = vpack.c.b16 %v574, %v573
      %v592 = vpack.c.b16 %v576, %v575
      %609 = vmatpush.bf16.msra.mxu0 %v584
      %610 = vmatpush.bf16.msra.mxu0 %v583
      %611 = vmatpush.bf16.msra.mxu0 %v582
      %612 = vmatpush.bf16.msra.mxu0 %v581
      %613 = vmatpush.bf16.msra.mxu0 %v580
      %614 = vmatpush.bf16.msra.mxu0 %v579
      %615 = vmatpush.bf16.msra.mxu0 %v578
      %616 = vmatpush.bf16.msra.mxu0 %v577
      %617 = vmatmul.bf16.gmra.mxu0 %v413
      %v618 = vpop.f32.mrf.mxu0
      %v619 = vadd.f32 %v261, %v618
      %v620 = vpop.f32.mrf.mxu0
      %v621 = vadd.f32 %v261, %v620
      %622 = vmatmul.bf16.gmra.mxu0 %v415
      %v623 = vpop.f32.mrf.mxu0
      %v624 = vadd.f32 %v261, %v623
      %v625 = vpop.f32.mrf.mxu0
      %v626 = vadd.f32 %v261, %v625
      %627 = vmatmul.bf16.gmra.mxu0 %v417
      %v628 = vpop.f32.mrf.mxu0
      %v629 = vadd.f32 %v261, %v628
      %v630 = vpop.f32.mrf.mxu0
      %v631 = vadd.f32 %v261, %v630
      %632 = vmatmul.bf16.gmra.mxu0 %v419
      %v633 = vpop.f32.mrf.mxu0
      %v634 = vadd.f32 %v261, %v633
      %v635 = vpop.f32.mrf.mxu0
      %v636 = vadd.f32 %v261, %v635
      %637 = vmatmul.bf16.gmra.mxu0 %v421
      %v638 = vpop.f32.mrf.mxu0
      %v639 = vadd.f32 %v261, %v638
      %v640 = vpop.f32.mrf.mxu0
      %v641 = vadd.f32 %v261, %v640
      %642 = vmatmul.bf16.gmra.mxu0 %v423
      %v643 = vpop.f32.mrf.mxu0
      %v644 = vadd.f32 %v261, %v643
      %v645 = vpop.f32.mrf.mxu0
      %v646 = vadd.f32 %v261, %v645
      %647 = vmatmul.bf16.gmra.mxu0 %v425
      %v648 = vpop.f32.mrf.mxu0
      %v649 = vadd.f32 %v261, %v648
      %v650 = vpop.f32.mrf.mxu0
      %v651 = vadd.f32 %v261, %v650
      %652 = vmatmul.bf16.gmra.mxu0 %v427
      %v653 = vpop.f32.mrf.mxu0
      %v654 = vadd.f32 %v261, %v653
      %v655 = vpop.f32.mrf.mxu0
      %v656 = vadd.f32 %v261, %v655
      %657 = vmatmul.bf16.gmra.mxu0 %v429
      %v658 = vpop.f32.mrf.mxu0
      %v659 = vadd.f32 %v261, %v658
      %v660 = vpop.f32.mrf.mxu0
      %v661 = vadd.f32 %v261, %v660
      %662 = vmatmul.bf16.gmra.mxu0 %v431
      %v663 = vpop.f32.mrf.mxu0
      %v664 = vadd.f32 %v261, %v663
      %v665 = vpop.f32.mrf.mxu0
      %v666 = vadd.f32 %v261, %v665
      %667 = vmatmul.bf16.gmra.mxu0 %v433
      %v668 = vpop.f32.mrf.mxu0
      %v669 = vadd.f32 %v261, %v668
      %v670 = vpop.f32.mrf.mxu0
      %v671 = vadd.f32 %v261, %v670
      %672 = vmatmul.bf16.gmra.mxu0 %v435
      %v673 = vpop.f32.mrf.mxu0
      %v674 = vadd.f32 %v261, %v673
      %v675 = vpop.f32.mrf.mxu0
      %v676 = vadd.f32 %v261, %v675
      %677 = vmatmul.bf16.gmra.mxu0 %v437
      %v678 = vpop.f32.mrf.mxu0
      %v679 = vadd.f32 %v261, %v678
      %v680 = vpop.f32.mrf.mxu0
      %v681 = vadd.f32 %v261, %v680
      %682 = vmatmul.bf16.gmra.mxu0 %v439
      %v683 = vpop.f32.mrf.mxu0
      %v684 = vadd.f32 %v261, %v683
      %v685 = vpop.f32.mrf.mxu0
      %v686 = vadd.f32 %v261, %v685
      %687 = vmatmul.bf16.gmra.mxu0 %v441
      %v688 = vpop.f32.mrf.mxu0
      %v689 = vadd.f32 %v261, %v688
      %v690 = vpop.f32.mrf.mxu0
      %v691 = vadd.f32 %v261, %v690
      %692 = vmatmul.bf16.gmra.mxu0 %v443
      %v693 = vpop.f32.mrf.mxu0
      %v694 = vadd.f32 %v261, %v693
      %v695 = vpop.f32.mrf.mxu0
      %v696 = vadd.f32 %v261, %v695
      %697 = vmatmul.bf16.gmra.mxu0 %v445
      %v698 = vpop.f32.mrf.mxu0
      %v699 = vadd.f32 %v261, %v698
      %v700 = vpop.f32.mrf.mxu0
      %v701 = vadd.f32 %v261, %v700
      %702 = vmatmul.bf16.gmra.mxu0 %v447
      %v703 = vpop.f32.mrf.mxu0
      %v704 = vadd.f32 %v261, %v703
      %v705 = vpop.f32.mrf.mxu0
      %v706 = vadd.f32 %v261, %v705
      %707 = vmatmul.bf16.gmra.mxu0 %v449
      %v708 = vpop.f32.mrf.mxu0
      %v709 = vadd.f32 %v261, %v708
      %v710 = vpop.f32.mrf.mxu0
      %v711 = vadd.f32 %v261, %v710
      %712 = vmatmul.bf16.gmra.mxu0 %v451
      %v713 = vpop.f32.mrf.mxu0
      %v714 = vadd.f32 %v261, %v713
      %v715 = vpop.f32.mrf.mxu0
      %v716 = vadd.f32 %v261, %v715
      %717 = vmatmul.bf16.gmra.mxu0 %v453
      %v718 = vpop.f32.mrf.mxu0
      %v719 = vadd.f32 %v261, %v718
      %v720 = vpop.f32.mrf.mxu0
      %v721 = vadd.f32 %v261, %v720
      %722 = vmatmul.bf16.gmra.mxu0 %v455
      %v723 = vpop.f32.mrf.mxu0
      %v724 = vadd.f32 %v261, %v723
      %v725 = vpop.f32.mrf.mxu0
      %v726 = vadd.f32 %v261, %v725
      %727 = vmatmul.bf16.gmra.mxu0 %v457
      %v728 = vpop.f32.mrf.mxu0
      %v729 = vadd.f32 %v261, %v728
      %v730 = vpop.f32.mrf.mxu0
      %v731 = vadd.f32 %v261, %v730
      %732 = vmatmul.bf16.gmra.mxu0 %v459
      %v733 = vpop.f32.mrf.mxu0
      %v734 = vadd.f32 %v261, %v733
      %v735 = vpop.f32.mrf.mxu0
      %v736 = vadd.f32 %v261, %v735
      %737 = vmatmul.bf16.gmra.mxu0 %v461
      %v738 = vpop.f32.mrf.mxu0
      %v739 = vadd.f32 %v261, %v738
      %v740 = vpop.f32.mrf.mxu0
      %v741 = vadd.f32 %v261, %v740
      %742 = vdwg.mxu0
      %743 = vmatpush.bf16.msra.mxu0 %v592
      %744 = vmatpush.bf16.msra.mxu0 %v591
      %745 = vmatpush.bf16.msra.mxu0 %v590
      %746 = vmatpush.bf16.msra.mxu0 %v589
      %747 = vmatpush.bf16.msra.mxu0 %v588
      %748 = vmatpush.bf16.msra.mxu0 %v587
      %749 = vmatpush.bf16.msra.mxu0 %v586
      %750 = vmatpush.bf16.msra.mxu0 %v585
      %751 = vmatmul.bf16.gmra.mxu0 %v414
      %v752 = vpop.f32.mrf.mxu0
      %v753 = vadd.f32 %v619, %v752
      %v754 = vpop.f32.mrf.mxu0
      %v755 = vadd.f32 %v621, %v754
      %756 = vmatmul.bf16.gmra.mxu0 %v416
      %v757 = vpop.f32.mrf.mxu0
      %v758 = vadd.f32 %v624, %v757
      %v759 = vpop.f32.mrf.mxu0
      %v760 = vadd.f32 %v626, %v759
      %761 = vmatmul.bf16.gmra.mxu0 %v418
      %v762 = vpop.f32.mrf.mxu0
      %v763 = vadd.f32 %v629, %v762
      %v764 = vpop.f32.mrf.mxu0
      %v765 = vadd.f32 %v631, %v764
      %766 = vmatmul.bf16.gmra.mxu0 %v420
      %v767 = vpop.f32.mrf.mxu0
      %v768 = vadd.f32 %v634, %v767
      %v769 = vpop.f32.mrf.mxu0
      %v770 = vadd.f32 %v636, %v769
      %771 = vmatmul.bf16.gmra.mxu0 %v422
      %v772 = vpop.f32.mrf.mxu0
      %v773 = vadd.f32 %v639, %v772
      %v774 = vpop.f32.mrf.mxu0
      %v775 = vadd.f32 %v641, %v774
      %776 = vmatmul.bf16.gmra.mxu0 %v424
      %v777 = vpop.f32.mrf.mxu0
      %v778 = vadd.f32 %v644, %v777
      %v779 = vpop.f32.mrf.mxu0
      %v780 = vadd.f32 %v646, %v779
      %781 = vmatmul.bf16.gmra.mxu0 %v426
      %v782 = vpop.f32.mrf.mxu0
      %v783 = vadd.f32 %v649, %v782
      %v784 = vpop.f32.mrf.mxu0
      %v785 = vadd.f32 %v651, %v784
      %786 = vmatmul.bf16.gmra.mxu0 %v428
      %v787 = vpop.f32.mrf.mxu0
      %v788 = vadd.f32 %v654, %v787
      %v789 = vpop.f32.mrf.mxu0
      %v790 = vadd.f32 %v656, %v789
      %791 = vmatmul.bf16.gmra.mxu0 %v430
      %v792 = vpop.f32.mrf.mxu0
      %v793 = vadd.f32 %v659, %v792
      %v794 = vpop.f32.mrf.mxu0
      %v795 = vadd.f32 %v661, %v794
      %796 = vmatmul.bf16.gmra.mxu0 %v432
      %v797 = vpop.f32.mrf.mxu0
      %v798 = vadd.f32 %v664, %v797
      %v799 = vpop.f32.mrf.mxu0
      %v800 = vadd.f32 %v666, %v799
      %801 = vmatmul.bf16.gmra.mxu0 %v434
      %v802 = vpop.f32.mrf.mxu0
      %v803 = vadd.f32 %v669, %v802
      %v804 = vpop.f32.mrf.mxu0
      %v805 = vadd.f32 %v671, %v804
      %806 = vmatmul.bf16.gmra.mxu0 %v436
      %v807 = vpop.f32.mrf.mxu0
      %v808 = vadd.f32 %v674, %v807
      %v809 = vpop.f32.mrf.mxu0
      %v810 = vadd.f32 %v676, %v809
      %811 = vmatmul.bf16.gmra.mxu0 %v438
      %v812 = vpop.f32.mrf.mxu0
      %v813 = vadd.f32 %v679, %v812
      %v814 = vpop.f32.mrf.mxu0
      %v815 = vadd.f32 %v681, %v814
      %816 = vmatmul.bf16.gmra.mxu0 %v440
      %v817 = vpop.f32.mrf.mxu0
      %v818 = vadd.f32 %v684, %v817
      %v819 = vpop.f32.mrf.mxu0
      %v820 = vadd.f32 %v686, %v819
      %821 = vmatmul.bf16.gmra.mxu0 %v442
      %v822 = vpop.f32.mrf.mxu0
      %v823 = vadd.f32 %v689, %v822
      %v824 = vpop.f32.mrf.mxu0
      %v825 = vadd.f32 %v691, %v824
      %826 = vmatmul.bf16.gmra.mxu0 %v444
      %v827 = vpop.f32.mrf.mxu0
      %v828 = vadd.f32 %v694, %v827
      %v829 = vpop.f32.mrf.mxu0
      %v830 = vadd.f32 %v696, %v829
      %831 = vmatmul.bf16.gmra.mxu0 %v446
      %v832 = vpop.f32.mrf.mxu0
      %v833 = vadd.f32 %v699, %v832
      %v834 = vpop.f32.mrf.mxu0
      %v835 = vadd.f32 %v701, %v834
      %836 = vmatmul.bf16.gmra.mxu0 %v448
      %v837 = vpop.f32.mrf.mxu0
      %v838 = vadd.f32 %v704, %v837
      %v839 = vpop.f32.mrf.mxu0
      %v840 = vadd.f32 %v706, %v839
      %841 = vmatmul.bf16.gmra.mxu0 %v450
      %v842 = vpop.f32.mrf.mxu0
      %v843 = vadd.f32 %v709, %v842
      %v844 = vpop.f32.mrf.mxu0
      %v845 = vadd.f32 %v711, %v844
      %846 = vmatmul.bf16.gmra.mxu0 %v452
      %v847 = vpop.f32.mrf.mxu0
      %v848 = vadd.f32 %v714, %v847
      %v849 = vpop.f32.mrf.mxu0
      %v850 = vadd.f32 %v716, %v849
      %851 = vmatmul.bf16.gmra.mxu0 %v454
      %v852 = vpop.f32.mrf.mxu0
      %v853 = vadd.f32 %v719, %v852
      %v854 = vpop.f32.mrf.mxu0
      %v855 = vadd.f32 %v721, %v854
      %856 = vmatmul.bf16.gmra.mxu0 %v456
      %v857 = vpop.f32.mrf.mxu0
      %v858 = vadd.f32 %v724, %v857
      %v859 = vpop.f32.mrf.mxu0
      %v860 = vadd.f32 %v726, %v859
      %861 = vmatmul.bf16.gmra.mxu0 %v458
      %v862 = vpop.f32.mrf.mxu0
      %v863 = vadd.f32 %v729, %v862
      %v864 = vpop.f32.mrf.mxu0
      %v865 = vadd.f32 %v731, %v864
      %866 = vmatmul.bf16.gmra.mxu0 %v460
      %v867 = vpop.f32.mrf.mxu0
      %v868 = vadd.f32 %v734, %v867
      %v869 = vpop.f32.mrf.mxu0
      %v870 = vadd.f32 %v736, %v869
      %871 = vmatmul.bf16.gmra.mxu0 %v462
      %v872 = vpop.f32.mrf.mxu0
      %v873 = vadd.f32 %v739, %v872
      %v874 = vpop.f32.mrf.mxu0
      %v875 = vadd.f32 %v741, %v874
      %876 = vdwg.mxu0
      %v877 = vmax.f32 %v753, 0.0
      %v878 = vmax.f32 %v755, 0.0
      %v879 = vmax.f32 %v758, 0.0
      %v880 = vmax.f32 %v760, 0.0
      %v881 = vmax.f32 %v763, 0.0
      %v882 = vmax.f32 %v765, 0.0
      %v883 = vmax.f32 %v768, 0.0
      %v884 = vmax.f32 %v770, 0.0
      %v885 = vmax.f32 %v773, 0.0
      %v886 = vmax.f32 %v775, 0.0
      %v887 = vmax.f32 %v778, 0.0
      %v888 = vmax.f32 %v780, 0.0
      %v889 = vmax.f32 %v783, 0.0
      %v890 = vmax.f32 %v785, 0.0
      %v891 = vmax.f32 %v788, 0.0
      %v892 = vmax.f32 %v790, 0.0
      %v893 = vmax.f32 %v793, 0.0
      %v894 = vmax.f32 %v795, 0.0
      %v895 = vmax.f32 %v798, 0.0
      %v896 = vmax.f32 %v800, 0.0
      %v897 = vmax.f32 %v803, 0.0
      %v898 = vmax.f32 %v805, 0.0
      %v899 = vmax.f32 %v808, 0.0
      %v900 = vmax.f32 %v810, 0.0
      %v901 = vmax.f32 %v813, 0.0
      %v902 = vmax.f32 %v815, 0.0
      %v903 = vmax.f32 %v818, 0.0
      %v904 = vmax.f32 %v820, 0.0
      %v905 = vmax.f32 %v823, 0.0
      %v906 = vmax.f32 %v825, 0.0
      %v907 = vmax.f32 %v828, 0.0
      %v908 = vmax.f32 %v830, 0.0
      %v909 = vmax.f32 %v833, 0.0
      %v910 = vmax.f32 %v835, 0.0
      %v911 = vmax.f32 %v838, 0.0
      %v912 = vmax.f32 %v840, 0.0
      %v913 = vmax.f32 %v843, 0.0
      %v914 = vmax.f32 %v845, 0.0
      %v915 = vmax.f32 %v848, 0.0
      %v916 = vmax.f32 %v850, 0.0
      %v917 = vmax.f32 %v853, 0.0
      %v918 = vmax.f32 %v855, 0.0
      %v919 = vmax.f32 %v858, 0.0
      %v920 = vmax.f32 %v860, 0.0
      %v921 = vmax.f32 %v863, 0.0
      %v922 = vmax.f32 %v865, 0.0
      %v923 = vmax.f32 %v868, 0.0
      %v924 = vmax.f32 %v870, 0.0
      %v925 = vmax.f32 %v873, 0.0
      %v926 = vmax.f32 %v875, 0.0
      %v927 = vpack.c.bf16 %v877, %v877
      %v928 = vpack.c.bf16 %v878, %v878
      %v929 = vpack.c.bf16 %v879, %v879
      %v930 = vpack.c.bf16 %v880, %v880
      %v931 = vpack.c.bf16 %v881, %v881
      %v932 = vpack.c.bf16 %v882, %v882
      %v933 = vpack.c.bf16 %v883, %v883
      %v934 = vpack.c.bf16 %v884, %v884
      %v935 = vpack.c.bf16 %v885, %v885
      %v936 = vpack.c.bf16 %v886, %v886
      %v937 = vpack.c.bf16 %v887, %v887
      %v938 = vpack.c.bf16 %v888, %v888
      %v939 = vpack.c.bf16 %v889, %v889
      %v940 = vpack.c.bf16 %v890, %v890
      %v941 = vpack.c.bf16 %v891, %v891
      %v942 = vpack.c.bf16 %v892, %v892
      %v943 = vpack.c.bf16 %v893, %v893
      %v944 = vpack.c.bf16 %v894, %v894
      %v945 = vpack.c.bf16 %v895, %v895
      %v946 = vpack.c.bf16 %v896, %v896
      %v947 = vpack.c.bf16 %v897, %v897
      %v948 = vpack.c.bf16 %v898, %v898
      %v949 = vpack.c.bf16 %v899, %v899
      %v950 = vpack.c.bf16 %v900, %v900
      %v951 = vpack.c.bf16 %v901, %v901
      %v952 = vpack.c.bf16 %v902, %v902
      %v953 = vpack.c.bf16 %v903, %v903
      %v954 = vpack.c.bf16 %v904, %v904
      %v955 = vpack.c.bf16 %v905, %v905
      %v956 = vpack.c.bf16 %v906, %v906
      %v957 = vpack.c.bf16 %v907, %v907
      %v958 = vpack.c.bf16 %v908, %v908
      %v959 = vpack.c.bf16 %v909, %v909
      %v960 = vpack.c.bf16 %v910, %v910
      %v961 = vpack.c.bf16 %v911, %v911
      %v962 = vpack.c.bf16 %v912, %v912
      %v963 = vpack.c.bf16 %v913, %v913
      %v964 = vpack.c.bf16 %v914, %v914
      %v965 = vpack.c.bf16 %v915, %v915
      %v966 = vpack.c.bf16 %v916, %v916
      %v967 = vpack.c.bf16 %v917, %v917
      %v968 = vpack.c.bf16 %v918, %v918
      %v969 = vpack.c.bf16 %v919, %v919
      %v970 = vpack.c.bf16 %v920, %v920
      %v971 = vpack.c.bf16 %v921, %v921
      %v972 = vpack.c.bf16 %v922, %v922
      %v973 = vpack.c.bf16 %v923, %v923
      %v974 = vpack.c.bf16 %v924, %v924
      %v975 = vpack.c.bf16 %v925, %v925
      %v976 = vpack.c.bf16 %v926, %v926
      %vm977 = vcmask 257024
      %978 = vst.msk [vmem:[%s175] sm:$0xf] %vm977, %v927
      %979 = vst.msk [vmem:[%s175 + $0x4] sm:$0xf] %vm977, %v928
      %980 = vst.msk [vmem:[%s175 + $0x8] sm:$0xf] %vm977, %v929
      %981 = vst.msk [vmem:[%s175 + $0xc] sm:$0xf] %vm977, %v930
      %982 = vst.msk [vmem:[%s175 + $0x10] sm:$0xf] %vm977, %v931
      %983 = vst.msk [vmem:[%s175 + $0x14] sm:$0xf] %vm977, %v932
      %984 = vst.msk [vmem:[%s175 + $0x18] sm:$0xf] %vm977, %v933
      %985 = vst.msk [vmem:[%s175 + $0x1c] sm:$0xf] %vm977, %v934
      %986 = vst.msk [vmem:[%s175 + $0x20] sm:$0xf] %vm977, %v935
      %987 = vst.msk [vmem:[%s175 + $0x24] sm:$0xf] %vm977, %v936
      %988 = vst.msk [vmem:[%s175 + $0x28] sm:$0xf] %vm977, %v937
      %989 = vst.msk [vmem:[%s175 + $0x2c] sm:$0xf] %vm977, %v938
      %990 = vst.msk [vmem:[%s175 + $0x30] sm:$0xf] %vm977, %v939
      %991 = vst.msk [vmem:[%s175 + $0x34] sm:$0xf] %vm977, %v940
      %992 = vst.msk [vmem:[%s175 + $0x38] sm:$0xf] %vm977, %v941
      %993 = vst.msk [vmem:[%s175 + $0x3c] sm:$0xf] %vm977, %v942
      %994 = vst.msk [vmem:[%s175 + $0x40] sm:$0xf] %vm977, %v943
      %995 = vst.msk [vmem:[%s175 + $0x44] sm:$0xf] %vm977, %v944
      %996 = vst.msk [vmem:[%s175 + $0x48] sm:$0xf] %vm977, %v945
      %997 = vst.msk [vmem:[%s175 + $0x4c] sm:$0xf] %vm977, %v946
      %998 = vst.msk [vmem:[%s175 + $0x50] sm:$0xf] %vm977, %v947
      %999 = vst.msk [vmem:[%s175 + $0x54] sm:$0xf] %vm977, %v948
      %1000 = vst.msk [vmem:[%s175 + $0x58] sm:$0xf] %vm977, %v949
      %1001 = vst.msk [vmem:[%s175 + $0x5c] sm:$0xf] %vm977, %v950
      %1002 = vst.msk [vmem:[%s175 + $0x60] sm:$0xf] %vm977, %v951
      %1003 = vst.msk [vmem:[%s175 + $0x64] sm:$0xf] %vm977, %v952
      %1004 = vst.msk [vmem:[%s175 + $0x68] sm:$0xf] %vm977, %v953
      %1005 = vst.msk [vmem:[%s175 + $0x6c] sm:$0xf] %vm977, %v954
      %1006 = vst.msk [vmem:[%s175 + $0x70] sm:$0xf] %vm977, %v955
      %1007 = vst.msk [vmem:[%s175 + $0x74] sm:$0xf] %vm977, %v956
      %1008 = vst.msk [vmem:[%s175 + $0x78] sm:$0xf] %vm977, %v957
      %1009 = vst.msk [vmem:[%s175 + $0x7c] sm:$0xf] %vm977, %v958
      %1010 = vst.msk [vmem:[%s175 + $0x80] sm:$0xf] %vm977, %v959
      %1011 = vst.msk [vmem:[%s175 + $0x84] sm:$0xf] %vm977, %v960
      %1012 = vst.msk [vmem:[%s175 + $0x88] sm:$0xf] %vm977, %v961
      %1013 = vst.msk [vmem:[%s175 + $0x8c] sm:$0xf] %vm977, %v962
      %1014 = vst.msk [vmem:[%s175 + $0x90] sm:$0xf] %vm977, %v963
      %1015 = vst.msk [vmem:[%s175 + $0x94] sm:$0xf] %vm977, %v964
      %1016 = vst.msk [vmem:[%s175 + $0x98] sm:$0xf] %vm977, %v965
      %1017 = vst.msk [vmem:[%s175 + $0x9c] sm:$0xf] %vm977, %v966
      %1018 = vst.msk [vmem:[%s175 + $0xa0] sm:$0xf] %vm977, %v967
      %1019 = vst.msk [vmem:[%s175 + $0xa4] sm:$0xf] %vm977, %v968
      %1020 = vst.msk [vmem:[%s175 + $0xa8] sm:$0xf] %vm977, %v969
      %1021 = vst.msk [vmem:[%s175 + $0xac] sm:$0xf] %vm977, %v970
      %1022 = vst.msk [vmem:[%s175 + $0xb0] sm:$0xf] %vm977, %v971
      %1023 = vst.msk [vmem:[%s175 + $0xb4] sm:$0xf] %vm977, %v972
      %1024 = vst.msk [vmem:[%s175 + $0xb8] sm:$0xf] %vm977, %v973
      %1025 = vst.msk [vmem:[%s175 + $0xbc] sm:$0xf] %vm977, %v974
      %1026 = vst.msk [vmem:[%s175 + $0xc0] sm:$0xf] %vm977, %v975
      %1027 = vst.msk [vmem:[%s175 + $0xc4] sm:$0xf] %vm977, %v976
      %s1028 = smul.u32 50, %s14
      %p1029 = scmp.lt.s32.totalorder %s1028, 99
      %s1030 = scalar_select %p1029, %s1028, 99
      %s1031 = smul.addr %s1030, 4
      %s1032 = scalar_lea.vmem %s3, %s1031
      // Predicated region
      $region33: #{value_net_forward.4} parent=31 // pred_check
        %p1033 = pneg %p100
      $region34: #{value_net_forward.4} parent=31 // pred_check_branch
        %1035 = sbr.rel (%p1033) target = $region36
      $region35: #{value_net_forward.4} parent=31 // pred_region
        %s1036 = smul.u32 50, %s14
      $region36: #{value_net_forward.4} parent=31 // pred_fallthru
        _
    $region32: #{value_net_forward.4} parent=5 // pred_fallthru
      _
    %p1037 = scmp.le.s32.totalorder 2, %s9
    // Predicated region
    $region37: #{value_net_forward.4} parent=5 // pred_check
      %p1038 = pneg %p1037
    $region38: #{value_net_forward.4} parent=5 // pred_check_branch
      %1040 = sbr.rel (%p1038) target = $region40
    $region39: #{value_net_forward.4} parent=5 // pred_region
      %s1041 = ssub.s32 %s9, 2
      // Predicated region
      $region41: #{value_net_forward.4} parent=39 // pred_check
        %p1042 = pneg %p106
      $region42: #{value_net_forward.4} parent=39 // pred_check_branch
        %1044 = sbr.rel (%p1042) target = $region44
      $region43: #{value_net_forward.4} parent=39 // pred_region
        %s1045 = smul.u32 50, %s15
        %p1046 = scmp.lt.s32.totalorder %s1045, 99
        %s1047 = scalar_select %p1046, %s1045, 99
        %s1048 = smul.addr %s1047, 4
        %s1049 = scalar_lea.vmem %s3, %s1048
      $region44: #{value_net_forward.4} parent=39 // pred_fallthru
        _
    $region40: #{value_net_forward.4} parent=5 // pred_fallthru
      _
  $region6: #{value_net_forward.4} parent=0 // loop_footer
    %s13 = sadd.s32 1, %s9
  $region7: #{value_net_forward.4} parent=0 // loop_footer_branch
    %8 = sbr.rel target = $region3
  $region8: #{value_net_forward.4} parent=0 // loop_exit
    _

// kernel: value_net_forward.5
$region0: #{value_net_forward.5}
  #allocation0 [shape = 'u32[]', space=smem, size = 0x4, offset = 0x4, fixed_abs, tag = 'smem constant byte address 0x4 - core index']
  #allocation1 [shape = 'u32[72,128]{1,0:T(1,128)}', space=vmem, size = 0x9000, scoped, tag = 'internal scratch']
  %s0 = inlined_call_operand.vmem [shape: bf16[162,512], index: 0, kind: input, shape index: {}]
  %s1 = inlined_call_operand.vmem [shape: bf16[512,64], index: 1, kind: input, shape index: {}]
  %s2 = inlined_call_operand.vmem [shape: f32[1,64], index: 2, kind: input, shape index: {}]
  %s3 = inlined_call_operand.vmem [shape: bf16[162,64], index: 3, kind: output, shape index: {}]
  %s4 = sld [smem:[#allocation0]]
  $region22: #{value_net_forward.5} parent=0
    _
  %s6 = ssub.s32 1, %s4
  %s7 = scalar_select 0, %s6, %s4
  // Predicated region
  $region2: #{value_net_forward.5} parent=0 // pred_check
    _
  $region3: #{value_net_forward.5} parent=0 // pred_check_branch
    %9 = sbr.rel (0) target = $region5
  $region4: #{value_net_forward.5} parent=0 // pred_region
    _
  $region5: #{value_net_forward.5} parent=0 // pred_fallthru
    _
  // Predicated region
  $region6: #{value_net_forward.5} parent=0 // pred_check
    _
  $region7: #{value_net_forward.5} parent=0 // pred_check_branch
    %11 = sbr.rel (0) target = $region9
  $region8: #{value_net_forward.5} parent=0 // pred_region
    _
  $region9: #{value_net_forward.5} parent=0 // pred_fallthru
    _
  // Predicated region
  $region10: #{value_net_forward.5} parent=0 // pred_check
    _
  $region11: #{value_net_forward.5} parent=0 // pred_check_branch
    %13 = sbr.rel (0) target = $region13
  $region12: #{value_net_forward.5} parent=0 // pred_region
    _
  $region13: #{value_net_forward.5} parent=0 // pred_fallthru
    _
  %v14 = vld [vmem:[%s0] sm:$0xff]
  %v15 = vld [vmem:[%s0 + $0x8] sm:$0xff]
  %v16 = vld [vmem:[%s0 + $0x10] sm:$0xff]
  %v17 = vld [vmem:[%s0 + $0x18] sm:$0xff]
  %v18 = vld [vmem:[%s0 + $0x20] sm:$0xff]
  %v19 = vld [vmem:[%s0 + $0x28] sm:$0xff]
  %v20 = vld [vmem:[%s0 + $0x30] sm:$0xff]
  %v21 = vld [vmem:[%s0 + $0x38] sm:$0xff]
  %v22 = vld [vmem:[%s0 + $0x40] sm:$0xff]
  %v23 = vld [vmem:[%s0 + $0x48] sm:$0xff]
  %v24 = vld [vmem:[%s0 + $0x50] sm:$0xff]
  %v25 = vld [vmem:[%s0 + $0x58] sm:$0xff]
  %v26 = vld [vmem:[%s0 + $0x60] sm:$0xff]
  %v27 = vld [vmem:[%s0 + $0x68] sm:$0xff]
  %v28 = vld [vmem:[%s0 + $0x70] sm:$0xff]
  %v29 = vld [vmem:[%s0 + $0x78] sm:$0xff]
  %v30 = vld [vmem:[%s0 + $0x80] sm:$0xff]
  %v31 = vld [vmem:[%s0 + $0x88] sm:$0xff]
  %v32 = vld [vmem:[%s0 + $0x90] sm:$0xff]
  %v33 = vld [vmem:[%s0 + $0x98] sm:$0xff]
  %v34 = vld [vmem:[%s0 + $0xa0] sm:$0xff]
  %v35 = vld [vmem:[%s0 + $0xa8] sm:$0xff]
  %v36 = vld [vmem:[%s0 + $0xb0] sm:$0xff]
  %v37 = vld [vmem:[%s0 + $0xb8] sm:$0xff]
  %v38 = vld [vmem:[%s0 + $0xc0] sm:$0xff]
  %v39 = vld [vmem:[%s0 + $0xc8] sm:$0xff]
  %v40 = vld [vmem:[%s0 + $0xd0] sm:$0xff]
  %v41 = vld [vmem:[%s0 + $0xd8] sm:$0xff]
  %v42 = vld [vmem:[%s0 + $0xe0] sm:$0xff]
  %v43 = vld [vmem:[%s0 + $0xe8] sm:$0xff]
  %v44 = vld [vmem:[%s0 + $0xf0] sm:$0xff]
  %v45 = vld [vmem:[%s0 + $0xf8] sm:$0xff]
  %v46 = vld [vmem:[%s0 + $0x100] sm:$0xff]
  %v47 = vld [vmem:[%s0 + $0x108] sm:$0xff]
  %v48 = vld [vmem:[%s0 + $0x110] sm:$0xff]
  %v49 = vld [vmem:[%s0 + $0x118] sm:$0xff]
  %v50 = vld [vmem:[%s0 + $0x120] sm:$0xff]
  %v51 = vld [vmem:[%s0 + $0x128] sm:$0xff]
  %v52 = vld [vmem:[%s0 + $0x130] sm:$0xff]
  %v53 = vld [vmem:[%s0 + $0x138] sm:$0xff]
  %v54 = vld [vmem:[%s0 + $0x140] sm:$0x11]
  %v55 = vld [vmem:[%s0 + $0x148] sm:$0x11]
  %v56 = vld [vmem:[%s1] sm:$0xf]
  %v57 = vld [vmem:[%s1 + $0x4] sm:$0xf]
  %v58 = vld [vmem:[%s1 + $0x8] sm:$0xf]
  %v59 = vld [vmem:[%s1 + $0xc] sm:$0xf]
  %v60 = vld [vmem:[%s1 + $0x10] sm:$0xf]
  %v61 = vld [vmem:[%s1 + $0x14] sm:$0xf]
  %v62 = vld [vmem:[%s1 + $0x18] sm:$0xf]
  %v63 = vld [vmem:[%s1 + $0x1c] sm:$0xf]
  %v64 = vld [vmem:[%s1 + $0x20] sm:$0xf]
  %v65 = vld [vmem:[%s1 + $0x24] sm:$0xf]
  %v66 = vld [vmem:[%s1 + $0x28] sm:$0xf]
  %v67 = vld [vmem:[%s1 + $0x2c] sm:$0xf]
  %v68 = vld [vmem:[%s1 + $0x30] sm:$0xf]
  %v69 = vld [vmem:[%s1 + $0x34] sm:$0xf]
  %v70 = vld [vmem:[%s1 + $0x38] sm:$0xf]
  %v71 = vld [vmem:[%s1 + $0x3c] sm:$0xf]
  %v72 = vld [vmem:[%s1 + $0x40] sm:$0xf]
  %v73 = vld [vmem:[%s1 + $0x44] sm:$0xf]
  %v74 = vld [vmem:[%s1 + $0x48] sm:$0xf]
  %v75 = vld [vmem:[%s1 + $0x4c] sm:$0xf]
  %v76 = vld [vmem:[%s1 + $0x50] sm:$0xf]
  %v77 = vld [vmem:[%s1 + $0x54] sm:$0xf]
  %v78 = vld [vmem:[%s1 + $0x58] sm:$0xf]
  %v79 = vld [vmem:[%s1 + $0x5c] sm:$0xf]
  %v80 = vld [vmem:[%s1 + $0x60] sm:$0xf]
  %v81 = vld [vmem:[%s1 + $0x64] sm:$0xf]
  %v82 = vld [vmem:[%s1 + $0x68] sm:$0xf]
  %v83 = vld [vmem:[%s1 + $0x6c] sm:$0xf]
  %v84 = vld [vmem:[%s1 + $0x70] sm:$0xf]
  %v85 = vld [vmem:[%s1 + $0x74] sm:$0xf]
  %v86 = vld [vmem:[%s1 + $0x78] sm:$0xf]
  %v87 = vld [vmem:[%s1 + $0x7c] sm:$0xf]
  %v88 = vld [vmem:[%s1 + $0x80] sm:$0xf]
  %v89 = vld [vmem:[%s1 + $0x84] sm:$0xf]
  %v90 = vld [vmem:[%s1 + $0x88] sm:$0xf]
  %v91 = vld [vmem:[%s1 + $0x8c] sm:$0xf]
  %v92 = vld [vmem:[%s1 + $0x90] sm:$0xf]
  %v93 = vld [vmem:[%s1 + $0x94] sm:$0xf]
  %v94 = vld [vmem:[%s1 + $0x98] sm:$0xf]
  %v95 = vld [vmem:[%s1 + $0x9c] sm:$0xf]
  %v96 = vld [vmem:[%s1 + $0xa0] sm:$0xf]
  %v97 = vld [vmem:[%s1 + $0xa4] sm:$0xf]
  %v98 = vld [vmem:[%s1 + $0xa8] sm:$0xf]
  %v99 = vld [vmem:[%s1 + $0xac] sm:$0xf]
  %v100 = vld [vmem:[%s1 + $0xb0] sm:$0xf]
  %v101 = vld [vmem:[%s1 + $0xb4] sm:$0xf]
  %v102 = vld [vmem:[%s1 + $0xb8] sm:$0xf]
  %v103 = vld [vmem:[%s1 + $0xbc] sm:$0xf]
  %v104 = vld [vmem:[%s1 + $0xc0] sm:$0xf]
  %v105 = vld [vmem:[%s1 + $0xc4] sm:$0xf]
  %v106 = vld [vmem:[%s1 + $0xc8] sm:$0xf]
  %v107 = vld [vmem:[%s1 + $0xcc] sm:$0xf]
  %v108 = vld [vmem:[%s1 + $0xd0] sm:$0xf]
  %v109 = vld [vmem:[%s1 + $0xd4] sm:$0xf]
  %v110 = vld [vmem:[%s1 + $0xd8] sm:$0xf]
  %v111 = vld [vmem:[%s1 + $0xdc] sm:$0xf]
  %v112 = vld [vmem:[%s1 + $0xe0] sm:$0xf]
  %v113 = vld [vmem:[%s1 + $0xe4] sm:$0xf]
  %v114 = vld [vmem:[%s1 + $0xe8] sm:$0xf]
  %v115 = vld [vmem:[%s1 + $0xec] sm:$0xf]
  %v116 = vld [vmem:[%s1 + $0xf0] sm:$0xf]
  %v117 = vld [vmem:[%s1 + $0xf4] sm:$0xf]
  %v118 = vld [vmem:[%s1 + $0xf8] sm:$0xf]
  %v119 = vld [vmem:[%s1 + $0xfc] sm:$0xf]
  %v120 = vld [vmem:[%s2] sm:$0x1]
  %v122 = vperm.slane %v120, 0
  %v166 = vunpack.c.l.b16 %v14
  %v167 = vunpack.c.h.b16 %v14
  %v168 = vunpack.c.l.b16 %v15
  %v169 = vunpack.c.h.b16 %v15
  %v170 = vunpack.c.l.b16 %v16
  %v171 = vunpack.c.h.b16 %v16
  %v172 = vunpack.c.l.b16 %v17
  %v173 = vunpack.c.h.b16 %v17
  %v174 = vunpack.c.l.b16 %v18
  %v175 = vunpack.c.h.b16 %v18
  %v176 = vunpack.c.l.b16 %v19
  %v177 = vunpack.c.h.b16 %v19
  %v178 = vunpack.c.l.b16 %v20
  %v179 = vunpack.c.h.b16 %v20
  %v180 = vunpack.c.l.b16 %v21
  %v181 = vunpack.c.h.b16 %v21
  %v182 = vunpack.c.l.b16 %v22
  %v183 = vunpack.c.h.b16 %v22
  %v184 = vunpack.c.l.b16 %v23
  %v185 = vunpack.c.h.b16 %v23
  %v186 = vunpack.c.l.b16 %v24
  %v187 = vunpack.c.h.b16 %v24
  %v188 = vunpack.c.l.b16 %v25
  %v189 = vunpack.c.h.b16 %v25
  %v190 = vunpack.c.l.b16 %v26
  %v191 = vunpack.c.h.b16 %v26
  %v192 = vunpack.c.l.b16 %v27
  %v193 = vunpack.c.h.b16 %v27
  %v194 = vunpack.c.l.b16 %v28
  %v195 = vunpack.c.h.b16 %v28
  %v196 = vunpack.c.l.b16 %v29
  %v197 = vunpack.c.h.b16 %v29
  %v198 = vunpack.c.l.b16 %v30
  %v199 = vunpack.c.h.b16 %v30
  %v200 = vunpack.c.l.b16 %v31
  %v201 = vunpack.c.h.b16 %v31
  %v202 = vunpack.c.l.b16 %v32
  %v203 = vunpack.c.h.b16 %v32
  %v204 = vunpack.c.l.b16 %v33
  %v205 = vunpack.c.h.b16 %v33
  %v206 = vunpack.c.l.b16 %v34
  %v207 = vunpack.c.h.b16 %v34
  %v208 = vunpack.c.l.b16 %v35
  %v209 = vunpack.c.h.b16 %v35
  %v210 = vunpack.c.l.b16 %v36
  %v211 = vunpack.c.h.b16 %v36
  %v212 = vunpack.c.l.b16 %v37
  %v213 = vunpack.c.h.b16 %v37
  %v214 = vunpack.c.l.b16 %v38
  %v215 = vunpack.c.h.b16 %v38
  %v216 = vunpack.c.l.b16 %v39
  %v217 = vunpack.c.h.b16 %v39
  %v218 = vunpack.c.l.b16 %v40
  %v219 = vunpack.c.h.b16 %v40
  %v220 = vunpack.c.l.b16 %v41
  %v221 = vunpack.c.h.b16 %v41
  %v222 = vunpack.c.l.b16 %v42
  %v223 = vunpack.c.h.b16 %v42
  %v224 = vunpack.c.l.b16 %v43
  %v225 = vunpack.c.h.b16 %v43
  %v226 = vunpack.c.l.b16 %v44
  %v227 = vunpack.c.h.b16 %v44
  %v228 = vunpack.c.l.b16 %v45
  %v229 = vunpack.c.h.b16 %v45
  %v230 = vunpack.c.l.b16 %v46
  %v231 = vunpack.c.h.b16 %v46
  %v232 = vunpack.c.l.b16 %v47
  %v233 = vunpack.c.h.b16 %v47
  %v234 = vunpack.c.l.b16 %v48
  %v235 = vunpack.c.h.b16 %v48
  %v236 = vunpack.c.l.b16 %v49
  %v237 = vunpack.c.h.b16 %v49
  %v238 = vunpack.c.l.b16 %v50
  %v239 = vunpack.c.h.b16 %v50
  %v240 = vunpack.c.l.b16 %v51
  %v241 = vunpack.c.h.b16 %v51
  %v242 = vunpack.c.l.b16 %v52
  %v243 = vunpack.c.h.b16 %v52
  %v244 = vunpack.c.l.b16 %v53
  %v245 = vunpack.c.h.b16 %v53
  %v246 = vunpack.c.l.b16 %v54
  %v247 = vunpack.c.h.b16 %v54
  %v248 = vunpack.c.l.b16 %v55
  %v249 = vunpack.c.h.b16 %v55
  %v250 = vpack.c.b16 %v170, %v166
  %v251 = vpack.c.b16 %v171, %v167
  %v252 = vpack.c.b16 %v172, %v168
  %v253 = vpack.c.b16 %v173, %v169
  %v254 = vpack.c.b16 %v178, %v174
  %v255 = vpack.c.b16 %v179, %v175
  %v256 = vpack.c.b16 %v180, %v176
  %v257 = vpack.c.b16 %v181, %v177
  %v258 = vpack.c.b16 %v186, %v182
  %v259 = vpack.c.b16 %v187, %v183
  %v260 = vpack.c.b16 %v188, %v184
  %v261 = vpack.c.b16 %v189, %v185
  %v262 = vpack.c.b16 %v194, %v190
  %v263 = vpack.c.b16 %v195, %v191
  %v264 = vpack.c.b16 %v196, %v192
  %v265 = vpack.c.b16 %v197, %v193
  %v266 = vpack.c.b16 %v202, %v198
  %v267 = vpack.c.b16 %v203, %v199
  %v268 = vpack.c.b16 %v204, %v200
  %v269 = vpack.c.b16 %v205, %v201
  %v270 = vpack.c.b16 %v210, %v206
  %v271 = vpack.c.b16 %v211, %v207
  %v272 = vpack.c.b16 %v212, %v208
  %v273 = vpack.c.b16 %v213, %v209
  %v274 = vpack.c.b16 %v218, %v214
  %v275 = vpack.c.b16 %v219, %v215
  %v276 = vpack.c.b16 %v220, %v216
  %v277 = vpack.c.b16 %v221, %v217
  %v278 = vpack.c.b16 %v226, %v222
  %v279 = vpack.c.b16 %v227, %v223
  %v280 = vpack.c.b16 %v228, %v224
  %v281 = vpack.c.b16 %v229, %v225
  %v282 = vpack.c.b16 %v234, %v230
  %v283 = vpack.c.b16 %v235, %v231
  %v284 = vpack.c.b16 %v236, %v232
  %v285 = vpack.c.b16 %v237, %v233
  %v286 = vpack.c.b16 %v242, %v238
  %v287 = vpack.c.b16 %v243, %v239
  %v288 = vpack.c.b16 %v244, %v240
  %v289 = vpack.c.b16 %v245, %v241
  %v290 = vpack.c.b16 %v246, %v246
  %v291 = vpack.c.b16 %v247, %v247
  %v292 = vpack.c.b16 %v248, %v248
  %v293 = vpack.c.b16 %v249, %v249
  %v402 = vunpack.c.l.b16 %v56
  %v403 = vunpack.c.l.b16 %v57
  %v404 = vunpack.c.l.b16 %v58
  %v405 = vunpack.c.l.b16 %v59
  %v406 = vunpack.c.l.b16 %v60
  %v407 = vunpack.c.l.b16 %v61
  %v408 = vunpack.c.l.b16 %v62
  %v409 = vunpack.c.l.b16 %v63
  %v410 = vunpack.c.l.b16 %v64
  %v411 = vunpack.c.l.b16 %v65
  %v412 = vunpack.c.l.b16 %v66
  %v413 = vunpack.c.l.b16 %v67
  %v414 = vunpack.c.l.b16 %v68
  %v415 = vunpack.c.l.b16 %v69
  %v416 = vunpack.c.l.b16 %v70
  %v417 = vunpack.c.l.b16 %v71
  %v418 = vunpack.c.l.b16 %v72
  %v419 = vunpack.c.l.b16 %v73
  %v420 = vunpack.c.l.b16 %v74
  %v421 = vunpack.c.l.b16 %v75
  %v422 = vunpack.c.l.b16 %v76
  %v423 = vunpack.c.l.b16 %v77
  %v424 = vunpack.c.l.b16 %v78
  %v425 = vunpack.c.l.b16 %v79
  %v426 = vunpack.c.l.b16 %v80
  %v427 = vunpack.c.l.b16 %v81
  %v428 = vunpack.c.l.b16 %v82
  %v429 = vunpack.c.l.b16 %v83
  %v430 = vunpack.c.l.b16 %v84
  %v431 = vunpack.c.l.b16 %v85
  %v432 = vunpack.c.l.b16 %v86
  %v433 = vunpack.c.l.b16 %v87
  %v434 = vunpack.c.l.b16 %v88
  %v435 = vunpack.c.l.b16 %v89
  %v436 = vunpack.c.l.b16 %v90
  %v437 = vunpack.c.l.b16 %v91
  %v438 = vunpack.c.l.b16 %v92
  %v439 = vunpack.c.l.b16 %v93
  %v440 = vunpack.c.l.b16 %v94
  %v441 = vunpack.c.l.b16 %v95
  %v442 = vunpack.c.l.b16 %v96
  %v443 = vunpack.c.l.b16 %v97
  %v444 = vunpack.c.l.b16 %v98
  %v445 = vunpack.c.l.b16 %v99
  %v446 = vunpack.c.l.b16 %v100
  %v447 = vunpack.c.l.b16 %v101
  %v448 = vunpack.c.l.b16 %v102
  %v449 = vunpack.c.l.b16 %v103
  %v450 = vunpack.c.l.b16 %v104
  %v451 = vunpack.c.l.b16 %v105
  %v452 = vunpack.c.l.b16 %v106
  %v453 = vunpack.c.l.b16 %v107
  %v454 = vunpack.c.l.b16 %v108
  %v455 = vunpack.c.l.b16 %v109
  %v456 = vunpack.c.l.b16 %v110
  %v457 = vunpack.c.l.b16 %v111
  %v458 = vunpack.c.l.b16 %v112
  %v459 = vunpack.c.l.b16 %v113
  %v460 = vunpack.c.l.b16 %v114
  %v461 = vunpack.c.l.b16 %v115
  %v462 = vunpack.c.l.b16 %v116
  %v463 = vunpack.c.l.b16 %v117
  %v464 = vunpack.c.l.b16 %v118
  %v465 = vunpack.c.l.b16 %v119
  %v466 = vpack.c.b16 %v403, %v402
  %v467 = vpack.c.b16 %v405, %v404
  %v468 = vpack.c.b16 %v407, %v406
  %v469 = vpack.c.b16 %v409, %v408
  %v470 = vpack.c.b16 %v411, %v410
  %v471 = vpack.c.b16 %v413, %v412
  %v472 = vpack.c.b16 %v415, %v414
  %v473 = vpack.c.b16 %v417, %v416
  %v474 = vpack.c.b16 %v419, %v418
  %v475 = vpack.c.b16 %v421, %v420
  %v476 = vpack.c.b16 %v423, %v422
  %v477 = vpack.c.b16 %v425, %v424
  %v478 = vpack.c.b16 %v427, %v426
  %v479 = vpack.c.b16 %v429, %v428
  %v480 = vpack.c.b16 %v431, %v430
  %v481 = vpack.c.b16 %v433, %v432
  %v482 = vpack.c.b16 %v435, %v434
  %v483 = vpack.c.b16 %v437, %v436
  %v484 = vpack.c.b16 %v439, %v438
  %v485 = vpack.c.b16 %v441, %v440
  %v486 = vpack.c.b16 %v443, %v442
  %v487 = vpack.c.b16 %v445, %v444
  %v488 = vpack.c.b16 %v447, %v446
  %v489 = vpack.c.b16 %v449, %v448
  %v490 = vpack.c.b16 %v451, %v450
  %v491 = vpack.c.b16 %v453, %v452
  %v492 = vpack.c.b16 %v455, %v454
  %v493 = vpack.c.b16 %v457, %v456
  %v494 = vpack.c.b16 %v459, %v458
  %v495 = vpack.c.b16 %v461, %v460
  %v496 = vpack.c.b16 %v463, %v462
  %v497 = vpack.c.b16 %v465, %v464
  %530 = vmatpush.bf16.msra.mxu0 %v473
  %531 = vmatpush.bf16.msra.mxu0 %v472
  %532 = vmatpush.bf16.msra.mxu0 %v471
  %533 = vmatpush.bf16.msra.mxu0 %v470
  %534 = vmatpush.bf16.msra.mxu0 %v469
  %535 = vmatpush.bf16.msra.mxu0 %v468
  %536 = vmatpush.bf16.msra.mxu0 %v467
  %537 = vmatpush.bf16.msra.mxu0 %v466
  %538 = vmatmul.bf16.gmra.mxu0 %v250
  %v539 = vpop.f32.mrf.mxu0
  %v540 = vadd.f32 %v122, %v539
  %v541 = vpop.f32.mrf.mxu0
  %v542 = vadd.f32 %v122, %v541
  %543 = vmatmul.bf16.gmra.mxu0 %v254
  %v544 = vpop.f32.mrf.mxu0
  %v545 = vadd.f32 %v122, %v544
  %v546 = vpop.f32.mrf.mxu0
  %v547 = vadd.f32 %v122, %v546
  %548 = vmatmul.bf16.gmra.mxu0 %v258
  %v549 = vpop.f32.mrf.mxu0
  %v550 = vadd.f32 %v122, %v549
  %v551 = vpop.f32.mrf.mxu0
  %v552 = vadd.f32 %v122, %v551
  %553 = vmatmul.bf16.gmra.mxu0 %v262
  %v554 = vpop.f32.mrf.mxu0
  %v555 = vadd.f32 %v122, %v554
  %v556 = vpop.f32.mrf.mxu0
  %v557 = vadd.f32 %v122, %v556
  %558 = vmatmul.bf16.gmra.mxu0 %v266
  %v559 = vpop.f32.mrf.mxu0
  %v560 = vadd.f32 %v122, %v559
  %v561 = vpop.f32.mrf.mxu0
  %v562 = vadd.f32 %v122, %v561
  %563 = vmatmul.bf16.gmra.mxu0 %v270
  %v564 = vpop.f32.mrf.mxu0
  %v565 = vadd.f32 %v122, %v564
  %v566 = vpop.f32.mrf.mxu0
  %v567 = vadd.f32 %v122, %v566
  %568 = vmatmul.bf16.gmra.mxu0 %v274
  %v569 = vpop.f32.mrf.mxu0
  %v570 = vadd.f32 %v122, %v569
  %v571 = vpop.f32.mrf.mxu0
  %v572 = vadd.f32 %v122, %v571
  %573 = vmatmul.bf16.gmra.mxu0 %v278
  %v574 = vpop.f32.mrf.mxu0
  %v575 = vadd.f32 %v122, %v574
  %v576 = vpop.f32.mrf.mxu0
  %v577 = vadd.f32 %v122, %v576
  %578 = vmatmul.bf16.gmra.mxu0 %v282
  %v579 = vpop.f32.mrf.mxu0
  %v580 = vadd.f32 %v122, %v579
  %v581 = vpop.f32.mrf.mxu0
  %v582 = vadd.f32 %v122, %v581
  %583 = vmatmul.bf16.gmra.mxu0 %v286
  %v584 = vpop.f32.mrf.mxu0
  %v585 = vadd.f32 %v122, %v584
  %v586 = vpop.f32.mrf.mxu0
  %v587 = vadd.f32 %v122, %v586
  %588 = vmatmul.bf16.gmra.mxu0 %v290
  %v589 = vpop.f32.mrf.mxu0
  %v590 = vadd.f32 %v122, %v589
  %v591 = vpop.f32.mrf.mxu0
  %592 = vdwg.mxu0
  %593 = vmatpush.bf16.msra.mxu0 %v481
  %594 = vmatpush.bf16.msra.mxu0 %v480
  %595 = vmatpush.bf16.msra.mxu0 %v479
  %596 = vmatpush.bf16.msra.mxu0 %v478
  %597 = vmatpush.bf16.msra.mxu0 %v477
  %598 = vmatpush.bf16.msra.mxu0 %v476
  %599 = vmatpush.bf16.msra.mxu0 %v475
  %600 = vmatpush.bf16.msra.mxu0 %v474
  %601 = vmatmul.bf16.gmra.mxu0 %v251
  %v602 = vpop.f32.mrf.mxu0
  %v603 = vadd.f32 %v540, %v602
  %v604 = vpop.f32.mrf.mxu0
  %v605 = vadd.f32 %v542, %v604
  %606 = vmatmul.bf16.gmra.mxu0 %v255
  %v607 = vpop.f32.mrf.mxu0
  %v608 = vadd.f32 %v545, %v607
  %v609 = vpop.f32.mrf.mxu0
  %v610 = vadd.f32 %v547, %v609
  %611 = vmatmul.bf16.gmra.mxu0 %v259
  %v612 = vpop.f32.mrf.mxu0
  %v613 = vadd.f32 %v550, %v612
  %v614 = vpop.f32.mrf.mxu0
  %v615 = vadd.f32 %v552, %v614
  %616 = vmatmul.bf16.gmra.mxu0 %v263
  %v617 = vpop.f32.mrf.mxu0
  %v618 = vadd.f32 %v555, %v617
  %v619 = vpop.f32.mrf.mxu0
  %v620 = vadd.f32 %v557, %v619
  %621 = vmatmul.bf16.gmra.mxu0 %v267
  %v622 = vpop.f32.mrf.mxu0
  %v623 = vadd.f32 %v560, %v622
  %v624 = vpop.f32.mrf.mxu0
  %v625 = vadd.f32 %v562, %v624
  %626 = vmatmul.bf16.gmra.mxu0 %v271
  %v627 = vpop.f32.mrf.mxu0
  %v628 = vadd.f32 %v565, %v627
  %v629 = vpop.f32.mrf.mxu0
  %v630 = vadd.f32 %v567, %v629
  %631 = vmatmul.bf16.gmra.mxu0 %v275
  %v632 = vpop.f32.mrf.mxu0
  %v633 = vadd.f32 %v570, %v632
  %v634 = vpop.f32.mrf.mxu0
  %v635 = vadd.f32 %v572, %v634
  %636 = vmatmul.bf16.gmra.mxu0 %v279
  %v637 = vpop.f32.mrf.mxu0
  %v638 = vadd.f32 %v575, %v637
  %v639 = vpop.f32.mrf.mxu0
  %v640 = vadd.f32 %v577, %v639
  %641 = vmatmul.bf16.gmra.mxu0 %v283
  %v642 = vpop.f32.mrf.mxu0
  %v643 = vadd.f32 %v580, %v642
  %v644 = vpop.f32.mrf.mxu0
  %v645 = vadd.f32 %v582, %v644
  %646 = vmatmul.bf16.gmra.mxu0 %v287
  %v647 = vpop.f32.mrf.mxu0
  %v648 = vadd.f32 %v585, %v647
  %v649 = vpop.f32.mrf.mxu0
  %v650 = vadd.f32 %v587, %v649
  %651 = vmatmul.bf16.gmra.mxu0 %v291
  %v652 = vpop.f32.mrf.mxu0
  %v653 = vadd.f32 %v590, %v652
  %v654 = vpop.f32.mrf.mxu0
  %655 = vdwg.mxu0
  %656 = vmatpush.bf16.msra.mxu0 %v489
  %657 = vmatpush.bf16.msra.mxu0 %v488
  %658 = vmatpush.bf16.msra.mxu0 %v487
  %659 = vmatpush.bf16.msra.mxu0 %v486
  %660 = vmatpush.bf16.msra.mxu0 %v485
  %661 = vmatpush.bf16.msra.mxu0 %v484
  %662 = vmatpush.bf16.msra.mxu0 %v483
  %663 = vmatpush.bf16.msra.mxu0 %v482
  %664 = vmatmul.bf16.gmra.mxu0 %v252
  %v665 = vpop.f32.mrf.mxu0
  %v666 = vadd.f32 %v603, %v665
  %v667 = vpop.f32.mrf.mxu0
  %v668 = vadd.f32 %v605, %v667
  %669 = vmatmul.bf16.gmra.mxu0 %v256
  %v670 = vpop.f32.mrf.mxu0
  %v671 = vadd.f32 %v608, %v670
  %v672 = vpop.f32.mrf.mxu0
  %v673 = vadd.f32 %v610, %v672
  %674 = vmatmul.bf16.gmra.mxu0 %v260
  %v675 = vpop.f32.mrf.mxu0
  %v676 = vadd.f32 %v613, %v675
  %v677 = vpop.f32.mrf.mxu0
  %v678 = vadd.f32 %v615, %v677
  %679 = vmatmul.bf16.gmra.mxu0 %v264
  %v680 = vpop.f32.mrf.mxu0
  %v681 = vadd.f32 %v618, %v680
  %v682 = vpop.f32.mrf.mxu0
  %v683 = vadd.f32 %v620, %v682
  %684 = vmatmul.bf16.gmra.mxu0 %v268
  %v685 = vpop.f32.mrf.mxu0
  %v686 = vadd.f32 %v623, %v685
  %v687 = vpop.f32.mrf.mxu0
  %v688 = vadd.f32 %v625, %v687
  %689 = vmatmul.bf16.gmra.mxu0 %v272
  %v690 = vpop.f32.mrf.mxu0
  %v691 = vadd.f32 %v628, %v690
  %v692 = vpop.f32.mrf.mxu0
  %v693 = vadd.f32 %v630, %v692
  %694 = vmatmul.bf16.gmra.mxu0 %v276
  %v695 = vpop.f32.mrf.mxu0
  %v696 = vadd.f32 %v633, %v695
  %v697 = vpop.f32.mrf.mxu0
  %v698 = vadd.f32 %v635, %v697
  %699 = vmatmul.bf16.gmra.mxu0 %v280
  %v700 = vpop.f32.mrf.mxu0
  %v701 = vadd.f32 %v638, %v700
  %v702 = vpop.f32.mrf.mxu0
  %v703 = vadd.f32 %v640, %v702
  %704 = vmatmul.bf16.gmra.mxu0 %v284
  %v705 = vpop.f32.mrf.mxu0
  %v706 = vadd.f32 %v643, %v705
  %v707 = vpop.f32.mrf.mxu0
  %v708 = vadd.f32 %v645, %v707
  %709 = vmatmul.bf16.gmra.mxu0 %v288
  %v710 = vpop.f32.mrf.mxu0
  %v711 = vadd.f32 %v648, %v710
  %v712 = vpop.f32.mrf.mxu0
  %v713 = vadd.f32 %v650, %v712
  %714 = vmatmul.bf16.gmra.mxu0 %v292
  %v715 = vpop.f32.mrf.mxu0
  %v716 = vadd.f32 %v653, %v715
  %v717 = vpop.f32.mrf.mxu0
  %718 = vdwg.mxu0
  %719 = vmatpush.bf16.msra.mxu0 %v497
  %720 = vmatpush.bf16.msra.mxu0 %v496
  %721 = vmatpush.bf16.msra.mxu0 %v495
  %722 = vmatpush.bf16.msra.mxu0 %v494
  %723 = vmatpush.bf16.msra.mxu0 %v493
  %724 = vmatpush.bf16.msra.mxu0 %v492
  %725 = vmatpush.bf16.msra.mxu0 %v491
  %726 = vmatpush.bf16.msra.mxu0 %v490
  %727 = vmatmul.bf16.gmra.mxu0 %v253
  %v728 = vpop.f32.mrf.mxu0
  %v729 = vadd.f32 %v666, %v728
  %v730 = vpop.f32.mrf.mxu0
  %v731 = vadd.f32 %v668, %v730
  %732 = vmatmul.bf16.gmra.mxu0 %v257
  %v733 = vpop.f32.mrf.mxu0
  %v734 = vadd.f32 %v671, %v733
  %v735 = vpop.f32.mrf.mxu0
  %v736 = vadd.f32 %v673, %v735
  %737 = vmatmul.bf16.gmra.mxu0 %v261
  %v738 = vpop.f32.mrf.mxu0
  %v739 = vadd.f32 %v676, %v738
  %v740 = vpop.f32.mrf.mxu0
  %v741 = vadd.f32 %v678, %v740
  %742 = vmatmul.bf16.gmra.mxu0 %v265
  %v743 = vpop.f32.mrf.mxu0
  %v744 = vadd.f32 %v681, %v743
  %v745 = vpop.f32.mrf.mxu0
  %v746 = vadd.f32 %v683, %v745
  %747 = vmatmul.bf16.gmra.mxu0 %v269
  %v748 = vpop.f32.mrf.mxu0
  %v749 = vadd.f32 %v686, %v748
  %v750 = vpop.f32.mrf.mxu0
  %v751 = vadd.f32 %v688, %v750
  %752 = vmatmul.bf16.gmra.mxu0 %v273
  %v753 = vpop.f32.mrf.mxu0
  %v754 = vadd.f32 %v691, %v753
  %v755 = vpop.f32.mrf.mxu0
  %v756 = vadd.f32 %v693, %v755
  %757 = vmatmul.bf16.gmra.mxu0 %v277
  %v758 = vpop.f32.mrf.mxu0
  %v759 = vadd.f32 %v696, %v758
  %v760 = vpop.f32.mrf.mxu0
  %v761 = vadd.f32 %v698, %v760
  %762 = vmatmul.bf16.gmra.mxu0 %v281
  %v763 = vpop.f32.mrf.mxu0
  %v764 = vadd.f32 %v701, %v763
  %v765 = vpop.f32.mrf.mxu0
  %v766 = vadd.f32 %v703, %v765
  %767 = vmatmul.bf16.gmra.mxu0 %v285
  %v768 = vpop.f32.mrf.mxu0
  %v769 = vadd.f32 %v706, %v768
  %v770 = vpop.f32.mrf.mxu0
  %v771 = vadd.f32 %v708, %v770
  %772 = vmatmul.bf16.gmra.mxu0 %v289
  %v773 = vpop.f32.mrf.mxu0
  %v774 = vadd.f32 %v711, %v773
  %v775 = vpop.f32.mrf.mxu0
  %v776 = vadd.f32 %v713, %v775
  %777 = vmatmul.bf16.gmra.mxu0 %v293
  %v778 = vpop.f32.mrf.mxu0
  %v779 = vadd.f32 %v716, %v778
  %v780 = vpop.f32.mrf.mxu0
  %781 = vdwg.mxu0
  %v782 = vmax.f32 %v729, 0.0
  %v783 = vmax.f32 %v731, 0.0
  %v784 = vmax.f32 %v734, 0.0
  %v785 = vmax.f32 %v736, 0.0
  %v786 = vmax.f32 %v739, 0.0
  %v787 = vmax.f32 %v741, 0.0
  %v788 = vmax.f32 %v744, 0.0
  %v789 = vmax.f32 %v746, 0.0
  %v790 = vmax.f32 %v749, 0.0
  %v791 = vmax.f32 %v751, 0.0
  %v792 = vmax.f32 %v754, 0.0
  %v793 = vmax.f32 %v756, 0.0
  %v794 = vmax.f32 %v759, 0.0
  %v795 = vmax.f32 %v761, 0.0
  %v796 = vmax.f32 %v764, 0.0
  %v797 = vmax.f32 %v766, 0.0
  %v798 = vmax.f32 %v769, 0.0
  %v799 = vmax.f32 %v771, 0.0
  %v800 = vmax.f32 %v774, 0.0
  %v801 = vmax.f32 %v776, 0.0
  %v802 = vmax.f32 %v779, 0.0
  %v803 = vpack.c.bf16 %v782, %v782
  %v804 = vpack.c.bf16 %v783, %v783
  %v805 = vpack.c.bf16 %v784, %v784
  %v806 = vpack.c.bf16 %v785, %v785
  %v807 = vpack.c.bf16 %v786, %v786
  %v808 = vpack.c.bf16 %v787, %v787
  %v809 = vpack.c.bf16 %v788, %v788
  %v810 = vpack.c.bf16 %v789, %v789
  %v811 = vpack.c.bf16 %v790, %v790
  %v812 = vpack.c.bf16 %v791, %v791
  %v813 = vpack.c.bf16 %v792, %v792
  %v814 = vpack.c.bf16 %v793, %v793
  %v815 = vpack.c.bf16 %v794, %v794
  %v816 = vpack.c.bf16 %v795, %v795
  %v817 = vpack.c.bf16 %v796, %v796
  %v818 = vpack.c.bf16 %v797, %v797
  %v819 = vpack.c.bf16 %v798, %v798
  %v820 = vpack.c.bf16 %v799, %v799
  %v821 = vpack.c.bf16 %v800, %v800
  %v822 = vpack.c.bf16 %v801, %v801
  %v823 = vpack.c.bf16 %v802, %v802
  %vm824 = vcmask 519168
  %825 = vst.msk [vmem:[%s3] sm:$0xf] %vm824, %v803
  %826 = vst.msk [vmem:[%s3 + $0x4] sm:$0xf] %vm824, %v804
  %827 = vst.msk [vmem:[%s3 + $0x8] sm:$0xf] %vm824, %v805
  %828 = vst.msk [vmem:[%s3 + $0xc] sm:$0xf] %vm824, %v806
  %829 = vst.msk [vmem:[%s3 + $0x10] sm:$0xf] %vm824, %v807
  %830 = vst.msk [vmem:[%s3 + $0x14] sm:$0xf] %vm824, %v808
  %831 = vst.msk [vmem:[%s3 + $0x18] sm:$0xf] %vm824, %v809
  %832 = vst.msk [vmem:[%s3 + $0x1c] sm:$0xf] %vm824, %v810
  %833 = vst.msk [vmem:[%s3 + $0x20] sm:$0xf] %vm824, %v811
  %834 = vst.msk [vmem:[%s3 + $0x24] sm:$0xf] %vm824, %v812
  %835 = vst.msk [vmem:[%s3 + $0x28] sm:$0xf] %vm824, %v813
  %836 = vst.msk [vmem:[%s3 + $0x2c] sm:$0xf] %vm824, %v814
  %837 = vst.msk [vmem:[%s3 + $0x30] sm:$0xf] %vm824, %v815
  %838 = vst.msk [vmem:[%s3 + $0x34] sm:$0xf] %vm824, %v816
  %839 = vst.msk [vmem:[%s3 + $0x38] sm:$0xf] %vm824, %v817
  %840 = vst.msk [vmem:[%s3 + $0x3c] sm:$0xf] %vm824, %v818
  %841 = vst.msk [vmem:[%s3 + $0x40] sm:$0xf] %vm824, %v819
  %842 = vst.msk [vmem:[%s3 + $0x44] sm:$0xf] %vm824, %v820
  %843 = vst.msk [vmem:[%s3 + $0x48] sm:$0xf] %vm824, %v821
  %844 = vst.msk [vmem:[%s3 + $0x4c] sm:$0xf] %vm824, %v822
  %vm845 = vcmask 516096
  %846 = vst.msk [vmem:[%s3 + $0x50] sm:$0x1] %vm845, %v823
  // Predicated region
  $region14: #{value_net_forward.5} parent=0 // pred_check
    _
  $region15: #{value_net_forward.5} parent=0 // pred_check_branch
    %848 = sbr.rel (0) target = $region17
  $region16: #{value_net_forward.5} parent=0 // pred_region
    _
  $region17: #{value_net_forward.5} parent=0 // pred_fallthru
    _
  // Predicated region
  $region18: #{value_net_forward.5} parent=0 // pred_check
    _
  $region19: #{value_net_forward.5} parent=0 // pred_check_branch
    %850 = sbr.rel (0) target = $region21
  $region20: #{value_net_forward.5} parent=0 // pred_region
    _
  $region21: #{value_net_forward.5} parent=0 // pred_fallthru
    _

// kernel: value_net_forward.6
$region0: #{value_net_forward.6}
  #allocation0 [shape = 'u32[]', space=smem, size = 0x4, offset = 0x4, fixed_abs, tag = 'smem constant byte address 0x4 - core index']
  #allocation1 [shape = 'u32[72,128]{1,0:T(1,128)}', space=vmem, size = 0x9000, scoped, tag = 'internal scratch']
  %s0 = inlined_call_operand.vmem [shape: bf16[98,576], index: 0, kind: input, shape index: {}]
  %s1 = inlined_call_operand.vmem [shape: bf16[576,64], index: 1, kind: input, shape index: {}]
  %s2 = inlined_call_operand.vmem [shape: f32[1,64], index: 2, kind: input, shape index: {}]
  %s3 = inlined_call_operand.vmem [shape: bf16[98,64], index: 3, kind: output, shape index: {}]
  %s4 = sld [smem:[#allocation0]]
  $region22: #{value_net_forward.6} parent=0
    _
  %s6 = ssub.s32 1, %s4
  %s7 = scalar_select 0, %s6, %s4
  // Predicated region
  $region2: #{value_net_forward.6} parent=0 // pred_check
    _
  $region3: #{value_net_forward.6} parent=0 // pred_check_branch
    %9 = sbr.rel (0) target = $region5
  $region4: #{value_net_forward.6} parent=0 // pred_region
    _
  $region5: #{value_net_forward.6} parent=0 // pred_fallthru
    _
  // Predicated region
  $region6: #{value_net_forward.6} parent=0 // pred_check
    _
  $region7: #{value_net_forward.6} parent=0 // pred_check_branch
    %11 = sbr.rel (0) target = $region9
  $region8: #{value_net_forward.6} parent=0 // pred_region
    _
  $region9: #{value_net_forward.6} parent=0 // pred_fallthru
    _
  // Predicated region
  $region10: #{value_net_forward.6} parent=0 // pred_check
    _
  $region11: #{value_net_forward.6} parent=0 // pred_check_branch
    %13 = sbr.rel (0) target = $region13
  $region12: #{value_net_forward.6} parent=0 // pred_region
    _
  $region13: #{value_net_forward.6} parent=0 // pred_fallthru
    _
  %v15 = vld [vmem:[%s0] sm:$0xff]
  %v16 = vld [vmem:[%s0 + $0x8] sm:$0xff]
  %v17 = vld [vmem:[%s0 + $0x10] sm:$0xf]
  %v18 = vld [vmem:[%s0 + $0x14] sm:$0xff]
  %v19 = vld [vmem:[%s0 + $0x1c] sm:$0xff]
  %v20 = vld [vmem:[%s0 + $0x24] sm:$0xf]
  %v21 = vld [vmem:[%s0 + $0x28] sm:$0xff]
  %v22 = vld [vmem:[%s0 + $0x30] sm:$0xff]
  %v23 = vld [vmem:[%s0 + $0x38] sm:$0xf]
  %v24 = vld [vmem:[%s0 + $0x3c] sm:$0xff]
  %v25 = vld [vmem:[%s0 + $0x44] sm:$0xff]
  %v26 = vld [vmem:[%s0 + $0x4c] sm:$0xf]
  %v27 = vld [vmem:[%s0 + $0x50] sm:$0xff]
  %v28 = vld [vmem:[%s0 + $0x58] sm:$0xff]
  %v29 = vld [vmem:[%s0 + $0x60] sm:$0xf]
  %v30 = vld [vmem:[%s0 + $0x64] sm:$0xff]
  %v31 = vld [vmem:[%s0 + $0x6c] sm:$0xff]
  %v32 = vld [vmem:[%s0 + $0x74] sm:$0xf]
  %v33 = vld [vmem:[%s0 + $0x78] sm:$0xff]
  %v34 = vld [vmem:[%s0 + $0x80] sm:$0xff]
  %v35 = vld [vmem:[%s0 + $0x88] sm:$0xf]
  %v36 = vld [vmem:[%s0 + $0x8c] sm:$0xff]
  %v37 = vld [vmem:[%s0 + $0x94] sm:$0xff]
  %v38 = vld [vmem:[%s0 + $0x9c] sm:$0xf]
  %v39 = vld [vmem:[%s0 + $0xa0] sm:$0xff]
  %v40 = vld [vmem:[%s0 + $0xa8] sm:$0xff]
  %v41 = vld [vmem:[%s0 + $0xb0] sm:$0xf]
  %v42 = vld [vmem:[%s0 + $0xb4] sm:$0xff]
  %v43 = vld [vmem:[%s0 + $0xbc] sm:$0xff]
  %v44 = vld [vmem:[%s0 + $0xc4] sm:$0xf]
  %v45 = vld [vmem:[%s0 + $0xc8] sm:$0xff]
  %v46 = vld [vmem:[%s0 + $0xd0] sm:$0xff]
  %v47 = vld [vmem:[%s0 + $0xd8] sm:$0xf]
  %v48 = vld [vmem:[%s0 + $0xdc] sm:$0xff]
  %v49 = vld [vmem:[%s0 + $0xe4] sm:$0xff]
  %v50 = vld [vmem:[%s0 + $0xec] sm:$0xf]
  %v51 = vld [vmem:[%s0 + $0xf0] sm:$0x11]
  %v52 = vld [vmem:[%s0 + $0xf8] sm:$0x11]
  %v53 = vld [vmem:[%s0 + $0x100] sm:$0x1]
  %v54 = vld [vmem:[%s1] sm:$0xf]
  %v55 = vld [vmem:[%s1 + $0x4] sm:$0xf]
  %v56 = vld [vmem:[%s1 + $0x8] sm:$0xf]
  %v57 = vld [vmem:[%s1 + $0xc] sm:$0xf]
  %v58 = vld [vmem:[%s1 + $0x10] sm:$0xf]
  %v59 = vld [vmem:[%s1 + $0x14] sm:$0xf]
  %v60 = vld [vmem:[%s1 + $0x18] sm:$0xf]
  %v61 = vld [vmem:[%s1 + $0x1c] sm:$0xf]
  %v62 = vld [vmem:[%s1 + $0x20] sm:$0xf]
  %v63 = vld [vmem:[%s1 + $0x24] sm:$0xf]
  %v64 = vld [vmem:[%s1 + $0x28] sm:$0xf]
  %v65 = vld [vmem:[%s1 + $0x2c] sm:$0xf]
  %v66 = vld [vmem:[%s1 + $0x30] sm:$0xf]
  %v67 = vld [vmem:[%s1 + $0x34] sm:$0xf]
  %v68 = vld [vmem:[%s1 + $0x38] sm:$0xf]
  %v69 = vld [vmem:[%s1 + $0x3c] sm:$0xf]
  %v70 = vld [vmem:[%s1 + $0x40] sm:$0xf]
  %v71 = vld [vmem:[%s1 + $0x44] sm:$0xf]
  %v72 = vld [vmem:[%s1 + $0x48] sm:$0xf]
  %v73 = vld [vmem:[%s1 + $0x4c] sm:$0xf]
  %v74 = vld [vmem:[%s1 + $0x50] sm:$0xf]
  %v75 = vld [vmem:[%s1 + $0x54] sm:$0xf]
  %v76 = vld [vmem:[%s1 + $0x58] sm:$0xf]
  %v77 = vld [vmem:[%s1 + $0x5c] sm:$0xf]
  %v78 = vld [vmem:[%s1 + $0x60] sm:$0xf]
  %v79 = vld [vmem:[%s1 + $0x64] sm:$0xf]
  %v80 = vld [vmem:[%s1 + $0x68] sm:$0xf]
  %v81 = vld [vmem:[%s1 + $0x6c] sm:$0xf]
  %v82 = vld [vmem:[%s1 + $0x70] sm:$0xf]
  %v83 = vld [vmem:[%s1 + $0x74] sm:$0xf]
  %v84 = vld [vmem:[%s1 + $0x78] sm:$0xf]
  %v85 = vld [vmem:[%s1 + $0x7c] sm:$0xf]
  %v86 = vld [vmem:[%s1 + $0x80] sm:$0xf]
  %v87 = vld [vmem:[%s1 + $0x84] sm:$0xf]
  %v88 = vld [vmem:[%s1 + $0x88] sm:$0xf]
  %v89 = vld [vmem:[%s1 + $0x8c] sm:$0xf]
  %v90 = vld [vmem:[%s1 + $0x90] sm:$0xf]
  %v91 = vld [vmem:[%s1 + $0x94] sm:$0xf]
  %v92 = vld [vmem:[%s1 + $0x98] sm:$0xf]
  %v93 = vld [vmem:[%s1 + $0x9c] sm:$0xf]
  %v94 = vld [vmem:[%s1 + $0xa0] sm:$0xf]
  %v95 = vld [vmem:[%s1 + $0xa4] sm:$0xf]
  %v96 = vld [vmem:[%s1 + $0xa8] sm:$0xf]
  %v97 = vld [vmem:[%s1 + $0xac] sm:$0xf]
  %v98 = vld [vmem:[%s1 + $0xb0] sm:$0xf]
  %v99 = vld [vmem:[%s1 + $0xb4] sm:$0xf]
  %v100 = vld [vmem:[%s1 + $0xb8] sm:$0xf]
  %v101 = vld [vmem:[%s1 + $0xbc] sm:$0xf]
  %v102 = vld [vmem:[%s1 + $0xc0] sm:$0xf]
  %v103 = vld [vmem:[%s1 + $0xc4] sm:$0xf]
  %v104 = vld [vmem:[%s1 + $0xc8] sm:$0xf]
  %v105 = vld [vmem:[%s1 + $0xcc] sm:$0xf]
  %v106 = vld [vmem:[%s1 + $0xd0] sm:$0xf]
  %v107 = vld [vmem:[%s1 + $0xd4] sm:$0xf]
  %v108 = vld [vmem:[%s1 + $0xd8] sm:$0xf]
  %v109 = vld [vmem:[%s1 + $0xdc] sm:$0xf]
  %v110 = vld [vmem:[%s1 + $0xe0] sm:$0xf]
  %v111 = vld [vmem:[%s1 + $0xe4] sm:$0xf]
  %v112 = vld [vmem:[%s1 + $0xe8] sm:$0xf]
  %v113 = vld [vmem:[%s1 + $0xec] sm:$0xf]
  %v114 = vld [vmem:[%s1 + $0xf0] sm:$0xf]
  %v115 = vld [vmem:[%s1 + $0xf4] sm:$0xf]
  %v116 = vld [vmem:[%s1 + $0xf8] sm:$0xf]
  %v117 = vld [vmem:[%s1 + $0xfc] sm:$0xf]
  %v118 = vld [vmem:[%s1 + $0x100] sm:$0xf]
  %v119 = vld [vmem:[%s1 + $0x104] sm:$0xf]
  %v120 = vld [vmem:[%s1 + $0x108] sm:$0xf]
  %v121 = vld [vmem:[%s1 + $0x10c] sm:$0xf]
  %v122 = vld [vmem:[%s1 + $0x110] sm:$0xf]
  %v123 = vld [vmem:[%s1 + $0x114] sm:$0xf]
  %v124 = vld [vmem:[%s1 + $0x118] sm:$0xf]
  %v125 = vld [vmem:[%s1 + $0x11c] sm:$0xf]
  %v126 = vld [vmem:[%s2] sm:$0x1]
  %v128 = vperm.slane %v126, 0
  %v169 = vunpack.c.l.b16 %v15
  %v170 = vunpack.c.h.b16 %v15
  %v171 = vunpack.c.l.b16 %v16
  %v172 = vunpack.c.h.b16 %v16
  %v173 = vunpack.c.l.b16 %v17
  %v174 = vunpack.c.l.b16 %v18
  %v175 = vunpack.c.h.b16 %v18
  %v176 = vunpack.c.l.b16 %v19
  %v177 = vunpack.c.h.b16 %v19
  %v178 = vunpack.c.l.b16 %v20
  %v179 = vunpack.c.l.b16 %v21
  %v180 = vunpack.c.h.b16 %v21
  %v181 = vunpack.c.l.b16 %v22
  %v182 = vunpack.c.h.b16 %v22
  %v183 = vunpack.c.l.b16 %v23
  %v184 = vunpack.c.l.b16 %v24
  %v185 = vunpack.c.h.b16 %v24
  %v186 = vunpack.c.l.b16 %v25
  %v187 = vunpack.c.h.b16 %v25
  %v188 = vunpack.c.l.b16 %v26
  %v189 = vunpack.c.l.b16 %v27
  %v190 = vunpack.c.h.b16 %v27
  %v191 = vunpack.c.l.b16 %v28
  %v192 = vunpack.c.h.b16 %v28
  %v193 = vunpack.c.l.b16 %v29
  %v194 = vunpack.c.l.b16 %v30
  %v195 = vunpack.c.h.b16 %v30
  %v196 = vunpack.c.l.b16 %v31
  %v197 = vunpack.c.h.b16 %v31
  %v198 = vunpack.c.l.b16 %v32
  %v199 = vunpack.c.l.b16 %v33
  %v200 = vunpack.c.h.b16 %v33
  %v201 = vunpack.c.l.b16 %v34
  %v202 = vunpack.c.h.b16 %v34
  %v203 = vunpack.c.l.b16 %v35
  %v204 = vunpack.c.l.b16 %v36
  %v205 = vunpack.c.h.b16 %v36
  %v206 = vunpack.c.l.b16 %v37
  %v207 = vunpack.c.h.b16 %v37
  %v208 = vunpack.c.l.b16 %v38
  %v209 = vunpack.c.l.b16 %v39
  %v210 = vunpack.c.h.b16 %v39
  %v211 = vunpack.c.l.b16 %v40
  %v212 = vunpack.c.h.b16 %v40
  %v213 = vunpack.c.l.b16 %v41
  %v214 = vunpack.c.l.b16 %v42
  %v215 = vunpack.c.h.b16 %v42
  %v216 = vunpack.c.l.b16 %v43
  %v217 = vunpack.c.h.b16 %v43
  %v218 = vunpack.c.l.b16 %v44
  %v219 = vunpack.c.l.b16 %v45
  %v220 = vunpack.c.h.b16 %v45
  %v221 = vunpack.c.l.b16 %v46
  %v222 = vunpack.c.h.b16 %v46
  %v223 = vunpack.c.l.b16 %v47
  %v224 = vunpack.c.l.b16 %v48
  %v225 = vunpack.c.h.b16 %v48
  %v226 = vunpack.c.l.b16 %v49
  %v227 = vunpack.c.h.b16 %v49
  %v228 = vunpack.c.l.b16 %v50
  %v229 = vunpack.c.l.b16 %v51
  %v230 = vunpack.c.h.b16 %v51
  %v231 = vunpack.c.l.b16 %v52
  %v232 = vunpack.c.h.b16 %v52
  %v233 = vunpack.c.l.b16 %v53
  %v234 = vpack.c.b16 %v174, %v169
  %v235 = vpack.c.b16 %v175, %v170
  %v236 = vpack.c.b16 %v176, %v171
  %v237 = vpack.c.b16 %v177, %v172
  %v238 = vpack.c.b16 %v178, %v173
  %v239 = vpack.c.b16 %v184, %v179
  %v240 = vpack.c.b16 %v185, %v180
  %v241 = vpack.c.b16 %v186, %v181
  %v242 = vpack.c.b16 %v187, %v182
  %v243 = vpack.c.b16 %v188, %v183
  %v244 = vpack.c.b16 %v194, %v189
  %v245 = vpack.c.b16 %v195, %v190
  %v246 = vpack.c.b16 %v196, %v191
  %v247 = vpack.c.b16 %v197, %v192
  %v248 = vpack.c.b16 %v198, %v193
  %v249 = vpack.c.b16 %v204, %v199
  %v250 = vpack.c.b16 %v205, %v200
  %v251 = vpack.c.b16 %v206, %v201
  %v252 = vpack.c.b16 %v207, %v202
  %v253 = vpack.c.b16 %v208, %v203
  %v254 = vpack.c.b16 %v214, %v209
  %v255 = vpack.c.b16 %v215, %v210
  %v256 = vpack.c.b16 %v216, %v211
  %v257 = vpack.c.b16 %v217, %v212
  %v258 = vpack.c.b16 %v218, %v213
  %v259 = vpack.c.b16 %v224, %v219
  %v260 = vpack.c.b16 %v225, %v220
  %v261 = vpack.c.b16 %v226, %v221
  %v262 = vpack.c.b16 %v227, %v222
  %v263 = vpack.c.b16 %v228, %v223
  %v264 = vpack.c.b16 %v229, %v229
  %v265 = vpack.c.b16 %v230, %v230
  %v266 = vpack.c.b16 %v231, %v231
  %v267 = vpack.c.b16 %v232, %v232
  %v268 = vpack.c.b16 %v233, %v233
  %v369 = vunpack.c.l.b16 %v54
  %v370 = vunpack.c.l.b16 %v55
  %v371 = vunpack.c.l.b16 %v56
  %v372 = vunpack.c.l.b16 %v57
  %v373 = vunpack.c.l.b16 %v58
  %v374 = vunpack.c.l.b16 %v59
  %v375 = vunpack.c.l.b16 %v60
  %v376 = vunpack.c.l.b16 %v61
  %v377 = vunpack.c.l.b16 %v62
  %v378 = vunpack.c.l.b16 %v63
  %v379 = vunpack.c.l.b16 %v64
  %v380 = vunpack.c.l.b16 %v65
  %v381 = vunpack.c.l.b16 %v66
  %v382 = vunpack.c.l.b16 %v67
  %v383 = vunpack.c.l.b16 %v68
  %v384 = vunpack.c.l.b16 %v69
  %v385 = vunpack.c.l.b16 %v70
  %v386 = vunpack.c.l.b16 %v71
  %v387 = vunpack.c.l.b16 %v72
  %v388 = vunpack.c.l.b16 %v73
  %v389 = vunpack.c.l.b16 %v74
  %v390 = vunpack.c.l.b16 %v75
  %v391 = vunpack.c.l.b16 %v76
  %v392 = vunpack.c.l.b16 %v77
  %v393 = vunpack.c.l.b16 %v78
  %v394 = vunpack.c.l.b16 %v79
  %v395 = vunpack.c.l.b16 %v80
  %v396 = vunpack.c.l.b16 %v81
  %v397 = vunpack.c.l.b16 %v82
  %v398 = vunpack.c.l.b16 %v83
  %v399 = vunpack.c.l.b16 %v84
  %v400 = vunpack.c.l.b16 %v85
  %v401 = vunpack.c.l.b16 %v86
  %v402 = vunpack.c.l.b16 %v87
  %v403 = vunpack.c.l.b16 %v88
  %v404 = vunpack.c.l.b16 %v89
  %v405 = vunpack.c.l.b16 %v90
  %v406 = vunpack.c.l.b16 %v91
  %v407 = vunpack.c.l.b16 %v92
  %v408 = vunpack.c.l.b16 %v93
  %v409 = vunpack.c.l.b16 %v94
  %v410 = vunpack.c.l.b16 %v95
  %v411 = vunpack.c.l.b16 %v96
  %v412 = vunpack.c.l.b16 %v97
  %v413 = vunpack.c.l.b16 %v98
  %v414 = vunpack.c.l.b16 %v99
  %v415 = vunpack.c.l.b16 %v100
  %v416 = vunpack.c.l.b16 %v101
  %v417 = vunpack.c.l.b16 %v102
  %v418 = vunpack.c.l.b16 %v103
  %v419 = vunpack.c.l.b16 %v104
  %v420 = vunpack.c.l.b16 %v105
  %v421 = vunpack.c.l.b16 %v106
  %v422 = vunpack.c.l.b16 %v107
  %v423 = vunpack.c.l.b16 %v108
  %v424 = vunpack.c.l.b16 %v109
  %v425 = vunpack.c.l.b16 %v110
  %v426 = vunpack.c.l.b16 %v111
  %v427 = vunpack.c.l.b16 %v112
  %v428 = vunpack.c.l.b16 %v113
  %v429 = vunpack.c.l.b16 %v114
  %v430 = vunpack.c.l.b16 %v115
  %v431 = vunpack.c.l.b16 %v116
  %v432 = vunpack.c.l.b16 %v117
  %v433 = vunpack.c.l.b16 %v118
  %v434 = vunpack.c.l.b16 %v119
  %v435 = vunpack.c.l.b16 %v120
  %v436 = vunpack.c.l.b16 %v121
  %v437 = vunpack.c.l.b16 %v122
  %v438 = vunpack.c.l.b16 %v123
  %v439 = vunpack.c.l.b16 %v124
  %v440 = vunpack.c.l.b16 %v125
  %v441 = vpack.c.b16 %v370, %v369
  %v442 = vpack.c.b16 %v372, %v371
  %v443 = vpack.c.b16 %v374, %v373
  %v444 = vpack.c.b16 %v376, %v375
  %v445 = vpack.c.b16 %v378, %v377
  %v446 = vpack.c.b16 %v380, %v379
  %v447 = vpack.c.b16 %v382, %v381
  %v448 = vpack.c.b16 %v384, %v383
  %v449 = vpack.c.b16 %v386, %v385
  %v450 = vpack.c.b16 %v388, %v387
  %v451 = vpack.c.b16 %v390, %v389
  %v452 = vpack.c.b16 %v392, %v391
  %v453 = vpack.c.b16 %v394, %v393
  %v454 = vpack.c.b16 %v396, %v395
  %v455 = vpack.c.b16 %v398, %v397
  %v456 = vpack.c.b16 %v400, %v399
  %v457 = vpack.c.b16 %v402, %v401
  %v458 = vpack.c.b16 %v404, %v403
  %v459 = vpack.c.b16 %v406, %v405
  %v460 = vpack.c.b16 %v408, %v407
  %v461 = vpack.c.b16 %v410, %v409
  %v462 = vpack.c.b16 %v412, %v411
  %v463 = vpack.c.b16 %v414, %v413
  %v464 = vpack.c.b16 %v416, %v415
  %v465 = vpack.c.b16 %v418, %v417
  %v466 = vpack.c.b16 %v420, %v419
  %v467 = vpack.c.b16 %v422, %v421
  %v468 = vpack.c.b16 %v424, %v423
  %v469 = vpack.c.b16 %v426, %v425
  %v470 = vpack.c.b16 %v428, %v427
  %v471 = vpack.c.b16 %v430, %v429
  %v472 = vpack.c.b16 %v432, %v431
  %v473 = vpack.c.b16 %v434, %v433
  %v474 = vpack.c.b16 %v436, %v435
  %v475 = vpack.c.b16 %v438, %v437
  %v476 = vpack.c.b16 %v440, %v439
  %vm513 = vcmask 523264
  %v515 = vsel %vm513, %v238, 0
  %v518 = vsel %vm513, %v243, 0
  %v521 = vsel %vm513, %v248, 0
  %v524 = vsel %vm513, %v253, 0
  %v527 = vsel %vm513, %v258, 0
  %v530 = vsel %vm513, %v263, 0
  %v533 = vsel %vm513, %v268, 0
  %535 = vmatpush.bf16.msra.mxu0 %v448
  %536 = vmatpush.bf16.msra.mxu0 %v447
  %537 = vmatpush.bf16.msra.mxu0 %v446
  %538 = vmatpush.bf16.msra.mxu0 %v445
  %539 = vmatpush.bf16.msra.mxu0 %v444
  %540 = vmatpush.bf16.msra.mxu0 %v443
  %541 = vmatpush.bf16.msra.mxu0 %v442
  %542 = vmatpush.bf16.msra.mxu0 %v441
  %543 = vmatmul.bf16.gmra.mxu0 %v234
  %v544 = vpop.f32.mrf.mxu0
  %v545 = vadd.f32 %v128, %v544
  %v546 = vpop.f32.mrf.mxu0
  %v547 = vadd.f32 %v128, %v546
  %548 = vmatmul.bf16.gmra.mxu0 %v239
  %v549 = vpop.f32.mrf.mxu0
  %v550 = vadd.f32 %v128, %v549
  %v551 = vpop.f32.mrf.mxu0
  %v552 = vadd.f32 %v128, %v551
  %553 = vmatmul.bf16.gmra.mxu0 %v244
  %v554 = vpop.f32.mrf.mxu0
  %v555 = vadd.f32 %v128, %v554
  %v556 = vpop.f32.mrf.mxu0
  %v557 = vadd.f32 %v128, %v556
  %558 = vmatmul.bf16.gmra.mxu0 %v249
  %v559 = vpop.f32.mrf.mxu0
  %v560 = vadd.f32 %v128, %v559
  %v561 = vpop.f32.mrf.mxu0
  %v562 = vadd.f32 %v128, %v561
  %563 = vmatmul.bf16.gmra.mxu0 %v254
  %v564 = vpop.f32.mrf.mxu0
  %v565 = vadd.f32 %v128, %v564
  %v566 = vpop.f32.mrf.mxu0
  %v567 = vadd.f32 %v128, %v566
  %568 = vmatmul.bf16.gmra.mxu0 %v259
  %v569 = vpop.f32.mrf.mxu0
  %v570 = vadd.f32 %v128, %v569
  %v571 = vpop.f32.mrf.mxu0
  %v572 = vadd.f32 %v128, %v571
  %573 = vmatmul.bf16.gmra.mxu0 %v264
  %v574 = vpop.f32.mrf.mxu0
  %v575 = vadd.f32 %v128, %v574
  %v576 = vpop.f32.mrf.mxu0
  %577 = vdwg.mxu0
  %578 = vmatpush.bf16.msra.mxu0 %v456
  %579 = vmatpush.bf16.msra.mxu0 %v455
  %580 = vmatpush.bf16.msra.mxu0 %v454
  %581 = vmatpush.bf16.msra.mxu0 %v453
  %582 = vmatpush.bf16.msra.mxu0 %v452
  %583 = vmatpush.bf16.msra.mxu0 %v451
  %584 = vmatpush.bf16.msra.mxu0 %v450
  %585 = vmatpush.bf16.msra.mxu0 %v449
  %586 = vmatmul.bf16.gmra.mxu0 %v235
  %v587 = vpop.f32.mrf.mxu0
  %v588 = vadd.f32 %v545, %v587
  %v589 = vpop.f32.mrf.mxu0
  %v590 = vadd.f32 %v547, %v589
  %591 = vmatmul.bf16.gmra.mxu0 %v240
  %v592 = vpop.f32.mrf.mxu0
  %v593 = vadd.f32 %v550, %v592
  %v594 = vpop.f32.mrf.mxu0
  %v595 = vadd.f32 %v552, %v594
  %596 = vmatmul.bf16.gmra.mxu0 %v245
  %v597 = vpop.f32.mrf.mxu0
  %v598 = vadd.f32 %v555, %v597
  %v599 = vpop.f32.mrf.mxu0
  %v600 = vadd.f32 %v557, %v599
  %601 = vmatmul.bf16.gmra.mxu0 %v250
  %v602 = vpop.f32.mrf.mxu0
  %v603 = vadd.f32 %v560, %v602
  %v604 = vpop.f32.mrf.mxu0
  %v605 = vadd.f32 %v562, %v604
  %606 = vmatmul.bf16.gmra.mxu0 %v255
  %v607 = vpop.f32.mrf.mxu0
  %v608 = vadd.f32 %v565, %v607
  %v609 = vpop.f32.mrf.mxu0
  %v610 = vadd.f32 %v567, %v609
  %611 = vmatmul.bf16.gmra.mxu0 %v260
  %v612 = vpop.f32.mrf.mxu0
  %v613 = vadd.f32 %v570, %v612
  %v614 = vpop.f32.mrf.mxu0
  %v615 = vadd.f32 %v572, %v614
  %616 = vmatmul.bf16.gmra.mxu0 %v265
  %v617 = vpop.f32.mrf.mxu0
  %v618 = vadd.f32 %v575, %v617
  %v619 = vpop.f32.mrf.mxu0
  %620 = vdwg.mxu0
  %621 = vmatpush.bf16.msra.mxu0 %v464
  %622 = vmatpush.bf16.msra.mxu0 %v463
  %623 = vmatpush.bf16.msra.mxu0 %v462
  %624 = vmatpush.bf16.msra.mxu0 %v461
  %625 = vmatpush.bf16.msra.mxu0 %v460
  %626 = vmatpush.bf16.msra.mxu0 %v459
  %627 = vmatpush.bf16.msra.mxu0 %v458
  %628 = vmatpush.bf16.msra.mxu0 %v457
  %629 = vmatmul.bf16.gmra.mxu0 %v236
  %v630 = vpop.f32.mrf.mxu0
  %v631 = vadd.f32 %v588, %v630
  %v632 = vpop.f32.mrf.mxu0
  %v633 = vadd.f32 %v590, %v632
  %634 = vmatmul.bf16.gmra.mxu0 %v241
  %v635 = vpop.f32.mrf.mxu0
  %v636 = vadd.f32 %v593, %v635
  %v637 = vpop.f32.mrf.mxu0
  %v638 = vadd.f32 %v595, %v637
  %639 = vmatmul.bf16.gmra.mxu0 %v246
  %v640 = vpop.f32.mrf.mxu0
  %v641 = vadd.f32 %v598, %v640
  %v642 = vpop.f32.mrf.mxu0
  %v643 = vadd.f32 %v600, %v642
  %644 = vmatmul.bf16.gmra.mxu0 %v251
  %v645 = vpop.f32.mrf.mxu0
  %v646 = vadd.f32 %v603, %v645
  %v647 = vpop.f32.mrf.mxu0
  %v648 = vadd.f32 %v605, %v647
  %649 = vmatmul.bf16.gmra.mxu0 %v256
  %v650 = vpop.f32.mrf.mxu0
  %v651 = vadd.f32 %v608, %v650
  %v652 = vpop.f32.mrf.mxu0
  %v653 = vadd.f32 %v610, %v652
  %654 = vmatmul.bf16.gmra.mxu0 %v261
  %v655 = vpop.f32.mrf.mxu0
  %v656 = vadd.f32 %v613, %v655
  %v657 = vpop.f32.mrf.mxu0
  %v658 = vadd.f32 %v615, %v657
  %659 = vmatmul.bf16.gmra.mxu0 %v266
  %v660 = vpop.f32.mrf.mxu0
  %v661 = vadd.f32 %v618, %v660
  %v662 = vpop.f32.mrf.mxu0
  %663 = vdwg.mxu0
  %664 = vmatpush.bf16.msra.mxu0 %v472
  %665 = vmatpush.bf16.msra.mxu0 %v471
  %666 = vmatpush.bf16.msra.mxu0 %v470
  %667 = vmatpush.bf16.msra.mxu0 %v469
  %668 = vmatpush.bf16.msra.mxu0 %v468
  %669 = vmatpush.bf16.msra.mxu0 %v467
  %670 = vmatpush.bf16.msra.mxu0 %v466
  %671 = vmatpush.bf16.msra.mxu0 %v465
  %672 = vmatmul.bf16.gmra.mxu0 %v237
  %v673 = vpop.f32.mrf.mxu0
  %v674 = vadd.f32 %v631, %v673
  %v675 = vpop.f32.mrf.mxu0
  %v676 = vadd.f32 %v633, %v675
  %677 = vmatmul.bf16.gmra.mxu0 %v242
  %v678 = vpop.f32.mrf.mxu0
  %v679 = vadd.f32 %v636, %v678
  %v680 = vpop.f32.mrf.mxu0
  %v681 = vadd.f32 %v638, %v680
  %682 = vmatmul.bf16.gmra.mxu0 %v247
  %v683 = vpop.f32.mrf.mxu0
  %v684 = vadd.f32 %v641, %v683
  %v685 = vpop.f32.mrf.mxu0
  %v686 = vadd.f32 %v643, %v685
  %687 = vmatmul.bf16.gmra.mxu0 %v252
  %v688 = vpop.f32.mrf.mxu0
  %v689 = vadd.f32 %v646, %v688
  %v690 = vpop.f32.mrf.mxu0
  %v691 = vadd.f32 %v648, %v690
  %692 = vmatmul.bf16.gmra.mxu0 %v257
  %v693 = vpop.f32.mrf.mxu0
  %v694 = vadd.f32 %v651, %v693
  %v695 = vpop.f32.mrf.mxu0
  %v696 = vadd.f32 %v653, %v695
  %697 = vmatmul.bf16.gmra.mxu0 %v262
  %v698 = vpop.f32.mrf.mxu0
  %v699 = vadd.f32 %v656, %v698
  %v700 = vpop.f32.mrf.mxu0
  %v701 = vadd.f32 %v658, %v700
  %702 = vmatmul.bf16.gmra.mxu0 %v267
  %v703 = vpop.f32.mrf.mxu0
  %v704 = vadd.f32 %v661, %v703
  %v705 = vpop.f32.mrf.mxu0
  %706 = vdwg.mxu0
  %707 = vmatpush.bf16.msra.mxu0 0
  %708 = vmatpush.bf16.msra.mxu0 0
  %709 = vmatpush.bf16.msra.mxu0 0
  %710 = vmatpush.bf16.msra.mxu0 0
  %711 = vmatpush.bf16.msra.mxu0 %v476
  %712 = vmatpush.bf16.msra.mxu0 %v475
  %713 = vmatpush.bf16.msra.mxu0 %v474
  %714 = vmatpush.bf16.msra.mxu0 %v473
  %715 = vmatmul.bf16.gmra.mxu0 %v515
  %v716 = vpop.f32.mrf.mxu0
  %v717 = vadd.f32 %v674, %v716
  %v718 = vpop.f32.mrf.mxu0
  %v719 = vadd.f32 %v676, %v718
  %720 = vmatmul.bf16.gmra.mxu0 %v518
  %v721 = vpop.f32.mrf.mxu0
  %v722 = vadd.f32 %v679, %v721
  %v723 = vpop.f32.mrf.mxu0
  %v724 = vadd.f32 %v681, %v723
  %725 = vmatmul.bf16.gmra.mxu0 %v521
  %v726 = vpop.f32.mrf.mxu0
  %v727 = vadd.f32 %v684, %v726
  %v728 = vpop.f32.mrf.mxu0
  %v729 = vadd.f32 %v686, %v728
  %730 = vmatmul.bf16.gmra.mxu0 %v524
  %v731 = vpop.f32.mrf.mxu0
  %v732 = vadd.f32 %v689, %v731
  %v733 = vpop.f32.mrf.mxu0
  %v734 = vadd.f32 %v691, %v733
  %735 = vmatmul.bf16.gmra.mxu0 %v527
  %v736 = vpop.f32.mrf.mxu0
  %v737 = vadd.f32 %v694, %v736
  %v738 = vpop.f32.mrf.mxu0
  %v739 = vadd.f32 %v696, %v738
  %740 = vmatmul.bf16.gmra.mxu0 %v530
  %v741 = vpop.f32.mrf.mxu0
  %v742 = vadd.f32 %v699, %v741
  %v743 = vpop.f32.mrf.mxu0
  %v744 = vadd.f32 %v701, %v743
  %745 = vmatmul.bf16.gmra.mxu0 %v533
  %v746 = vpop.f32.mrf.mxu0
  %v747 = vadd.f32 %v704, %v746
  %v748 = vpop.f32.mrf.mxu0
  %749 = vdwg.mxu0
  %v750 = vmax.f32 %v717, 0.0
  %v751 = vmax.f32 %v719, 0.0
  %v752 = vmax.f32 %v722, 0.0
  %v753 = vmax.f32 %v724, 0.0
  %v754 = vmax.f32 %v727, 0.0
  %v755 = vmax.f32 %v729, 0.0
  %v756 = vmax.f32 %v732, 0.0
  %v757 = vmax.f32 %v734, 0.0
  %v758 = vmax.f32 %v737, 0.0
  %v759 = vmax.f32 %v739, 0.0
  %v760 = vmax.f32 %v742, 0.0
  %v761 = vmax.f32 %v744, 0.0
  %v762 = vmax.f32 %v747, 0.0
  %v763 = vpack.c.bf16 %v750, %v750
  %v764 = vpack.c.bf16 %v751, %v751
  %v765 = vpack.c.bf16 %v752, %v752
  %v766 = vpack.c.bf16 %v753, %v753
  %v767 = vpack.c.bf16 %v754, %v754
  %v768 = vpack.c.bf16 %v755, %v755
  %v769 = vpack.c.bf16 %v756, %v756
  %v770 = vpack.c.bf16 %v757, %v757
  %v771 = vpack.c.bf16 %v758, %v758
  %v772 = vpack.c.bf16 %v759, %v759
  %v773 = vpack.c.bf16 %v760, %v760
  %v774 = vpack.c.bf16 %v761, %v761
  %v775 = vpack.c.bf16 %v762, %v762
  %vm776 = vcmask 519168
  %777 = vst.msk [vmem:[%s3] sm:$0xf] %vm776, %v763
  %778 = vst.msk [vmem:[%s3 + $0x4] sm:$0xf] %vm776, %v764
  %779 = vst.msk [vmem:[%s3 + $0x8] sm:$0xf] %vm776, %v765
  %780 = vst.msk [vmem:[%s3 + $0xc] sm:$0xf] %vm776, %v766
  %781 = vst.msk [vmem:[%s3 + $0x10] sm:$0xf] %vm776, %v767
  %782 = vst.msk [vmem:[%s3 + $0x14] sm:$0xf] %vm776, %v768
  %783 = vst.msk [vmem:[%s3 + $0x18] sm:$0xf] %vm776, %v769
  %784 = vst.msk [vmem:[%s3 + $0x1c] sm:$0xf] %vm776, %v770
  %785 = vst.msk [vmem:[%s3 + $0x20] sm:$0xf] %vm776, %v771
  %786 = vst.msk [vmem:[%s3 + $0x24] sm:$0xf] %vm776, %v772
  %787 = vst.msk [vmem:[%s3 + $0x28] sm:$0xf] %vm776, %v773
  %788 = vst.msk [vmem:[%s3 + $0x2c] sm:$0xf] %vm776, %v774
  %vm789 = vcmask 516096
  %790 = vst.msk [vmem:[%s3 + $0x30] sm:$0x1] %vm789, %v775
  // Predicated region
  $region14: #{value_net_forward.6} parent=0 // pred_check
    _
  $region15: #{value_net_forward.6} parent=0 // pred_check_branch
    %792 = sbr.rel (0) target = $region17
  $region16: #{value_net_forward.6} parent=0 // pred_region
    _
  $region17: #{value_net_forward.6} parent=0 // pred_fallthru
    _
  // Predicated region
  $region18: #{value_net_forward.6} parent=0 // pred_check
    _
  $region19: #{value_net_forward.6} parent=0 // pred_check_branch
    %794 = sbr.rel (0) target = $region21
  $region20: #{value_net_forward.6} parent=0 // pred_region
    _
  $region21: #{value_net_forward.6} parent=0 // pred_fallthru
    _

// kernel: value_net_forward.7
$region0: #{value_net_forward.7}
  #allocation0 [shape = 'u32[]', space=smem, size = 0x4, offset = 0x4, fixed_abs, tag = 'smem constant byte address 0x4 - core index']
  #allocation1 [shape = 'u32[72,128]{1,0:T(1,128)}', space=vmem, size = 0x9000, scoped, tag = 'internal scratch']
  #allocation2 [shape = 'f32[1,1]{1,0:T(1,128)S(1)}', space=vmem, size = 0x200, scoped, tag = 'scoped memory for value_net_forward.7']
  %s0 = inlined_call_operand.vmem [shape: bf16[2,3136], index: 0, kind: input, shape index: {}]
  %s1 = inlined_call_operand.vmem [shape: bf16[3136,512], index: 1, kind: input, shape index: {}]
  %s2 = inlined_call_operand.vmem [shape: f32[1,512], index: 2, kind: input, shape index: {}]
  %s3 = inlined_call_operand.vmem [shape: f32[1,512], index: 3, kind: input, shape index: {}]
  %s4 = inlined_call_operand.<no memory space> [shape: f32[1,1], index: 4, kind: input, shape index: {}]
  %s5 = inlined_call_operand.vmem [shape: f32[2,1], index: 5, kind: output, shape index: {}]
  %s6 = sld [smem:[#allocation0]]
  $region30: #{value_net_forward.7} parent=0
    _
  %s8 = ssub.s32 1, %s6
  %s9 = scalar_select 0, %s8, %s6
  %v10 = vstv %s4
  %11 = vst [vmem:[#allocation2] sm:$0x1] %v10
  // Predicated region
  $region2: #{value_net_forward.7} parent=0 // pred_check
    _
  $region3: #{value_net_forward.7} parent=0 // pred_check_branch
    %13 = sbr.rel (0) target = $region5
  $region4: #{value_net_forward.7} parent=0 // pred_region
    _
  $region5: #{value_net_forward.7} parent=0 // pred_fallthru
    _
  // Predicated region
  $region6: #{value_net_forward.7} parent=0 // pred_check
    _
  $region7: #{value_net_forward.7} parent=0 // pred_check_branch
    %15 = sbr.rel (0) target = $region9
  $region8: #{value_net_forward.7} parent=0 // pred_region
    _
  $region9: #{value_net_forward.7} parent=0 // pred_fallthru
    _
  // Predicated region
  $region10: #{value_net_forward.7} parent=0 // pred_check
    _
  $region11: #{value_net_forward.7} parent=0 // pred_check_branch
    %17 = sbr.rel (0) target = $region13
  $region12: #{value_net_forward.7} parent=0 // pred_region
    _
  $region13: #{value_net_forward.7} parent=0 // pred_fallthru
    _
  // Predicated region
  $region14: #{value_net_forward.7} parent=0 // pred_check
    _
  $region15: #{value_net_forward.7} parent=0 // pred_check_branch
    %19 = sbr.rel (0) target = $region17
  $region16: #{value_net_forward.7} parent=0 // pred_region
    _
  $region17: #{value_net_forward.7} parent=0 // pred_fallthru
    _
  // Predicated region
  $region18: #{value_net_forward.7} parent=0 // pred_check
    _
  $region19: #{value_net_forward.7} parent=0 // pred_check_branch
    %21 = sbr.rel (0) target = $region21
  $region20: #{value_net_forward.7} parent=0 // pred_region
    _
  $region21: #{value_net_forward.7} parent=0 // pred_fallthru
    _
  %v23 = vld [vmem:[%s0] sm:$0xff]
  %v24 = vld [vmem:[%s0 + $0x8] sm:$0xff]
  %v25 = vld [vmem:[%s0 + $0x10] sm:$0xff]
  %v26 = vld [vmem:[%s0 + $0x18] sm:$0x1]
  %v27 = vld [vmem:[%s1] sm:$0xff]
  %v28 = vld [vmem:[%s1 + $0x8] sm:$0xff]
  %v29 = vld [vmem:[%s1 + $0x10] sm:$0xff]
  %v30 = vld [vmem:[%s1 + $0x18] sm:$0xff]
  %v31 = vld [vmem:[%s1 + $0x20] sm:$0xff]
  %v32 = vld [vmem:[%s1 + $0x28] sm:$0xff]
  %v33 = vld [vmem:[%s1 + $0x30] sm:$0xff]
  %v34 = vld [vmem:[%s1 + $0x38] sm:$0xff]
  %v35 = vld [vmem:[%s1 + $0x40] sm:$0xff]
  %v36 = vld [vmem:[%s1 + $0x48] sm:$0xff]
  %v37 = vld [vmem:[%s1 + $0x50] sm:$0xff]
  %v38 = vld [vmem:[%s1 + $0x58] sm:$0xff]
  %v39 = vld [vmem:[%s1 + $0x60] sm:$0xff]
  %v40 = vld [vmem:[%s1 + $0x68] sm:$0xff]
  %v41 = vld [vmem:[%s1 + $0x70] sm:$0xff]
  %v42 = vld [vmem:[%s1 + $0x78] sm:$0xff]
  %v43 = vld [vmem:[%s1 + $0x80] sm:$0xff]
  %v44 = vld [vmem:[%s1 + $0x88] sm:$0xff]
  %v45 = vld [vmem:[%s1 + $0x90] sm:$0xff]
  %v46 = vld [vmem:[%s1 + $0x98] sm:$0xff]
  %v47 = vld [vmem:[%s1 + $0xa0] sm:$0xff]
  %v48 = vld [vmem:[%s1 + $0xa8] sm:$0xff]
  %v49 = vld [vmem:[%s1 + $0xb0] sm:$0xff]
  %v50 = vld [vmem:[%s1 + $0xb8] sm:$0xff]
  %v51 = vld [vmem:[%s1 + $0xc0] sm:$0xff]
  %v52 = vld [vmem:[%s1 + $0xc8] sm:$0xff]
  %v53 = vld [vmem:[%s1 + $0xd0] sm:$0xff]
  %v54 = vld [vmem:[%s1 + $0xd8] sm:$0xff]
  %v55 = vld [vmem:[%s1 + $0xe0] sm:$0xff]
  %v56 = vld [vmem:[%s1 + $0xe8] sm:$0xff]
  %v57 = vld [vmem:[%s1 + $0xf0] sm:$0xff]
  %v58 = vld [vmem:[%s1 + $0xf8] sm:$0xff]
  %v59 = vld [vmem:[%s1 + $0x100] sm:$0xff]
  %v60 = vld [vmem:[%s1 + $0x108] sm:$0xff]
  %v61 = vld [vmem:[%s1 + $0x110] sm:$0xff]
  %v62 = vld [vmem:[%s1 + $0x118] sm:$0xff]
  %v63 = vld [vmem:[%s1 + $0x120] sm:$0xff]
  %v64 = vld [vmem:[%s1 + $0x128] sm:$0xff]
  %v65 = vld [vmem:[%s1 + $0x130] sm:$0xff]
  %v66 = vld [vmem:[%s1 + $0x138] sm:$0xff]
  %v67 = vld [vmem:[%s1 + $0x140] sm:$0xff]
  %v68 = vld [vmem:[%s1 + $0x148] sm:$0xff]
  %v69 = vld [vmem:[%s1 + $0x150] sm:$0xff]
  %v70 = vld [vmem:[%s1 + $0x158] sm:$0xff]
  %v71 = vld [vmem:[%s1 + $0x160] sm:$0xff]
  %v72 = vld [vmem:[%s1 + $0x168] sm:$0xff]
  %v73 = vld [vmem:[%s1 + $0x170] sm:$0xff]
  %v74 = vld [vmem:[%s1 + $0x178] sm:$0xff]
  %v75 = vld [vmem:[%s1 + $0x180] sm:$0xff]
  %v76 = vld [vmem:[%s1 + $0x188] sm:$0xff]
  %v77 = vld [vmem:[%s1 + $0x190] sm:$0xff]
  %v78 = vld [vmem:[%s1 + $0x198] sm:$0xff]
  %v79 = vld [vmem:[%s1 + $0x1a0] sm:$0xff]
  %v80 = vld [vmem:[%s1 + $0x1a8] sm:$0xff]
  %v81 = vld [vmem:[%s1 + $0x1b0] sm:$0xff]
  %v82 = vld [vmem:[%s1 + $0x1b8] sm:$0xff]
  %v83 = vld [vmem:[%s1 + $0x1c0] sm:$0xff]
  %v84 = vld [vmem:[%s1 + $0x1c8] sm:$0xff]
  %v85 = vld [vmem:[%s1 + $0x1d0] sm:$0xff]
  %v86 = vld [vmem:[%s1 + $0x1d8] sm:$0xff]
  %v87 = vld [vmem:[%s1 + $0x1e0] sm:$0xff]
  %v88 = vld [vmem:[%s1 + $0x1e8] sm:$0xff]
  %v89 = vld [vmem:[%s1 + $0x1f0] sm:$0xff]
  %v90 = vld [vmem:[%s1 + $0x1f8] sm:$0xff]
  %v91 = vld [vmem:[%s1 + $0x200] sm:$0xff]
  %v92 = vld [vmem:[%s1 + $0x208] sm:$0xff]
  %v93 = vld [vmem:[%s1 + $0x210] sm:$0xff]
  %v94 = vld [vmem:[%s1 + $0x218] sm:$0xff]
  %v95 = vld [vmem:[%s1 + $0x220] sm:$0xff]
  %v96 = vld [vmem:[%s1 + $0x228] sm:$0xff]
  %v97 = vld [vmem:[%s1 + $0x230] sm:$0xff]
  %v98 = vld [vmem:[%s1 + $0x238] sm:$0xff]
  %v99 = vld [vmem:[%s1 + $0x240] sm:$0xff]
  %v100 = vld [vmem:[%s1 + $0x248] sm:$0xff]
  %v101 = vld [vmem:[%s1 + $0x250] sm:$0xff]
  %v102 = vld [vmem:[%s1 + $0x258] sm:$0xff]
  %v103 = vld [vmem:[%s1 + $0x260] sm:$0xff]
  %v104 = vld [vmem:[%s1 + $0x268] sm:$0xff]
  %v105 = vld [vmem:[%s1 + $0x270] sm:$0xff]
  %v106 = vld [vmem:[%s1 + $0x278] sm:$0xff]
  %v107 = vld [vmem:[%s1 + $0x280] sm:$0xff]
  %v108 = vld [vmem:[%s1 + $0x288] sm:$0xff]
  %v109 = vld [vmem:[%s1 + $0x290] sm:$0xff]
  %v110 = vld [vmem:[%s1 + $0x298] sm:$0xff]
  %v111 = vld [vmem:[%s1 + $0x2a0] sm:$0xff]
  %v112 = vld [vmem:[%s1 + $0x2a8] sm:$0xff]
  %v113 = vld [vmem:[%s1 + $0x2b0] sm:$0xff]
  %v114 = vld [vmem:[%s1 + $0x2b8] sm:$0xff]
  %v115 = vld [vmem:[%s1 + $0x2c0] sm:$0xff]
  %v116 = vld [vmem:[%s1 + $0x2c8] sm:$0xff]
  %v117 = vld [vmem:[%s1 + $0x2d0] sm:$0xff]
  %v118 = vld [vmem:[%s1 + $0x2d8] sm:$0xff]
  %v119 = vld [vmem:[%s1 + $0x2e0] sm:$0xff]
  %v120 = vld [vmem:[%s1 + $0x2e8] sm:$0xff]
  %v121 = vld [vmem:[%s1 + $0x2f0] sm:$0xff]
  %v122 = vld [vmem:[%s1 + $0x2f8] sm:$0xff]
  %v123 = vld [vmem:[%s1 + $0x300] sm:$0xff]
  %v124 = vld [vmem:[%s1 + $0x308] sm:$0xff]
  %v125 = vld [vmem:[%s1 + $0x310] sm:$0xff]
  %v126 = vld [vmem:[%s1 + $0x318] sm:$0xff]
  %v127 = vld [vmem:[%s1 + $0x320] sm:$0xff]
  %v128 = vld [vmem:[%s1 + $0x328] sm:$0xff]
  %v129 = vld [vmem:[%s1 + $0x330] sm:$0xff]
  %v130 = vld [vmem:[%s1 + $0x338] sm:$0xff]
  %v131 = vld [vmem:[%s1 + $0x340] sm:$0xff]
  %v132 = vld [vmem:[%s1 + $0x348] sm:$0xff]
  %v133 = vld [vmem:[%s1 + $0x350] sm:$0xff]
  %v134 = vld [vmem:[%s1 + $0x358] sm:$0xff]
  %v135 = vld [vmem:[%s1 + $0x360] sm:$0xff]
  %v136 = vld [vmem:[%s1 + $0x368] sm:$0xff]
  %v137 = vld [vmem:[%s1 + $0x370] sm:$0xff]
  %v138 = vld [vmem:[%s1 + $0x378] sm:$0xff]
  %v139 = vld [vmem:[%s1 + $0x380] sm:$0xff]
  %v140 = vld [vmem:[%s1 + $0x388] sm:$0xff]
  %v141 = vld [vmem:[%s1 + $0x390] sm:$0xff]
  %v142 = vld [vmem:[%s1 + $0x398] sm:$0xff]
  %v143 = vld [vmem:[%s1 + $0x3a0] sm:$0xff]
  %v144 = vld [vmem:[%s1 + $0x3a8] sm:$0xff]
  %v145 = vld [vmem:[%s1 + $0x3b0] sm:$0xff]
  %v146 = vld [vmem:[%s1 + $0x3b8] sm:$0xff]
  %v147 = vld [vmem:[%s1 + $0x3c0] sm:$0xff]
  %v148 = vld [vmem:[%s1 + $0x3c8] sm:$0xff]
  %v149 = vld [vmem:[%s1 + $0x3d0] sm:$0xff]
  %v150 = vld [vmem:[%s1 + $0x3d8] sm:$0xff]
  %v151 = vld [vmem:[%s1 + $0x3e0] sm:$0xff]
  %v152 = vld [vmem:[%s1 + $0x3e8] sm:$0xff]
  %v153 = vld [vmem:[%s1 + $0x3f0] sm:$0xff]
  %v154 = vld [vmem:[%s1 + $0x3f8] sm:$0xff]
  %v155 = vld [vmem:[%s1 + $0x400] sm:$0xff]
  %v156 = vld [vmem:[%s1 + $0x408] sm:$0xff]
  %v157 = vld [vmem:[%s1 + $0x410] sm:$0xff]
  %v158 = vld [vmem:[%s1 + $0x418] sm:$0xff]
  %v159 = vld [vmem:[%s1 + $0x420] sm:$0xff]
  %v160 = vld [vmem:[%s1 + $0x428] sm:$0xff]
  %v161 = vld [vmem:[%s1 + $0x430] sm:$0xff]
  %v162 = vld [vmem:[%s1 + $0x438] sm:$0xff]
  %v163 = vld [vmem:[%s1 + $0x440] sm:$0xff]
  %v164 = vld [vmem:[%s1 + $0x448] sm:$0xff]
  %v165 = vld [vmem:[%s1 + $0x450] sm:$0xff]
  %v166 = vld [vmem:[%s1 + $0x458] sm:$0xff]
  %v167 = vld [vmem:[%s1 + $0x460] sm:$0xff]
  %v168 = vld [vmem:[%s1 + $0x468] sm:$0xff]
  %v169 = vld [vmem:[%s1 + $0x470] sm:$0xff]
  %v170 = vld [vmem:[%s1 + $0x478] sm:$0xff]
  %v171 = vld [vmem:[%s1 + $0x480] sm:$0xff]
  %v172 = vld [vmem:[%s1 + $0x488] sm:$0xff]
  %v173 = vld [vmem:[%s1 + $0x490] sm:$0xff]
  %v174 = vld [vmem:[%s1 + $0x498] sm:$0xff]
  %v175 = vld [vmem:[%s1 + $0x4a0] sm:$0xff]
  %v176 = vld [vmem:[%s1 + $0x4a8] sm:$0xff]
  %v177 = vld [vmem:[%s1 + $0x4b0] sm:$0xff]
  %v178 = vld [vmem:[%s1 + $0x4b8] sm:$0xff]
  %v179 = vld [vmem:[%s1 + $0x4c0] sm:$0xff]
  %v180 = vld [vmem:[%s1 + $0x4c8] sm:$0xff]
  %v181 = vld [vmem:[%s1 + $0x4d0] sm:$0xff]
  %v182 = vld [vmem:[%s1 + $0x4d8] sm:$0xff]
  %v183 = vld [vmem:[%s1 + $0x4e0] sm:$0xff]
  %v184 = vld [vmem:[%s1 + $0x4e8] sm:$0xff]
  %v185 = vld [vmem:[%s1 + $0x4f0] sm:$0xff]
  %v186 = vld [vmem:[%s1 + $0x4f8] sm:$0xff]
  %v187 = vld [vmem:[%s1 + $0x500] sm:$0xff]
  %v188 = vld [vmem:[%s1 + $0x508] sm:$0xff]
  %v189 = vld [vmem:[%s1 + $0x510] sm:$0xff]
  %v190 = vld [vmem:[%s1 + $0x518] sm:$0xff]
  %v191 = vld [vmem:[%s1 + $0x520] sm:$0xff]
  %v192 = vld [vmem:[%s1 + $0x528] sm:$0xff]
  %v193 = vld [vmem:[%s1 + $0x530] sm:$0xff]
  %v194 = vld [vmem:[%s1 + $0x538] sm:$0xff]
  %v195 = vld [vmem:[%s1 + $0x540] sm:$0xff]
  %v196 = vld [vmem:[%s1 + $0x548] sm:$0xff]
  %v197 = vld [vmem:[%s1 + $0x550] sm:$0xff]
  %v198 = vld [vmem:[%s1 + $0x558] sm:$0xff]
  %v199 = vld [vmem:[%s1 + $0x560] sm:$0xff]
  %v200 = vld [vmem:[%s1 + $0x568] sm:$0xff]
  %v201 = vld [vmem:[%s1 + $0x570] sm:$0xff]
  %v202 = vld [vmem:[%s1 + $0x578] sm:$0xff]
  %v203 = vld [vmem:[%s1 + $0x580] sm:$0xff]
  %v204 = vld [vmem:[%s1 + $0x588] sm:$0xff]
  %v205 = vld [vmem:[%s1 + $0x590] sm:$0xff]
  %v206 = vld [vmem:[%s1 + $0x598] sm:$0xff]
  %v207 = vld [vmem:[%s1 + $0x5a0] sm:$0xff]
  %v208 = vld [vmem:[%s1 + $0x5a8] sm:$0xff]
  %v209 = vld [vmem:[%s1 + $0x5b0] sm:$0xff]
  %v210 = vld [vmem:[%s1 + $0x5b8] sm:$0xff]
  %v211 = vld [vmem:[%s1 + $0x5c0] sm:$0xff]
  %v212 = vld [vmem:[%s1 + $0x5c8] sm:$0xff]
  %v213 = vld [vmem:[%s1 + $0x5d0] sm:$0xff]
  %v214 = vld [vmem:[%s1 + $0x5d8] sm:$0xff]
  %v215 = vld [vmem:[%s1 + $0x5e0] sm:$0xff]
  %v216 = vld [vmem:[%s1 + $0x5e8] sm:$0xff]
  %v217 = vld [vmem:[%s1 + $0x5f0] sm:$0xff]
  %v218 = vld [vmem:[%s1 + $0x5f8] sm:$0xff]
  %v219 = vld [vmem:[%s1 + $0x600] sm:$0xff]
  %v220 = vld [vmem:[%s1 + $0x608] sm:$0xff]
  %v221 = vld [vmem:[%s1 + $0x610] sm:$0xff]
  %v222 = vld [vmem:[%s1 + $0x618] sm:$0xff]
  %v223 = vld [vmem:[%s1 + $0x620] sm:$0xff]
  %v224 = vld [vmem:[%s1 + $0x628] sm:$0xff]
  %v225 = vld [vmem:[%s1 + $0x630] sm:$0xff]
  %v226 = vld [vmem:[%s1 + $0x638] sm:$0xff]
  %v227 = vld [vmem:[%s1 + $0x640] sm:$0xff]
  %v228 = vld [vmem:[%s1 + $0x648] sm:$0xff]
  %v229 = vld [vmem:[%s1 + $0x650] sm:$0xff]
  %v230 = vld [vmem:[%s1 + $0x658] sm:$0xff]
  %v231 = vld [vmem:[%s1 + $0x660] sm:$0xff]
  %v232 = vld [vmem:[%s1 + $0x668] sm:$0xff]
  %v233 = vld [vmem:[%s1 + $0x670] sm:$0xff]
  %v234 = vld [vmem:[%s1 + $0x678] sm:$0xff]
  %v235 = vld [vmem:[%s1 + $0x680] sm:$0xff]
  %v236 = vld [vmem:[%s1 + $0x688] sm:$0xff]
  %v237 = vld [vmem:[%s1 + $0x690] sm:$0xff]
  %v238 = vld [vmem:[%s1 + $0x698] sm:$0xff]
  %v239 = vld [vmem:[%s1 + $0x6a0] sm:$0xff]
  %v240 = vld [vmem:[%s1 + $0x6a8] sm:$0xff]
  %v241 = vld [vmem:[%s1 + $0x6b0] sm:$0xff]
  %v242 = vld [vmem:[%s1 + $0x6b8] sm:$0xff]
  %v243 = vld [vmem:[%s1 + $0x6c0] sm:$0xff]
  %v244 = vld [vmem:[%s1 + $0x6c8] sm:$0xff]
  %v245 = vld [vmem:[%s1 + $0x6d0] sm:$0xff]
  %v246 = vld [vmem:[%s1 + $0x6d8] sm:$0xff]
  %v247 = vld [vmem:[%s1 + $0x6e0] sm:$0xff]
  %v248 = vld [vmem:[%s1 + $0x6e8] sm:$0xff]
  %v249 = vld [vmem:[%s1 + $0x6f0] sm:$0xff]
  %v250 = vld [vmem:[%s1 + $0x6f8] sm:$0xff]
  %v251 = vld [vmem:[%s1 + $0x700] sm:$0xff]
  %v252 = vld [vmem:[%s1 + $0x708] sm:$0xff]
  %v253 = vld [vmem:[%s1 + $0x710] sm:$0xff]
  %v254 = vld [vmem:[%s1 + $0x718] sm:$0xff]
  %v255 = vld [vmem:[%s1 + $0x720] sm:$0xff]
  %v256 = vld [vmem:[%s1 + $0x728] sm:$0xff]
  %v257 = vld [vmem:[%s1 + $0x730] sm:$0xff]
  %v258 = vld [vmem:[%s1 + $0x738] sm:$0xff]
  %v259 = vld [vmem:[%s1 + $0x740] sm:$0xff]
  %v260 = vld [vmem:[%s1 + $0x748] sm:$0xff]
  %v261 = vld [vmem:[%s1 + $0x750] sm:$0xff]
  %v262 = vld [vmem:[%s1 + $0x758] sm:$0xff]
  %v263 = vld [vmem:[%s1 + $0x760] sm:$0xff]
  %v264 = vld [vmem:[%s1 + $0x768] sm:$0xff]
  %v265 = vld [vmem:[%s1 + $0x770] sm:$0xff]
  %v266 = vld [vmem:[%s1 + $0x778] sm:$0xff]
  %v267 = vld [vmem:[%s1 + $0x780] sm:$0xff]
  %v268 = vld [vmem:[%s1 + $0x788] sm:$0xff]
  %v269 = vld [vmem:[%s1 + $0x790] sm:$0xff]
  %v270 = vld [vmem:[%s1 + $0x798] sm:$0xff]
  %v271 = vld [vmem:[%s1 + $0x7a0] sm:$0xff]
  %v272 = vld [vmem:[%s1 + $0x7a8] sm:$0xff]
  %v273 = vld [vmem:[%s1 + $0x7b0] sm:$0xff]
  %v274 = vld [vmem:[%s1 + $0x7b8] sm:$0xff]
  %v275 = vld [vmem:[%s1 + $0x7c0] sm:$0xff]
  %v276 = vld [vmem:[%s1 + $0x7c8] sm:$0xff]
  %v277 = vld [vmem:[%s1 + $0x7d0] sm:$0xff]
  %v278 = vld [vmem:[%s1 + $0x7d8] sm:$0xff]
  %v279 = vld [vmem:[%s1 + $0x7e0] sm:$0xff]
  %v280 = vld [vmem:[%s1 + $0x7e8] sm:$0xff]
  %v281 = vld [vmem:[%s1 + $0x7f0] sm:$0xff]
  %v282 = vld [vmem:[%s1 + $0x7f8] sm:$0xff]
  %v283 = vld [vmem:[%s1 + $0x800] sm:$0xff]
  %v284 = vld [vmem:[%s1 + $0x808] sm:$0xff]
  %v285 = vld [vmem:[%s1 + $0x810] sm:$0xff]
  %v286 = vld [vmem:[%s1 + $0x818] sm:$0xff]
  %v287 = vld [vmem:[%s1 + $0x820] sm:$0xff]
  %v288 = vld [vmem:[%s1 + $0x828] sm:$0xff]
  %v289 = vld [vmem:[%s1 + $0x830] sm:$0xff]
  %v290 = vld [vmem:[%s1 + $0x838] sm:$0xff]
  %v291 = vld [vmem:[%s1 + $0x840] sm:$0xff]
  %v292 = vld [vmem:[%s1 + $0x848] sm:$0xff]
  %v293 = vld [vmem:[%s1 + $0x850] sm:$0xff]
  %v294 = vld [vmem:[%s1 + $0x858] sm:$0xff]
  %v295 = vld [vmem:[%s1 + $0x860] sm:$0xff]
  %v296 = vld [vmem:[%s1 + $0x868] sm:$0xff]
  %v297 = vld [vmem:[%s1 + $0x870] sm:$0xff]
  %v298 = vld [vmem:[%s1 + $0x878] sm:$0xff]
  %v299 = vld [vmem:[%s1 + $0x880] sm:$0xff]
  %v300 = vld [vmem:[%s1 + $0x888] sm:$0xff]
  %v301 = vld [vmem:[%s1 + $0x890] sm:$0xff]
  %v302 = vld [vmem:[%s1 + $0x898] sm:$0xff]
  %v303 = vld [vmem:[%s1 + $0x8a0] sm:$0xff]
  %v304 = vld [vmem:[%s1 + $0x8a8] sm:$0xff]
  %v305 = vld [vmem:[%s1 + $0x8b0] sm:$0xff]
  %v306 = vld [vmem:[%s1 + $0x8b8] sm:$0xff]
  %v307 = vld [vmem:[%s1 + $0x8c0] sm:$0xff]
  %v308 = vld [vmem:[%s1 + $0x8c8] sm:$0xff]
  %v309 = vld [vmem:[%s1 + $0x8d0] sm:$0xff]
  %v310 = vld [vmem:[%s1 + $0x8d8] sm:$0xff]
  %v311 = vld [vmem:[%s1 + $0x8e0] sm:$0xff]
  %v312 = vld [vmem:[%s1 + $0x8e8] sm:$0xff]
  %v313 = vld [vmem:[%s1 + $0x8f0] sm:$0xff]
  %v314 = vld [vmem:[%s1 + $0x8f8] sm:$0xff]
  %v315 = vld [vmem:[%s1 + $0x900] sm:$0xff]
  %v316 = vld [vmem:[%s1 + $0x908] sm:$0xff]
  %v317 = vld [vmem:[%s1 + $0x910] sm:$0xff]
  %v318 = vld [vmem:[%s1 + $0x918] sm:$0xff]
  %v319 = vld [vmem:[%s1 + $0x920] sm:$0xff]
  %v320 = vld [vmem:[%s1 + $0x928] sm:$0xff]
  %v321 = vld [vmem:[%s1 + $0x930] sm:$0xff]
  %v322 = vld [vmem:[%s1 + $0x938] sm:$0xff]
  %v323 = vld [vmem:[%s1 + $0x940] sm:$0xff]
  %v324 = vld [vmem:[%s1 + $0x948] sm:$0xff]
  %v325 = vld [vmem:[%s1 + $0x950] sm:$0xff]
  %v326 = vld [vmem:[%s1 + $0x958] sm:$0xff]
  %v327 = vld [vmem:[%s1 + $0x960] sm:$0xff]
  %v328 = vld [vmem:[%s1 + $0x968] sm:$0xff]
  %v329 = vld [vmem:[%s1 + $0x970] sm:$0xff]
  %v330 = vld [vmem:[%s1 + $0x978] sm:$0xff]
  %v331 = vld [vmem:[%s1 + $0x980] sm:$0xff]
  %v332 = vld [vmem:[%s1 + $0x988] sm:$0xff]
  %v333 = vld [vmem:[%s1 + $0x990] sm:$0xff]
  %v334 = vld [vmem:[%s1 + $0x998] sm:$0xff]
  %v335 = vld [vmem:[%s1 + $0x9a0] sm:$0xff]
  %v336 = vld [vmem:[%s1 + $0x9a8] sm:$0xff]
  %v337 = vld [vmem:[%s1 + $0x9b0] sm:$0xff]
  %v338 = vld [vmem:[%s1 + $0x9b8] sm:$0xff]
  %v339 = vld [vmem:[%s1 + $0x9c0] sm:$0xff]
  %v340 = vld [vmem:[%s1 + $0x9c8] sm:$0xff]
  %v341 = vld [vmem:[%s1 + $0x9d0] sm:$0xff]
  %v342 = vld [vmem:[%s1 + $0x9d8] sm:$0xff]
  %v343 = vld [vmem:[%s1 + $0x9e0] sm:$0xff]
  %v344 = vld [vmem:[%s1 + $0x9e8] sm:$0xff]
  %v345 = vld [vmem:[%s1 + $0x9f0] sm:$0xff]
  %v346 = vld [vmem:[%s1 + $0x9f8] sm:$0xff]
  %v347 = vld [vmem:[%s1 + $0xa00] sm:$0xff]
  %v348 = vld [vmem:[%s1 + $0xa08] sm:$0xff]
  %v349 = vld [vmem:[%s1 + $0xa10] sm:$0xff]
  %v350 = vld [vmem:[%s1 + $0xa18] sm:$0xff]
  %v351 = vld [vmem:[%s1 + $0xa20] sm:$0xff]
  %v352 = vld [vmem:[%s1 + $0xa28] sm:$0xff]
  %v353 = vld [vmem:[%s1 + $0xa30] sm:$0xff]
  %v354 = vld [vmem:[%s1 + $0xa38] sm:$0xff]
  %v355 = vld [vmem:[%s1 + $0xa40] sm:$0xff]
  %v356 = vld [vmem:[%s1 + $0xa48] sm:$0xff]
  %v357 = vld [vmem:[%s1 + $0xa50] sm:$0xff]
  %v358 = vld [vmem:[%s1 + $0xa58] sm:$0xff]
  %v359 = vld [vmem:[%s1 + $0xa60] sm:$0xff]
  %v360 = vld [vmem:[%s1 + $0xa68] sm:$0xff]
  %v361 = vld [vmem:[%s1 + $0xa70] sm:$0xff]
  %v362 = vld [vmem:[%s1 + $0xa78] sm:$0xff]
  %v363 = vld [vmem:[%s1 + $0xa80] sm:$0xff]
  %v364 = vld [vmem:[%s1 + $0xa88] sm:$0xff]
  %v365 = vld [vmem:[%s1 + $0xa90] sm:$0xff]
  %v366 = vld [vmem:[%s1 + $0xa98] sm:$0xff]
  %v367 = vld [vmem:[%s1 + $0xaa0] sm:$0xff]
  %v368 = vld [vmem:[%s1 + $0xaa8] sm:$0xff]
  %v369 = vld [vmem:[%s1 + $0xab0] sm:$0xff]
  %v370 = vld [vmem:[%s1 + $0xab8] sm:$0xff]
  %v371 = vld [vmem:[%s1 + $0xac0] sm:$0xff]
  %v372 = vld [vmem:[%s1 + $0xac8] sm:$0xff]
  %v373 = vld [vmem:[%s1 + $0xad0] sm:$0xff]
  %v374 = vld [vmem:[%s1 + $0xad8] sm:$0xff]
  %v375 = vld [vmem:[%s1 + $0xae0] sm:$0xff]
  %v376 = vld [vmem:[%s1 + $0xae8] sm:$0xff]
  %v377 = vld [vmem:[%s1 + $0xaf0] sm:$0xff]
  %v378 = vld [vmem:[%s1 + $0xaf8] sm:$0xff]
  %v379 = vld [vmem:[%s1 + $0xb00] sm:$0xff]
  %v380 = vld [vmem:[%s1 + $0xb08] sm:$0xff]
  %v381 = vld [vmem:[%s1 + $0xb10] sm:$0xff]
  %v382 = vld [vmem:[%s1 + $0xb18] sm:$0xff]
  %v383 = vld [vmem:[%s1 + $0xb20] sm:$0xff]
  %v384 = vld [vmem:[%s1 + $0xb28] sm:$0xff]
  %v385 = vld [vmem:[%s1 + $0xb30] sm:$0xff]
  %v386 = vld [vmem:[%s1 + $0xb38] sm:$0xff]
  %v387 = vld [vmem:[%s1 + $0xb40] sm:$0xff]
  %v388 = vld [vmem:[%s1 + $0xb48] sm:$0xff]
  %v389 = vld [vmem:[%s1 + $0xb50] sm:$0xff]
  %v390 = vld [vmem:[%s1 + $0xb58] sm:$0xff]
  %v391 = vld [vmem:[%s1 + $0xb60] sm:$0xff]
  %v392 = vld [vmem:[%s1 + $0xb68] sm:$0xff]
  %v393 = vld [vmem:[%s1 + $0xb70] sm:$0xff]
  %v394 = vld [vmem:[%s1 + $0xb78] sm:$0xff]
  %v395 = vld [vmem:[%s1 + $0xb80] sm:$0xff]
  %v396 = vld [vmem:[%s1 + $0xb88] sm:$0xff]
  %v397 = vld [vmem:[%s1 + $0xb90] sm:$0xff]
  %v398 = vld [vmem:[%s1 + $0xb98] sm:$0xff]
  %v399 = vld [vmem:[%s1 + $0xba0] sm:$0xff]
  %v400 = vld [vmem:[%s1 + $0xba8] sm:$0xff]
  %v401 = vld [vmem:[%s1 + $0xbb0] sm:$0xff]
  %v402 = vld [vmem:[%s1 + $0xbb8] sm:$0xff]
  %v403 = vld [vmem:[%s1 + $0xbc0] sm:$0xff]
  %v404 = vld [vmem:[%s1 + $0xbc8] sm:$0xff]
  %v405 = vld [vmem:[%s1 + $0xbd0] sm:$0xff]
  %v406 = vld [vmem:[%s1 + $0xbd8] sm:$0xff]
  %v407 = vld [vmem:[%s1 + $0xbe0] sm:$0xff]
  %v408 = vld [vmem:[%s1 + $0xbe8] sm:$0xff]
  %v409 = vld [vmem:[%s1 + $0xbf0] sm:$0xff]
  %v410 = vld [vmem:[%s1 + $0xbf8] sm:$0xff]
  %v411 = vld [vmem:[%s1 + $0xc00] sm:$0xff]
  %v412 = vld [vmem:[%s1 + $0xc08] sm:$0xff]
  %v413 = vld [vmem:[%s1 + $0xc10] sm:$0xff]
  %v414 = vld [vmem:[%s1 + $0xc18] sm:$0xff]
  %v415 = vld [vmem:[%s1 + $0xc20] sm:$0xff]
  %v416 = vld [vmem:[%s1 + $0xc28] sm:$0xff]
  %v417 = vld [vmem:[%s1 + $0xc30] sm:$0xff]
  %v418 = vld [vmem:[%s1 + $0xc38] sm:$0xff]
  %v419 = vld [vmem:[%s1 + $0xc40] sm:$0xff]
  %v420 = vld [vmem:[%s1 + $0xc48] sm:$0xff]
  %v421 = vld [vmem:[%s1 + $0xc50] sm:$0xff]
  %v422 = vld [vmem:[%s1 + $0xc58] sm:$0xff]
  %v423 = vld [vmem:[%s1 + $0xc60] sm:$0xff]
  %v424 = vld [vmem:[%s1 + $0xc68] sm:$0xff]
  %v425 = vld [vmem:[%s1 + $0xc70] sm:$0xff]
  %v426 = vld [vmem:[%s1 + $0xc78] sm:$0xff]
  %v427 = vld [vmem:[%s1 + $0xc80] sm:$0xff]
  %v428 = vld [vmem:[%s1 + $0xc88] sm:$0xff]
  %v429 = vld [vmem:[%s1 + $0xc90] sm:$0xff]
  %v430 = vld [vmem:[%s1 + $0xc98] sm:$0xff]
  %v431 = vld [vmem:[%s1 + $0xca0] sm:$0xff]
  %v432 = vld [vmem:[%s1 + $0xca8] sm:$0xff]
  %v433 = vld [vmem:[%s1 + $0xcb0] sm:$0xff]
  %v434 = vld [vmem:[%s1 + $0xcb8] sm:$0xff]
  %v435 = vld [vmem:[%s1 + $0xcc0] sm:$0xff]
  %v436 = vld [vmem:[%s1 + $0xcc8] sm:$0xff]
  %v437 = vld [vmem:[%s1 + $0xcd0] sm:$0xff]
  %v438 = vld [vmem:[%s1 + $0xcd8] sm:$0xff]
  %v439 = vld [vmem:[%s1 + $0xce0] sm:$0xff]
  %v440 = vld [vmem:[%s1 + $0xce8] sm:$0xff]
  %v441 = vld [vmem:[%s1 + $0xcf0] sm:$0xff]
  %v442 = vld [vmem:[%s1 + $0xcf8] sm:$0xff]
  %v443 = vld [vmem:[%s1 + $0xd00] sm:$0xff]
  %v444 = vld [vmem:[%s1 + $0xd08] sm:$0xff]
  %v445 = vld [vmem:[%s1 + $0xd10] sm:$0xff]
  %v446 = vld [vmem:[%s1 + $0xd18] sm:$0xff]
  %v447 = vld [vmem:[%s1 + $0xd20] sm:$0xff]
  %v448 = vld [vmem:[%s1 + $0xd28] sm:$0xff]
  %v449 = vld [vmem:[%s1 + $0xd30] sm:$0xff]
  %v450 = vld [vmem:[%s1 + $0xd38] sm:$0xff]
  %v451 = vld [vmem:[%s1 + $0xd40] sm:$0xff]
  %v452 = vld [vmem:[%s1 + $0xd48] sm:$0xff]
  %v453 = vld [vmem:[%s1 + $0xd50] sm:$0xff]
  %v454 = vld [vmem:[%s1 + $0xd58] sm:$0xff]
  %v455 = vld [vmem:[%s1 + $0xd60] sm:$0xff]
  %v456 = vld [vmem:[%s1 + $0xd68] sm:$0xff]
  %v457 = vld [vmem:[%s1 + $0xd70] sm:$0xff]
  %v458 = vld [vmem:[%s1 + $0xd78] sm:$0xff]
  %v459 = vld [vmem:[%s1 + $0xd80] sm:$0xff]
  %v460 = vld [vmem:[%s1 + $0xd88] sm:$0xff]
  %v461 = vld [vmem:[%s1 + $0xd90] sm:$0xff]
  %v462 = vld [vmem:[%s1 + $0xd98] sm:$0xff]
  %v463 = vld [vmem:[%s1 + $0xda0] sm:$0xff]
  %v464 = vld [vmem:[%s1 + $0xda8] sm:$0xff]
  %v465 = vld [vmem:[%s1 + $0xdb0] sm:$0xff]
  %v466 = vld [vmem:[%s1 + $0xdb8] sm:$0xff]
  %v467 = vld [vmem:[%s1 + $0xdc0] sm:$0xff]
  %v468 = vld [vmem:[%s1 + $0xdc8] sm:$0xff]
  %v469 = vld [vmem:[%s1 + $0xdd0] sm:$0xff]
  %v470 = vld [vmem:[%s1 + $0xdd8] sm:$0xff]
  %v471 = vld [vmem:[%s1 + $0xde0] sm:$0xff]
  %v472 = vld [vmem:[%s1 + $0xde8] sm:$0xff]
  %v473 = vld [vmem:[%s1 + $0xdf0] sm:$0xff]
  %v474 = vld [vmem:[%s1 + $0xdf8] sm:$0xff]
  %v475 = vld [vmem:[%s1 + $0xe00] sm:$0xff]
  %v476 = vld [vmem:[%s1 + $0xe08] sm:$0xff]
  %v477 = vld [vmem:[%s1 + $0xe10] sm:$0xff]
  %v478 = vld [vmem:[%s1 + $0xe18] sm:$0xff]
  %v479 = vld [vmem:[%s1 + $0xe20] sm:$0xff]
  %v480 = vld [vmem:[%s1 + $0xe28] sm:$0xff]
  %v481 = vld [vmem:[%s1 + $0xe30] sm:$0xff]
  %v482 = vld [vmem:[%s1 + $0xe38] sm:$0xff]
  %v483 = vld [vmem:[%s1 + $0xe40] sm:$0xff]
  %v484 = vld [vmem:[%s1 + $0xe48] sm:$0xff]
  %v485 = vld [vmem:[%s1 + $0xe50] sm:$0xff]
  %v486 = vld [vmem:[%s1 + $0xe58] sm:$0xff]
  %v487 = vld [vmem:[%s1 + $0xe60] sm:$0xff]
  %v488 = vld [vmem:[%s1 + $0xe68] sm:$0xff]
  %v489 = vld [vmem:[%s1 + $0xe70] sm:$0xff]
  %v490 = vld [vmem:[%s1 + $0xe78] sm:$0xff]
  %v491 = vld [vmem:[%s1 + $0xe80] sm:$0xff]
  %v492 = vld [vmem:[%s1 + $0xe88] sm:$0xff]
  %v493 = vld [vmem:[%s1 + $0xe90] sm:$0xff]
  %v494 = vld [vmem:[%s1 + $0xe98] sm:$0xff]
  %v495 = vld [vmem:[%s1 + $0xea0] sm:$0xff]
  %v496 = vld [vmem:[%s1 + $0xea8] sm:$0xff]
  %v497 = vld [vmem:[%s1 + $0xeb0] sm:$0xff]
  %v498 = vld [vmem:[%s1 + $0xeb8] sm:$0xff]
  %v499 = vld [vmem:[%s1 + $0xec0] sm:$0xff]
  %v500 = vld [vmem:[%s1 + $0xec8] sm:$0xff]
  %v501 = vld [vmem:[%s1 + $0xed0] sm:$0xff]
  %v502 = vld [vmem:[%s1 + $0xed8] sm:$0xff]
  %v503 = vld [vmem:[%s1 + $0xee0] sm:$0xff]
  %v504 = vld [vmem:[%s1 + $0xee8] sm:$0xff]
  %v505 = vld [vmem:[%s1 + $0xef0] sm:$0xff]
  %v506 = vld [vmem:[%s1 + $0xef8] sm:$0xff]
  %v507 = vld [vmem:[%s1 + $0xf00] sm:$0xff]
  %v508 = vld [vmem:[%s1 + $0xf08] sm:$0xff]
  %v509 = vld [vmem:[%s1 + $0xf10] sm:$0xff]
  %v510 = vld [vmem:[%s1 + $0xf18] sm:$0xff]
  %v511 = vld [vmem:[%s1 + $0xf20] sm:$0xff]
  %v512 = vld [vmem:[%s1 + $0xf28] sm:$0xff]
  %v513 = vld [vmem:[%s1 + $0xf30] sm:$0xff]
  %v514 = vld [vmem:[%s1 + $0xf38] sm:$0xff]
  %v515 = vld [vmem:[%s1 + $0xf40] sm:$0xff]
  %v516 = vld [vmem:[%s1 + $0xf48] sm:$0xff]
  %v517 = vld [vmem:[%s1 + $0xf50] sm:$0xff]
  %v518 = vld [vmem:[%s1 + $0xf58] sm:$0xff]
  %v519 = vld [vmem:[%s1 + $0xf60] sm:$0xff]
  %v520 = vld [vmem:[%s1 + $0xf68] sm:$0xff]
  %v521 = vld [vmem:[%s1 + $0xf70] sm:$0xff]
  %v522 = vld [vmem:[%s1 + $0xf78] sm:$0xff]
  %v523 = vld [vmem:[%s1 + $0xf80] sm:$0xff]
  %v524 = vld [vmem:[%s1 + $0xf88] sm:$0xff]
  %v525 = vld [vmem:[%s1 + $0xf90] sm:$0xff]
  %v526 = vld [vmem:[%s1 + $0xf98] sm:$0xff]
  %v527 = vld [vmem:[%s1 + $0xfa0] sm:$0xff]
  %v528 = vld [vmem:[%s1 + $0xfa8] sm:$0xff]
  %v529 = vld [vmem:[%s1 + $0xfb0] sm:$0xff]
  %v530 = vld [vmem:[%s1 + $0xfb8] sm:$0xff]
  %v531 = vld [vmem:[%s1 + $0xfc0] sm:$0xff]
  %v532 = vld [vmem:[%s1 + $0xfc8] sm:$0xff]
  %v533 = vld [vmem:[%s1 + $0xfd0] sm:$0xff]
  %v534 = vld [vmem:[%s1 + $0xfd8] sm:$0xff]
  %v535 = vld [vmem:[%s1 + $0xfe0] sm:$0xff]
  %v536 = vld [vmem:[%s1 + $0xfe8] sm:$0xff]
  %v537 = vld [vmem:[%s1 + $0xff0] sm:$0xff]
  %v538 = vld [vmem:[%s1 + $0xff8] sm:$0xff]
  %v539 = vld [vmem:[%s1 + $0x1000] sm:$0xff]
  %v540 = vld [vmem:[%s1 + $0x1008] sm:$0xff]
  %v541 = vld [vmem:[%s1 + $0x1010] sm:$0xff]
  %v542 = vld [vmem:[%s1 + $0x1018] sm:$0xff]
  %v543 = vld [vmem:[%s1 + $0x1020] sm:$0xff]
  %v544 = vld [vmem:[%s1 + $0x1028] sm:$0xff]
  %v545 = vld [vmem:[%s1 + $0x1030] sm:$0xff]
  %v546 = vld [vmem:[%s1 + $0x1038] sm:$0xff]
  %v547 = vld [vmem:[%s1 + $0x1040] sm:$0xff]
  %v548 = vld [vmem:[%s1 + $0x1048] sm:$0xff]
  %v549 = vld [vmem:[%s1 + $0x1050] sm:$0xff]
  %v550 = vld [vmem:[%s1 + $0x1058] sm:$0xff]
  %v551 = vld [vmem:[%s1 + $0x1060] sm:$0xff]
  %v552 = vld [vmem:[%s1 + $0x1068] sm:$0xff]
  %v553 = vld [vmem:[%s1 + $0x1070] sm:$0xff]
  %v554 = vld [vmem:[%s1 + $0x1078] sm:$0xff]
  %v555 = vld [vmem:[%s1 + $0x1080] sm:$0xff]
  %v556 = vld [vmem:[%s1 + $0x1088] sm:$0xff]
  %v557 = vld [vmem:[%s1 + $0x1090] sm:$0xff]
  %v558 = vld [vmem:[%s1 + $0x1098] sm:$0xff]
  %v559 = vld [vmem:[%s1 + $0x10a0] sm:$0xff]
  %v560 = vld [vmem:[%s1 + $0x10a8] sm:$0xff]
  %v561 = vld [vmem:[%s1 + $0x10b0] sm:$0xff]
  %v562 = vld [vmem:[%s1 + $0x10b8] sm:$0xff]
  %v563 = vld [vmem:[%s1 + $0x10c0] sm:$0xff]
  %v564 = vld [vmem:[%s1 + $0x10c8] sm:$0xff]
  %v565 = vld [vmem:[%s1 + $0x10d0] sm:$0xff]
  %v566 = vld [vmem:[%s1 + $0x10d8] sm:$0xff]
  %v567 = vld [vmem:[%s1 + $0x10e0] sm:$0xff]
  %v568 = vld [vmem:[%s1 + $0x10e8] sm:$0xff]
  %v569 = vld [vmem:[%s1 + $0x10f0] sm:$0xff]
  %v570 = vld [vmem:[%s1 + $0x10f8] sm:$0xff]
  %v571 = vld [vmem:[%s1 + $0x1100] sm:$0xff]
  %v572 = vld [vmem:[%s1 + $0x1108] sm:$0xff]
  %v573 = vld [vmem:[%s1 + $0x1110] sm:$0xff]
  %v574 = vld [vmem:[%s1 + $0x1118] sm:$0xff]
  %v575 = vld [vmem:[%s1 + $0x1120] sm:$0xff]
  %v576 = vld [vmem:[%s1 + $0x1128] sm:$0xff]
  %v577 = vld [vmem:[%s1 + $0x1130] sm:$0xff]
  %v578 = vld [vmem:[%s1 + $0x1138] sm:$0xff]
  %v579 = vld [vmem:[%s1 + $0x1140] sm:$0xff]
  %v580 = vld [vmem:[%s1 + $0x1148] sm:$0xff]
  %v581 = vld [vmem:[%s1 + $0x1150] sm:$0xff]
  %v582 = vld [vmem:[%s1 + $0x1158] sm:$0xff]
  %v583 = vld [vmem:[%s1 + $0x1160] sm:$0xff]
  %v584 = vld [vmem:[%s1 + $0x1168] sm:$0xff]
  %v585 = vld [vmem:[%s1 + $0x1170] sm:$0xff]
  %v586 = vld [vmem:[%s1 + $0x1178] sm:$0xff]
  %v587 = vld [vmem:[%s1 + $0x1180] sm:$0xff]
  %v588 = vld [vmem:[%s1 + $0x1188] sm:$0xff]
  %v589 = vld [vmem:[%s1 + $0x1190] sm:$0xff]
  %v590 = vld [vmem:[%s1 + $0x1198] sm:$0xff]
  %v591 = vld [vmem:[%s1 + $0x11a0] sm:$0xff]
  %v592 = vld [vmem:[%s1 + $0x11a8] sm:$0xff]
  %v593 = vld [vmem:[%s1 + $0x11b0] sm:$0xff]
  %v594 = vld [vmem:[%s1 + $0x11b8] sm:$0xff]
  %v595 = vld [vmem:[%s1 + $0x11c0] sm:$0xff]
  %v596 = vld [vmem:[%s1 + $0x11c8] sm:$0xff]
  %v597 = vld [vmem:[%s1 + $0x11d0] sm:$0xff]
  %v598 = vld [vmem:[%s1 + $0x11d8] sm:$0xff]
  %v599 = vld [vmem:[%s1 + $0x11e0] sm:$0xff]
  %v600 = vld [vmem:[%s1 + $0x11e8] sm:$0xff]
  %v601 = vld [vmem:[%s1 + $0x11f0] sm:$0xff]
  %v602 = vld [vmem:[%s1 + $0x11f8] sm:$0xff]
  %v603 = vld [vmem:[%s1 + $0x1200] sm:$0xff]
  %v604 = vld [vmem:[%s1 + $0x1208] sm:$0xff]
  %v605 = vld [vmem:[%s1 + $0x1210] sm:$0xff]
  %v606 = vld [vmem:[%s1 + $0x1218] sm:$0xff]
  %v607 = vld [vmem:[%s1 + $0x1220] sm:$0xff]
  %v608 = vld [vmem:[%s1 + $0x1228] sm:$0xff]
  %v609 = vld [vmem:[%s1 + $0x1230] sm:$0xff]
  %v610 = vld [vmem:[%s1 + $0x1238] sm:$0xff]
  %v611 = vld [vmem:[%s1 + $0x1240] sm:$0xff]
  %v612 = vld [vmem:[%s1 + $0x1248] sm:$0xff]
  %v613 = vld [vmem:[%s1 + $0x1250] sm:$0xff]
  %v614 = vld [vmem:[%s1 + $0x1258] sm:$0xff]
  %v615 = vld [vmem:[%s1 + $0x1260] sm:$0xff]
  %v616 = vld [vmem:[%s1 + $0x1268] sm:$0xff]
  %v617 = vld [vmem:[%s1 + $0x1270] sm:$0xff]
  %v618 = vld [vmem:[%s1 + $0x1278] sm:$0xff]
  %v619 = vld [vmem:[%s1 + $0x1280] sm:$0xff]
  %v620 = vld [vmem:[%s1 + $0x1288] sm:$0xff]
  %v621 = vld [vmem:[%s1 + $0x1290] sm:$0xff]
  %v622 = vld [vmem:[%s1 + $0x1298] sm:$0xff]
  %v623 = vld [vmem:[%s1 + $0x12a0] sm:$0xff]
  %v624 = vld [vmem:[%s1 + $0x12a8] sm:$0xff]
  %v625 = vld [vmem:[%s1 + $0x12b0] sm:$0xff]
  %v626 = vld [vmem:[%s1 + $0x12b8] sm:$0xff]
  %v627 = vld [vmem:[%s1 + $0x12c0] sm:$0xff]
  %v628 = vld [vmem:[%s1 + $0x12c8] sm:$0xff]
  %v629 = vld [vmem:[%s1 + $0x12d0] sm:$0xff]
  %v630 = vld [vmem:[%s1 + $0x12d8] sm:$0xff]
  %v631 = vld [vmem:[%s1 + $0x12e0] sm:$0xff]
  %v632 = vld [vmem:[%s1 + $0x12e8] sm:$0xff]
  %v633 = vld [vmem:[%s1 + $0x12f0] sm:$0xff]
  %v634 = vld [vmem:[%s1 + $0x12f8] sm:$0xff]
  %v635 = vld [vmem:[%s1 + $0x1300] sm:$0xff]
  %v636 = vld [vmem:[%s1 + $0x1308] sm:$0xff]
  %v637 = vld [vmem:[%s1 + $0x1310] sm:$0xff]
  %v638 = vld [vmem:[%s1 + $0x1318] sm:$0xff]
  %v639 = vld [vmem:[%s1 + $0x1320] sm:$0xff]
  %v640 = vld [vmem:[%s1 + $0x1328] sm:$0xff]
  %v641 = vld [vmem:[%s1 + $0x1330] sm:$0xff]
  %v642 = vld [vmem:[%s1 + $0x1338] sm:$0xff]
  %v643 = vld [vmem:[%s1 + $0x1340] sm:$0xff]
  %v644 = vld [vmem:[%s1 + $0x1348] sm:$0xff]
  %v645 = vld [vmem:[%s1 + $0x1350] sm:$0xff]
  %v646 = vld [vmem:[%s1 + $0x1358] sm:$0xff]
  %v647 = vld [vmem:[%s1 + $0x1360] sm:$0xff]
  %v648 = vld [vmem:[%s1 + $0x1368] sm:$0xff]
  %v649 = vld [vmem:[%s1 + $0x1370] sm:$0xff]
  %v650 = vld [vmem:[%s1 + $0x1378] sm:$0xff]
  %v651 = vld [vmem:[%s1 + $0x1380] sm:$0xff]
  %v652 = vld [vmem:[%s1 + $0x1388] sm:$0xff]
  %v653 = vld [vmem:[%s1 + $0x1390] sm:$0xff]
  %v654 = vld [vmem:[%s1 + $0x1398] sm:$0xff]
  %v655 = vld [vmem:[%s1 + $0x13a0] sm:$0xff]
  %v656 = vld [vmem:[%s1 + $0x13a8] sm:$0xff]
  %v657 = vld [vmem:[%s1 + $0x13b0] sm:$0xff]
  %v658 = vld [vmem:[%s1 + $0x13b8] sm:$0xff]
  %v659 = vld [vmem:[%s1 + $0x13c0] sm:$0xff]
  %v660 = vld [vmem:[%s1 + $0x13c8] sm:$0xff]
  %v661 = vld [vmem:[%s1 + $0x13d0] sm:$0xff]
  %v662 = vld [vmem:[%s1 + $0x13d8] sm:$0xff]
  %v663 = vld [vmem:[%s1 + $0x13e0] sm:$0xff]
  %v664 = vld [vmem:[%s1 + $0x13e8] sm:$0xff]
  %v665 = vld [vmem:[%s1 + $0x13f0] sm:$0xff]
  %v666 = vld [vmem:[%s1 + $0x13f8] sm:$0xff]
  %v667 = vld [vmem:[%s1 + $0x1400] sm:$0xff]
  %v668 = vld [vmem:[%s1 + $0x1408] sm:$0xff]
  %v669 = vld [vmem:[%s1 + $0x1410] sm:$0xff]
  %v670 = vld [vmem:[%s1 + $0x1418] sm:$0xff]
  %v671 = vld [vmem:[%s1 + $0x1420] sm:$0xff]
  %v672 = vld [vmem:[%s1 + $0x1428] sm:$0xff]
  %v673 = vld [vmem:[%s1 + $0x1430] sm:$0xff]
  %v674 = vld [vmem:[%s1 + $0x1438] sm:$0xff]
  %v675 = vld [vmem:[%s1 + $0x1440] sm:$0xff]
  %v676 = vld [vmem:[%s1 + $0x1448] sm:$0xff]
  %v677 = vld [vmem:[%s1 + $0x1450] sm:$0xff]
  %v678 = vld [vmem:[%s1 + $0x1458] sm:$0xff]
  %v679 = vld [vmem:[%s1 + $0x1460] sm:$0xff]
  %v680 = vld [vmem:[%s1 + $0x1468] sm:$0xff]
  %v681 = vld [vmem:[%s1 + $0x1470] sm:$0xff]
  %v682 = vld [vmem:[%s1 + $0x1478] sm:$0xff]
  %v683 = vld [vmem:[%s1 + $0x1480] sm:$0xff]
  %v684 = vld [vmem:[%s1 + $0x1488] sm:$0xff]
  %v685 = vld [vmem:[%s1 + $0x1490] sm:$0xff]
  %v686 = vld [vmem:[%s1 + $0x1498] sm:$0xff]
  %v687 = vld [vmem:[%s1 + $0x14a0] sm:$0xff]
  %v688 = vld [vmem:[%s1 + $0x14a8] sm:$0xff]
  %v689 = vld [vmem:[%s1 + $0x14b0] sm:$0xff]
  %v690 = vld [vmem:[%s1 + $0x14b8] sm:$0xff]
  %v691 = vld [vmem:[%s1 + $0x14c0] sm:$0xff]
  %v692 = vld [vmem:[%s1 + $0x14c8] sm:$0xff]
  %v693 = vld [vmem:[%s1 + $0x14d0] sm:$0xff]
  %v694 = vld [vmem:[%s1 + $0x14d8] sm:$0xff]
  %v695 = vld [vmem:[%s1 + $0x14e0] sm:$0xff]
  %v696 = vld [vmem:[%s1 + $0x14e8] sm:$0xff]
  %v697 = vld [vmem:[%s1 + $0x14f0] sm:$0xff]
  %v698 = vld [vmem:[%s1 + $0x14f8] sm:$0xff]
  %v699 = vld [vmem:[%s1 + $0x1500] sm:$0xff]
  %v700 = vld [vmem:[%s1 + $0x1508] sm:$0xff]
  %v701 = vld [vmem:[%s1 + $0x1510] sm:$0xff]
  %v702 = vld [vmem:[%s1 + $0x1518] sm:$0xff]
  %v703 = vld [vmem:[%s1 + $0x1520] sm:$0xff]
  %v704 = vld [vmem:[%s1 + $0x1528] sm:$0xff]
  %v705 = vld [vmem:[%s1 + $0x1530] sm:$0xff]
  %v706 = vld [vmem:[%s1 + $0x1538] sm:$0xff]
  %v707 = vld [vmem:[%s1 + $0x1540] sm:$0xff]
  %v708 = vld [vmem:[%s1 + $0x1548] sm:$0xff]
  %v709 = vld [vmem:[%s1 + $0x1550] sm:$0xff]
  %v710 = vld [vmem:[%s1 + $0x1558] sm:$0xff]
  %v711 = vld [vmem:[%s1 + $0x1560] sm:$0xff]
  %v712 = vld [vmem:[%s1 + $0x1568] sm:$0xff]
  %v713 = vld [vmem:[%s1 + $0x1570] sm:$0xff]
  %v714 = vld [vmem:[%s1 + $0x1578] sm:$0xff]
  %v715 = vld [vmem:[%s1 + $0x1580] sm:$0xff]
  %v716 = vld [vmem:[%s1 + $0x1588] sm:$0xff]
  %v717 = vld [vmem:[%s1 + $0x1590] sm:$0xff]
  %v718 = vld [vmem:[%s1 + $0x1598] sm:$0xff]
  %v719 = vld [vmem:[%s1 + $0x15a0] sm:$0xff]
  %v720 = vld [vmem:[%s1 + $0x15a8] sm:$0xff]
  %v721 = vld [vmem:[%s1 + $0x15b0] sm:$0xff]
  %v722 = vld [vmem:[%s1 + $0x15b8] sm:$0xff]
  %v723 = vld [vmem:[%s1 + $0x15c0] sm:$0xff]
  %v724 = vld [vmem:[%s1 + $0x15c8] sm:$0xff]
  %v725 = vld [vmem:[%s1 + $0x15d0] sm:$0xff]
  %v726 = vld [vmem:[%s1 + $0x15d8] sm:$0xff]
  %v727 = vld [vmem:[%s1 + $0x15e0] sm:$0xff]
  %v728 = vld [vmem:[%s1 + $0x15e8] sm:$0xff]
  %v729 = vld [vmem:[%s1 + $0x15f0] sm:$0xff]
  %v730 = vld [vmem:[%s1 + $0x15f8] sm:$0xff]
  %v731 = vld [vmem:[%s1 + $0x1600] sm:$0xff]
  %v732 = vld [vmem:[%s1 + $0x1608] sm:$0xff]
  %v733 = vld [vmem:[%s1 + $0x1610] sm:$0xff]
  %v734 = vld [vmem:[%s1 + $0x1618] sm:$0xff]
  %v735 = vld [vmem:[%s1 + $0x1620] sm:$0xff]
  %v736 = vld [vmem:[%s1 + $0x1628] sm:$0xff]
  %v737 = vld [vmem:[%s1 + $0x1630] sm:$0xff]
  %v738 = vld [vmem:[%s1 + $0x1638] sm:$0xff]
  %v739 = vld [vmem:[%s1 + $0x1640] sm:$0xff]
  %v740 = vld [vmem:[%s1 + $0x1648] sm:$0xff]
  %v741 = vld [vmem:[%s1 + $0x1650] sm:$0xff]
  %v742 = vld [vmem:[%s1 + $0x1658] sm:$0xff]
  %v743 = vld [vmem:[%s1 + $0x1660] sm:$0xff]
  %v744 = vld [vmem:[%s1 + $0x1668] sm:$0xff]
  %v745 = vld [vmem:[%s1 + $0x1670] sm:$0xff]
  %v746 = vld [vmem:[%s1 + $0x1678] sm:$0xff]
  %v747 = vld [vmem:[%s1 + $0x1680] sm:$0xff]
  %v748 = vld [vmem:[%s1 + $0x1688] sm:$0xff]
  %v749 = vld [vmem:[%s1 + $0x1690] sm:$0xff]
  %v750 = vld [vmem:[%s1 + $0x1698] sm:$0xff]
  %v751 = vld [vmem:[%s1 + $0x16a0] sm:$0xff]
  %v752 = vld [vmem:[%s1 + $0x16a8] sm:$0xff]
  %v753 = vld [vmem:[%s1 + $0x16b0] sm:$0xff]
  %v754 = vld [vmem:[%s1 + $0x16b8] sm:$0xff]
  %v755 = vld [vmem:[%s1 + $0x16c0] sm:$0xff]
  %v756 = vld [vmem:[%s1 + $0x16c8] sm:$0xff]
  %v757 = vld [vmem:[%s1 + $0x16d0] sm:$0xff]
  %v758 = vld [vmem:[%s1 + $0x16d8] sm:$0xff]
  %v759 = vld [vmem:[%s1 + $0x16e0] sm:$0xff]
  %v760 = vld [vmem:[%s1 + $0x16e8] sm:$0xff]
  %v761 = vld [vmem:[%s1 + $0x16f0] sm:$0xff]
  %v762 = vld [vmem:[%s1 + $0x16f8] sm:$0xff]
  %v763 = vld [vmem:[%s1 + $0x1700] sm:$0xff]
  %v764 = vld [vmem:[%s1 + $0x1708] sm:$0xff]
  %v765 = vld [vmem:[%s1 + $0x1710] sm:$0xff]
  %v766 = vld [vmem:[%s1 + $0x1718] sm:$0xff]
  %v767 = vld [vmem:[%s1 + $0x1720] sm:$0xff]
  %v768 = vld [vmem:[%s1 + $0x1728] sm:$0xff]
  %v769 = vld [vmem:[%s1 + $0x1730] sm:$0xff]
  %v770 = vld [vmem:[%s1 + $0x1738] sm:$0xff]
  %v771 = vld [vmem:[%s1 + $0x1740] sm:$0xff]
  %v772 = vld [vmem:[%s1 + $0x1748] sm:$0xff]
  %v773 = vld [vmem:[%s1 + $0x1750] sm:$0xff]
  %v774 = vld [vmem:[%s1 + $0x1758] sm:$0xff]
  %v775 = vld [vmem:[%s1 + $0x1760] sm:$0xff]
  %v776 = vld [vmem:[%s1 + $0x1768] sm:$0xff]
  %v777 = vld [vmem:[%s1 + $0x1770] sm:$0xff]
  %v778 = vld [vmem:[%s1 + $0x1778] sm:$0xff]
  %v779 = vld [vmem:[%s1 + $0x1780] sm:$0xff]
  %v780 = vld [vmem:[%s1 + $0x1788] sm:$0xff]
  %v781 = vld [vmem:[%s1 + $0x1790] sm:$0xff]
  %v782 = vld [vmem:[%s1 + $0x1798] sm:$0xff]
  %v783 = vld [vmem:[%s1 + $0x17a0] sm:$0xff]
  %v784 = vld [vmem:[%s1 + $0x17a8] sm:$0xff]
  %v785 = vld [vmem:[%s1 + $0x17b0] sm:$0xff]
  %v786 = vld [vmem:[%s1 + $0x17b8] sm:$0xff]
  %v787 = vld [vmem:[%s1 + $0x17c0] sm:$0xff]
  %v788 = vld [vmem:[%s1 + $0x17c8] sm:$0xff]
  %v789 = vld [vmem:[%s1 + $0x17d0] sm:$0xff]
  %v790 = vld [vmem:[%s1 + $0x17d8] sm:$0xff]
  %v791 = vld [vmem:[%s1 + $0x17e0] sm:$0xff]
  %v792 = vld [vmem:[%s1 + $0x17e8] sm:$0xff]
  %v793 = vld [vmem:[%s1 + $0x17f0] sm:$0xff]
  %v794 = vld [vmem:[%s1 + $0x17f8] sm:$0xff]
  %v795 = vld [vmem:[%s1 + $0x1800] sm:$0xff]
  %v796 = vld [vmem:[%s1 + $0x1808] sm:$0xff]
  %v797 = vld [vmem:[%s1 + $0x1810] sm:$0xff]
  %v798 = vld [vmem:[%s1 + $0x1818] sm:$0xff]
  %v799 = vld [vmem:[%s1 + $0x1820] sm:$0xff]
  %v800 = vld [vmem:[%s1 + $0x1828] sm:$0xff]
  %v801 = vld [vmem:[%s1 + $0x1830] sm:$0xff]
  %v802 = vld [vmem:[%s1 + $0x1838] sm:$0xff]
  %v803 = vld [vmem:[%s1 + $0x1840] sm:$0xff]
  %v804 = vld [vmem:[%s1 + $0x1848] sm:$0xff]
  %v805 = vld [vmem:[%s1 + $0x1850] sm:$0xff]
  %v806 = vld [vmem:[%s1 + $0x1858] sm:$0xff]
  %v807 = vld [vmem:[%s1 + $0x1860] sm:$0xff]
  %v808 = vld [vmem:[%s1 + $0x1868] sm:$0xff]
  %v809 = vld [vmem:[%s1 + $0x1870] sm:$0xff]
  %v810 = vld [vmem:[%s1 + $0x1878] sm:$0xff]
  %v811 = vld [vmem:[%s2] sm:$0xf]
  %v813 = vperm.slane %v811, 0
  %v814 = vperm.slane %v811, 1
  %v815 = vperm.slane %v811, 2
  %v816 = vperm.slane %v811, 3
  %822 = vst [vmem:[#allocation1] ss:$9 sm:$0xff] %v23
  %v823 = vld [vmem:[#allocation1] sm:$0xff]
  %v824 = vld [vmem:[#allocation1 + $0x9] sm:$0xff]
  %v825 = vld [vmem:[#allocation1 + $0x12] sm:$0xff]
  %v826 = vld [vmem:[#allocation1 + $0x1b] sm:$0xff]
  %v827 = vld [vmem:[#allocation1 + $0x24] sm:$0xff]
  %v828 = vld [vmem:[#allocation1 + $0x2d] sm:$0xff]
  %v829 = vld [vmem:[#allocation1 + $0x36] sm:$0xff]
  %v830 = vld [vmem:[#allocation1 + $0x3f] sm:$0xff]
  %832 = vst [vmem:[#allocation1] ss:$9 sm:$0xff] %v24
  %v833 = vld [vmem:[#allocation1] sm:$0xff]
  %v834 = vld [vmem:[#allocation1 + $0x9] sm:$0xff]
  %v835 = vld [vmem:[#allocation1 + $0x12] sm:$0xff]
  %v836 = vld [vmem:[#allocation1 + $0x1b] sm:$0xff]
  %v837 = vld [vmem:[#allocation1 + $0x24] sm:$0xff]
  %v838 = vld [vmem:[#allocation1 + $0x2d] sm:$0xff]
  %v839 = vld [vmem:[#allocation1 + $0x36] sm:$0xff]
  %v840 = vld [vmem:[#allocation1 + $0x3f] sm:$0xff]
  %842 = vst [vmem:[#allocation1] ss:$9 sm:$0xff] %v25
  %v843 = vld [vmem:[#allocation1] sm:$0xff]
  %v844 = vld [vmem:[#allocation1 + $0x9] sm:$0xff]
  %v845 = vld [vmem:[#allocation1 + $0x12] sm:$0xff]
  %v846 = vld [vmem:[#allocation1 + $0x1b] sm:$0xff]
  %v847 = vld [vmem:[#allocation1 + $0x24] sm:$0xff]
  %v848 = vld [vmem:[#allocation1 + $0x2d] sm:$0xff]
  %v849 = vld [vmem:[#allocation1 + $0x36] sm:$0xff]
  %v850 = vld [vmem:[#allocation1 + $0x3f] sm:$0xff]
  %852 = vst [vmem:[#allocation1] ss:$9 sm:$0xff] %v26
  %v853 = vld [vmem:[#allocation1] sm:$0xff]
  %v1662 = vunpack.c.l.b16 %v27
  %v1663 = vunpack.c.h.b16 %v27
  %v1664 = vunpack.c.l.b16 %v28
  %v1665 = vunpack.c.h.b16 %v28
  %v1666 = vunpack.c.l.b16 %v29
  %v1667 = vunpack.c.h.b16 %v29
  %v1668 = vunpack.c.l.b16 %v30
  %v1669 = vunpack.c.h.b16 %v30
  %v1670 = vunpack.c.l.b16 %v31
  %v1671 = vunpack.c.h.b16 %v31
  %v1672 = vunpack.c.l.b16 %v32
  %v1673 = vunpack.c.h.b16 %v32
  %v1674 = vunpack.c.l.b16 %v33
  %v1675 = vunpack.c.h.b16 %v33
  %v1676 = vunpack.c.l.b16 %v34
  %v1677 = vunpack.c.h.b16 %v34
  %v1678 = vunpack.c.l.b16 %v35
  %v1679 = vunpack.c.h.b16 %v35
  %v1680 = vunpack.c.l.b16 %v36
  %v1681 = vunpack.c.h.b16 %v36
  %v1682 = vunpack.c.l.b16 %v37
  %v1683 = vunpack.c.h.b16 %v37
  %v1684 = vunpack.c.l.b16 %v38
  %v1685 = vunpack.c.h.b16 %v38
  %v1686 = vunpack.c.l.b16 %v39
  %v1687 = vunpack.c.h.b16 %v39
  %v1688 = vunpack.c.l.b16 %v40
  %v1689 = vunpack.c.h.b16 %v40
  %v1690 = vunpack.c.l.b16 %v41
  %v1691 = vunpack.c.h.b16 %v41
  %v1692 = vunpack.c.l.b16 %v42
  %v1693 = vunpack.c.h.b16 %v42
  %v1694 = vunpack.c.l.b16 %v43
  %v1695 = vunpack.c.h.b16 %v43
  %v1696 = vunpack.c.l.b16 %v44
  %v1697 = vunpack.c.h.b16 %v44
  %v1698 = vunpack.c.l.b16 %v45
  %v1699 = vunpack.c.h.b16 %v45
  %v1700 = vunpack.c.l.b16 %v46
  %v1701 = vunpack.c.h.b16 %v46
  %v1702 = vunpack.c.l.b16 %v47
  %v1703 = vunpack.c.h.b16 %v47
  %v1704 = vunpack.c.l.b16 %v48
  %v1705 = vunpack.c.h.b16 %v48
  %v1706 = vunpack.c.l.b16 %v49
  %v1707 = vunpack.c.h.b16 %v49
  %v1708 = vunpack.c.l.b16 %v50
  %v1709 = vunpack.c.h.b16 %v50
  %v1710 = vunpack.c.l.b16 %v51
  %v1711 = vunpack.c.h.b16 %v51
  %v1712 = vunpack.c.l.b16 %v52
  %v1713 = vunpack.c.h.b16 %v52
  %v1714 = vunpack.c.l.b16 %v53
  %v1715 = vunpack.c.h.b16 %v53
  %v1716 = vunpack.c.l.b16 %v54
  %v1717 = vunpack.c.h.b16 %v54
  %v1718 = vunpack.c.l.b16 %v55
  %v1719 = vunpack.c.h.b16 %v55
  %v1720 = vunpack.c.l.b16 %v56
  %v1721 = vunpack.c.h.b16 %v56
  %v1722 = vunpack.c.l.b16 %v57
  %v1723 = vunpack.c.h.b16 %v57
  %v1724 = vunpack.c.l.b16 %v58
  %v1725 = vunpack.c.h.b16 %v58
  %v1726 = vunpack.c.l.b16 %v59
  %v1727 = vunpack.c.h.b16 %v59
  %v1728 = vunpack.c.l.b16 %v60
  %v1729 = vunpack.c.h.b16 %v60
  %v1730 = vunpack.c.l.b16 %v61
  %v1731 = vunpack.c.h.b16 %v61
  %v1732 = vunpack.c.l.b16 %v62
  %v1733 = vunpack.c.h.b16 %v62
  %v1734 = vunpack.c.l.b16 %v63
  %v1735 = vunpack.c.h.b16 %v63
  %v1736 = vunpack.c.l.b16 %v64
  %v1737 = vunpack.c.h.b16 %v64
  %v1738 = vunpack.c.l.b16 %v65
  %v1739 = vunpack.c.h.b16 %v65
  %v1740 = vunpack.c.l.b16 %v66
  %v1741 = vunpack.c.h.b16 %v66
  %v1742 = vunpack.c.l.b16 %v67
  %v1743 = vunpack.c.h.b16 %v67
  %v1744 = vunpack.c.l.b16 %v68
  %v1745 = vunpack.c.h.b16 %v68
  %v1746 = vunpack.c.l.b16 %v69
  %v1747 = vunpack.c.h.b16 %v69
  %v1748 = vunpack.c.l.b16 %v70
  %v1749 = vunpack.c.h.b16 %v70
  %v1750 = vunpack.c.l.b16 %v71
  %v1751 = vunpack.c.h.b16 %v71
  %v1752 = vunpack.c.l.b16 %v72
  %v1753 = vunpack.c.h.b16 %v72
  %v1754 = vunpack.c.l.b16 %v73
  %v1755 = vunpack.c.h.b16 %v73
  %v1756 = vunpack.c.l.b16 %v74
  %v1757 = vunpack.c.h.b16 %v74
  %v1758 = vunpack.c.l.b16 %v75
  %v1759 = vunpack.c.h.b16 %v75
  %v1760 = vunpack.c.l.b16 %v76
  %v1761 = vunpack.c.h.b16 %v76
  %v1762 = vunpack.c.l.b16 %v77
  %v1763 = vunpack.c.h.b16 %v77
  %v1764 = vunpack.c.l.b16 %v78
  %v1765 = vunpack.c.h.b16 %v78
  %v1766 = vunpack.c.l.b16 %v79
  %v1767 = vunpack.c.h.b16 %v79
  %v1768 = vunpack.c.l.b16 %v80
  %v1769 = vunpack.c.h.b16 %v80
  %v1770 = vunpack.c.l.b16 %v81
  %v1771 = vunpack.c.h.b16 %v81
  %v1772 = vunpack.c.l.b16 %v82
  %v1773 = vunpack.c.h.b16 %v82
  %v1774 = vunpack.c.l.b16 %v83
  %v1775 = vunpack.c.h.b16 %v83
  %v1776 = vunpack.c.l.b16 %v84
  %v1777 = vunpack.c.h.b16 %v84
  %v1778 = vunpack.c.l.b16 %v85
  %v1779 = vunpack.c.h.b16 %v85
  %v1780 = vunpack.c.l.b16 %v86
  %v1781 = vunpack.c.h.b16 %v86
  %v1782 = vunpack.c.l.b16 %v87
  %v1783 = vunpack.c.h.b16 %v87
  %v1784 = vunpack.c.l.b16 %v88
  %v1785 = vunpack.c.h.b16 %v88
  %v1786 = vunpack.c.l.b16 %v89
  %v1787 = vunpack.c.h.b16 %v89
  %v1788 = vunpack.c.l.b16 %v90
  %v1789 = vunpack.c.h.b16 %v90
  %v1790 = vunpack.c.l.b16 %v91
  %v1791 = vunpack.c.h.b16 %v91
  %v1792 = vunpack.c.l.b16 %v92
  %v1793 = vunpack.c.h.b16 %v92
  %v1794 = vunpack.c.l.b16 %v93
  %v1795 = vunpack.c.h.b16 %v93
  %v1796 = vunpack.c.l.b16 %v94
  %v1797 = vunpack.c.h.b16 %v94
  %v1798 = vunpack.c.l.b16 %v95
  %v1799 = vunpack.c.h.b16 %v95
  %v1800 = vunpack.c.l.b16 %v96
  %v1801 = vunpack.c.h.b16 %v96
  %v1802 = vunpack.c.l.b16 %v97
  %v1803 = vunpack.c.h.b16 %v97
  %v1804 = vunpack.c.l.b16 %v98
  %v1805 = vunpack.c.h.b16 %v98
  %v1806 = vunpack.c.l.b16 %v99
  %v1807 = vunpack.c.h.b16 %v99
  %v1808 = vunpack.c.l.b16 %v100
  %v1809 = vunpack.c.h.b16 %v100
  %v1810 = vunpack.c.l.b16 %v101
  %v1811 = vunpack.c.h.b16 %v101
  %v1812 = vunpack.c.l.b16 %v102
  %v1813 = vunpack.c.h.b16 %v102
  %v1814 = vunpack.c.l.b16 %v103
  %v1815 = vunpack.c.h.b16 %v103
  %v1816 = vunpack.c.l.b16 %v104
  %v1817 = vunpack.c.h.b16 %v104
  %v1818 = vunpack.c.l.b16 %v105
  %v1819 = vunpack.c.h.b16 %v105
  %v1820 = vunpack.c.l.b16 %v106
  %v1821 = vunpack.c.h.b16 %v106
  %v1822 = vunpack.c.l.b16 %v107
  %v1823 = vunpack.c.h.b16 %v107
  %v1824 = vunpack.c.l.b16 %v108
  %v1825 = vunpack.c.h.b16 %v108
  %v1826 = vunpack.c.l.b16 %v109
  %v1827 = vunpack.c.h.b16 %v109
  %v1828 = vunpack.c.l.b16 %v110
  %v1829 = vunpack.c.h.b16 %v110
  %v1830 = vunpack.c.l.b16 %v111
  %v1831 = vunpack.c.h.b16 %v111
  %v1832 = vunpack.c.l.b16 %v112
  %v1833 = vunpack.c.h.b16 %v112
  %v1834 = vunpack.c.l.b16 %v113
  %v1835 = vunpack.c.h.b16 %v113
  %v1836 = vunpack.c.l.b16 %v114
  %v1837 = vunpack.c.h.b16 %v114
  %v1838 = vunpack.c.l.b16 %v115
  %v1839 = vunpack.c.h.b16 %v115
  %v1840 = vunpack.c.l.b16 %v116
  %v1841 = vunpack.c.h.b16 %v116
  %v1842 = vunpack.c.l.b16 %v117
  %v1843 = vunpack.c.h.b16 %v117
  %v1844 = vunpack.c.l.b16 %v118
  %v1845 = vunpack.c.h.b16 %v118
  %v1846 = vunpack.c.l.b16 %v119
  %v1847 = vunpack.c.h.b16 %v119
  %v1848 = vunpack.c.l.b16 %v120
  %v1849 = vunpack.c.h.b16 %v120
  %v1850 = vunpack.c.l.b16 %v121
  %v1851 = vunpack.c.h.b16 %v121
  %v1852 = vunpack.c.l.b16 %v122
  %v1853 = vunpack.c.h.b16 %v122
  %v1854 = vunpack.c.l.b16 %v123
  %v1855 = vunpack.c.h.b16 %v123
  %v1856 = vunpack.c.l.b16 %v124
  %v1857 = vunpack.c.h.b16 %v124
  %v1858 = vunpack.c.l.b16 %v125
  %v1859 = vunpack.c.h.b16 %v125
  %v1860 = vunpack.c.l.b16 %v126
  %v1861 = vunpack.c.h.b16 %v126
  %v1862 = vunpack.c.l.b16 %v127
  %v1863 = vunpack.c.h.b16 %v127
  %v1864 = vunpack.c.l.b16 %v128
  %v1865 = vunpack.c.h.b16 %v128
  %v1866 = vunpack.c.l.b16 %v129
  %v1867 = vunpack.c.h.b16 %v129
  %v1868 = vunpack.c.l.b16 %v130
  %v1869 = vunpack.c.h.b16 %v130
  %v1870 = vunpack.c.l.b16 %v131
  %v1871 = vunpack.c.h.b16 %v131
  %v1872 = vunpack.c.l.b16 %v132
  %v1873 = vunpack.c.h.b16 %v132
  %v1874 = vunpack.c.l.b16 %v133
  %v1875 = vunpack.c.h.b16 %v133
  %v1876 = vunpack.c.l.b16 %v134
  %v1877 = vunpack.c.h.b16 %v134
  %v1878 = vunpack.c.l.b16 %v135
  %v1879 = vunpack.c.h.b16 %v135
  %v1880 = vunpack.c.l.b16 %v136
  %v1881 = vunpack.c.h.b16 %v136
  %v1882 = vunpack.c.l.b16 %v137
  %v1883 = vunpack.c.h.b16 %v137
  %v1884 = vunpack.c.l.b16 %v138
  %v1885 = vunpack.c.h.b16 %v138
  %v1886 = vunpack.c.l.b16 %v139
  %v1887 = vunpack.c.h.b16 %v139
  %v1888 = vunpack.c.l.b16 %v140
  %v1889 = vunpack.c.h.b16 %v140
  %v1890 = vunpack.c.l.b16 %v141
  %v1891 = vunpack.c.h.b16 %v141
  %v1892 = vunpack.c.l.b16 %v142
  %v1893 = vunpack.c.h.b16 %v142
  %v1894 = vunpack.c.l.b16 %v143
  %v1895 = vunpack.c.h.b16 %v143
  %v1896 = vunpack.c.l.b16 %v144
  %v1897 = vunpack.c.h.b16 %v144
  %v1898 = vunpack.c.l.b16 %v145
  %v1899 = vunpack.c.h.b16 %v145
  %v1900 = vunpack.c.l.b16 %v146
  %v1901 = vunpack.c.h.b16 %v146
  %v1902 = vunpack.c.l.b16 %v147
  %v1903 = vunpack.c.h.b16 %v147
  %v1904 = vunpack.c.l.b16 %v148
  %v1905 = vunpack.c.h.b16 %v148
  %v1906 = vunpack.c.l.b16 %v149
  %v1907 = vunpack.c.h.b16 %v149
  %v1908 = vunpack.c.l.b16 %v150
  %v1909 = vunpack.c.h.b16 %v150
  %v1910 = vunpack.c.l.b16 %v151
  %v1911 = vunpack.c.h.b16 %v151
  %v1912 = vunpack.c.l.b16 %v152
  %v1913 = vunpack.c.h.b16 %v152
  %v1914 = vunpack.c.l.b16 %v153
  %v1915 = vunpack.c.h.b16 %v153
  %v1916 = vunpack.c.l.b16 %v154
  %v1917 = vunpack.c.h.b16 %v154
  %v1918 = vunpack.c.l.b16 %v155
  %v1919 = vunpack.c.h.b16 %v155
  %v1920 = vunpack.c.l.b16 %v156
  %v1921 = vunpack.c.h.b16 %v156
  %v1922 = vunpack.c.l.b16 %v157
  %v1923 = vunpack.c.h.b16 %v157
  %v1924 = vunpack.c.l.b16 %v158
  %v1925 = vunpack.c.h.b16 %v158
  %v1926 = vunpack.c.l.b16 %v159
  %v1927 = vunpack.c.h.b16 %v159
  %v1928 = vunpack.c.l.b16 %v160
  %v1929 = vunpack.c.h.b16 %v160
  %v1930 = vunpack.c.l.b16 %v161
  %v1931 = vunpack.c.h.b16 %v161
  %v1932 = vunpack.c.l.b16 %v162
  %v1933 = vunpack.c.h.b16 %v162
  %v1934 = vunpack.c.l.b16 %v163
  %v1935 = vunpack.c.h.b16 %v163
  %v1936 = vunpack.c.l.b16 %v164
  %v1937 = vunpack.c.h.b16 %v164
  %v1938 = vunpack.c.l.b16 %v165
  %v1939 = vunpack.c.h.b16 %v165
  %v1940 = vunpack.c.l.b16 %v166
  %v1941 = vunpack.c.h.b16 %v166
  %v1942 = vunpack.c.l.b16 %v167
  %v1943 = vunpack.c.h.b16 %v167
  %v1944 = vunpack.c.l.b16 %v168
  %v1945 = vunpack.c.h.b16 %v168
  %v1946 = vunpack.c.l.b16 %v169
  %v1947 = vunpack.c.h.b16 %v169
  %v1948 = vunpack.c.l.b16 %v170
  %v1949 = vunpack.c.h.b16 %v170
  %v1950 = vunpack.c.l.b16 %v171
  %v1951 = vunpack.c.h.b16 %v171
  %v1952 = vunpack.c.l.b16 %v172
  %v1953 = vunpack.c.h.b16 %v172
  %v1954 = vunpack.c.l.b16 %v173
  %v1955 = vunpack.c.h.b16 %v173
  %v1956 = vunpack.c.l.b16 %v174
  %v1957 = vunpack.c.h.b16 %v174
  %v1958 = vunpack.c.l.b16 %v175
  %v1959 = vunpack.c.h.b16 %v175
  %v1960 = vunpack.c.l.b16 %v176
  %v1961 = vunpack.c.h.b16 %v176
  %v1962 = vunpack.c.l.b16 %v177
  %v1963 = vunpack.c.h.b16 %v177
  %v1964 = vunpack.c.l.b16 %v178
  %v1965 = vunpack.c.h.b16 %v178
  %v1966 = vunpack.c.l.b16 %v179
  %v1967 = vunpack.c.h.b16 %v179
  %v1968 = vunpack.c.l.b16 %v180
  %v1969 = vunpack.c.h.b16 %v180
  %v1970 = vunpack.c.l.b16 %v181
  %v1971 = vunpack.c.h.b16 %v181
  %v1972 = vunpack.c.l.b16 %v182
  %v1973 = vunpack.c.h.b16 %v182
  %v1974 = vunpack.c.l.b16 %v183
  %v1975 = vunpack.c.h.b16 %v183
  %v1976 = vunpack.c.l.b16 %v184
  %v1977 = vunpack.c.h.b16 %v184
  %v1978 = vunpack.c.l.b16 %v185
  %v1979 = vunpack.c.h.b16 %v185
  %v1980 = vunpack.c.l.b16 %v186
  %v1981 = vunpack.c.h.b16 %v186
  %v1982 = vunpack.c.l.b16 %v187
  %v1983 = vunpack.c.h.b16 %v187
  %v1984 = vunpack.c.l.b16 %v188
  %v1985 = vunpack.c.h.b16 %v188
  %v1986 = vunpack.c.l.b16 %v189
  %v1987 = vunpack.c.h.b16 %v189
  %v1988 = vunpack.c.l.b16 %v190
  %v1989 = vunpack.c.h.b16 %v190
  %v1990 = vunpack.c.l.b16 %v191
  %v1991 = vunpack.c.h.b16 %v191
  %v1992 = vunpack.c.l.b16 %v192
  %v1993 = vunpack.c.h.b16 %v192
  %v1994 = vunpack.c.l.b16 %v193
  %v1995 = vunpack.c.h.b16 %v193
  %v1996 = vunpack.c.l.b16 %v194
  %v1997 = vunpack.c.h.b16 %v194
  %v1998 = vunpack.c.l.b16 %v195
  %v1999 = vunpack.c.h.b16 %v195
  %v2000 = vunpack.c.l.b16 %v196
  %v2001 = vunpack.c.h.b16 %v196
  %v2002 = vunpack.c.l.b16 %v197
  %v2003 = vunpack.c.h.b16 %v197
  %v2004 = vunpack.c.l.b16 %v198
  %v2005 = vunpack.c.h.b16 %v198
  %v2006 = vunpack.c.l.b16 %v199
  %v2007 = vunpack.c.h.b16 %v199
  %v2008 = vunpack.c.l.b16 %v200
  %v2009 = vunpack.c.h.b16 %v200
  %v2010 = vunpack.c.l.b16 %v201
  %v2011 = vunpack.c.h.b16 %v201
  %v2012 = vunpack.c.l.b16 %v202
  %v2013 = vunpack.c.h.b16 %v202
  %v2014 = vunpack.c.l.b16 %v203
  %v2015 = vunpack.c.h.b16 %v203
  %v2016 = vunpack.c.l.b16 %v204
  %v2017 = vunpack.c.h.b16 %v204
  %v2018 = vunpack.c.l.b16 %v205
  %v2019 = vunpack.c.h.b16 %v205
  %v2020 = vunpack.c.l.b16 %v206
  %v2021 = vunpack.c.h.b16 %v206
  %v2022 = vunpack.c.l.b16 %v207
  %v2023 = vunpack.c.h.b16 %v207
  %v2024 = vunpack.c.l.b16 %v208
  %v2025 = vunpack.c.h.b16 %v208
  %v2026 = vunpack.c.l.b16 %v209
  %v2027 = vunpack.c.h.b16 %v209
  %v2028 = vunpack.c.l.b16 %v210
  %v2029 = vunpack.c.h.b16 %v210
  %v2030 = vunpack.c.l.b16 %v211
  %v2031 = vunpack.c.h.b16 %v211
  %v2032 = vunpack.c.l.b16 %v212
  %v2033 = vunpack.c.h.b16 %v212
  %v2034 = vunpack.c.l.b16 %v213
  %v2035 = vunpack.c.h.b16 %v213
  %v2036 = vunpack.c.l.b16 %v214
  %v2037 = vunpack.c.h.b16 %v214
  %v2038 = vunpack.c.l.b16 %v215
  %v2039 = vunpack.c.h.b16 %v215
  %v2040 = vunpack.c.l.b16 %v216
  %v2041 = vunpack.c.h.b16 %v216
  %v2042 = vunpack.c.l.b16 %v217
  %v2043 = vunpack.c.h.b16 %v217
  %v2044 = vunpack.c.l.b16 %v218
  %v2045 = vunpack.c.h.b16 %v218
  %v2046 = vunpack.c.l.b16 %v219
  %v2047 = vunpack.c.h.b16 %v219
  %v2048 = vunpack.c.l.b16 %v220
  %v2049 = vunpack.c.h.b16 %v220
  %v2050 = vunpack.c.l.b16 %v221
  %v2051 = vunpack.c.h.b16 %v221
  %v2052 = vunpack.c.l.b16 %v222
  %v2053 = vunpack.c.h.b16 %v222
  %v2054 = vunpack.c.l.b16 %v223
  %v2055 = vunpack.c.h.b16 %v223
  %v2056 = vunpack.c.l.b16 %v224
  %v2057 = vunpack.c.h.b16 %v224
  %v2058 = vunpack.c.l.b16 %v225
  %v2059 = vunpack.c.h.b16 %v225
  %v2060 = vunpack.c.l.b16 %v226
  %v2061 = vunpack.c.h.b16 %v226
  %v2062 = vunpack.c.l.b16 %v227
  %v2063 = vunpack.c.h.b16 %v227
  %v2064 = vunpack.c.l.b16 %v228
  %v2065 = vunpack.c.h.b16 %v228
  %v2066 = vunpack.c.l.b16 %v229
  %v2067 = vunpack.c.h.b16 %v229
  %v2068 = vunpack.c.l.b16 %v230
  %v2069 = vunpack.c.h.b16 %v230
  %v2070 = vunpack.c.l.b16 %v231
  %v2071 = vunpack.c.h.b16 %v231
  %v2072 = vunpack.c.l.b16 %v232
  %v2073 = vunpack.c.h.b16 %v232
  %v2074 = vunpack.c.l.b16 %v233
  %v2075 = vunpack.c.h.b16 %v233
  %v2076 = vunpack.c.l.b16 %v234
  %v2077 = vunpack.c.h.b16 %v234
  %v2078 = vunpack.c.l.b16 %v235
  %v2079 = vunpack.c.h.b16 %v235
  %v2080 = vunpack.c.l.b16 %v236
  %v2081 = vunpack.c.h.b16 %v236
  %v2082 = vunpack.c.l.b16 %v237
  %v2083 = vunpack.c.h.b16 %v237
  %v2084 = vunpack.c.l.b16 %v238
  %v2085 = vunpack.c.h.b16 %v238
  %v2086 = vunpack.c.l.b16 %v239
  %v2087 = vunpack.c.h.b16 %v239
  %v2088 = vunpack.c.l.b16 %v240
  %v2089 = vunpack.c.h.b16 %v240
  %v2090 = vunpack.c.l.b16 %v241
  %v2091 = vunpack.c.h.b16 %v241
  %v2092 = vunpack.c.l.b16 %v242
  %v2093 = vunpack.c.h.b16 %v242
  %v2094 = vunpack.c.l.b16 %v243
  %v2095 = vunpack.c.h.b16 %v243
  %v2096 = vunpack.c.l.b16 %v244
  %v2097 = vunpack.c.h.b16 %v244
  %v2098 = vunpack.c.l.b16 %v245
  %v2099 = vunpack.c.h.b16 %v245
  %v2100 = vunpack.c.l.b16 %v246
  %v2101 = vunpack.c.h.b16 %v246
  %v2102 = vunpack.c.l.b16 %v247
  %v2103 = vunpack.c.h.b16 %v247
  %v2104 = vunpack.c.l.b16 %v248
  %v2105 = vunpack.c.h.b16 %v248
  %v2106 = vunpack.c.l.b16 %v249
  %v2107 = vunpack.c.h.b16 %v249
  %v2108 = vunpack.c.l.b16 %v250
  %v2109 = vunpack.c.h.b16 %v250
  %v2110 = vunpack.c.l.b16 %v251
  %v2111 = vunpack.c.h.b16 %v251
  %v2112 = vunpack.c.l.b16 %v252
  %v2113 = vunpack.c.h.b16 %v252
  %v2114 = vunpack.c.l.b16 %v253
  %v2115 = vunpack.c.h.b16 %v253
  %v2116 = vunpack.c.l.b16 %v254
  %v2117 = vunpack.c.h.b16 %v254
  %v2118 = vunpack.c.l.b16 %v255
  %v2119 = vunpack.c.h.b16 %v255
  %v2120 = vunpack.c.l.b16 %v256
  %v2121 = vunpack.c.h.b16 %v256
  %v2122 = vunpack.c.l.b16 %v257
  %v2123 = vunpack.c.h.b16 %v257
  %v2124 = vunpack.c.l.b16 %v258
  %v2125 = vunpack.c.h.b16 %v258
  %v2126 = vunpack.c.l.b16 %v259
  %v2127 = vunpack.c.h.b16 %v259
  %v2128 = vunpack.c.l.b16 %v260
  %v2129 = vunpack.c.h.b16 %v260
  %v2130 = vunpack.c.l.b16 %v261
  %v2131 = vunpack.c.h.b16 %v261
  %v2132 = vunpack.c.l.b16 %v262
  %v2133 = vunpack.c.h.b16 %v262
  %v2134 = vunpack.c.l.b16 %v263
  %v2135 = vunpack.c.h.b16 %v263
  %v2136 = vunpack.c.l.b16 %v264
  %v2137 = vunpack.c.h.b16 %v264
  %v2138 = vunpack.c.l.b16 %v265
  %v2139 = vunpack.c.h.b16 %v265
  %v2140 = vunpack.c.l.b16 %v266
  %v2141 = vunpack.c.h.b16 %v266
  %v2142 = vunpack.c.l.b16 %v267
  %v2143 = vunpack.c.h.b16 %v267
  %v2144 = vunpack.c.l.b16 %v268
  %v2145 = vunpack.c.h.b16 %v268
  %v2146 = vunpack.c.l.b16 %v269
  %v2147 = vunpack.c.h.b16 %v269
  %v2148 = vunpack.c.l.b16 %v270
  %v2149 = vunpack.c.h.b16 %v270
  %v2150 = vunpack.c.l.b16 %v271
  %v2151 = vunpack.c.h.b16 %v271
  %v2152 = vunpack.c.l.b16 %v272
  %v2153 = vunpack.c.h.b16 %v272
  %v2154 = vunpack.c.l.b16 %v273
  %v2155 = vunpack.c.h.b16 %v273
  %v2156 = vunpack.c.l.b16 %v274
  %v2157 = vunpack.c.h.b16 %v274
  %v2158 = vunpack.c.l.b16 %v275
  %v2159 = vunpack.c.h.b16 %v275
  %v2160 = vunpack.c.l.b16 %v276
  %v2161 = vunpack.c.h.b16 %v276
  %v2162 = vunpack.c.l.b16 %v277
  %v2163 = vunpack.c.h.b16 %v277
  %v2164 = vunpack.c.l.b16 %v278
  %v2165 = vunpack.c.h.b16 %v278
  %v2166 = vunpack.c.l.b16 %v279
  %v2167 = vunpack.c.h.b16 %v279
  %v2168 = vunpack.c.l.b16 %v280
  %v2169 = vunpack.c.h.b16 %v280
  %v2170 = vunpack.c.l.b16 %v281
  %v2171 = vunpack.c.h.b16 %v281
  %v2172 = vunpack.c.l.b16 %v282
  %v2173 = vunpack.c.h.b16 %v282
  %v2174 = vunpack.c.l.b16 %v283
  %v2175 = vunpack.c.h.b16 %v283
  %v2176 = vunpack.c.l.b16 %v284
  %v2177 = vunpack.c.h.b16 %v284
  %v2178 = vunpack.c.l.b16 %v285
  %v2179 = vunpack.c.h.b16 %v285
  %v2180 = vunpack.c.l.b16 %v286
  %v2181 = vunpack.c.h.b16 %v286
  %v2182 = vunpack.c.l.b16 %v287
  %v2183 = vunpack.c.h.b16 %v287
  %v2184 = vunpack.c.l.b16 %v288
  %v2185 = vunpack.c.h.b16 %v288
  %v2186 = vunpack.c.l.b16 %v289
  %v2187 = vunpack.c.h.b16 %v289
  %v2188 = vunpack.c.l.b16 %v290
  %v2189 = vunpack.c.h.b16 %v290
  %v2190 = vunpack.c.l.b16 %v291
  %v2191 = vunpack.c.h.b16 %v291
  %v2192 = vunpack.c.l.b16 %v292
  %v2193 = vunpack.c.h.b16 %v292
  %v2194 = vunpack.c.l.b16 %v293
  %v2195 = vunpack.c.h.b16 %v293
  %v2196 = vunpack.c.l.b16 %v294
  %v2197 = vunpack.c.h.b16 %v294
  %v2198 = vunpack.c.l.b16 %v295
  %v2199 = vunpack.c.h.b16 %v295
  %v2200 = vunpack.c.l.b16 %v296
  %v2201 = vunpack.c.h.b16 %v296
  %v2202 = vunpack.c.l.b16 %v297
  %v2203 = vunpack.c.h.b16 %v297
  %v2204 = vunpack.c.l.b16 %v298
  %v2205 = vunpack.c.h.b16 %v298
  %v2206 = vunpack.c.l.b16 %v299
  %v2207 = vunpack.c.h.b16 %v299
  %v2208 = vunpack.c.l.b16 %v300
  %v2209 = vunpack.c.h.b16 %v300
  %v2210 = vunpack.c.l.b16 %v301
  %v2211 = vunpack.c.h.b16 %v301
  %v2212 = vunpack.c.l.b16 %v302
  %v2213 = vunpack.c.h.b16 %v302
  %v2214 = vunpack.c.l.b16 %v303
  %v2215 = vunpack.c.h.b16 %v303
  %v2216 = vunpack.c.l.b16 %v304
  %v2217 = vunpack.c.h.b16 %v304
  %v2218 = vunpack.c.l.b16 %v305
  %v2219 = vunpack.c.h.b16 %v305
  %v2220 = vunpack.c.l.b16 %v306
  %v2221 = vunpack.c.h.b16 %v306
  %v2222 = vunpack.c.l.b16 %v307
  %v2223 = vunpack.c.h.b16 %v307
  %v2224 = vunpack.c.l.b16 %v308
  %v2225 = vunpack.c.h.b16 %v308
  %v2226 = vunpack.c.l.b16 %v309
  %v2227 = vunpack.c.h.b16 %v309
  %v2228 = vunpack.c.l.b16 %v310
  %v2229 = vunpack.c.h.b16 %v310
  %v2230 = vunpack.c.l.b16 %v311
  %v2231 = vunpack.c.h.b16 %v311
  %v2232 = vunpack.c.l.b16 %v312
  %v2233 = vunpack.c.h.b16 %v312
  %v2234 = vunpack.c.l.b16 %v313
  %v2235 = vunpack.c.h.b16 %v313
  %v2236 = vunpack.c.l.b16 %v314
  %v2237 = vunpack.c.h.b16 %v314
  %v2238 = vunpack.c.l.b16 %v315
  %v2239 = vunpack.c.h.b16 %v315
  %v2240 = vunpack.c.l.b16 %v316
  %v2241 = vunpack.c.h.b16 %v316
  %v2242 = vunpack.c.l.b16 %v317
  %v2243 = vunpack.c.h.b16 %v317
  %v2244 = vunpack.c.l.b16 %v318
  %v2245 = vunpack.c.h.b16 %v318
  %v2246 = vunpack.c.l.b16 %v319
  %v2247 = vunpack.c.h.b16 %v319
  %v2248 = vunpack.c.l.b16 %v320
  %v2249 = vunpack.c.h.b16 %v320
  %v2250 = vunpack.c.l.b16 %v321
  %v2251 = vunpack.c.h.b16 %v321
  %v2252 = vunpack.c.l.b16 %v322
  %v2253 = vunpack.c.h.b16 %v322
  %v2254 = vunpack.c.l.b16 %v323
  %v2255 = vunpack.c.h.b16 %v323
  %v2256 = vunpack.c.l.b16 %v324
  %v2257 = vunpack.c.h.b16 %v324
  %v2258 = vunpack.c.l.b16 %v325
  %v2259 = vunpack.c.h.b16 %v325
  %v2260 = vunpack.c.l.b16 %v326
  %v2261 = vunpack.c.h.b16 %v326
  %v2262 = vunpack.c.l.b16 %v327
  %v2263 = vunpack.c.h.b16 %v327
  %v2264 = vunpack.c.l.b16 %v328
  %v2265 = vunpack.c.h.b16 %v328
  %v2266 = vunpack.c.l.b16 %v329
  %v2267 = vunpack.c.h.b16 %v329
  %v2268 = vunpack.c.l.b16 %v330
  %v2269 = vunpack.c.h.b16 %v330
  %v2270 = vunpack.c.l.b16 %v331
  %v2271 = vunpack.c.h.b16 %v331
  %v2272 = vunpack.c.l.b16 %v332
  %v2273 = vunpack.c.h.b16 %v332
  %v2274 = vunpack.c.l.b16 %v333
  %v2275 = vunpack.c.h.b16 %v333
  %v2276 = vunpack.c.l.b16 %v334
  %v2277 = vunpack.c.h.b16 %v334
  %v2278 = vunpack.c.l.b16 %v335
  %v2279 = vunpack.c.h.b16 %v335
  %v2280 = vunpack.c.l.b16 %v336
  %v2281 = vunpack.c.h.b16 %v336
  %v2282 = vunpack.c.l.b16 %v337
  %v2283 = vunpack.c.h.b16 %v337
  %v2284 = vunpack.c.l.b16 %v338
  %v2285 = vunpack.c.h.b16 %v338
  %v2286 = vunpack.c.l.b16 %v339
  %v2287 = vunpack.c.h.b16 %v339
  %v2288 = vunpack.c.l.b16 %v340
  %v2289 = vunpack.c.h.b16 %v340
  %v2290 = vunpack.c.l.b16 %v341
  %v2291 = vunpack.c.h.b16 %v341
  %v2292 = vunpack.c.l.b16 %v342
  %v2293 = vunpack.c.h.b16 %v342
  %v2294 = vunpack.c.l.b16 %v343
  %v2295 = vunpack.c.h.b16 %v343
  %v2296 = vunpack.c.l.b16 %v344
  %v2297 = vunpack.c.h.b16 %v344
  %v2298 = vunpack.c.l.b16 %v345
  %v2299 = vunpack.c.h.b16 %v345
  %v2300 = vunpack.c.l.b16 %v346
  %v2301 = vunpack.c.h.b16 %v346
  %v2302 = vunpack.c.l.b16 %v347
  %v2303 = vunpack.c.h.b16 %v347
  %v2304 = vunpack.c.l.b16 %v348
  %v2305 = vunpack.c.h.b16 %v348
  %v2306 = vunpack.c.l.b16 %v349
  %v2307 = vunpack.c.h.b16 %v349
  %v2308 = vunpack.c.l.b16 %v350
  %v2309 = vunpack.c.h.b16 %v350
  %v2310 = vunpack.c.l.b16 %v351
  %v2311 = vunpack.c.h.b16 %v351
  %v2312 = vunpack.c.l.b16 %v352
  %v2313 = vunpack.c.h.b16 %v352
  %v2314 = vunpack.c.l.b16 %v353
  %v2315 = vunpack.c.h.b16 %v353
  %v2316 = vunpack.c.l.b16 %v354
  %v2317 = vunpack.c.h.b16 %v354
  %v2318 = vunpack.c.l.b16 %v355
  %v2319 = vunpack.c.h.b16 %v355
  %v2320 = vunpack.c.l.b16 %v356
  %v2321 = vunpack.c.h.b16 %v356
  %v2322 = vunpack.c.l.b16 %v357
  %v2323 = vunpack.c.h.b16 %v357
  %v2324 = vunpack.c.l.b16 %v358
  %v2325 = vunpack.c.h.b16 %v358
  %v2326 = vunpack.c.l.b16 %v359
  %v2327 = vunpack.c.h.b16 %v359
  %v2328 = vunpack.c.l.b16 %v360
  %v2329 = vunpack.c.h.b16 %v360
  %v2330 = vunpack.c.l.b16 %v361
  %v2331 = vunpack.c.h.b16 %v361
  %v2332 = vunpack.c.l.b16 %v362
  %v2333 = vunpack.c.h.b16 %v362
  %v2334 = vunpack.c.l.b16 %v363
  %v2335 = vunpack.c.h.b16 %v363
  %v2336 = vunpack.c.l.b16 %v364
  %v2337 = vunpack.c.h.b16 %v364
  %v2338 = vunpack.c.l.b16 %v365
  %v2339 = vunpack.c.h.b16 %v365
  %v2340 = vunpack.c.l.b16 %v366
  %v2341 = vunpack.c.h.b16 %v366
  %v2342 = vunpack.c.l.b16 %v367
  %v2343 = vunpack.c.h.b16 %v367
  %v2344 = vunpack.c.l.b16 %v368
  %v2345 = vunpack.c.h.b16 %v368
  %v2346 = vunpack.c.l.b16 %v369
  %v2347 = vunpack.c.h.b16 %v369
  %v2348 = vunpack.c.l.b16 %v370
  %v2349 = vunpack.c.h.b16 %v370
  %v2350 = vunpack.c.l.b16 %v371
  %v2351 = vunpack.c.h.b16 %v371
  %v2352 = vunpack.c.l.b16 %v372
  %v2353 = vunpack.c.h.b16 %v372
  %v2354 = vunpack.c.l.b16 %v373
  %v2355 = vunpack.c.h.b16 %v373
  %v2356 = vunpack.c.l.b16 %v374
  %v2357 = vunpack.c.h.b16 %v374
  %v2358 = vunpack.c.l.b16 %v375
  %v2359 = vunpack.c.h.b16 %v375
  %v2360 = vunpack.c.l.b16 %v376
  %v2361 = vunpack.c.h.b16 %v376
  %v2362 = vunpack.c.l.b16 %v377
  %v2363 = vunpack.c.h.b16 %v377
  %v2364 = vunpack.c.l.b16 %v378
  %v2365 = vunpack.c.h.b16 %v378
  %v2366 = vunpack.c.l.b16 %v379
  %v2367 = vunpack.c.h.b16 %v379
  %v2368 = vunpack.c.l.b16 %v380
  %v2369 = vunpack.c.h.b16 %v380
  %v2370 = vunpack.c.l.b16 %v381
  %v2371 = vunpack.c.h.b16 %v381
  %v2372 = vunpack.c.l.b16 %v382
  %v2373 = vunpack.c.h.b16 %v382
  %v2374 = vunpack.c.l.b16 %v383
  %v2375 = vunpack.c.h.b16 %v383
  %v2376 = vunpack.c.l.b16 %v384
  %v2377 = vunpack.c.h.b16 %v384
  %v2378 = vunpack.c.l.b16 %v385
  %v2379 = vunpack.c.h.b16 %v385
  %v2380 = vunpack.c.l.b16 %v386
  %v2381 = vunpack.c.h.b16 %v386
  %v2382 = vunpack.c.l.b16 %v387
  %v2383 = vunpack.c.h.b16 %v387
  %v2384 = vunpack.c.l.b16 %v388
  %v2385 = vunpack.c.h.b16 %v388
  %v2386 = vunpack.c.l.b16 %v389
  %v2387 = vunpack.c.h.b16 %v389
  %v2388 = vunpack.c.l.b16 %v390
  %v2389 = vunpack.c.h.b16 %v390
  %v2390 = vunpack.c.l.b16 %v391
  %v2391 = vunpack.c.h.b16 %v391
  %v2392 = vunpack.c.l.b16 %v392
  %v2393 = vunpack.c.h.b16 %v392
  %v2394 = vunpack.c.l.b16 %v393
  %v2395 = vunpack.c.h.b16 %v393
  %v2396 = vunpack.c.l.b16 %v394
  %v2397 = vunpack.c.h.b16 %v394
  %v2398 = vunpack.c.l.b16 %v395
  %v2399 = vunpack.c.h.b16 %v395
  %v2400 = vunpack.c.l.b16 %v396
  %v2401 = vunpack.c.h.b16 %v396
  %v2402 = vunpack.c.l.b16 %v397
  %v2403 = vunpack.c.h.b16 %v397
  %v2404 = vunpack.c.l.b16 %v398
  %v2405 = vunpack.c.h.b16 %v398
  %v2406 = vunpack.c.l.b16 %v399
  %v2407 = vunpack.c.h.b16 %v399
  %v2408 = vunpack.c.l.b16 %v400
  %v2409 = vunpack.c.h.b16 %v400
  %v2410 = vunpack.c.l.b16 %v401
  %v2411 = vunpack.c.h.b16 %v401
  %v2412 = vunpack.c.l.b16 %v402
  %v2413 = vunpack.c.h.b16 %v402
  %v2414 = vunpack.c.l.b16 %v403
  %v2415 = vunpack.c.h.b16 %v403
  %v2416 = vunpack.c.l.b16 %v404
  %v2417 = vunpack.c.h.b16 %v404
  %v2418 = vunpack.c.l.b16 %v405
  %v2419 = vunpack.c.h.b16 %v405
  %v2420 = vunpack.c.l.b16 %v406
  %v2421 = vunpack.c.h.b16 %v406
  %v2422 = vunpack.c.l.b16 %v407
  %v2423 = vunpack.c.h.b16 %v407
  %v2424 = vunpack.c.l.b16 %v408
  %v2425 = vunpack.c.h.b16 %v408
  %v2426 = vunpack.c.l.b16 %v409
  %v2427 = vunpack.c.h.b16 %v409
  %v2428 = vunpack.c.l.b16 %v410
  %v2429 = vunpack.c.h.b16 %v410
  %v2430 = vunpack.c.l.b16 %v411
  %v2431 = vunpack.c.h.b16 %v411
  %v2432 = vunpack.c.l.b16 %v412
  %v2433 = vunpack.c.h.b16 %v412
  %v2434 = vunpack.c.l.b16 %v413
  %v2435 = vunpack.c.h.b16 %v413
  %v2436 = vunpack.c.l.b16 %v414
  %v2437 = vunpack.c.h.b16 %v414
  %v2438 = vunpack.c.l.b16 %v415
  %v2439 = vunpack.c.h.b16 %v415
  %v2440 = vunpack.c.l.b16 %v416
  %v2441 = vunpack.c.h.b16 %v416
  %v2442 = vunpack.c.l.b16 %v417
  %v2443 = vunpack.c.h.b16 %v417
  %v2444 = vunpack.c.l.b16 %v418
  %v2445 = vunpack.c.h.b16 %v418
  %v2446 = vunpack.c.l.b16 %v419
  %v2447 = vunpack.c.h.b16 %v419
  %v2448 = vunpack.c.l.b16 %v420
  %v2449 = vunpack.c.h.b16 %v420
  %v2450 = vunpack.c.l.b16 %v421
  %v2451 = vunpack.c.h.b16 %v421
  %v2452 = vunpack.c.l.b16 %v422
  %v2453 = vunpack.c.h.b16 %v422
  %v2454 = vunpack.c.l.b16 %v423
  %v2455 = vunpack.c.h.b16 %v423
  %v2456 = vunpack.c.l.b16 %v424
  %v2457 = vunpack.c.h.b16 %v424
  %v2458 = vunpack.c.l.b16 %v425
  %v2459 = vunpack.c.h.b16 %v425
  %v2460 = vunpack.c.l.b16 %v426
  %v2461 = vunpack.c.h.b16 %v426
  %v2462 = vunpack.c.l.b16 %v427
  %v2463 = vunpack.c.h.b16 %v427
  %v2464 = vunpack.c.l.b16 %v428
  %v2465 = vunpack.c.h.b16 %v428
  %v2466 = vunpack.c.l.b16 %v429
  %v2467 = vunpack.c.h.b16 %v429
  %v2468 = vunpack.c.l.b16 %v430
  %v2469 = vunpack.c.h.b16 %v430
  %v2470 = vunpack.c.l.b16 %v431
  %v2471 = vunpack.c.h.b16 %v431
  %v2472 = vunpack.c.l.b16 %v432
  %v2473 = vunpack.c.h.b16 %v432
  %v2474 = vunpack.c.l.b16 %v433
  %v2475 = vunpack.c.h.b16 %v433
  %v2476 = vunpack.c.l.b16 %v434
  %v2477 = vunpack.c.h.b16 %v434
  %v2478 = vunpack.c.l.b16 %v435
  %v2479 = vunpack.c.h.b16 %v435
  %v2480 = vunpack.c.l.b16 %v436
  %v2481 = vunpack.c.h.b16 %v436
  %v2482 = vunpack.c.l.b16 %v437
  %v2483 = vunpack.c.h.b16 %v437
  %v2484 = vunpack.c.l.b16 %v438
  %v2485 = vunpack.c.h.b16 %v438
  %v2486 = vunpack.c.l.b16 %v439
  %v2487 = vunpack.c.h.b16 %v439
  %v2488 = vunpack.c.l.b16 %v440
  %v2489 = vunpack.c.h.b16 %v440
  %v2490 = vunpack.c.l.b16 %v441
  %v2491 = vunpack.c.h.b16 %v441
  %v2492 = vunpack.c.l.b16 %v442
  %v2493 = vunpack.c.h.b16 %v442
  %v2494 = vunpack.c.l.b16 %v443
  %v2495 = vunpack.c.h.b16 %v443
  %v2496 = vunpack.c.l.b16 %v444
  %v2497 = vunpack.c.h.b16 %v444
  %v2498 = vunpack.c.l.b16 %v445
  %v2499 = vunpack.c.h.b16 %v445
  %v2500 = vunpack.c.l.b16 %v446
  %v2501 = vunpack.c.h.b16 %v446
  %v2502 = vunpack.c.l.b16 %v447
  %v2503 = vunpack.c.h.b16 %v447
  %v2504 = vunpack.c.l.b16 %v448
  %v2505 = vunpack.c.h.b16 %v448
  %v2506 = vunpack.c.l.b16 %v449
  %v2507 = vunpack.c.h.b16 %v449
  %v2508 = vunpack.c.l.b16 %v450
  %v2509 = vunpack.c.h.b16 %v450
  %v2510 = vunpack.c.l.b16 %v451
  %v2511 = vunpack.c.h.b16 %v451
  %v2512 = vunpack.c.l.b16 %v452
  %v2513 = vunpack.c.h.b16 %v452
  %v2514 = vunpack.c.l.b16 %v453
  %v2515 = vunpack.c.h.b16 %v453
  %v2516 = vunpack.c.l.b16 %v454
  %v2517 = vunpack.c.h.b16 %v454
  %v2518 = vunpack.c.l.b16 %v455
  %v2519 = vunpack.c.h.b16 %v455
  %v2520 = vunpack.c.l.b16 %v456
  %v2521 = vunpack.c.h.b16 %v456
  %v2522 = vunpack.c.l.b16 %v457
  %v2523 = vunpack.c.h.b16 %v457
  %v2524 = vunpack.c.l.b16 %v458
  %v2525 = vunpack.c.h.b16 %v458
  %v2526 = vunpack.c.l.b16 %v459
  %v2527 = vunpack.c.h.b16 %v459
  %v2528 = vunpack.c.l.b16 %v460
  %v2529 = vunpack.c.h.b16 %v460
  %v2530 = vunpack.c.l.b16 %v461
  %v2531 = vunpack.c.h.b16 %v461
  %v2532 = vunpack.c.l.b16 %v462
  %v2533 = vunpack.c.h.b16 %v462
  %v2534 = vunpack.c.l.b16 %v463
  %v2535 = vunpack.c.h.b16 %v463
  %v2536 = vunpack.c.l.b16 %v464
  %v2537 = vunpack.c.h.b16 %v464
  %v2538 = vunpack.c.l.b16 %v465
  %v2539 = vunpack.c.h.b16 %v465
  %v2540 = vunpack.c.l.b16 %v466
  %v2541 = vunpack.c.h.b16 %v466
  %v2542 = vunpack.c.l.b16 %v467
  %v2543 = vunpack.c.h.b16 %v467
  %v2544 = vunpack.c.l.b16 %v468
  %v2545 = vunpack.c.h.b16 %v468
  %v2546 = vunpack.c.l.b16 %v469
  %v2547 = vunpack.c.h.b16 %v469
  %v2548 = vunpack.c.l.b16 %v470
  %v2549 = vunpack.c.h.b16 %v470
  %v2550 = vunpack.c.l.b16 %v471
  %v2551 = vunpack.c.h.b16 %v471
  %v2552 = vunpack.c.l.b16 %v472
  %v2553 = vunpack.c.h.b16 %v472
  %v2554 = vunpack.c.l.b16 %v473
  %v2555 = vunpack.c.h.b16 %v473
  %v2556 = vunpack.c.l.b16 %v474
  %v2557 = vunpack.c.h.b16 %v474
  %v2558 = vunpack.c.l.b16 %v475
  %v2559 = vunpack.c.h.b16 %v475
  %v2560 = vunpack.c.l.b16 %v476
  %v2561 = vunpack.c.h.b16 %v476
  %v2562 = vunpack.c.l.b16 %v477
  %v2563 = vunpack.c.h.b16 %v477
  %v2564 = vunpack.c.l.b16 %v478
  %v2565 = vunpack.c.h.b16 %v478
  %v2566 = vunpack.c.l.b16 %v479
  %v2567 = vunpack.c.h.b16 %v479
  %v2568 = vunpack.c.l.b16 %v480
  %v2569 = vunpack.c.h.b16 %v480
  %v2570 = vunpack.c.l.b16 %v481
  %v2571 = vunpack.c.h.b16 %v481
  %v2572 = vunpack.c.l.b16 %v482
  %v2573 = vunpack.c.h.b16 %v482
  %v2574 = vunpack.c.l.b16 %v483
  %v2575 = vunpack.c.h.b16 %v483
  %v2576 = vunpack.c.l.b16 %v484
  %v2577 = vunpack.c.h.b16 %v484
  %v2578 = vunpack.c.l.b16 %v485
  %v2579 = vunpack.c.h.b16 %v485
  %v2580 = vunpack.c.l.b16 %v486
  %v2581 = vunpack.c.h.b16 %v486
  %v2582 = vunpack.c.l.b16 %v487
  %v2583 = vunpack.c.h.b16 %v487
  %v2584 = vunpack.c.l.b16 %v488
  %v2585 = vunpack.c.h.b16 %v488
  %v2586 = vunpack.c.l.b16 %v489
  %v2587 = vunpack.c.h.b16 %v489
  %v2588 = vunpack.c.l.b16 %v490
  %v2589 = vunpack.c.h.b16 %v490
  %v2590 = vunpack.c.l.b16 %v491
  %v2591 = vunpack.c.h.b16 %v491
  %v2592 = vunpack.c.l.b16 %v492
  %v2593 = vunpack.c.h.b16 %v492
  %v2594 = vunpack.c.l.b16 %v493
  %v2595 = vunpack.c.h.b16 %v493
  %v2596 = vunpack.c.l.b16 %v494
  %v2597 = vunpack.c.h.b16 %v494
  %v2598 = vunpack.c.l.b16 %v495
  %v2599 = vunpack.c.h.b16 %v495
  %v2600 = vunpack.c.l.b16 %v496
  %v2601 = vunpack.c.h.b16 %v496
  %v2602 = vunpack.c.l.b16 %v497
  %v2603 = vunpack.c.h.b16 %v497
  %v2604 = vunpack.c.l.b16 %v498
  %v2605 = vunpack.c.h.b16 %v498
  %v2606 = vunpack.c.l.b16 %v499
  %v2607 = vunpack.c.h.b16 %v499
  %v2608 = vunpack.c.l.b16 %v500
  %v2609 = vunpack.c.h.b16 %v500
  %v2610 = vunpack.c.l.b16 %v501
  %v2611 = vunpack.c.h.b16 %v501
  %v2612 = vunpack.c.l.b16 %v502
  %v2613 = vunpack.c.h.b16 %v502
  %v2614 = vunpack.c.l.b16 %v503
  %v2615 = vunpack.c.h.b16 %v503
  %v2616 = vunpack.c.l.b16 %v504
  %v2617 = vunpack.c.h.b16 %v504
  %v2618 = vunpack.c.l.b16 %v505
  %v2619 = vunpack.c.h.b16 %v505
  %v2620 = vunpack.c.l.b16 %v506
  %v2621 = vunpack.c.h.b16 %v506
  %v2622 = vunpack.c.l.b16 %v507
  %v2623 = vunpack.c.h.b16 %v507
  %v2624 = vunpack.c.l.b16 %v508
  %v2625 = vunpack.c.h.b16 %v508
  %v2626 = vunpack.c.l.b16 %v509
  %v2627 = vunpack.c.h.b16 %v509
  %v2628 = vunpack.c.l.b16 %v510
  %v2629 = vunpack.c.h.b16 %v510
  %v2630 = vunpack.c.l.b16 %v511
  %v2631 = vunpack.c.h.b16 %v511
  %v2632 = vunpack.c.l.b16 %v512
  %v2633 = vunpack.c.h.b16 %v512
  %v2634 = vunpack.c.l.b16 %v513
  %v2635 = vunpack.c.h.b16 %v513
  %v2636 = vunpack.c.l.b16 %v514
  %v2637 = vunpack.c.h.b16 %v514
  %v2638 = vunpack.c.l.b16 %v515
  %v2639 = vunpack.c.h.b16 %v515
  %v2640 = vunpack.c.l.b16 %v516
  %v2641 = vunpack.c.h.b16 %v516
  %v2642 = vunpack.c.l.b16 %v517
  %v2643 = vunpack.c.h.b16 %v517
  %v2644 = vunpack.c.l.b16 %v518
  %v2645 = vunpack.c.h.b16 %v518
  %v2646 = vunpack.c.l.b16 %v519
  %v2647 = vunpack.c.h.b16 %v519
  %v2648 = vunpack.c.l.b16 %v520
  %v2649 = vunpack.c.h.b16 %v520
  %v2650 = vunpack.c.l.b16 %v521
  %v2651 = vunpack.c.h.b16 %v521
  %v2652 = vunpack.c.l.b16 %v522
  %v2653 = vunpack.c.h.b16 %v522
  %v2654 = vunpack.c.l.b16 %v523
  %v2655 = vunpack.c.h.b16 %v523
  %v2656 = vunpack.c.l.b16 %v524
  %v2657 = vunpack.c.h.b16 %v524
  %v2658 = vunpack.c.l.b16 %v525
  %v2659 = vunpack.c.h.b16 %v525
  %v2660 = vunpack.c.l.b16 %v526
  %v2661 = vunpack.c.h.b16 %v526
  %v2662 = vunpack.c.l.b16 %v527
  %v2663 = vunpack.c.h.b16 %v527
  %v2664 = vunpack.c.l.b16 %v528
  %v2665 = vunpack.c.h.b16 %v528
  %v2666 = vunpack.c.l.b16 %v529
  %v2667 = vunpack.c.h.b16 %v529
  %v2668 = vunpack.c.l.b16 %v530
  %v2669 = vunpack.c.h.b16 %v530
  %v2670 = vunpack.c.l.b16 %v531
  %v2671 = vunpack.c.h.b16 %v531
  %v2672 = vunpack.c.l.b16 %v532
  %v2673 = vunpack.c.h.b16 %v532
  %v2674 = vunpack.c.l.b16 %v533
  %v2675 = vunpack.c.h.b16 %v533
  %v2676 = vunpack.c.l.b16 %v534
  %v2677 = vunpack.c.h.b16 %v534
  %v2678 = vunpack.c.l.b16 %v535
  %v2679 = vunpack.c.h.b16 %v535
  %v2680 = vunpack.c.l.b16 %v536
  %v2681 = vunpack.c.h.b16 %v536
  %v2682 = vunpack.c.l.b16 %v537
  %v2683 = vunpack.c.h.b16 %v537
  %v2684 = vunpack.c.l.b16 %v538
  %v2685 = vunpack.c.h.b16 %v538
  %v2686 = vunpack.c.l.b16 %v539
  %v2687 = vunpack.c.h.b16 %v539
  %v2688 = vunpack.c.l.b16 %v540
  %v2689 = vunpack.c.h.b16 %v540
  %v2690 = vunpack.c.l.b16 %v541
  %v2691 = vunpack.c.h.b16 %v541
  %v2692 = vunpack.c.l.b16 %v542
  %v2693 = vunpack.c.h.b16 %v542
  %v2694 = vunpack.c.l.b16 %v543
  %v2695 = vunpack.c.h.b16 %v543
  %v2696 = vunpack.c.l.b16 %v544
  %v2697 = vunpack.c.h.b16 %v544
  %v2698 = vunpack.c.l.b16 %v545
  %v2699 = vunpack.c.h.b16 %v545
  %v2700 = vunpack.c.l.b16 %v546
  %v2701 = vunpack.c.h.b16 %v546
  %v2702 = vunpack.c.l.b16 %v547
  %v2703 = vunpack.c.h.b16 %v547
  %v2704 = vunpack.c.l.b16 %v548
  %v2705 = vunpack.c.h.b16 %v548
  %v2706 = vunpack.c.l.b16 %v549
  %v2707 = vunpack.c.h.b16 %v549
  %v2708 = vunpack.c.l.b16 %v550
  %v2709 = vunpack.c.h.b16 %v550
  %v2710 = vunpack.c.l.b16 %v551
  %v2711 = vunpack.c.h.b16 %v551
  %v2712 = vunpack.c.l.b16 %v552
  %v2713 = vunpack.c.h.b16 %v552
  %v2714 = vunpack.c.l.b16 %v553
  %v2715 = vunpack.c.h.b16 %v553
  %v2716 = vunpack.c.l.b16 %v554
  %v2717 = vunpack.c.h.b16 %v554
  %v2718 = vunpack.c.l.b16 %v555
  %v2719 = vunpack.c.h.b16 %v555
  %v2720 = vunpack.c.l.b16 %v556
  %v2721 = vunpack.c.h.b16 %v556
  %v2722 = vunpack.c.l.b16 %v557
  %v2723 = vunpack.c.h.b16 %v557
  %v2724 = vunpack.c.l.b16 %v558
  %v2725 = vunpack.c.h.b16 %v558
  %v2726 = vunpack.c.l.b16 %v559
  %v2727 = vunpack.c.h.b16 %v559
  %v2728 = vunpack.c.l.b16 %v560
  %v2729 = vunpack.c.h.b16 %v560
  %v2730 = vunpack.c.l.b16 %v561
  %v2731 = vunpack.c.h.b16 %v561
  %v2732 = vunpack.c.l.b16 %v562
  %v2733 = vunpack.c.h.b16 %v562
  %v2734 = vunpack.c.l.b16 %v563
  %v2735 = vunpack.c.h.b16 %v563
  %v2736 = vunpack.c.l.b16 %v564
  %v2737 = vunpack.c.h.b16 %v564
  %v2738 = vunpack.c.l.b16 %v565
  %v2739 = vunpack.c.h.b16 %v565
  %v2740 = vunpack.c.l.b16 %v566
  %v2741 = vunpack.c.h.b16 %v566
  %v2742 = vunpack.c.l.b16 %v567
  %v2743 = vunpack.c.h.b16 %v567
  %v2744 = vunpack.c.l.b16 %v568
  %v2745 = vunpack.c.h.b16 %v568
  %v2746 = vunpack.c.l.b16 %v569
  %v2747 = vunpack.c.h.b16 %v569
  %v2748 = vunpack.c.l.b16 %v570
  %v2749 = vunpack.c.h.b16 %v570
  %v2750 = vunpack.c.l.b16 %v571
  %v2751 = vunpack.c.h.b16 %v571
  %v2752 = vunpack.c.l.b16 %v572
  %v2753 = vunpack.c.h.b16 %v572
  %v2754 = vunpack.c.l.b16 %v573
  %v2755 = vunpack.c.h.b16 %v573
  %v2756 = vunpack.c.l.b16 %v574
  %v2757 = vunpack.c.h.b16 %v574
  %v2758 = vunpack.c.l.b16 %v575
  %v2759 = vunpack.c.h.b16 %v575
  %v2760 = vunpack.c.l.b16 %v576
  %v2761 = vunpack.c.h.b16 %v576
  %v2762 = vunpack.c.l.b16 %v577
  %v2763 = vunpack.c.h.b16 %v577
  %v2764 = vunpack.c.l.b16 %v578
  %v2765 = vunpack.c.h.b16 %v578
  %v2766 = vunpack.c.l.b16 %v579
  %v2767 = vunpack.c.h.b16 %v579
  %v2768 = vunpack.c.l.b16 %v580
  %v2769 = vunpack.c.h.b16 %v580
  %v2770 = vunpack.c.l.b16 %v581
  %v2771 = vunpack.c.h.b16 %v581
  %v2772 = vunpack.c.l.b16 %v582
  %v2773 = vunpack.c.h.b16 %v582
  %v2774 = vunpack.c.l.b16 %v583
  %v2775 = vunpack.c.h.b16 %v583
  %v2776 = vunpack.c.l.b16 %v584
  %v2777 = vunpack.c.h.b16 %v584
  %v2778 = vunpack.c.l.b16 %v585
  %v2779 = vunpack.c.h.b16 %v585
  %v2780 = vunpack.c.l.b16 %v586
  %v2781 = vunpack.c.h.b16 %v586
  %v2782 = vunpack.c.l.b16 %v587
  %v2783 = vunpack.c.h.b16 %v587
  %v2784 = vunpack.c.l.b16 %v588
  %v2785 = vunpack.c.h.b16 %v588
  %v2786 = vunpack.c.l.b16 %v589
  %v2787 = vunpack.c.h.b16 %v589
  %v2788 = vunpack.c.l.b16 %v590
  %v2789 = vunpack.c.h.b16 %v590
  %v2790 = vunpack.c.l.b16 %v591
  %v2791 = vunpack.c.h.b16 %v591
  %v2792 = vunpack.c.l.b16 %v592
  %v2793 = vunpack.c.h.b16 %v592
  %v2794 = vunpack.c.l.b16 %v593
  %v2795 = vunpack.c.h.b16 %v593
  %v2796 = vunpack.c.l.b16 %v594
  %v2797 = vunpack.c.h.b16 %v594
  %v2798 = vunpack.c.l.b16 %v595
  %v2799 = vunpack.c.h.b16 %v595
  %v2800 = vunpack.c.l.b16 %v596
  %v2801 = vunpack.c.h.b16 %v596
  %v2802 = vunpack.c.l.b16 %v597
  %v2803 = vunpack.c.h.b16 %v597
  %v2804 = vunpack.c.l.b16 %v598
  %v2805 = vunpack.c.h.b16 %v598
  %v2806 = vunpack.c.l.b16 %v599
  %v2807 = vunpack.c.h.b16 %v599
  %v2808 = vunpack.c.l.b16 %v600
  %v2809 = vunpack.c.h.b16 %v600
  %v2810 = vunpack.c.l.b16 %v601
  %v2811 = vunpack.c.h.b16 %v601
  %v2812 = vunpack.c.l.b16 %v602
  %v2813 = vunpack.c.h.b16 %v602
  %v2814 = vunpack.c.l.b16 %v603
  %v2815 = vunpack.c.h.b16 %v603
  %v2816 = vunpack.c.l.b16 %v604
  %v2817 = vunpack.c.h.b16 %v604
  %v2818 = vunpack.c.l.b16 %v605
  %v2819 = vunpack.c.h.b16 %v605
  %v2820 = vunpack.c.l.b16 %v606
  %v2821 = vunpack.c.h.b16 %v606
  %v2822 = vunpack.c.l.b16 %v607
  %v2823 = vunpack.c.h.b16 %v607
  %v2824 = vunpack.c.l.b16 %v608
  %v2825 = vunpack.c.h.b16 %v608
  %v2826 = vunpack.c.l.b16 %v609
  %v2827 = vunpack.c.h.b16 %v609
  %v2828 = vunpack.c.l.b16 %v610
  %v2829 = vunpack.c.h.b16 %v610
  %v2830 = vunpack.c.l.b16 %v611
  %v2831 = vunpack.c.h.b16 %v611
  %v2832 = vunpack.c.l.b16 %v612
  %v2833 = vunpack.c.h.b16 %v612
  %v2834 = vunpack.c.l.b16 %v613
  %v2835 = vunpack.c.h.b16 %v613
  %v2836 = vunpack.c.l.b16 %v614
  %v2837 = vunpack.c.h.b16 %v614
  %v2838 = vunpack.c.l.b16 %v615
  %v2839 = vunpack.c.h.b16 %v615
  %v2840 = vunpack.c.l.b16 %v616
  %v2841 = vunpack.c.h.b16 %v616
  %v2842 = vunpack.c.l.b16 %v617
  %v2843 = vunpack.c.h.b16 %v617
  %v2844 = vunpack.c.l.b16 %v618
  %v2845 = vunpack.c.h.b16 %v618
  %v2846 = vunpack.c.l.b16 %v619
  %v2847 = vunpack.c.h.b16 %v619
  %v2848 = vunpack.c.l.b16 %v620
  %v2849 = vunpack.c.h.b16 %v620
  %v2850 = vunpack.c.l.b16 %v621
  %v2851 = vunpack.c.h.b16 %v621
  %v2852 = vunpack.c.l.b16 %v622
  %v2853 = vunpack.c.h.b16 %v622
  %v2854 = vunpack.c.l.b16 %v623
  %v2855 = vunpack.c.h.b16 %v623
  %v2856 = vunpack.c.l.b16 %v624
  %v2857 = vunpack.c.h.b16 %v624
  %v2858 = vunpack.c.l.b16 %v625
  %v2859 = vunpack.c.h.b16 %v625
  %v2860 = vunpack.c.l.b16 %v626
  %v2861 = vunpack.c.h.b16 %v626
  %v2862 = vunpack.c.l.b16 %v627
  %v2863 = vunpack.c.h.b16 %v627
  %v2864 = vunpack.c.l.b16 %v628
  %v2865 = vunpack.c.h.b16 %v628
  %v2866 = vunpack.c.l.b16 %v629
  %v2867 = vunpack.c.h.b16 %v629
  %v2868 = vunpack.c.l.b16 %v630
  %v2869 = vunpack.c.h.b16 %v630
  %v2870 = vunpack.c.l.b16 %v631
  %v2871 = vunpack.c.h.b16 %v631
  %v2872 = vunpack.c.l.b16 %v632
  %v2873 = vunpack.c.h.b16 %v632
  %v2874 = vunpack.c.l.b16 %v633
  %v2875 = vunpack.c.h.b16 %v633
  %v2876 = vunpack.c.l.b16 %v634
  %v2877 = vunpack.c.h.b16 %v634
  %v2878 = vunpack.c.l.b16 %v635
  %v2879 = vunpack.c.h.b16 %v635
  %v2880 = vunpack.c.l.b16 %v636
  %v2881 = vunpack.c.h.b16 %v636
  %v2882 = vunpack.c.l.b16 %v637
  %v2883 = vunpack.c.h.b16 %v637
  %v2884 = vunpack.c.l.b16 %v638
  %v2885 = vunpack.c.h.b16 %v638
  %v2886 = vunpack.c.l.b16 %v639
  %v2887 = vunpack.c.h.b16 %v639
  %v2888 = vunpack.c.l.b16 %v640
  %v2889 = vunpack.c.h.b16 %v640
  %v2890 = vunpack.c.l.b16 %v641
  %v2891 = vunpack.c.h.b16 %v641
  %v2892 = vunpack.c.l.b16 %v642
  %v2893 = vunpack.c.h.b16 %v642
  %v2894 = vunpack.c.l.b16 %v643
  %v2895 = vunpack.c.h.b16 %v643
  %v2896 = vunpack.c.l.b16 %v644
  %v2897 = vunpack.c.h.b16 %v644
  %v2898 = vunpack.c.l.b16 %v645
  %v2899 = vunpack.c.h.b16 %v645
  %v2900 = vunpack.c.l.b16 %v646
  %v2901 = vunpack.c.h.b16 %v646
  %v2902 = vunpack.c.l.b16 %v647
  %v2903 = vunpack.c.h.b16 %v647
  %v2904 = vunpack.c.l.b16 %v648
  %v2905 = vunpack.c.h.b16 %v648
  %v2906 = vunpack.c.l.b16 %v649
  %v2907 = vunpack.c.h.b16 %v649
  %v2908 = vunpack.c.l.b16 %v650
  %v2909 = vunpack.c.h.b16 %v650
  %v2910 = vunpack.c.l.b16 %v651
  %v2911 = vunpack.c.h.b16 %v651
  %v2912 = vunpack.c.l.b16 %v652
  %v2913 = vunpack.c.h.b16 %v652
  %v2914 = vunpack.c.l.b16 %v653
  %v2915 = vunpack.c.h.b16 %v653
  %v2916 = vunpack.c.l.b16 %v654
  %v2917 = vunpack.c.h.b16 %v654
  %v2918 = vunpack.c.l.b16 %v655
  %v2919 = vunpack.c.h.b16 %v655
  %v2920 = vunpack.c.l.b16 %v656
  %v2921 = vunpack.c.h.b16 %v656
  %v2922 = vunpack.c.l.b16 %v657
  %v2923 = vunpack.c.h.b16 %v657
  %v2924 = vunpack.c.l.b16 %v658
  %v2925 = vunpack.c.h.b16 %v658
  %v2926 = vunpack.c.l.b16 %v659
  %v2927 = vunpack.c.h.b16 %v659
  %v2928 = vunpack.c.l.b16 %v660
  %v2929 = vunpack.c.h.b16 %v660
  %v2930 = vunpack.c.l.b16 %v661
  %v2931 = vunpack.c.h.b16 %v661
  %v2932 = vunpack.c.l.b16 %v662
  %v2933 = vunpack.c.h.b16 %v662
  %v2934 = vunpack.c.l.b16 %v663
  %v2935 = vunpack.c.h.b16 %v663
  %v2936 = vunpack.c.l.b16 %v664
  %v2937 = vunpack.c.h.b16 %v664
  %v2938 = vunpack.c.l.b16 %v665
  %v2939 = vunpack.c.h.b16 %v665
  %v2940 = vunpack.c.l.b16 %v666
  %v2941 = vunpack.c.h.b16 %v666
  %v2942 = vunpack.c.l.b16 %v667
  %v2943 = vunpack.c.h.b16 %v667
  %v2944 = vunpack.c.l.b16 %v668
  %v2945 = vunpack.c.h.b16 %v668
  %v2946 = vunpack.c.l.b16 %v669
  %v2947 = vunpack.c.h.b16 %v669
  %v2948 = vunpack.c.l.b16 %v670
  %v2949 = vunpack.c.h.b16 %v670
  %v2950 = vunpack.c.l.b16 %v671
  %v2951 = vunpack.c.h.b16 %v671
  %v2952 = vunpack.c.l.b16 %v672
  %v2953 = vunpack.c.h.b16 %v672
  %v2954 = vunpack.c.l.b16 %v673
  %v2955 = vunpack.c.h.b16 %v673
  %v2956 = vunpack.c.l.b16 %v674
  %v2957 = vunpack.c.h.b16 %v674
  %v2958 = vunpack.c.l.b16 %v675
  %v2959 = vunpack.c.h.b16 %v675
  %v2960 = vunpack.c.l.b16 %v676
  %v2961 = vunpack.c.h.b16 %v676
  %v2962 = vunpack.c.l.b16 %v677
  %v2963 = vunpack.c.h.b16 %v677
  %v2964 = vunpack.c.l.b16 %v678
  %v2965 = vunpack.c.h.b16 %v678
  %v2966 = vunpack.c.l.b16 %v679
  %v2967 = vunpack.c.h.b16 %v679
  %v2968 = vunpack.c.l.b16 %v680
  %v2969 = vunpack.c.h.b16 %v680
  %v2970 = vunpack.c.l.b16 %v681
  %v2971 = vunpack.c.h.b16 %v681
  %v2972 = vunpack.c.l.b16 %v682
  %v2973 = vunpack.c.h.b16 %v682
  %v2974 = vunpack.c.l.b16 %v683
  %v2975 = vunpack.c.h.b16 %v683
  %v2976 = vunpack.c.l.b16 %v684
  %v2977 = vunpack.c.h.b16 %v684
  %v2978 = vunpack.c.l.b16 %v685
  %v2979 = vunpack.c.h.b16 %v685
  %v2980 = vunpack.c.l.b16 %v686
  %v2981 = vunpack.c.h.b16 %v686
  %v2982 = vunpack.c.l.b16 %v687
  %v2983 = vunpack.c.h.b16 %v687
  %v2984 = vunpack.c.l.b16 %v688
  %v2985 = vunpack.c.h.b16 %v688
  %v2986 = vunpack.c.l.b16 %v689
  %v2987 = vunpack.c.h.b16 %v689
  %v2988 = vunpack.c.l.b16 %v690
  %v2989 = vunpack.c.h.b16 %v690
  %v2990 = vunpack.c.l.b16 %v691
  %v2991 = vunpack.c.h.b16 %v691
  %v2992 = vunpack.c.l.b16 %v692
  %v2993 = vunpack.c.h.b16 %v692
  %v2994 = vunpack.c.l.b16 %v693
  %v2995 = vunpack.c.h.b16 %v693
  %v2996 = vunpack.c.l.b16 %v694
  %v2997 = vunpack.c.h.b16 %v694
  %v2998 = vunpack.c.l.b16 %v695
  %v2999 = vunpack.c.h.b16 %v695
  %v3000 = vunpack.c.l.b16 %v696
  %v3001 = vunpack.c.h.b16 %v696
  %v3002 = vunpack.c.l.b16 %v697
  %v3003 = vunpack.c.h.b16 %v697
  %v3004 = vunpack.c.l.b16 %v698
  %v3005 = vunpack.c.h.b16 %v698
  %v3006 = vunpack.c.l.b16 %v699
  %v3007 = vunpack.c.h.b16 %v699
  %v3008 = vunpack.c.l.b16 %v700
  %v3009 = vunpack.c.h.b16 %v700
  %v3010 = vunpack.c.l.b16 %v701
  %v3011 = vunpack.c.h.b16 %v701
  %v3012 = vunpack.c.l.b16 %v702
  %v3013 = vunpack.c.h.b16 %v702
  %v3014 = vunpack.c.l.b16 %v703
  %v3015 = vunpack.c.h.b16 %v703
  %v3016 = vunpack.c.l.b16 %v704
  %v3017 = vunpack.c.h.b16 %v704
  %v3018 = vunpack.c.l.b16 %v705
  %v3019 = vunpack.c.h.b16 %v705
  %v3020 = vunpack.c.l.b16 %v706
  %v3021 = vunpack.c.h.b16 %v706
  %v3022 = vunpack.c.l.b16 %v707
  %v3023 = vunpack.c.h.b16 %v707
  %v3024 = vunpack.c.l.b16 %v708
  %v3025 = vunpack.c.h.b16 %v708
  %v3026 = vunpack.c.l.b16 %v709
  %v3027 = vunpack.c.h.b16 %v709
  %v3028 = vunpack.c.l.b16 %v710
  %v3029 = vunpack.c.h.b16 %v710
  %v3030 = vunpack.c.l.b16 %v711
  %v3031 = vunpack.c.h.b16 %v711
  %v3032 = vunpack.c.l.b16 %v712
  %v3033 = vunpack.c.h.b16 %v712
  %v3034 = vunpack.c.l.b16 %v713
  %v3035 = vunpack.c.h.b16 %v713
  %v3036 = vunpack.c.l.b16 %v714
  %v3037 = vunpack.c.h.b16 %v714
  %v3038 = vunpack.c.l.b16 %v715
  %v3039 = vunpack.c.h.b16 %v715
  %v3040 = vunpack.c.l.b16 %v716
  %v3041 = vunpack.c.h.b16 %v716
  %v3042 = vunpack.c.l.b16 %v717
  %v3043 = vunpack.c.h.b16 %v717
  %v3044 = vunpack.c.l.b16 %v718
  %v3045 = vunpack.c.h.b16 %v718
  %v3046 = vunpack.c.l.b16 %v719
  %v3047 = vunpack.c.h.b16 %v719
  %v3048 = vunpack.c.l.b16 %v720
  %v3049 = vunpack.c.h.b16 %v720
  %v3050 = vunpack.c.l.b16 %v721
  %v3051 = vunpack.c.h.b16 %v721
  %v3052 = vunpack.c.l.b16 %v722
  %v3053 = vunpack.c.h.b16 %v722
  %v3054 = vunpack.c.l.b16 %v723
  %v3055 = vunpack.c.h.b16 %v723
  %v3056 = vunpack.c.l.b16 %v724
  %v3057 = vunpack.c.h.b16 %v724
  %v3058 = vunpack.c.l.b16 %v725
  %v3059 = vunpack.c.h.b16 %v725
  %v3060 = vunpack.c.l.b16 %v726
  %v3061 = vunpack.c.h.b16 %v726
  %v3062 = vunpack.c.l.b16 %v727
  %v3063 = vunpack.c.h.b16 %v727
  %v3064 = vunpack.c.l.b16 %v728
  %v3065 = vunpack.c.h.b16 %v728
  %v3066 = vunpack.c.l.b16 %v729
  %v3067 = vunpack.c.h.b16 %v729
  %v3068 = vunpack.c.l.b16 %v730
  %v3069 = vunpack.c.h.b16 %v730
  %v3070 = vunpack.c.l.b16 %v731
  %v3071 = vunpack.c.h.b16 %v731
  %v3072 = vunpack.c.l.b16 %v732
  %v3073 = vunpack.c.h.b16 %v732
  %v3074 = vunpack.c.l.b16 %v733
  %v3075 = vunpack.c.h.b16 %v733
  %v3076 = vunpack.c.l.b16 %v734
  %v3077 = vunpack.c.h.b16 %v734
  %v3078 = vunpack.c.l.b16 %v735
  %v3079 = vunpack.c.h.b16 %v735
  %v3080 = vunpack.c.l.b16 %v736
  %v3081 = vunpack.c.h.b16 %v736
  %v3082 = vunpack.c.l.b16 %v737
  %v3083 = vunpack.c.h.b16 %v737
  %v3084 = vunpack.c.l.b16 %v738
  %v3085 = vunpack.c.h.b16 %v738
  %v3086 = vunpack.c.l.b16 %v739
  %v3087 = vunpack.c.h.b16 %v739
  %v3088 = vunpack.c.l.b16 %v740
  %v3089 = vunpack.c.h.b16 %v740
  %v3090 = vunpack.c.l.b16 %v741
  %v3091 = vunpack.c.h.b16 %v741
  %v3092 = vunpack.c.l.b16 %v742
  %v3093 = vunpack.c.h.b16 %v742
  %v3094 = vunpack.c.l.b16 %v743
  %v3095 = vunpack.c.h.b16 %v743
  %v3096 = vunpack.c.l.b16 %v744
  %v3097 = vunpack.c.h.b16 %v744
  %v3098 = vunpack.c.l.b16 %v745
  %v3099 = vunpack.c.h.b16 %v745
  %v3100 = vunpack.c.l.b16 %v746
  %v3101 = vunpack.c.h.b16 %v746
  %v3102 = vunpack.c.l.b16 %v747
  %v3103 = vunpack.c.h.b16 %v747
  %v3104 = vunpack.c.l.b16 %v748
  %v3105 = vunpack.c.h.b16 %v748
  %v3106 = vunpack.c.l.b16 %v749
  %v3107 = vunpack.c.h.b16 %v749
  %v3108 = vunpack.c.l.b16 %v750
  %v3109 = vunpack.c.h.b16 %v750
  %v3110 = vunpack.c.l.b16 %v751
  %v3111 = vunpack.c.h.b16 %v751
  %v3112 = vunpack.c.l.b16 %v752
  %v3113 = vunpack.c.h.b16 %v752
  %v3114 = vunpack.c.l.b16 %v753
  %v3115 = vunpack.c.h.b16 %v753
  %v3116 = vunpack.c.l.b16 %v754
  %v3117 = vunpack.c.h.b16 %v754
  %v3118 = vunpack.c.l.b16 %v755
  %v3119 = vunpack.c.h.b16 %v755
  %v3120 = vunpack.c.l.b16 %v756
  %v3121 = vunpack.c.h.b16 %v756
  %v3122 = vunpack.c.l.b16 %v757
  %v3123 = vunpack.c.h.b16 %v757
  %v3124 = vunpack.c.l.b16 %v758
  %v3125 = vunpack.c.h.b16 %v758
  %v3126 = vunpack.c.l.b16 %v759
  %v3127 = vunpack.c.h.b16 %v759
  %v3128 = vunpack.c.l.b16 %v760
  %v3129 = vunpack.c.h.b16 %v760
  %v3130 = vunpack.c.l.b16 %v761
  %v3131 = vunpack.c.h.b16 %v761
  %v3132 = vunpack.c.l.b16 %v762
  %v3133 = vunpack.c.h.b16 %v762
  %v3134 = vunpack.c.l.b16 %v763
  %v3135 = vunpack.c.h.b16 %v763
  %v3136 = vunpack.c.l.b16 %v764
  %v3137 = vunpack.c.h.b16 %v764
  %v3138 = vunpack.c.l.b16 %v765
  %v3139 = vunpack.c.h.b16 %v765
  %v3140 = vunpack.c.l.b16 %v766
  %v3141 = vunpack.c.h.b16 %v766
  %v3142 = vunpack.c.l.b16 %v767
  %v3143 = vunpack.c.h.b16 %v767
  %v3144 = vunpack.c.l.b16 %v768
  %v3145 = vunpack.c.h.b16 %v768
  %v3146 = vunpack.c.l.b16 %v769
  %v3147 = vunpack.c.h.b16 %v769
  %v3148 = vunpack.c.l.b16 %v770
  %v3149 = vunpack.c.h.b16 %v770
  %v3150 = vunpack.c.l.b16 %v771
  %v3151 = vunpack.c.h.b16 %v771
  %v3152 = vunpack.c.l.b16 %v772
  %v3153 = vunpack.c.h.b16 %v772
  %v3154 = vunpack.c.l.b16 %v773
  %v3155 = vunpack.c.h.b16 %v773
  %v3156 = vunpack.c.l.b16 %v774
  %v3157 = vunpack.c.h.b16 %v774
  %v3158 = vunpack.c.l.b16 %v775
  %v3159 = vunpack.c.h.b16 %v775
  %v3160 = vunpack.c.l.b16 %v776
  %v3161 = vunpack.c.h.b16 %v776
  %v3162 = vunpack.c.l.b16 %v777
  %v3163 = vunpack.c.h.b16 %v777
  %v3164 = vunpack.c.l.b16 %v778
  %v3165 = vunpack.c.h.b16 %v778
  %v3166 = vunpack.c.l.b16 %v779
  %v3167 = vunpack.c.h.b16 %v779
  %v3168 = vunpack.c.l.b16 %v780
  %v3169 = vunpack.c.h.b16 %v780
  %v3170 = vunpack.c.l.b16 %v781
  %v3171 = vunpack.c.h.b16 %v781
  %v3172 = vunpack.c.l.b16 %v782
  %v3173 = vunpack.c.h.b16 %v782
  %v3174 = vunpack.c.l.b16 %v783
  %v3175 = vunpack.c.h.b16 %v783
  %v3176 = vunpack.c.l.b16 %v784
  %v3177 = vunpack.c.h.b16 %v784
  %v3178 = vunpack.c.l.b16 %v785
  %v3179 = vunpack.c.h.b16 %v785
  %v3180 = vunpack.c.l.b16 %v786
  %v3181 = vunpack.c.h.b16 %v786
  %v3182 = vunpack.c.l.b16 %v787
  %v3183 = vunpack.c.h.b16 %v787
  %v3184 = vunpack.c.l.b16 %v788
  %v3185 = vunpack.c.h.b16 %v788
  %v3186 = vunpack.c.l.b16 %v789
  %v3187 = vunpack.c.h.b16 %v789
  %v3188 = vunpack.c.l.b16 %v790
  %v3189 = vunpack.c.h.b16 %v790
  %v3190 = vunpack.c.l.b16 %v791
  %v3191 = vunpack.c.h.b16 %v791
  %v3192 = vunpack.c.l.b16 %v792
  %v3193 = vunpack.c.h.b16 %v792
  %v3194 = vunpack.c.l.b16 %v793
  %v3195 = vunpack.c.h.b16 %v793
  %v3196 = vunpack.c.l.b16 %v794
  %v3197 = vunpack.c.h.b16 %v794
  %v3198 = vunpack.c.l.b16 %v795
  %v3199 = vunpack.c.h.b16 %v795
  %v3200 = vunpack.c.l.b16 %v796
  %v3201 = vunpack.c.h.b16 %v796
  %v3202 = vunpack.c.l.b16 %v797
  %v3203 = vunpack.c.h.b16 %v797
  %v3204 = vunpack.c.l.b16 %v798
  %v3205 = vunpack.c.h.b16 %v798
  %v3206 = vunpack.c.l.b16 %v799
  %v3207 = vunpack.c.h.b16 %v799
  %v3208 = vunpack.c.l.b16 %v800
  %v3209 = vunpack.c.h.b16 %v800
  %v3210 = vunpack.c.l.b16 %v801
  %v3211 = vunpack.c.h.b16 %v801
  %v3212 = vunpack.c.l.b16 %v802
  %v3213 = vunpack.c.h.b16 %v802
  %v3214 = vunpack.c.l.b16 %v803
  %v3215 = vunpack.c.h.b16 %v803
  %v3216 = vunpack.c.l.b16 %v804
  %v3217 = vunpack.c.h.b16 %v804
  %v3218 = vunpack.c.l.b16 %v805
  %v3219 = vunpack.c.h.b16 %v805
  %v3220 = vunpack.c.l.b16 %v806
  %v3221 = vunpack.c.h.b16 %v806
  %v3222 = vunpack.c.l.b16 %v807
  %v3223 = vunpack.c.h.b16 %v807
  %v3224 = vunpack.c.l.b16 %v808
  %v3225 = vunpack.c.h.b16 %v808
  %v3226 = vunpack.c.l.b16 %v809
  %v3227 = vunpack.c.h.b16 %v809
  %v3228 = vunpack.c.l.b16 %v810
  %v3229 = vunpack.c.h.b16 %v810
  %v3230 = vpack.c.b16 %v1666, %v1662
  %v3231 = vpack.c.b16 %v1667, %v1663
  %v3232 = vpack.c.b16 %v1668, %v1664
  %v3233 = vpack.c.b16 %v1669, %v1665
  %v3234 = vpack.c.b16 %v1674, %v1670
  %v3235 = vpack.c.b16 %v1675, %v1671
  %v3236 = vpack.c.b16 %v1676, %v1672
  %v3237 = vpack.c.b16 %v1677, %v1673
  %v3238 = vpack.c.b16 %v1682, %v1678
  %v3239 = vpack.c.b16 %v1683, %v1679
  %v3240 = vpack.c.b16 %v1684, %v1680
  %v3241 = vpack.c.b16 %v1685, %v1681
  %v3242 = vpack.c.b16 %v1690, %v1686
  %v3243 = vpack.c.b16 %v1691, %v1687
  %v3244 = vpack.c.b16 %v1692, %v1688
  %v3245 = vpack.c.b16 %v1693, %v1689
  %v3246 = vpack.c.b16 %v1698, %v1694
  %v3247 = vpack.c.b16 %v1699, %v1695
  %v3248 = vpack.c.b16 %v1700, %v1696
  %v3249 = vpack.c.b16 %v1701, %v1697
  %v3250 = vpack.c.b16 %v1706, %v1702
  %v3251 = vpack.c.b16 %v1707, %v1703
  %v3252 = vpack.c.b16 %v1708, %v1704
  %v3253 = vpack.c.b16 %v1709, %v1705
  %v3254 = vpack.c.b16 %v1714, %v1710
  %v3255 = vpack.c.b16 %v1715, %v1711
  %v3256 = vpack.c.b16 %v1716, %v1712
  %v3257 = vpack.c.b16 %v1717, %v1713
  %v3258 = vpack.c.b16 %v1722, %v1718
  %v3259 = vpack.c.b16 %v1723, %v1719
  %v3260 = vpack.c.b16 %v1724, %v1720
  %v3261 = vpack.c.b16 %v1725, %v1721
  %v3262 = vpack.c.b16 %v1730, %v1726
  %v3263 = vpack.c.b16 %v1731, %v1727
  %v3264 = vpack.c.b16 %v1732, %v1728
  %v3265 = vpack.c.b16 %v1733, %v1729
  %v3266 = vpack.c.b16 %v1738, %v1734
  %v3267 = vpack.c.b16 %v1739, %v1735
  %v3268 = vpack.c.b16 %v1740, %v1736
  %v3269 = vpack.c.b16 %v1741, %v1737
  %v3270 = vpack.c.b16 %v1746, %v1742
  %v3271 = vpack.c.b16 %v1747, %v1743
  %v3272 = vpack.c.b16 %v1748, %v1744
  %v3273 = vpack.c.b16 %v1749, %v1745
  %v3274 = vpack.c.b16 %v1754, %v1750
  %v3275 = vpack.c.b16 %v1755, %v1751
  %v3276 = vpack.c.b16 %v1756, %v1752
  %v3277 = vpack.c.b16 %v1757, %v1753
  %v3278 = vpack.c.b16 %v1762, %v1758
  %v3279 = vpack.c.b16 %v1763, %v1759
  %v3280 = vpack.c.b16 %v1764, %v1760
  %v3281 = vpack.c.b16 %v1765, %v1761
  %v3282 = vpack.c.b16 %v1770, %v1766
  %v3283 = vpack.c.b16 %v1771, %v1767
  %v3284 = vpack.c.b16 %v1772, %v1768
  %v3285 = vpack.c.b16 %v1773, %v1769
  %v3286 = vpack.c.b16 %v1778, %v1774
  %v3287 = vpack.c.b16 %v1779, %v1775
  %v3288 = vpack.c.b16 %v1780, %v1776
  %v3289 = vpack.c.b16 %v1781, %v1777
  %v3290 = vpack.c.b16 %v1786, %v1782
  %v3291 = vpack.c.b16 %v1787, %v1783
  %v3292 = vpack.c.b16 %v1788, %v1784
  %v3293 = vpack.c.b16 %v1789, %v1785
  %v3294 = vpack.c.b16 %v1794, %v1790
  %v3295 = vpack.c.b16 %v1795, %v1791
  %v3296 = vpack.c.b16 %v1796, %v1792
  %v3297 = vpack.c.b16 %v1797, %v1793
  %v3298 = vpack.c.b16 %v1802, %v1798
  %v3299 = vpack.c.b16 %v1803, %v1799
  %v3300 = vpack.c.b16 %v1804, %v1800
  %v3301 = vpack.c.b16 %v1805, %v1801
  %v3302 = vpack.c.b16 %v1810, %v1806
  %v3303 = vpack.c.b16 %v1811, %v1807
  %v3304 = vpack.c.b16 %v1812, %v1808
  %v3305 = vpack.c.b16 %v1813, %v1809
  %v3306 = vpack.c.b16 %v1818, %v1814
  %v3307 = vpack.c.b16 %v1819, %v1815
  %v3308 = vpack.c.b16 %v1820, %v1816
  %v3309 = vpack.c.b16 %v1821, %v1817
  %v3310 = vpack.c.b16 %v1826, %v1822
  %v3311 = vpack.c.b16 %v1827, %v1823
  %v3312 = vpack.c.b16 %v1828, %v1824
  %v3313 = vpack.c.b16 %v1829, %v1825
  %v3314 = vpack.c.b16 %v1834, %v1830
  %v3315 = vpack.c.b16 %v1835, %v1831
  %v3316 = vpack.c.b16 %v1836, %v1832
  %v3317 = vpack.c.b16 %v1837, %v1833
  %v3318 = vpack.c.b16 %v1842, %v1838
  %v3319 = vpack.c.b16 %v1843, %v1839
  %v3320 = vpack.c.b16 %v1844, %v1840
  %v3321 = vpack.c.b16 %v1845, %v1841
  %v3322 = vpack.c.b16 %v1850, %v1846
  %v3323 = vpack.c.b16 %v1851, %v1847
  %v3324 = vpack.c.b16 %v1852, %v1848
  %v3325 = vpack.c.b16 %v1853, %v1849
  %v3326 = vpack.c.b16 %v1858, %v1854
  %v3327 = vpack.c.b16 %v1859, %v1855
  %v3328 = vpack.c.b16 %v1860, %v1856
  %v3329 = vpack.c.b16 %v1861, %v1857
  %v3330 = vpack.c.b16 %v1866, %v1862
  %v3331 = vpack.c.b16 %v1867, %v1863
  %v3332 = vpack.c.b16 %v1868, %v1864
  %v3333 = vpack.c.b16 %v1869, %v1865
  %v3334 = vpack.c.b16 %v1874, %v1870
  %v3335 = vpack.c.b16 %v1875, %v1871
  %v3336 = vpack.c.b16 %v1876, %v1872
  %v3337 = vpack.c.b16 %v1877, %v1873
  %v3338 = vpack.c.b16 %v1882, %v1878
  %v3339 = vpack.c.b16 %v1883, %v1879
  %v3340 = vpack.c.b16 %v1884, %v1880
  %v3341 = vpack.c.b16 %v1885, %v1881
  %v3342 = vpack.c.b16 %v1890, %v1886
  %v3343 = vpack.c.b16 %v1891, %v1887
  %v3344 = vpack.c.b16 %v1892, %v1888
  %v3345 = vpack.c.b16 %v1893, %v1889
  %v3346 = vpack.c.b16 %v1898, %v1894
  %v3347 = vpack.c.b16 %v1899, %v1895
  %v3348 = vpack.c.b16 %v1900, %v1896
  %v3349 = vpack.c.b16 %v1901, %v1897
  %v3350 = vpack.c.b16 %v1906, %v1902
  %v3351 = vpack.c.b16 %v1907, %v1903
  %v3352 = vpack.c.b16 %v1908, %v1904
  %v3353 = vpack.c.b16 %v1909, %v1905
  %v3354 = vpack.c.b16 %v1914, %v1910
  %v3355 = vpack.c.b16 %v1915, %v1911
  %v3356 = vpack.c.b16 %v1916, %v1912
  %v3357 = vpack.c.b16 %v1917, %v1913
  %v3358 = vpack.c.b16 %v1922, %v1918
  %v3359 = vpack.c.b16 %v1923, %v1919
  %v3360 = vpack.c.b16 %v1924, %v1920
  %v3361 = vpack.c.b16 %v1925, %v1921
  %v3362 = vpack.c.b16 %v1930, %v1926
  %v3363 = vpack.c.b16 %v1931, %v1927
  %v3364 = vpack.c.b16 %v1932, %v1928
  %v3365 = vpack.c.b16 %v1933, %v1929
  %v3366 = vpack.c.b16 %v1938, %v1934
  %v3367 = vpack.c.b16 %v1939, %v1935
  %v3368 = vpack.c.b16 %v1940, %v1936
  %v3369 = vpack.c.b16 %v1941, %v1937
  %v3370 = vpack.c.b16 %v1946, %v1942
  %v3371 = vpack.c.b16 %v1947, %v1943
  %v3372 = vpack.c.b16 %v1948, %v1944
  %v3373 = vpack.c.b16 %v1949, %v1945
  %v3374 = vpack.c.b16 %v1954, %v1950
  %v3375 = vpack.c.b16 %v1955, %v1951
  %v3376 = vpack.c.b16 %v1956, %v1952
  %v3377 = vpack.c.b16 %v1957, %v1953
  %v3378 = vpack.c.b16 %v1962, %v1958
  %v3379 = vpack.c.b16 %v1963, %v1959
  %v3380 = vpack.c.b16 %v1964, %v1960
  %v3381 = vpack.c.b16 %v1965, %v1961
  %v3382 = vpack.c.b16 %v1970, %v1966
  %v3383 = vpack.c.b16 %v1971, %v1967
  %v3384 = vpack.c.b16 %v1972, %v1968
  %v3385 = vpack.c.b16 %v1973, %v1969
  %v3386 = vpack.c.b16 %v1978, %v1974
  %v3387 = vpack.c.b16 %v1979, %v1975
  %v3388 = vpack.c.b16 %v1980, %v1976
  %v3389 = vpack.c.b16 %v1981, %v1977
  %v3390 = vpack.c.b16 %v1986, %v1982
  %v3391 = vpack.c.b16 %v1987, %v1983
  %v3392 = vpack.c.b16 %v1988, %v1984
  %v3393 = vpack.c.b16 %v1989, %v1985
  %v3394 = vpack.c.b16 %v1994, %v1990
  %v3395 = vpack.c.b16 %v1995, %v1991
  %v3396 = vpack.c.b16 %v1996, %v1992
  %v3397 = vpack.c.b16 %v1997, %v1993
  %v3398 = vpack.c.b16 %v2002, %v1998
  %v3399 = vpack.c.b16 %v2003, %v1999
  %v3400 = vpack.c.b16 %v2004, %v2000
  %v3401 = vpack.c.b16 %v2005, %v2001
  %v3402 = vpack.c.b16 %v2010, %v2006
  %v3403 = vpack.c.b16 %v2011, %v2007
  %v3404 = vpack.c.b16 %v2012, %v2008
  %v3405 = vpack.c.b16 %v2013, %v2009
  %v3406 = vpack.c.b16 %v2018, %v2014
  %v3407 = vpack.c.b16 %v2019, %v2015
  %v3408 = vpack.c.b16 %v2020, %v2016
  %v3409 = vpack.c.b16 %v2021, %v2017
  %v3410 = vpack.c.b16 %v2026, %v2022
  %v3411 = vpack.c.b16 %v2027, %v2023
  %v3412 = vpack.c.b16 %v2028, %v2024
  %v3413 = vpack.c.b16 %v2029, %v2025
  %v3414 = vpack.c.b16 %v2034, %v2030
  %v3415 = vpack.c.b16 %v2035, %v2031
  %v3416 = vpack.c.b16 %v2036, %v2032
  %v3417 = vpack.c.b16 %v2037, %v2033
  %v3418 = vpack.c.b16 %v2042, %v2038
  %v3419 = vpack.c.b16 %v2043, %v2039
  %v3420 = vpack.c.b16 %v2044, %v2040
  %v3421 = vpack.c.b16 %v2045, %v2041
  %v3422 = vpack.c.b16 %v2050, %v2046
  %v3423 = vpack.c.b16 %v2051, %v2047
  %v3424 = vpack.c.b16 %v2052, %v2048
  %v3425 = vpack.c.b16 %v2053, %v2049
  %v3426 = vpack.c.b16 %v2058, %v2054
  %v3427 = vpack.c.b16 %v2059, %v2055
  %v3428 = vpack.c.b16 %v2060, %v2056
  %v3429 = vpack.c.b16 %v2061, %v2057
  %v3430 = vpack.c.b16 %v2066, %v2062
  %v3431 = vpack.c.b16 %v2067, %v2063
  %v3432 = vpack.c.b16 %v2068, %v2064
  %v3433 = vpack.c.b16 %v2069, %v2065
  %v3434 = vpack.c.b16 %v2074, %v2070
  %v3435 = vpack.c.b16 %v2075, %v2071
  %v3436 = vpack.c.b16 %v2076, %v2072
  %v3437 = vpack.c.b16 %v2077, %v2073
  %v3438 = vpack.c.b16 %v2082, %v2078
  %v3439 = vpack.c.b16 %v2083, %v2079
  %v3440 = vpack.c.b16 %v2084, %v2080
  %v3441 = vpack.c.b16 %v2085, %v2081
  %v3442 = vpack.c.b16 %v2090, %v2086
  %v3443 = vpack.c.b16 %v2091, %v2087
  %v3444 = vpack.c.b16 %v2092, %v2088
  %v3445 = vpack.c.b16 %v2093, %v2089
  %v3446 = vpack.c.b16 %v2098, %v2094
  %v3447 = vpack.c.b16 %v2099, %v2095
  %v3448 = vpack.c.b16 %v2100, %v2096
  %v3449 = vpack.c.b16 %v2101, %v2097
  %v3450 = vpack.c.b16 %v2106, %v2102
  %v3451 = vpack.c.b16 %v2107, %v2103
  %v3452 = vpack.c.b16 %v2108, %v2104
  %v3453 = vpack.c.b16 %v2109, %v2105
  %v3454 = vpack.c.b16 %v2114, %v2110
  %v3455 = vpack.c.b16 %v2115, %v2111
  %v3456 = vpack.c.b16 %v2116, %v2112
  %v3457 = vpack.c.b16 %v2117, %v2113
  %v3458 = vpack.c.b16 %v2122, %v2118
  %v3459 = vpack.c.b16 %v2123, %v2119
  %v3460 = vpack.c.b16 %v2124, %v2120
  %v3461 = vpack.c.b16 %v2125, %v2121
  %v3462 = vpack.c.b16 %v2130, %v2126
  %v3463 = vpack.c.b16 %v2131, %v2127
  %v3464 = vpack.c.b16 %v2132, %v2128
  %v3465 = vpack.c.b16 %v2133, %v2129
  %v3466 = vpack.c.b16 %v2138, %v2134
  %v3467 = vpack.c.b16 %v2139, %v2135
  %v3468 = vpack.c.b16 %v2140, %v2136
  %v3469 = vpack.c.b16 %v2141, %v2137
  %v3470 = vpack.c.b16 %v2146, %v2142
  %v3471 = vpack.c.b16 %v2147, %v2143
  %v3472 = vpack.c.b16 %v2148, %v2144
  %v3473 = vpack.c.b16 %v2149, %v2145
  %v3474 = vpack.c.b16 %v2154, %v2150
  %v3475 = vpack.c.b16 %v2155, %v2151
  %v3476 = vpack.c.b16 %v2156, %v2152
  %v3477 = vpack.c.b16 %v2157, %v2153
  %v3478 = vpack.c.b16 %v2162, %v2158
  %v3479 = vpack.c.b16 %v2163, %v2159
  %v3480 = vpack.c.b16 %v2164, %v2160
  %v3481 = vpack.c.b16 %v2165, %v2161
  %v3482 = vpack.c.b16 %v2170, %v2166
  %v3483 = vpack.c.b16 %v2171, %v2167
  %v3484 = vpack.c.b16 %v2172, %v2168
  %v3485 = vpack.c.b16 %v2173, %v2169
  %v3486 = vpack.c.b16 %v2178, %v2174
  %v3487 = vpack.c.b16 %v2179, %v2175
  %v3488 = vpack.c.b16 %v2180, %v2176
  %v3489 = vpack.c.b16 %v2181, %v2177
  %v3490 = vpack.c.b16 %v2186, %v2182
  %v3491 = vpack.c.b16 %v2187, %v2183
  %v3492 = vpack.c.b16 %v2188, %v2184
  %v3493 = vpack.c.b16 %v2189, %v2185
  %v3494 = vpack.c.b16 %v2194, %v2190
  %v3495 = vpack.c.b16 %v2195, %v2191
  %v3496 = vpack.c.b16 %v2196, %v2192
  %v3497 = vpack.c.b16 %v2197, %v2193
  %v3498 = vpack.c.b16 %v2202, %v2198
  %v3499 = vpack.c.b16 %v2203, %v2199
  %v3500 = vpack.c.b16 %v2204, %v2200
  %v3501 = vpack.c.b16 %v2205, %v2201
  %v3502 = vpack.c.b16 %v2210, %v2206
  %v3503 = vpack.c.b16 %v2211, %v2207
  %v3504 = vpack.c.b16 %v2212, %v2208
  %v3505 = vpack.c.b16 %v2213, %v2209
  %v3506 = vpack.c.b16 %v2218, %v2214
  %v3507 = vpack.c.b16 %v2219, %v2215
  %v3508 = vpack.c.b16 %v2220, %v2216
  %v3509 = vpack.c.b16 %v2221, %v2217
  %v3510 = vpack.c.b16 %v2226, %v2222
  %v3511 = vpack.c.b16 %v2227, %v2223
  %v3512 = vpack.c.b16 %v2228, %v2224
  %v3513 = vpack.c.b16 %v2229, %v2225
  %v3514 = vpack.c.b16 %v2234, %v2230
  %v3515 = vpack.c.b16 %v2235, %v2231
  %v3516 = vpack.c.b16 %v2236, %v2232
  %v3517 = vpack.c.b16 %v2237, %v2233
  %v3518 = vpack.c.b16 %v2242, %v2238
  %v3519 = vpack.c.b16 %v2243, %v2239
  %v3520 = vpack.c.b16 %v2244, %v2240
  %v3521 = vpack.c.b16 %v2245, %v2241
  %v3522 = vpack.c.b16 %v2250, %v2246
  %v3523 = vpack.c.b16 %v2251, %v2247
  %v3524 = vpack.c.b16 %v2252, %v2248
  %v3525 = vpack.c.b16 %v2253, %v2249
  %v3526 = vpack.c.b16 %v2258, %v2254
  %v3527 = vpack.c.b16 %v2259, %v2255
  %v3528 = vpack.c.b16 %v2260, %v2256
  %v3529 = vpack.c.b16 %v2261, %v2257
  %v3530 = vpack.c.b16 %v2266, %v2262
  %v3531 = vpack.c.b16 %v2267, %v2263
  %v3532 = vpack.c.b16 %v2268, %v2264
  %v3533 = vpack.c.b16 %v2269, %v2265
  %v3534 = vpack.c.b16 %v2274, %v2270
  %v3535 = vpack.c.b16 %v2275, %v2271
  %v3536 = vpack.c.b16 %v2276, %v2272
  %v3537 = vpack.c.b16 %v2277, %v2273
  %v3538 = vpack.c.b16 %v2282, %v2278
  %v3539 = vpack.c.b16 %v2283, %v2279
  %v3540 = vpack.c.b16 %v2284, %v2280
  %v3541 = vpack.c.b16 %v2285, %v2281
  %v3542 = vpack.c.b16 %v2290, %v2286
  %v3543 = vpack.c.b16 %v2291, %v2287
  %v3544 = vpack.c.b16 %v2292, %v2288
  %v3545 = vpack.c.b16 %v2293, %v2289
  %v3546 = vpack.c.b16 %v2298, %v2294
  %v3547 = vpack.c.b16 %v2299, %v2295
  %v3548 = vpack.c.b16 %v2300, %v2296
  %v3549 = vpack.c.b16 %v2301, %v2297
  %v3550 = vpack.c.b16 %v2306, %v2302
  %v3551 = vpack.c.b16 %v2307, %v2303
  %v3552 = vpack.c.b16 %v2308, %v2304
  %v3553 = vpack.c.b16 %v2309, %v2305
  %v3554 = vpack.c.b16 %v2314, %v2310
  %v3555 = vpack.c.b16 %v2315, %v2311
  %v3556 = vpack.c.b16 %v2316, %v2312
  %v3557 = vpack.c.b16 %v2317, %v2313
  %v3558 = vpack.c.b16 %v2322, %v2318
  %v3559 = vpack.c.b16 %v2323, %v2319
  %v3560 = vpack.c.b16 %v2324, %v2320
  %v3561 = vpack.c.b16 %v2325, %v2321
  %v3562 = vpack.c.b16 %v2330, %v2326
  %v3563 = vpack.c.b16 %v2331, %v2327
  %v3564 = vpack.c.b16 %v2332, %v2328
  %v3565 = vpack.c.b16 %v2333, %v2329
  %v3566 = vpack.c.b16 %v2338, %v2334
  %v3567 = vpack.c.b16 %v2339, %v2335
  %v3568 = vpack.c.b16 %v2340, %v2336
  %v3569 = vpack.c.b16 %v2341, %v2337
  %v3570 = vpack.c.b16 %v2346, %v2342
  %v3571 = vpack.c.b16 %v2347, %v2343
  %v3572 = vpack.c.b16 %v2348, %v2344
  %v3573 = vpack.c.b16 %v2349, %v2345
  %v3574 = vpack.c.b16 %v2354, %v2350
  %v3575 = vpack.c.b16 %v2355, %v2351
  %v3576 = vpack.c.b16 %v2356, %v2352
  %v3577 = vpack.c.b16 %v2357, %v2353
  %v3578 = vpack.c.b16 %v2362, %v2358
  %v3579 = vpack.c.b16 %v2363, %v2359
  %v3580 = vpack.c.b16 %v2364, %v2360
  %v3581 = vpack.c.b16 %v2365, %v2361
  %v3582 = vpack.c.b16 %v2370, %v2366
  %v3583 = vpack.c.b16 %v2371, %v2367
  %v3584 = vpack.c.b16 %v2372, %v2368
  %v3585 = vpack.c.b16 %v2373, %v2369
  %v3586 = vpack.c.b16 %v2378, %v2374
  %v3587 = vpack.c.b16 %v2379, %v2375
  %v3588 = vpack.c.b16 %v2380, %v2376
  %v3589 = vpack.c.b16 %v2381, %v2377
  %v3590 = vpack.c.b16 %v2386, %v2382
  %v3591 = vpack.c.b16 %v2387, %v2383
  %v3592 = vpack.c.b16 %v2388, %v2384
  %v3593 = vpack.c.b16 %v2389, %v2385
  %v3594 = vpack.c.b16 %v2394, %v2390
  %v3595 = vpack.c.b16 %v2395, %v2391
  %v3596 = vpack.c.b16 %v2396, %v2392
  %v3597 = vpack.c.b16 %v2397, %v2393
  %v3598 = vpack.c.b16 %v2402, %v2398
  %v3599 = vpack.c.b16 %v2403, %v2399
  %v3600 = vpack.c.b16 %v2404, %v2400
  %v3601 = vpack.c.b16 %v2405, %v2401
  %v3602 = vpack.c.b16 %v2410, %v2406
  %v3603 = vpack.c.b16 %v2411, %v2407
  %v3604 = vpack.c.b16 %v2412, %v2408
  %v3605 = vpack.c.b16 %v2413, %v2409
  %v3606 = vpack.c.b16 %v2418, %v2414
  %v3607 = vpack.c.b16 %v2419, %v2415
  %v3608 = vpack.c.b16 %v2420, %v2416
  %v3609 = vpack.c.b16 %v2421, %v2417
  %v3610 = vpack.c.b16 %v2426, %v2422
  %v3611 = vpack.c.b16 %v2427, %v2423
  %v3612 = vpack.c.b16 %v2428, %v2424
  %v3613 = vpack.c.b16 %v2429, %v2425
  %v3614 = vpack.c.b16 %v2434, %v2430
  %v3615 = vpack.c.b16 %v2435, %v2431
  %v3616 = vpack.c.b16 %v2436, %v2432
  %v3617 = vpack.c.b16 %v2437, %v2433
  %v3618 = vpack.c.b16 %v2442, %v2438
  %v3619 = vpack.c.b16 %v2443, %v2439
  %v3620 = vpack.c.b16 %v2444, %v2440
  %v3621 = vpack.c.b16 %v2445, %v2441
  %v3622 = vpack.c.b16 %v2450, %v2446
  %v3623 = vpack.c.b16 %v2451, %v2447
  %v3624 = vpack.c.b16 %v2452, %v2448
  %v3625 = vpack.c.b16 %v2453, %v2449
  %v3626 = vpack.c.b16 %v2458, %v2454
  %v3627 = vpack.c.b16 %v2459, %v2455
  %v3628 = vpack.c.b16 %v2460, %v2456
  %v3629 = vpack.c.b16 %v2461, %v2457
  %v3630 = vpack.c.b16 %v2466, %v2462
  %v3631 = vpack.c.b16 %v2467, %v2463
  %v3632 = vpack.c.b16 %v2468, %v2464
  %v3633 = vpack.c.b16 %v2469, %v2465
  %v3634 = vpack.c.b16 %v2474, %v2470
  %v3635 = vpack.c.b16 %v2475, %v2471
  %v3636 = vpack.c.b16 %v2476, %v2472
  %v3637 = vpack.c.b16 %v2477, %v2473
  %v3638 = vpack.c.b16 %v2482, %v2478
  %v3639 = vpack.c.b16 %v2483, %v2479
  %v3640 = vpack.c.b16 %v2484, %v2480
  %v3641 = vpack.c.b16 %v2485, %v2481
  %v3642 = vpack.c.b16 %v2490, %v2486
  %v3643 = vpack.c.b16 %v2491, %v2487
  %v3644 = vpack.c.b16 %v2492, %v2488
  %v3645 = vpack.c.b16 %v2493, %v2489
  %v3646 = vpack.c.b16 %v2498, %v2494
  %v3647 = vpack.c.b16 %v2499, %v2495
  %v3648 = vpack.c.b16 %v2500, %v2496
  %v3649 = vpack.c.b16 %v2501, %v2497
  %v3650 = vpack.c.b16 %v2506, %v2502
  %v3651 = vpack.c.b16 %v2507, %v2503
  %v3652 = vpack.c.b16 %v2508, %v2504
  %v3653 = vpack.c.b16 %v2509, %v2505
  %v3654 = vpack.c.b16 %v2514, %v2510
  %v3655 = vpack.c.b16 %v2515, %v2511
  %v3656 = vpack.c.b16 %v2516, %v2512
  %v3657 = vpack.c.b16 %v2517, %v2513
  %v3658 = vpack.c.b16 %v2522, %v2518
  %v3659 = vpack.c.b16 %v2523, %v2519
  %v3660 = vpack.c.b16 %v2524, %v2520
  %v3661 = vpack.c.b16 %v2525, %v2521
  %v3662 = vpack.c.b16 %v2530, %v2526
  %v3663 = vpack.c.b16 %v2531, %v2527
  %v3664 = vpack.c.b16 %v2532, %v2528
  %v3665 = vpack.c.b16 %v2533, %v2529
  %v3666 = vpack.c.b16 %v2538, %v2534
  %v3667 = vpack.c.b16 %v2539, %v2535
  %v3668 = vpack.c.b16 %v2540, %v2536
  %v3669 = vpack.c.b16 %v2541, %v2537
  %v3670 = vpack.c.b16 %v2546, %v2542
  %v3671 = vpack.c.b16 %v2547, %v2543
  %v3672 = vpack.c.b16 %v2548, %v2544
  %v3673 = vpack.c.b16 %v2549, %v2545
  %v3674 = vpack.c.b16 %v2554, %v2550
  %v3675 = vpack.c.b16 %v2555, %v2551
  %v3676 = vpack.c.b16 %v2556, %v2552
  %v3677 = vpack.c.b16 %v2557, %v2553
  %v3678 = vpack.c.b16 %v2562, %v2558
  %v3679 = vpack.c.b16 %v2563, %v2559
  %v3680 = vpack.c.b16 %v2564, %v2560
  %v3681 = vpack.c.b16 %v2565, %v2561
  %v3682 = vpack.c.b16 %v2570, %v2566
  %v3683 = vpack.c.b16 %v2571, %v2567
  %v3684 = vpack.c.b16 %v2572, %v2568
  %v3685 = vpack.c.b16 %v2573, %v2569
  %v3686 = vpack.c.b16 %v2578, %v2574
  %v3687 = vpack.c.b16 %v2579, %v2575
  %v3688 = vpack.c.b16 %v2580, %v2576
  %v3689 = vpack.c.b16 %v2581, %v2577
  %v3690 = vpack.c.b16 %v2586, %v2582
  %v3691 = vpack.c.b16 %v2587, %v2583
  %v3692 = vpack.c.b16 %v2588, %v2584
  %v3693 = vpack.c.b16 %v2589, %v2585
  %v3694 = vpack.c.b16 %v2594, %v2590
  %v3695 = vpack.c.b16 %v2595, %v2591
  %v3696 = vpack.c.b16 %v2596, %v2592
  %v3697 = vpack.c.b16 %v2597, %v2593
  %v3698 = vpack.c.b16 %v2602, %v2598
  %v3699 = vpack.c.b16 %v2603, %v2599
  %v3700 = vpack.c.b16 %v2604, %v2600
  %v3701 = vpack.c.b16 %v2605, %v2601
  %v3702 = vpack.c.b16 %v2610, %v2606
  %v3703 = vpack.c.b16 %v2611, %v2607
  %v3704 = vpack.c.b16 %v2612, %v2608
  %v3705 = vpack.c.b16 %v2613, %v2609
  %v3706 = vpack.c.b16 %v2618, %v2614
  %v3707 = vpack.c.b16 %v2619, %v2615
  %v3708 = vpack.c.b16 %v2620, %v2616
  %v3709 = vpack.c.b16 %v2621, %v2617
  %v3710 = vpack.c.b16 %v2626, %v2622
  %v3711 = vpack.c.b16 %v2627, %v2623
  %v3712 = vpack.c.b16 %v2628, %v2624
  %v3713 = vpack.c.b16 %v2629, %v2625
  %v3714 = vpack.c.b16 %v2634, %v2630
  %v3715 = vpack.c.b16 %v2635, %v2631
  %v3716 = vpack.c.b16 %v2636, %v2632
  %v3717 = vpack.c.b16 %v2637, %v2633
  %v3718 = vpack.c.b16 %v2642, %v2638
  %v3719 = vpack.c.b16 %v2643, %v2639
  %v3720 = vpack.c.b16 %v2644, %v2640
  %v3721 = vpack.c.b16 %v2645, %v2641
  %v3722 = vpack.c.b16 %v2650, %v2646
  %v3723 = vpack.c.b16 %v2651, %v2647
  %v3724 = vpack.c.b16 %v2652, %v2648
  %v3725 = vpack.c.b16 %v2653, %v2649
  %v3726 = vpack.c.b16 %v2658, %v2654
  %v3727 = vpack.c.b16 %v2659, %v2655
  %v3728 = vpack.c.b16 %v2660, %v2656
  %v3729 = vpack.c.b16 %v2661, %v2657
  %v3730 = vpack.c.b16 %v2666, %v2662
  %v3731 = vpack.c.b16 %v2667, %v2663
  %v3732 = vpack.c.b16 %v2668, %v2664
  %v3733 = vpack.c.b16 %v2669, %v2665
  %v3734 = vpack.c.b16 %v2674, %v2670
  %v3735 = vpack.c.b16 %v2675, %v2671
  %v3736 = vpack.c.b16 %v2676, %v2672
  %v3737 = vpack.c.b16 %v2677, %v2673
  %v3738 = vpack.c.b16 %v2682, %v2678
  %v3739 = vpack.c.b16 %v2683, %v2679
  %v3740 = vpack.c.b16 %v2684, %v2680
  %v3741 = vpack.c.b16 %v2685, %v2681
  %v3742 = vpack.c.b16 %v2690, %v2686
  %v3743 = vpack.c.b16 %v2691, %v2687
  %v3744 = vpack.c.b16 %v2692, %v2688
  %v3745 = vpack.c.b16 %v2693, %v2689
  %v3746 = vpack.c.b16 %v2698, %v2694
  %v3747 = vpack.c.b16 %v2699, %v2695
  %v3748 = vpack.c.b16 %v2700, %v2696
  %v3749 = vpack.c.b16 %v2701, %v2697
  %v3750 = vpack.c.b16 %v2706, %v2702
  %v3751 = vpack.c.b16 %v2707, %v2703
  %v3752 = vpack.c.b16 %v2708, %v2704
  %v3753 = vpack.c.b16 %v2709, %v2705
  %v3754 = vpack.c.b16 %v2714, %v2710
  %v3755 = vpack.c.b16 %v2715, %v2711
  %v3756 = vpack.c.b16 %v2716, %v2712
  %v3757 = vpack.c.b16 %v2717, %v2713
  %v3758 = vpack.c.b16 %v2722, %v2718
  %v3759 = vpack.c.b16 %v2723, %v2719
  %v3760 = vpack.c.b16 %v2724, %v2720
  %v3761 = vpack.c.b16 %v2725, %v2721
  %v3762 = vpack.c.b16 %v2730, %v2726
  %v3763 = vpack.c.b16 %v2731, %v2727
  %v3764 = vpack.c.b16 %v2732, %v2728
  %v3765 = vpack.c.b16 %v2733, %v2729
  %v3766 = vpack.c.b16 %v2738, %v2734
  %v3767 = vpack.c.b16 %v2739, %v2735
  %v3768 = vpack.c.b16 %v2740, %v2736
  %v3769 = vpack.c.b16 %v2741, %v2737
  %v3770 = vpack.c.b16 %v2746, %v2742
  %v3771 = vpack.c.b16 %v2747, %v2743
  %v3772 = vpack.c.b16 %v2748, %v2744
  %v3773 = vpack.c.b16 %v2749, %v2745
  %v3774 = vpack.c.b16 %v2754, %v2750
  %v3775 = vpack.c.b16 %v2755, %v2751
  %v3776 = vpack.c.b16 %v2756, %v2752
  %v3777 = vpack.c.b16 %v2757, %v2753
  %v3778 = vpack.c.b16 %v2762, %v2758
  %v3779 = vpack.c.b16 %v2763, %v2759
  %v3780 = vpack.c.b16 %v2764, %v2760
  %v3781 = vpack.c.b16 %v2765, %v2761
  %v3782 = vpack.c.b16 %v2770, %v2766
  %v3783 = vpack.c.b16 %v2771, %v2767
  %v3784 = vpack.c.b16 %v2772, %v2768
  %v3785 = vpack.c.b16 %v2773, %v2769
  %v3786 = vpack.c.b16 %v2778, %v2774
  %v3787 = vpack.c.b16 %v2779, %v2775
  %v3788 = vpack.c.b16 %v2780, %v2776
  %v3789 = vpack.c.b16 %v2781, %v2777
  %v3790 = vpack.c.b16 %v2786, %v2782
  %v3791 = vpack.c.b16 %v2787, %v2783
  %v3792 = vpack.c.b16 %v2788, %v2784
  %v3793 = vpack.c.b16 %v2789, %v2785
  %v3794 = vpack.c.b16 %v2794, %v2790
  %v3795 = vpack.c.b16 %v2795, %v2791
  %v3796 = vpack.c.b16 %v2796, %v2792
  %v3797 = vpack.c.b16 %v2797, %v2793
  %v3798 = vpack.c.b16 %v2802, %v2798
  %v3799 = vpack.c.b16 %v2803, %v2799
  %v3800 = vpack.c.b16 %v2804, %v2800
  %v3801 = vpack.c.b16 %v2805, %v2801
  %v3802 = vpack.c.b16 %v2810, %v2806
  %v3803 = vpack.c.b16 %v2811, %v2807
  %v3804 = vpack.c.b16 %v2812, %v2808
  %v3805 = vpack.c.b16 %v2813, %v2809
  %v3806 = vpack.c.b16 %v2818, %v2814
  %v3807 = vpack.c.b16 %v2819, %v2815
  %v3808 = vpack.c.b16 %v2820, %v2816
  %v3809 = vpack.c.b16 %v2821, %v2817
  %v3810 = vpack.c.b16 %v2826, %v2822
  %v3811 = vpack.c.b16 %v2827, %v2823
  %v3812 = vpack.c.b16 %v2828, %v2824
  %v3813 = vpack.c.b16 %v2829, %v2825
  %v3814 = vpack.c.b16 %v2834, %v2830
  %v3815 = vpack.c.b16 %v2835, %v2831
  %v3816 = vpack.c.b16 %v2836, %v2832
  %v3817 = vpack.c.b16 %v2837, %v2833
  %v3818 = vpack.c.b16 %v2842, %v2838
  %v3819 = vpack.c.b16 %v2843, %v2839
  %v3820 = vpack.c.b16 %v2844, %v2840
  %v3821 = vpack.c.b16 %v2845, %v2841
  %v3822 = vpack.c.b16 %v2850, %v2846
  %v3823 = vpack.c.b16 %v2851, %v2847
  %v3824 = vpack.c.b16 %v2852, %v2848
  %v3825 = vpack.c.b16 %v2853, %v2849
  %v3826 = vpack.c.b16 %v2858, %v2854
  %v3827 = vpack.c.b16 %v2859, %v2855
  %v3828 = vpack.c.b16 %v2860, %v2856
  %v3829 = vpack.c.b16 %v2861, %v2857
  %v3830 = vpack.c.b16 %v2866, %v2862
  %v3831 = vpack.c.b16 %v2867, %v2863
  %v3832 = vpack.c.b16 %v2868, %v2864
  %v3833 = vpack.c.b16 %v2869, %v2865
  %v3834 = vpack.c.b16 %v2874, %v2870
  %v3835 = vpack.c.b16 %v2875, %v2871
  %v3836 = vpack.c.b16 %v2876, %v2872
  %v3837 = vpack.c.b16 %v2877, %v2873
  %v3838 = vpack.c.b16 %v2882, %v2878
  %v3839 = vpack.c.b16 %v2883, %v2879
  %v3840 = vpack.c.b16 %v2884, %v2880
  %v3841 = vpack.c.b16 %v2885, %v2881
  %v3842 = vpack.c.b16 %v2890, %v2886
  %v3843 = vpack.c.b16 %v2891, %v2887
  %v3844 = vpack.c.b16 %v2892, %v2888
  %v3845 = vpack.c.b16 %v2893, %v2889
  %v3846 = vpack.c.b16 %v2898, %v2894
  %v3847 = vpack.c.b16 %v2899, %v2895
  %v3848 = vpack.c.b16 %v2900, %v2896
  %v3849 = vpack.c.b16 %v2901, %v2897
  %v3850 = vpack.c.b16 %v2906, %v2902
  %v3851 = vpack.c.b16 %v2907, %v2903
  %v3852 = vpack.c.b16 %v2908, %v2904
  %v3853 = vpack.c.b16 %v2909, %v2905
  %v3854 = vpack.c.b16 %v2914, %v2910
  %v3855 = vpack.c.b16 %v2915, %v2911
  %v3856 = vpack.c.b16 %v2916, %v2912
  %v3857 = vpack.c.b16 %v2917, %v2913
  %v3858 = vpack.c.b16 %v2922, %v2918
  %v3859 = vpack.c.b16 %v2923, %v2919
  %v3860 = vpack.c.b16 %v2924, %v2920
  %v3861 = vpack.c.b16 %v2925, %v2921
  %v3862 = vpack.c.b16 %v2930, %v2926
  %v3863 = vpack.c.b16 %v2931, %v2927
  %v3864 = vpack.c.b16 %v2932, %v2928
  %v3865 = vpack.c.b16 %v2933, %v2929
  %v3866 = vpack.c.b16 %v2938, %v2934
  %v3867 = vpack.c.b16 %v2939, %v2935
  %v3868 = vpack.c.b16 %v2940, %v2936
  %v3869 = vpack.c.b16 %v2941, %v2937
  %v3870 = vpack.c.b16 %v2946, %v2942
  %v3871 = vpack.c.b16 %v2947, %v2943
  %v3872 = vpack.c.b16 %v2948, %v2944
  %v3873 = vpack.c.b16 %v2949, %v2945
  %v3874 = vpack.c.b16 %v2954, %v2950
  %v3875 = vpack.c.b16 %v2955, %v2951
  %v3876 = vpack.c.b16 %v2956, %v2952
  %v3877 = vpack.c.b16 %v2957, %v2953
  %v3878 = vpack.c.b16 %v2962, %v2958
  %v3879 = vpack.c.b16 %v2963, %v2959
  %v3880 = vpack.c.b16 %v2964, %v2960
  %v3881 = vpack.c.b16 %v2965, %v2961
  %v3882 = vpack.c.b16 %v2970, %v2966
  %v3883 = vpack.c.b16 %v2971, %v2967
  %v3884 = vpack.c.b16 %v2972, %v2968
  %v3885 = vpack.c.b16 %v2973, %v2969
  %v3886 = vpack.c.b16 %v2978, %v2974
  %v3887 = vpack.c.b16 %v2979, %v2975
  %v3888 = vpack.c.b16 %v2980, %v2976
  %v3889 = vpack.c.b16 %v2981, %v2977
  %v3890 = vpack.c.b16 %v2986, %v2982
  %v3891 = vpack.c.b16 %v2987, %v2983
  %v3892 = vpack.c.b16 %v2988, %v2984
  %v3893 = vpack.c.b16 %v2989, %v2985
  %v3894 = vpack.c.b16 %v2994, %v2990
  %v3895 = vpack.c.b16 %v2995, %v2991
  %v3896 = vpack.c.b16 %v2996, %v2992
  %v3897 = vpack.c.b16 %v2997, %v2993
  %v3898 = vpack.c.b16 %v3002, %v2998
  %v3899 = vpack.c.b16 %v3003, %v2999
  %v3900 = vpack.c.b16 %v3004, %v3000
  %v3901 = vpack.c.b16 %v3005, %v3001
  %v3902 = vpack.c.b16 %v3010, %v3006
  %v3903 = vpack.c.b16 %v3011, %v3007
  %v3904 = vpack.c.b16 %v3012, %v3008
  %v3905 = vpack.c.b16 %v3013, %v3009
  %v3906 = vpack.c.b16 %v3018, %v3014
  %v3907 = vpack.c.b16 %v3019, %v3015
  %v3908 = vpack.c.b16 %v3020, %v3016
  %v3909 = vpack.c.b16 %v3021, %v3017
  %v3910 = vpack.c.b16 %v3026, %v3022
  %v3911 = vpack.c.b16 %v3027, %v3023
  %v3912 = vpack.c.b16 %v3028, %v3024
  %v3913 = vpack.c.b16 %v3029, %v3025
  %v3914 = vpack.c.b16 %v3034, %v3030
  %v3915 = vpack.c.b16 %v3035, %v3031
  %v3916 = vpack.c.b16 %v3036, %v3032
  %v3917 = vpack.c.b16 %v3037, %v3033
  %v3918 = vpack.c.b16 %v3042, %v3038
  %v3919 = vpack.c.b16 %v3043, %v3039
  %v3920 = vpack.c.b16 %v3044, %v3040
  %v3921 = vpack.c.b16 %v3045, %v3041
  %v3922 = vpack.c.b16 %v3050, %v3046
  %v3923 = vpack.c.b16 %v3051, %v3047
  %v3924 = vpack.c.b16 %v3052, %v3048
  %v3925 = vpack.c.b16 %v3053, %v3049
  %v3926 = vpack.c.b16 %v3058, %v3054
  %v3927 = vpack.c.b16 %v3059, %v3055
  %v3928 = vpack.c.b16 %v3060, %v3056
  %v3929 = vpack.c.b16 %v3061, %v3057
  %v3930 = vpack.c.b16 %v3066, %v3062
  %v3931 = vpack.c.b16 %v3067, %v3063
  %v3932 = vpack.c.b16 %v3068, %v3064
  %v3933 = vpack.c.b16 %v3069, %v3065
  %v3934 = vpack.c.b16 %v3074, %v3070
  %v3935 = vpack.c.b16 %v3075, %v3071
  %v3936 = vpack.c.b16 %v3076, %v3072
  %v3937 = vpack.c.b16 %v3077, %v3073
  %v3938 = vpack.c.b16 %v3082, %v3078
  %v3939 = vpack.c.b16 %v3083, %v3079
  %v3940 = vpack.c.b16 %v3084, %v3080
  %v3941 = vpack.c.b16 %v3085, %v3081
  %v3942 = vpack.c.b16 %v3090, %v3086
  %v3943 = vpack.c.b16 %v3091, %v3087
  %v3944 = vpack.c.b16 %v3092, %v3088
  %v3945 = vpack.c.b16 %v3093, %v3089
  %v3946 = vpack.c.b16 %v3098, %v3094
  %v3947 = vpack.c.b16 %v3099, %v3095
  %v3948 = vpack.c.b16 %v3100, %v3096
  %v3949 = vpack.c.b16 %v3101, %v3097
  %v3950 = vpack.c.b16 %v3106, %v3102
  %v3951 = vpack.c.b16 %v3107, %v3103
  %v3952 = vpack.c.b16 %v3108, %v3104
  %v3953 = vpack.c.b16 %v3109, %v3105
  %v3954 = vpack.c.b16 %v3114, %v3110
  %v3955 = vpack.c.b16 %v3115, %v3111
  %v3956 = vpack.c.b16 %v3116, %v3112
  %v3957 = vpack.c.b16 %v3117, %v3113
  %v3958 = vpack.c.b16 %v3122, %v3118
  %v3959 = vpack.c.b16 %v3123, %v3119
  %v3960 = vpack.c.b16 %v3124, %v3120
  %v3961 = vpack.c.b16 %v3125, %v3121
  %v3962 = vpack.c.b16 %v3130, %v3126
  %v3963 = vpack.c.b16 %v3131, %v3127
  %v3964 = vpack.c.b16 %v3132, %v3128
  %v3965 = vpack.c.b16 %v3133, %v3129
  %v3966 = vpack.c.b16 %v3138, %v3134
  %v3967 = vpack.c.b16 %v3139, %v3135
  %v3968 = vpack.c.b16 %v3140, %v3136
  %v3969 = vpack.c.b16 %v3141, %v3137
  %v3970 = vpack.c.b16 %v3146, %v3142
  %v3971 = vpack.c.b16 %v3147, %v3143
  %v3972 = vpack.c.b16 %v3148, %v3144
  %v3973 = vpack.c.b16 %v3149, %v3145
  %v3974 = vpack.c.b16 %v3154, %v3150
  %v3975 = vpack.c.b16 %v3155, %v3151
  %v3976 = vpack.c.b16 %v3156, %v3152
  %v3977 = vpack.c.b16 %v3157, %v3153
  %v3978 = vpack.c.b16 %v3162, %v3158
  %v3979 = vpack.c.b16 %v3163, %v3159
  %v3980 = vpack.c.b16 %v3164, %v3160
  %v3981 = vpack.c.b16 %v3165, %v3161
  %v3982 = vpack.c.b16 %v3170, %v3166
  %v3983 = vpack.c.b16 %v3171, %v3167
  %v3984 = vpack.c.b16 %v3172, %v3168
  %v3985 = vpack.c.b16 %v3173, %v3169
  %v3986 = vpack.c.b16 %v3178, %v3174
  %v3987 = vpack.c.b16 %v3179, %v3175
  %v3988 = vpack.c.b16 %v3180, %v3176
  %v3989 = vpack.c.b16 %v3181, %v3177
  %v3990 = vpack.c.b16 %v3186, %v3182
  %v3991 = vpack.c.b16 %v3187, %v3183
  %v3992 = vpack.c.b16 %v3188, %v3184
  %v3993 = vpack.c.b16 %v3189, %v3185
  %v3994 = vpack.c.b16 %v3194, %v3190
  %v3995 = vpack.c.b16 %v3195, %v3191
  %v3996 = vpack.c.b16 %v3196, %v3192
  %v3997 = vpack.c.b16 %v3197, %v3193
  %v3998 = vpack.c.b16 %v3202, %v3198
  %v3999 = vpack.c.b16 %v3203, %v3199
  %v4000 = vpack.c.b16 %v3204, %v3200
  %v4001 = vpack.c.b16 %v3205, %v3201
  %v4002 = vpack.c.b16 %v3210, %v3206
  %v4003 = vpack.c.b16 %v3211, %v3207
  %v4004 = vpack.c.b16 %v3212, %v3208
  %v4005 = vpack.c.b16 %v3213, %v3209
  %v4006 = vpack.c.b16 %v3218, %v3214
  %v4007 = vpack.c.b16 %v3219, %v3215
  %v4008 = vpack.c.b16 %v3220, %v3216
  %v4009 = vpack.c.b16 %v3221, %v3217
  %v4010 = vpack.c.b16 %v3226, %v3222
  %v4011 = vpack.c.b16 %v3227, %v3223
  %v4012 = vpack.c.b16 %v3228, %v3224
  %v4013 = vpack.c.b16 %v3229, %v3225
  %vm4798 = vcmask 523264
  %v4799 = vsel %vm4798, %v853, 0
  %4801 = vmatpush.bf16.msra.mxu0 %v3258
  %4802 = vmatpush.bf16.msra.mxu0 %v3254
  %4803 = vmatpush.bf16.msra.mxu0 %v3250
  %4804 = vmatpush.bf16.msra.mxu0 %v3246
  %4805 = vmatpush.bf16.msra.mxu0 %v3242
  %4806 = vmatpush.bf16.msra.mxu0 %v3238
  %4807 = vmatpush.bf16.msra.mxu0 %v3234
  %4808 = vmatpush.bf16.msra.mxu0 %v3230
  %4809 = vmatmul.bf16.gmra.mxu0 %v823
  %v4810 = vpop.f32.mrf.mxu0
  %v4811 = vadd.f32 %v813, %v4810
  %v4812 = vpop.f32.mrf.mxu0
  %4813 = vdwg.mxu0
  %4814 = vmatpush.bf16.msra.mxu0 %v3290
  %4815 = vmatpush.bf16.msra.mxu0 %v3286
  %4816 = vmatpush.bf16.msra.mxu0 %v3282
  %4817 = vmatpush.bf16.msra.mxu0 %v3278
  %4818 = vmatpush.bf16.msra.mxu0 %v3274
  %4819 = vmatpush.bf16.msra.mxu0 %v3270
  %4820 = vmatpush.bf16.msra.mxu0 %v3266
  %4821 = vmatpush.bf16.msra.mxu0 %v3262
  %4822 = vmatmul.bf16.gmra.mxu0 %v824
  %v4823 = vpop.f32.mrf.mxu0
  %v4824 = vadd.f32 %v4811, %v4823
  %v4825 = vpop.f32.mrf.mxu0
  %4826 = vdwg.mxu0
  %4827 = vmatpush.bf16.msra.mxu0 %v3322
  %4828 = vmatpush.bf16.msra.mxu0 %v3318
  %4829 = vmatpush.bf16.msra.mxu0 %v3314
  %4830 = vmatpush.bf16.msra.mxu0 %v3310
  %4831 = vmatpush.bf16.msra.mxu0 %v3306
  %4832 = vmatpush.bf16.msra.mxu0 %v3302
  %4833 = vmatpush.bf16.msra.mxu0 %v3298
  %4834 = vmatpush.bf16.msra.mxu0 %v3294
  %4835 = vmatmul.bf16.gmra.mxu0 %v825
  %v4836 = vpop.f32.mrf.mxu0
  %v4837 = vadd.f32 %v4824, %v4836
  %v4838 = vpop.f32.mrf.mxu0
  %4839 = vdwg.mxu0
  %4840 = vmatpush.bf16.msra.mxu0 %v3354
  %4841 = vmatpush.bf16.msra.mxu0 %v3350
  %4842 = vmatpush.bf16.msra.mxu0 %v3346
  %4843 = vmatpush.bf16.msra.mxu0 %v3342
  %4844 = vmatpush.bf16.msra.mxu0 %v3338
  %4845 = vmatpush.bf16.msra.mxu0 %v3334
  %4846 = vmatpush.bf16.msra.mxu0 %v3330
  %4847 = vmatpush.bf16.msra.mxu0 %v3326
  %4848 = vmatmul.bf16.gmra.mxu0 %v826
  %v4849 = vpop.f32.mrf.mxu0
  %v4850 = vadd.f32 %v4837, %v4849
  %v4851 = vpop.f32.mrf.mxu0
  %4852 = vdwg.mxu0
  %4853 = vmatpush.bf16.msra.mxu0 %v3386
  %4854 = vmatpush.bf16.msra.mxu0 %v3382
  %4855 = vmatpush.bf16.msra.mxu0 %v3378
  %4856 = vmatpush.bf16.msra.mxu0 %v3374
  %4857 = vmatpush.bf16.msra.mxu0 %v3370
  %4858 = vmatpush.bf16.msra.mxu0 %v3366
  %4859 = vmatpush.bf16.msra.mxu0 %v3362
  %4860 = vmatpush.bf16.msra.mxu0 %v3358
  %4861 = vmatmul.bf16.gmra.mxu0 %v827
  %v4862 = vpop.f32.mrf.mxu0
  %v4863 = vadd.f32 %v4850, %v4862
  %v4864 = vpop.f32.mrf.mxu0
  %4865 = vdwg.mxu0
  %4866 = vmatpush.bf16.msra.mxu0 %v3418
  %4867 = vmatpush.bf16.msra.mxu0 %v3414
  %4868 = vmatpush.bf16.msra.mxu0 %v3410
  %4869 = vmatpush.bf16.msra.mxu0 %v3406
  %4870 = vmatpush.bf16.msra.mxu0 %v3402
  %4871 = vmatpush.bf16.msra.mxu0 %v3398
  %4872 = vmatpush.bf16.msra.mxu0 %v3394
  %4873 = vmatpush.bf16.msra.mxu0 %v3390
  %4874 = vmatmul.bf16.gmra.mxu0 %v828
  %v4875 = vpop.f32.mrf.mxu0
  %v4876 = vadd.f32 %v4863, %v4875
  %v4877 = vpop.f32.mrf.mxu0
  %4878 = vdwg.mxu0
  %4879 = vmatpush.bf16.msra.mxu0 %v3450
  %4880 = vmatpush.bf16.msra.mxu0 %v3446
  %4881 = vmatpush.bf16.msra.mxu0 %v3442
  %4882 = vmatpush.bf16.msra.mxu0 %v3438
  %4883 = vmatpush.bf16.msra.mxu0 %v3434
  %4884 = vmatpush.bf16.msra.mxu0 %v3430
  %4885 = vmatpush.bf16.msra.mxu0 %v3426
  %4886 = vmatpush.bf16.msra.mxu0 %v3422
  %4887 = vmatmul.bf16.gmra.mxu0 %v829
  %v4888 = vpop.f32.mrf.mxu0
  %v4889 = vadd.f32 %v4876, %v4888
  %v4890 = vpop.f32.mrf.mxu0
  %4891 = vdwg.mxu0
  %4892 = vmatpush.bf16.msra.mxu0 %v3482
  %4893 = vmatpush.bf16.msra.mxu0 %v3478
  %4894 = vmatpush.bf16.msra.mxu0 %v3474
  %4895 = vmatpush.bf16.msra.mxu0 %v3470
  %4896 = vmatpush.bf16.msra.mxu0 %v3466
  %4897 = vmatpush.bf16.msra.mxu0 %v3462
  %4898 = vmatpush.bf16.msra.mxu0 %v3458
  %4899 = vmatpush.bf16.msra.mxu0 %v3454
  %4900 = vmatmul.bf16.gmra.mxu0 %v830
  %v4901 = vpop.f32.mrf.mxu0
  %v4902 = vadd.f32 %v4889, %v4901
  %v4903 = vpop.f32.mrf.mxu0
  %4904 = vdwg.mxu0
  %4905 = vmatpush.bf16.msra.mxu0 %v3514
  %4906 = vmatpush.bf16.msra.mxu0 %v3510
  %4907 = vmatpush.bf16.msra.mxu0 %v3506
  %4908 = vmatpush.bf16.msra.mxu0 %v3502
  %4909 = vmatpush.bf16.msra.mxu0 %v3498
  %4910 = vmatpush.bf16.msra.mxu0 %v3494
  %4911 = vmatpush.bf16.msra.mxu0 %v3490
  %4912 = vmatpush.bf16.msra.mxu0 %v3486
  %4913 = vmatmul.bf16.gmra.mxu0 %v833
  %v4914 = vpop.f32.mrf.mxu0
  %v4915 = vadd.f32 %v4902, %v4914
  %v4916 = vpop.f32.mrf.mxu0
  %4917 = vdwg.mxu0
  %4918 = vmatpush.bf16.msra.mxu0 %v3546
  %4919 = vmatpush.bf16.msra.mxu0 %v3542
  %4920 = vmatpush.bf16.msra.mxu0 %v3538
  %4921 = vmatpush.bf16.msra.mxu0 %v3534
  %4922 = vmatpush.bf16.msra.mxu0 %v3530
  %4923 = vmatpush.bf16.msra.mxu0 %v3526
  %4924 = vmatpush.bf16.msra.mxu0 %v3522
  %4925 = vmatpush.bf16.msra.mxu0 %v3518
  %4926 = vmatmul.bf16.gmra.mxu0 %v834
  %v4927 = vpop.f32.mrf.mxu0
  %v4928 = vadd.f32 %v4915, %v4927
  %v4929 = vpop.f32.mrf.mxu0
  %4930 = vdwg.mxu0
  %4931 = vmatpush.bf16.msra.mxu0 %v3578
  %4932 = vmatpush.bf16.msra.mxu0 %v3574
  %4933 = vmatpush.bf16.msra.mxu0 %v3570
  %4934 = vmatpush.bf16.msra.mxu0 %v3566
  %4935 = vmatpush.bf16.msra.mxu0 %v3562
  %4936 = vmatpush.bf16.msra.mxu0 %v3558
  %4937 = vmatpush.bf16.msra.mxu0 %v3554
  %4938 = vmatpush.bf16.msra.mxu0 %v3550
  %4939 = vmatmul.bf16.gmra.mxu0 %v835
  %v4940 = vpop.f32.mrf.mxu0
  %v4941 = vadd.f32 %v4928, %v4940
  %v4942 = vpop.f32.mrf.mxu0
  %4943 = vdwg.mxu0
  %4944 = vmatpush.bf16.msra.mxu0 %v3610
  %4945 = vmatpush.bf16.msra.mxu0 %v3606
  %4946 = vmatpush.bf16.msra.mxu0 %v3602
  %4947 = vmatpush.bf16.msra.mxu0 %v3598
  %4948 = vmatpush.bf16.msra.mxu0 %v3594
  %4949 = vmatpush.bf16.msra.mxu0 %v3590
  %4950 = vmatpush.bf16.msra.mxu0 %v3586
  %4951 = vmatpush.bf16.msra.mxu0 %v3582
  %4952 = vmatmul.bf16.gmra.mxu0 %v836
  %v4953 = vpop.f32.mrf.mxu0
  %v4954 = vadd.f32 %v4941, %v4953
  %v4955 = vpop.f32.mrf.mxu0
  %4956 = vdwg.mxu0
  %4957 = vmatpush.bf16.msra.mxu0 %v3642
  %4958 = vmatpush.bf16.msra.mxu0 %v3638
  %4959 = vmatpush.bf16.msra.mxu0 %v3634
  %4960 = vmatpush.bf16.msra.mxu0 %v3630
  %4961 = vmatpush.bf16.msra.mxu0 %v3626
  %4962 = vmatpush.bf16.msra.mxu0 %v3622
  %4963 = vmatpush.bf16.msra.mxu0 %v3618
  %4964 = vmatpush.bf16.msra.mxu0 %v3614
  %4965 = vmatmul.bf16.gmra.mxu0 %v837
  %v4966 = vpop.f32.mrf.mxu0
  %v4967 = vadd.f32 %v4954, %v4966
  %v4968 = vpop.f32.mrf.mxu0
  %4969 = vdwg.mxu0
  %4970 = vmatpush.bf16.msra.mxu0 %v3674
  %4971 = vmatpush.bf16.msra.mxu0 %v3670
  %4972 = vmatpush.bf16.msra.mxu0 %v3666
  %4973 = vmatpush.bf16.msra.mxu0 %v3662
  %4974 = vmatpush.bf16.msra.mxu0 %v3658
  %4975 = vmatpush.bf16.msra.mxu0 %v3654
  %4976 = vmatpush.bf16.msra.mxu0 %v3650
  %4977 = vmatpush.bf16.msra.mxu0 %v3646
  %4978 = vmatmul.bf16.gmra.mxu0 %v838
  %v4979 = vpop.f32.mrf.mxu0
  %v4980 = vadd.f32 %v4967, %v4979
  %v4981 = vpop.f32.mrf.mxu0
  %4982 = vdwg.mxu0
  %4983 = vmatpush.bf16.msra.mxu0 %v3706
  %4984 = vmatpush.bf16.msra.mxu0 %v3702
  %4985 = vmatpush.bf16.msra.mxu0 %v3698
  %4986 = vmatpush.bf16.msra.mxu0 %v3694
  %4987 = vmatpush.bf16.msra.mxu0 %v3690
  %4988 = vmatpush.bf16.msra.mxu0 %v3686
  %4989 = vmatpush.bf16.msra.mxu0 %v3682
  %4990 = vmatpush.bf16.msra.mxu0 %v3678
  %4991 = vmatmul.bf16.gmra.mxu0 %v839
  %v4992 = vpop.f32.mrf.mxu0
  %v4993 = vadd.f32 %v4980, %v4992
  %v4994 = vpop.f32.mrf.mxu0
  %4995 = vdwg.mxu0
  %4996 = vmatpush.bf16.msra.mxu0 %v3738
  %4997 = vmatpush.bf16.msra.mxu0 %v3734
  %4998 = vmatpush.bf16.msra.mxu0 %v3730
  %4999 = vmatpush.bf16.msra.mxu0 %v3726
  %5000 = vmatpush.bf16.msra.mxu0 %v3722
  %5001 = vmatpush.bf16.msra.mxu0 %v3718
  %5002 = vmatpush.bf16.msra.mxu0 %v3714
  %5003 = vmatpush.bf16.msra.mxu0 %v3710
  %5004 = vmatmul.bf16.gmra.mxu0 %v840
  %v5005 = vpop.f32.mrf.mxu0
  %v5006 = vadd.f32 %v4993, %v5005
  %v5007 = vpop.f32.mrf.mxu0
  %5008 = vdwg.mxu0
  %5009 = vmatpush.bf16.msra.mxu0 %v3770
  %5010 = vmatpush.bf16.msra.mxu0 %v3766
  %5011 = vmatpush.bf16.msra.mxu0 %v3762
  %5012 = vmatpush.bf16.msra.mxu0 %v3758
  %5013 = vmatpush.bf16.msra.mxu0 %v3754
  %5014 = vmatpush.bf16.msra.mxu0 %v3750
  %5015 = vmatpush.bf16.msra.mxu0 %v3746
  %5016 = vmatpush.bf16.msra.mxu0 %v3742
  %5017 = vmatmul.bf16.gmra.mxu0 %v843
  %v5018 = vpop.f32.mrf.mxu0
  %v5019 = vadd.f32 %v5006, %v5018
  %v5020 = vpop.f32.mrf.mxu0
  %5021 = vdwg.mxu0
  %5022 = vmatpush.bf16.msra.mxu0 %v3802
  %5023 = vmatpush.bf16.msra.mxu0 %v3798
  %5024 = vmatpush.bf16.msra.mxu0 %v3794
  %5025 = vmatpush.bf16.msra.mxu0 %v3790
  %5026 = vmatpush.bf16.msra.mxu0 %v3786
  %5027 = vmatpush.bf16.msra.mxu0 %v3782
  %5028 = vmatpush.bf16.msra.mxu0 %v3778
  %5029 = vmatpush.bf16.msra.mxu0 %v3774
  %5030 = vmatmul.bf16.gmra.mxu0 %v844
  %v5031 = vpop.f32.mrf.mxu0
  %v5032 = vadd.f32 %v5019, %v5031
  %v5033 = vpop.f32.mrf.mxu0
  %5034 = vdwg.mxu0
  %5035 = vmatpush.bf16.msra.mxu0 %v3834
  %5036 = vmatpush.bf16.msra.mxu0 %v3830
  %5037 = vmatpush.bf16.msra.mxu0 %v3826
  %5038 = vmatpush.bf16.msra.mxu0 %v3822
  %5039 = vmatpush.bf16.msra.mxu0 %v3818
  %5040 = vmatpush.bf16.msra.mxu0 %v3814
  %5041 = vmatpush.bf16.msra.mxu0 %v3810
  %5042 = vmatpush.bf16.msra.mxu0 %v3806
  %5043 = vmatmul.bf16.gmra.mxu0 %v845
  %v5044 = vpop.f32.mrf.mxu0
  %v5045 = vadd.f32 %v5032, %v5044
  %v5046 = vpop.f32.mrf.mxu0
  %5047 = vdwg.mxu0
  %5048 = vmatpush.bf16.msra.mxu0 %v3866
  %5049 = vmatpush.bf16.msra.mxu0 %v3862
  %5050 = vmatpush.bf16.msra.mxu0 %v3858
  %5051 = vmatpush.bf16.msra.mxu0 %v3854
  %5052 = vmatpush.bf16.msra.mxu0 %v3850
  %5053 = vmatpush.bf16.msra.mxu0 %v3846
  %5054 = vmatpush.bf16.msra.mxu0 %v3842
  %5055 = vmatpush.bf16.msra.mxu0 %v3838
  %5056 = vmatmul.bf16.gmra.mxu0 %v846
  %v5057 = vpop.f32.mrf.mxu0
  %v5058 = vadd.f32 %v5045, %v5057
  %v5059 = vpop.f32.mrf.mxu0
  %5060 = vdwg.mxu0
  %5061 = vmatpush.bf16.msra.mxu0 %v3898
  %5062 = vmatpush.bf16.msra.mxu0 %v3894
  %5063 = vmatpush.bf16.msra.mxu0 %v3890
  %5064 = vmatpush.bf16.msra.mxu0 %v3886
  %5065 = vmatpush.bf16.msra.mxu0 %v3882
  %5066 = vmatpush.bf16.msra.mxu0 %v3878
  %5067 = vmatpush.bf16.msra.mxu0 %v3874
  %5068 = vmatpush.bf16.msra.mxu0 %v3870
  %5069 = vmatmul.bf16.gmra.mxu0 %v847
  %v5070 = vpop.f32.mrf.mxu0
  %v5071 = vadd.f32 %v5058, %v5070
  %v5072 = vpop.f32.mrf.mxu0
  %5073 = vdwg.mxu0
  %5074 = vmatpush.bf16.msra.mxu0 %v3930
  %5075 = vmatpush.bf16.msra.mxu0 %v3926
  %5076 = vmatpush.bf16.msra.mxu0 %v3922
  %5077 = vmatpush.bf16.msra.mxu0 %v3918
  %5078 = vmatpush.bf16.msra.mxu0 %v3914
  %5079 = vmatpush.bf16.msra.mxu0 %v3910
  %5080 = vmatpush.bf16.msra.mxu0 %v3906
  %5081 = vmatpush.bf16.msra.mxu0 %v3902
  %5082 = vmatmul.bf16.gmra.mxu0 %v848
  %v5083 = vpop.f32.mrf.mxu0
  %v5084 = vadd.f32 %v5071, %v5083
  %v5085 = vpop.f32.mrf.mxu0
  %5086 = vdwg.mxu0
  %5087 = vmatpush.bf16.msra.mxu0 %v3962
  %5088 = vmatpush.bf16.msra.mxu0 %v3958
  %5089 = vmatpush.bf16.msra.mxu0 %v3954
  %5090 = vmatpush.bf16.msra.mxu0 %v3950
  %5091 = vmatpush.bf16.msra.mxu0 %v3946
  %5092 = vmatpush.bf16.msra.mxu0 %v3942
  %5093 = vmatpush.bf16.msra.mxu0 %v3938
  %5094 = vmatpush.bf16.msra.mxu0 %v3934
  %5095 = vmatmul.bf16.gmra.mxu0 %v849
  %v5096 = vpop.f32.mrf.mxu0
  %v5097 = vadd.f32 %v5084, %v5096
  %v5098 = vpop.f32.mrf.mxu0
  %5099 = vdwg.mxu0
  %5100 = vmatpush.bf16.msra.mxu0 %v3994
  %5101 = vmatpush.bf16.msra.mxu0 %v3990
  %5102 = vmatpush.bf16.msra.mxu0 %v3986
  %5103 = vmatpush.bf16.msra.mxu0 %v3982
  %5104 = vmatpush.bf16.msra.mxu0 %v3978
  %5105 = vmatpush.bf16.msra.mxu0 %v3974
  %5106 = vmatpush.bf16.msra.mxu0 %v3970
  %5107 = vmatpush.bf16.msra.mxu0 %v3966
  %5108 = vmatmul.bf16.gmra.mxu0 %v850
  %v5109 = vpop.f32.mrf.mxu0
  %v5110 = vadd.f32 %v5097, %v5109
  %v5111 = vpop.f32.mrf.mxu0
  %5112 = vdwg.mxu0
  %5113 = vmatpush.bf16.msra.mxu0 0
  %5114 = vmatpush.bf16.msra.mxu0 0
  %5115 = vmatpush.bf16.msra.mxu0 0
  %5116 = vmatpush.bf16.msra.mxu0 0
  %5117 = vmatpush.bf16.msra.mxu0 %v4010
  %5118 = vmatpush.bf16.msra.mxu0 %v4006
  %5119 = vmatpush.bf16.msra.mxu0 %v4002
  %5120 = vmatpush.bf16.msra.mxu0 %v3998
  %5121 = vmatmul.bf16.gmra.mxu0 %v4799
  %v5122 = vpop.f32.mrf.mxu0
  %v5123 = vadd.f32 %v5110, %v5122
  %v5124 = vpop.f32.mrf.mxu0
  %5125 = vdwg.mxu0
  %5126 = vmatpush.bf16.msra.mxu0 %v3259
  %5127 = vmatpush.bf16.msra.mxu0 %v3255
  %5128 = vmatpush.bf16.msra.mxu0 %v3251
  %5129 = vmatpush.bf16.msra.mxu0 %v3247
  %5130 = vmatpush.bf16.msra.mxu0 %v3243
  %5131 = vmatpush.bf16.msra.mxu0 %v3239
  %5132 = vmatpush.bf16.msra.mxu0 %v3235
  %5133 = vmatpush.bf16.msra.mxu0 %v3231
  %5134 = vmatmul.bf16.gmra.mxu0 %v823
  %v5135 = vpop.f32.mrf.mxu0
  %v5136 = vadd.f32 %v814, %v5135
  %v5137 = vpop.f32.mrf.mxu0
  %5138 = vdwg.mxu0
  %5139 = vmatpush.bf16.msra.mxu0 %v3291
  %5140 = vmatpush.bf16.msra.mxu0 %v3287
  %5141 = vmatpush.bf16.msra.mxu0 %v3283
  %5142 = vmatpush.bf16.msra.mxu0 %v3279
  %5143 = vmatpush.bf16.msra.mxu0 %v3275
  %5144 = vmatpush.bf16.msra.mxu0 %v3271
  %5145 = vmatpush.bf16.msra.mxu0 %v3267
  %5146 = vmatpush.bf16.msra.mxu0 %v3263
  %5147 = vmatmul.bf16.gmra.mxu0 %v824
  %v5148 = vpop.f32.mrf.mxu0
  %v5149 = vadd.f32 %v5136, %v5148
  %v5150 = vpop.f32.mrf.mxu0
  %5151 = vdwg.mxu0
  %5152 = vmatpush.bf16.msra.mxu0 %v3323
  %5153 = vmatpush.bf16.msra.mxu0 %v3319
  %5154 = vmatpush.bf16.msra.mxu0 %v3315
  %5155 = vmatpush.bf16.msra.mxu0 %v3311
  %5156 = vmatpush.bf16.msra.mxu0 %v3307
  %5157 = vmatpush.bf16.msra.mxu0 %v3303
  %5158 = vmatpush.bf16.msra.mxu0 %v3299
  %5159 = vmatpush.bf16.msra.mxu0 %v3295
  %5160 = vmatmul.bf16.gmra.mxu0 %v825
  %v5161 = vpop.f32.mrf.mxu0
  %v5162 = vadd.f32 %v5149, %v5161
  %v5163 = vpop.f32.mrf.mxu0
  %5164 = vdwg.mxu0
  %5165 = vmatpush.bf16.msra.mxu0 %v3355
  %5166 = vmatpush.bf16.msra.mxu0 %v3351
  %5167 = vmatpush.bf16.msra.mxu0 %v3347
  %5168 = vmatpush.bf16.msra.mxu0 %v3343
  %5169 = vmatpush.bf16.msra.mxu0 %v3339
  %5170 = vmatpush.bf16.msra.mxu0 %v3335
  %5171 = vmatpush.bf16.msra.mxu0 %v3331
  %5172 = vmatpush.bf16.msra.mxu0 %v3327
  %5173 = vmatmul.bf16.gmra.mxu0 %v826
  %v5174 = vpop.f32.mrf.mxu0
  %v5175 = vadd.f32 %v5162, %v5174
  %v5176 = vpop.f32.mrf.mxu0
  %5177 = vdwg.mxu0
  %5178 = vmatpush.bf16.msra.mxu0 %v3387
  %5179 = vmatpush.bf16.msra.mxu0 %v3383
  %5180 = vmatpush.bf16.msra.mxu0 %v3379
  %5181 = vmatpush.bf16.msra.mxu0 %v3375
  %5182 = vmatpush.bf16.msra.mxu0 %v3371
  %5183 = vmatpush.bf16.msra.mxu0 %v3367
  %5184 = vmatpush.bf16.msra.mxu0 %v3363
  %5185 = vmatpush.bf16.msra.mxu0 %v3359
  %5186 = vmatmul.bf16.gmra.mxu0 %v827
  %v5187 = vpop.f32.mrf.mxu0
  %v5188 = vadd.f32 %v5175, %v5187
  %v5189 = vpop.f32.mrf.mxu0
  %5190 = vdwg.mxu0
  %5191 = vmatpush.bf16.msra.mxu0 %v3419
  %5192 = vmatpush.bf16.msra.mxu0 %v3415
  %5193 = vmatpush.bf16.msra.mxu0 %v3411
  %5194 = vmatpush.bf16.msra.mxu0 %v3407
  %5195 = vmatpush.bf16.msra.mxu0 %v3403
  %5196 = vmatpush.bf16.msra.mxu0 %v3399
  %5197 = vmatpush.bf16.msra.mxu0 %v3395
  %5198 = vmatpush.bf16.msra.mxu0 %v3391
  %5199 = vmatmul.bf16.gmra.mxu0 %v828
  %v5200 = vpop.f32.mrf.mxu0
  %v5201 = vadd.f32 %v5188, %v5200
  %v5202 = vpop.f32.mrf.mxu0
  %5203 = vdwg.mxu0
  %5204 = vmatpush.bf16.msra.mxu0 %v3451
  %5205 = vmatpush.bf16.msra.mxu0 %v3447
  %5206 = vmatpush.bf16.msra.mxu0 %v3443
  %5207 = vmatpush.bf16.msra.mxu0 %v3439
  %5208 = vmatpush.bf16.msra.mxu0 %v3435
  %5209 = vmatpush.bf16.msra.mxu0 %v3431
  %5210 = vmatpush.bf16.msra.mxu0 %v3427
  %5211 = vmatpush.bf16.msra.mxu0 %v3423
  %5212 = vmatmul.bf16.gmra.mxu0 %v829
  %v5213 = vpop.f32.mrf.mxu0
  %v5214 = vadd.f32 %v5201, %v5213
  %v5215 = vpop.f32.mrf.mxu0
  %5216 = vdwg.mxu0
  %5217 = vmatpush.bf16.msra.mxu0 %v3483
  %5218 = vmatpush.bf16.msra.mxu0 %v3479
  %5219 = vmatpush.bf16.msra.mxu0 %v3475
  %5220 = vmatpush.bf16.msra.mxu0 %v3471
  %5221 = vmatpush.bf16.msra.mxu0 %v3467
  %5222 = vmatpush.bf16.msra.mxu0 %v3463
  %5223 = vmatpush.bf16.msra.mxu0 %v3459
  %5224 = vmatpush.bf16.msra.mxu0 %v3455
  %5225 = vmatmul.bf16.gmra.mxu0 %v830
  %v5226 = vpop.f32.mrf.mxu0
  %v5227 = vadd.f32 %v5214, %v5226
  %v5228 = vpop.f32.mrf.mxu0
  %5229 = vdwg.mxu0
  %5230 = vmatpush.bf16.msra.mxu0 %v3515
  %5231 = vmatpush.bf16.msra.mxu0 %v3511
  %5232 = vmatpush.bf16.msra.mxu0 %v3507
  %5233 = vmatpush.bf16.msra.mxu0 %v3503
  %5234 = vmatpush.bf16.msra.mxu0 %v3499
  %5235 = vmatpush.bf16.msra.mxu0 %v3495
  %5236 = vmatpush.bf16.msra.mxu0 %v3491
  %5237 = vmatpush.bf16.msra.mxu0 %v3487
  %5238 = vmatmul.bf16.gmra.mxu0 %v833
  %v5239 = vpop.f32.mrf.mxu0
  %v5240 = vadd.f32 %v5227, %v5239
  %v5241 = vpop.f32.mrf.mxu0
  %5242 = vdwg.mxu0
  %5243 = vmatpush.bf16.msra.mxu0 %v3547
  %5244 = vmatpush.bf16.msra.mxu0 %v3543
  %5245 = vmatpush.bf16.msra.mxu0 %v3539
  %5246 = vmatpush.bf16.msra.mxu0 %v3535
  %5247 = vmatpush.bf16.msra.mxu0 %v3531
  %5248 = vmatpush.bf16.msra.mxu0 %v3527
  %5249 = vmatpush.bf16.msra.mxu0 %v3523
  %5250 = vmatpush.bf16.msra.mxu0 %v3519
  %5251 = vmatmul.bf16.gmra.mxu0 %v834
  %v5252 = vpop.f32.mrf.mxu0
  %v5253 = vadd.f32 %v5240, %v5252
  %v5254 = vpop.f32.mrf.mxu0
  %5255 = vdwg.mxu0
  %5256 = vmatpush.bf16.msra.mxu0 %v3579
  %5257 = vmatpush.bf16.msra.mxu0 %v3575
  %5258 = vmatpush.bf16.msra.mxu0 %v3571
  %5259 = vmatpush.bf16.msra.mxu0 %v3567
  %5260 = vmatpush.bf16.msra.mxu0 %v3563
  %5261 = vmatpush.bf16.msra.mxu0 %v3559
  %5262 = vmatpush.bf16.msra.mxu0 %v3555
  %5263 = vmatpush.bf16.msra.mxu0 %v3551
  %5264 = vmatmul.bf16.gmra.mxu0 %v835
  %v5265 = vpop.f32.mrf.mxu0
  %v5266 = vadd.f32 %v5253, %v5265
  %v5267 = vpop.f32.mrf.mxu0
  %5268 = vdwg.mxu0
  %5269 = vmatpush.bf16.msra.mxu0 %v3611
  %5270 = vmatpush.bf16.msra.mxu0 %v3607
  %5271 = vmatpush.bf16.msra.mxu0 %v3603
  %5272 = vmatpush.bf16.msra.mxu0 %v3599
  %5273 = vmatpush.bf16.msra.mxu0 %v3595
  %5274 = vmatpush.bf16.msra.mxu0 %v3591
  %5275 = vmatpush.bf16.msra.mxu0 %v3587
  %5276 = vmatpush.bf16.msra.mxu0 %v3583
  %5277 = vmatmul.bf16.gmra.mxu0 %v836
  %v5278 = vpop.f32.mrf.mxu0
  %v5279 = vadd.f32 %v5266, %v5278
  %v5280 = vpop.f32.mrf.mxu0
  %5281 = vdwg.mxu0
  %5282 = vmatpush.bf16.msra.mxu0 %v3643
  %5283 = vmatpush.bf16.msra.mxu0 %v3639
  %5284 = vmatpush.bf16.msra.mxu0 %v3635
  %5285 = vmatpush.bf16.msra.mxu0 %v3631
  %5286 = vmatpush.bf16.msra.mxu0 %v3627
  %5287 = vmatpush.bf16.msra.mxu0 %v3623
  %5288 = vmatpush.bf16.msra.mxu0 %v3619
  %5289 = vmatpush.bf16.msra.mxu0 %v3615
  %5290 = vmatmul.bf16.gmra.mxu0 %v837
  %v5291 = vpop.f32.mrf.mxu0
  %v5292 = vadd.f32 %v5279, %v5291
  %v5293 = vpop.f32.mrf.mxu0
  %5294 = vdwg.mxu0
  %5295 = vmatpush.bf16.msra.mxu0 %v3675
  %5296 = vmatpush.bf16.msra.mxu0 %v3671
  %5297 = vmatpush.bf16.msra.mxu0 %v3667
  %5298 = vmatpush.bf16.msra.mxu0 %v3663
  %5299 = vmatpush.bf16.msra.mxu0 %v3659
  %5300 = vmatpush.bf16.msra.mxu0 %v3655
  %5301 = vmatpush.bf16.msra.mxu0 %v3651
  %5302 = vmatpush.bf16.msra.mxu0 %v3647
  %5303 = vmatmul.bf16.gmra.mxu0 %v838
  %v5304 = vpop.f32.mrf.mxu0
  %v5305 = vadd.f32 %v5292, %v5304
  %v5306 = vpop.f32.mrf.mxu0
  %5307 = vdwg.mxu0
  %5308 = vmatpush.bf16.msra.mxu0 %v3707
  %5309 = vmatpush.bf16.msra.mxu0 %v3703
  %5310 = vmatpush.bf16.msra.mxu0 %v3699
  %5311 = vmatpush.bf16.msra.mxu0 %v3695
  %5312 = vmatpush.bf16.msra.mxu0 %v3691
  %5313 = vmatpush.bf16.msra.mxu0 %v3687
  %5314 = vmatpush.bf16.msra.mxu0 %v3683
  %5315 = vmatpush.bf16.msra.mxu0 %v3679
  %5316 = vmatmul.bf16.gmra.mxu0 %v839
  %v5317 = vpop.f32.mrf.mxu0
  %v5318 = vadd.f32 %v5305, %v5317
  %v5319 = vpop.f32.mrf.mxu0
  %5320 = vdwg.mxu0
  %5321 = vmatpush.bf16.msra.mxu0 %v3739
  %5322 = vmatpush.bf16.msra.mxu0 %v3735
  %5323 = vmatpush.bf16.msra.mxu0 %v3731
  %5324 = vmatpush.bf16.msra.mxu0 %v3727
  %5325 = vmatpush.bf16.msra.mxu0 %v3723
  %5326 = vmatpush.bf16.msra.mxu0 %v3719
  %5327 = vmatpush.bf16.msra.mxu0 %v3715
  %5328 = vmatpush.bf16.msra.mxu0 %v3711
  %5329 = vmatmul.bf16.gmra.mxu0 %v840
  %v5330 = vpop.f32.mrf.mxu0
  %v5331 = vadd.f32 %v5318, %v5330
  %v5332 = vpop.f32.mrf.mxu0
  %5333 = vdwg.mxu0
  %5334 = vmatpush.bf16.msra.mxu0 %v3771
  %5335 = vmatpush.bf16.msra.mxu0 %v3767
  %5336 = vmatpush.bf16.msra.mxu0 %v3763
  %5337 = vmatpush.bf16.msra.mxu0 %v3759
  %5338 = vmatpush.bf16.msra.mxu0 %v3755
  %5339 = vmatpush.bf16.msra.mxu0 %v3751
  %5340 = vmatpush.bf16.msra.mxu0 %v3747
  %5341 = vmatpush.bf16.msra.mxu0 %v3743
  %5342 = vmatmul.bf16.gmra.mxu0 %v843
  %v5343 = vpop.f32.mrf.mxu0
  %v5344 = vadd.f32 %v5331, %v5343
  %v5345 = vpop.f32.mrf.mxu0
  %5346 = vdwg.mxu0
  %5347 = vmatpush.bf16.msra.mxu0 %v3803
  %5348 = vmatpush.bf16.msra.mxu0 %v3799
  %5349 = vmatpush.bf16.msra.mxu0 %v3795
  %5350 = vmatpush.bf16.msra.mxu0 %v3791
  %5351 = vmatpush.bf16.msra.mxu0 %v3787
  %5352 = vmatpush.bf16.msra.mxu0 %v3783
  %5353 = vmatpush.bf16.msra.mxu0 %v3779
  %5354 = vmatpush.bf16.msra.mxu0 %v3775
  %5355 = vmatmul.bf16.gmra.mxu0 %v844
  %v5356 = vpop.f32.mrf.mxu0
  %v5357 = vadd.f32 %v5344, %v5356
  %v5358 = vpop.f32.mrf.mxu0
  %5359 = vdwg.mxu0
  %5360 = vmatpush.bf16.msra.mxu0 %v3835
  %5361 = vmatpush.bf16.msra.mxu0 %v3831
  %5362 = vmatpush.bf16.msra.mxu0 %v3827
  %5363 = vmatpush.bf16.msra.mxu0 %v3823
  %5364 = vmatpush.bf16.msra.mxu0 %v3819
  %5365 = vmatpush.bf16.msra.mxu0 %v3815
  %5366 = vmatpush.bf16.msra.mxu0 %v3811
  %5367 = vmatpush.bf16.msra.mxu0 %v3807
  %5368 = vmatmul.bf16.gmra.mxu0 %v845
  %v5369 = vpop.f32.mrf.mxu0
  %v5370 = vadd.f32 %v5357, %v5369
  %v5371 = vpop.f32.mrf.mxu0
  %5372 = vdwg.mxu0
  %5373 = vmatpush.bf16.msra.mxu0 %v3867
  %5374 = vmatpush.bf16.msra.mxu0 %v3863
  %5375 = vmatpush.bf16.msra.mxu0 %v3859
  %5376 = vmatpush.bf16.msra.mxu0 %v3855
  %5377 = vmatpush.bf16.msra.mxu0 %v3851
  %5378 = vmatpush.bf16.msra.mxu0 %v3847
  %5379 = vmatpush.bf16.msra.mxu0 %v3843
  %5380 = vmatpush.bf16.msra.mxu0 %v3839
  %5381 = vmatmul.bf16.gmra.mxu0 %v846
  %v5382 = vpop.f32.mrf.mxu0
  %v5383 = vadd.f32 %v5370, %v5382
  %v5384 = vpop.f32.mrf.mxu0
  %5385 = vdwg.mxu0
  %5386 = vmatpush.bf16.msra.mxu0 %v3899
  %5387 = vmatpush.bf16.msra.mxu0 %v3895
  %5388 = vmatpush.bf16.msra.mxu0 %v3891
  %5389 = vmatpush.bf16.msra.mxu0 %v3887
  %5390 = vmatpush.bf16.msra.mxu0 %v3883
  %5391 = vmatpush.bf16.msra.mxu0 %v3879
  %5392 = vmatpush.bf16.msra.mxu0 %v3875
  %5393 = vmatpush.bf16.msra.mxu0 %v3871
  %5394 = vmatmul.bf16.gmra.mxu0 %v847
  %v5395 = vpop.f32.mrf.mxu0
  %v5396 = vadd.f32 %v5383, %v5395
  %v5397 = vpop.f32.mrf.mxu0
  %5398 = vdwg.mxu0
  %5399 = vmatpush.bf16.msra.mxu0 %v3931
  %5400 = vmatpush.bf16.msra.mxu0 %v3927
  %5401 = vmatpush.bf16.msra.mxu0 %v3923
  %5402 = vmatpush.bf16.msra.mxu0 %v3919
  %5403 = vmatpush.bf16.msra.mxu0 %v3915
  %5404 = vmatpush.bf16.msra.mxu0 %v3911
  %5405 = vmatpush.bf16.msra.mxu0 %v3907
  %5406 = vmatpush.bf16.msra.mxu0 %v3903
  %5407 = vmatmul.bf16.gmra.mxu0 %v848
  %v5408 = vpop.f32.mrf.mxu0
  %v5409 = vadd.f32 %v5396, %v5408
  %v5410 = vpop.f32.mrf.mxu0
  %5411 = vdwg.mxu0
  %5412 = vmatpush.bf16.msra.mxu0 %v3963
  %5413 = vmatpush.bf16.msra.mxu0 %v3959
  %5414 = vmatpush.bf16.msra.mxu0 %v3955
  %5415 = vmatpush.bf16.msra.mxu0 %v3951
  %5416 = vmatpush.bf16.msra.mxu0 %v3947
  %5417 = vmatpush.bf16.msra.mxu0 %v3943
  %5418 = vmatpush.bf16.msra.mxu0 %v3939
  %5419 = vmatpush.bf16.msra.mxu0 %v3935
  %5420 = vmatmul.bf16.gmra.mxu0 %v849
  %v5421 = vpop.f32.mrf.mxu0
  %v5422 = vadd.f32 %v5409, %v5421
  %v5423 = vpop.f32.mrf.mxu0
  %5424 = vdwg.mxu0
  %5425 = vmatpush.bf16.msra.mxu0 %v3995
  %5426 = vmatpush.bf16.msra.mxu0 %v3991
  %5427 = vmatpush.bf16.msra.mxu0 %v3987
  %5428 = vmatpush.bf16.msra.mxu0 %v3983
  %5429 = vmatpush.bf16.msra.mxu0 %v3979
  %5430 = vmatpush.bf16.msra.mxu0 %v3975
  %5431 = vmatpush.bf16.msra.mxu0 %v3971
  %5432 = vmatpush.bf16.msra.mxu0 %v3967
  %5433 = vmatmul.bf16.gmra.mxu0 %v850
  %v5434 = vpop.f32.mrf.mxu0
  %v5435 = vadd.f32 %v5422, %v5434
  %v5436 = vpop.f32.mrf.mxu0
  %5437 = vdwg.mxu0
  %5438 = vmatpush.bf16.msra.mxu0 0
  %5439 = vmatpush.bf16.msra.mxu0 0
  %5440 = vmatpush.bf16.msra.mxu0 0
  %5441 = vmatpush.bf16.msra.mxu0 0
  %5442 = vmatpush.bf16.msra.mxu0 %v4011
  %5443 = vmatpush.bf16.msra.mxu0 %v4007
  %5444 = vmatpush.bf16.msra.mxu0 %v4003
  %5445 = vmatpush.bf16.msra.mxu0 %v3999
  %5446 = vmatmul.bf16.gmra.mxu0 %v4799
  %v5447 = vpop.f32.mrf.mxu0
  %v5448 = vadd.f32 %v5435, %v5447
  %v5449 = vpop.f32.mrf.mxu0
  %5450 = vdwg.mxu0
  %5451 = vmatpush.bf16.msra.mxu0 %v3260
  %5452 = vmatpush.bf16.msra.mxu0 %v3256
  %5453 = vmatpush.bf16.msra.mxu0 %v3252
  %5454 = vmatpush.bf16.msra.mxu0 %v3248
  %5455 = vmatpush.bf16.msra.mxu0 %v3244
  %5456 = vmatpush.bf16.msra.mxu0 %v3240
  %5457 = vmatpush.bf16.msra.mxu0 %v3236
  %5458 = vmatpush.bf16.msra.mxu0 %v3232
  %5459 = vmatmul.bf16.gmra.mxu0 %v823
  %v5460 = vpop.f32.mrf.mxu0
  %v5461 = vadd.f32 %v815, %v5460
  %v5462 = vpop.f32.mrf.mxu0
  %5463 = vdwg.mxu0
  %5464 = vmatpush.bf16.msra.mxu0 %v3292
  %5465 = vmatpush.bf16.msra.mxu0 %v3288
  %5466 = vmatpush.bf16.msra.mxu0 %v3284
  %5467 = vmatpush.bf16.msra.mxu0 %v3280
  %5468 = vmatpush.bf16.msra.mxu0 %v3276
  %5469 = vmatpush.bf16.msra.mxu0 %v3272
  %5470 = vmatpush.bf16.msra.mxu0 %v3268
  %5471 = vmatpush.bf16.msra.mxu0 %v3264
  %5472 = vmatmul.bf16.gmra.mxu0 %v824
  %v5473 = vpop.f32.mrf.mxu0
  %v5474 = vadd.f32 %v5461, %v5473
  %v5475 = vpop.f32.mrf.mxu0
  %5476 = vdwg.mxu0
  %5477 = vmatpush.bf16.msra.mxu0 %v3324
  %5478 = vmatpush.bf16.msra.mxu0 %v3320
  %5479 = vmatpush.bf16.msra.mxu0 %v3316
  %5480 = vmatpush.bf16.msra.mxu0 %v3312
  %5481 = vmatpush.bf16.msra.mxu0 %v3308
  %5482 = vmatpush.bf16.msra.mxu0 %v3304
  %5483 = vmatpush.bf16.msra.mxu0 %v3300
  %5484 = vmatpush.bf16.msra.mxu0 %v3296
  %5485 = vmatmul.bf16.gmra.mxu0 %v825
  %v5486 = vpop.f32.mrf.mxu0
  %v5487 = vadd.f32 %v5474, %v5486
  %v5488 = vpop.f32.mrf.mxu0
  %5489 = vdwg.mxu0
  %5490 = vmatpush.bf16.msra.mxu0 %v3356
  %5491 = vmatpush.bf16.msra.mxu0 %v3352
  %5492 = vmatpush.bf16.msra.mxu0 %v3348
  %5493 = vmatpush.bf16.msra.mxu0 %v3344
  %5494 = vmatpush.bf16.msra.mxu0 %v3340
  %5495 = vmatpush.bf16.msra.mxu0 %v3336
  %5496 = vmatpush.bf16.msra.mxu0 %v3332
  %5497 = vmatpush.bf16.msra.mxu0 %v3328
  %5498 = vmatmul.bf16.gmra.mxu0 %v826
  %v5499 = vpop.f32.mrf.mxu0
  %v5500 = vadd.f32 %v5487, %v5499
  %v5501 = vpop.f32.mrf.mxu0
  %5502 = vdwg.mxu0
  %5503 = vmatpush.bf16.msra.mxu0 %v3388
  %5504 = vmatpush.bf16.msra.mxu0 %v3384
  %5505 = vmatpush.bf16.msra.mxu0 %v3380
  %5506 = vmatpush.bf16.msra.mxu0 %v3376
  %5507 = vmatpush.bf16.msra.mxu0 %v3372
  %5508 = vmatpush.bf16.msra.mxu0 %v3368
  %5509 = vmatpush.bf16.msra.mxu0 %v3364
  %5510 = vmatpush.bf16.msra.mxu0 %v3360
  %5511 = vmatmul.bf16.gmra.mxu0 %v827
  %v5512 = vpop.f32.mrf.mxu0
  %v5513 = vadd.f32 %v5500, %v5512
  %v5514 = vpop.f32.mrf.mxu0
  %5515 = vdwg.mxu0
  %5516 = vmatpush.bf16.msra.mxu0 %v3420
  %5517 = vmatpush.bf16.msra.mxu0 %v3416
  %5518 = vmatpush.bf16.msra.mxu0 %v3412
  %5519 = vmatpush.bf16.msra.mxu0 %v3408
  %5520 = vmatpush.bf16.msra.mxu0 %v3404
  %5521 = vmatpush.bf16.msra.mxu0 %v3400
  %5522 = vmatpush.bf16.msra.mxu0 %v3396
  %5523 = vmatpush.bf16.msra.mxu0 %v3392
  %5524 = vmatmul.bf16.gmra.mxu0 %v828
  %v5525 = vpop.f32.mrf.mxu0
  %v5526 = vadd.f32 %v5513, %v5525
  %v5527 = vpop.f32.mrf.mxu0
  %5528 = vdwg.mxu0
  %5529 = vmatpush.bf16.msra.mxu0 %v3452
  %5530 = vmatpush.bf16.msra.mxu0 %v3448
  %5531 = vmatpush.bf16.msra.mxu0 %v3444
  %5532 = vmatpush.bf16.msra.mxu0 %v3440
  %5533 = vmatpush.bf16.msra.mxu0 %v3436
  %5534 = vmatpush.bf16.msra.mxu0 %v3432
  %5535 = vmatpush.bf16.msra.mxu0 %v3428
  %5536 = vmatpush.bf16.msra.mxu0 %v3424
  %5537 = vmatmul.bf16.gmra.mxu0 %v829
  %v5538 = vpop.f32.mrf.mxu0
  %v5539 = vadd.f32 %v5526, %v5538
  %v5540 = vpop.f32.mrf.mxu0
  %5541 = vdwg.mxu0
  %5542 = vmatpush.bf16.msra.mxu0 %v3484
  %5543 = vmatpush.bf16.msra.mxu0 %v3480
  %5544 = vmatpush.bf16.msra.mxu0 %v3476
  %5545 = vmatpush.bf16.msra.mxu0 %v3472
  %5546 = vmatpush.bf16.msra.mxu0 %v3468
  %5547 = vmatpush.bf16.msra.mxu0 %v3464
  %5548 = vmatpush.bf16.msra.mxu0 %v3460
  %5549 = vmatpush.bf16.msra.mxu0 %v3456
  %5550 = vmatmul.bf16.gmra.mxu0 %v830
  %v5551 = vpop.f32.mrf.mxu0
  %v5552 = vadd.f32 %v5539, %v5551
  %v5553 = vpop.f32.mrf.mxu0
  %5554 = vdwg.mxu0
  %5555 = vmatpush.bf16.msra.mxu0 %v3516
  %5556 = vmatpush.bf16.msra.mxu0 %v3512
  %5557 = vmatpush.bf16.msra.mxu0 %v3508
  %5558 = vmatpush.bf16.msra.mxu0 %v3504
  %5559 = vmatpush.bf16.msra.mxu0 %v3500
  %5560 = vmatpush.bf16.msra.mxu0 %v3496
  %5561 = vmatpush.bf16.msra.mxu0 %v3492
  %5562 = vmatpush.bf16.msra.mxu0 %v3488
  %5563 = vmatmul.bf16.gmra.mxu0 %v833
  %v5564 = vpop.f32.mrf.mxu0
  %v5565 = vadd.f32 %v5552, %v5564
  %v5566 = vpop.f32.mrf.mxu0
  %5567 = vdwg.mxu0
  %5568 = vmatpush.bf16.msra.mxu0 %v3548
  %5569 = vmatpush.bf16.msra.mxu0 %v3544
  %5570 = vmatpush.bf16.msra.mxu0 %v3540
  %5571 = vmatpush.bf16.msra.mxu0 %v3536
  %5572 = vmatpush.bf16.msra.mxu0 %v3532
  %5573 = vmatpush.bf16.msra.mxu0 %v3528
  %5574 = vmatpush.bf16.msra.mxu0 %v3524
  %5575 = vmatpush.bf16.msra.mxu0 %v3520
  %5576 = vmatmul.bf16.gmra.mxu0 %v834
  %v5577 = vpop.f32.mrf.mxu0
  %v5578 = vadd.f32 %v5565, %v5577
  %v5579 = vpop.f32.mrf.mxu0
  %5580 = vdwg.mxu0
  %5581 = vmatpush.bf16.msra.mxu0 %v3580
  %5582 = vmatpush.bf16.msra.mxu0 %v3576
  %5583 = vmatpush.bf16.msra.mxu0 %v3572
  %5584 = vmatpush.bf16.msra.mxu0 %v3568
  %5585 = vmatpush.bf16.msra.mxu0 %v3564
  %5586 = vmatpush.bf16.msra.mxu0 %v3560
  %5587 = vmatpush.bf16.msra.mxu0 %v3556
  %5588 = vmatpush.bf16.msra.mxu0 %v3552
  %5589 = vmatmul.bf16.gmra.mxu0 %v835
  %v5590 = vpop.f32.mrf.mxu0
  %v5591 = vadd.f32 %v5578, %v5590
  %v5592 = vpop.f32.mrf.mxu0
  %5593 = vdwg.mxu0
  %5594 = vmatpush.bf16.msra.mxu0 %v3612
  %5595 = vmatpush.bf16.msra.mxu0 %v3608
  %5596 = vmatpush.bf16.msra.mxu0 %v3604
  %5597 = vmatpush.bf16.msra.mxu0 %v3600
  %5598 = vmatpush.bf16.msra.mxu0 %v3596
  %5599 = vmatpush.bf16.msra.mxu0 %v3592
  %5600 = vmatpush.bf16.msra.mxu0 %v3588
  %5601 = vmatpush.bf16.msra.mxu0 %v3584
  %5602 = vmatmul.bf16.gmra.mxu0 %v836
  %v5603 = vpop.f32.mrf.mxu0
  %v5604 = vadd.f32 %v5591, %v5603
  %v5605 = vpop.f32.mrf.mxu0
  %5606 = vdwg.mxu0
  %5607 = vmatpush.bf16.msra.mxu0 %v3644
  %5608 = vmatpush.bf16.msra.mxu0 %v3640
  %5609 = vmatpush.bf16.msra.mxu0 %v3636
  %5610 = vmatpush.bf16.msra.mxu0 %v3632
  %5611 = vmatpush.bf16.msra.mxu0 %v3628
  %5612 = vmatpush.bf16.msra.mxu0 %v3624
  %5613 = vmatpush.bf16.msra.mxu0 %v3620
  %5614 = vmatpush.bf16.msra.mxu0 %v3616
  %5615 = vmatmul.bf16.gmra.mxu0 %v837
  %v5616 = vpop.f32.mrf.mxu0
  %v5617 = vadd.f32 %v5604, %v5616
  %v5618 = vpop.f32.mrf.mxu0
  %5619 = vdwg.mxu0
  %5620 = vmatpush.bf16.msra.mxu0 %v3676
  %5621 = vmatpush.bf16.msra.mxu0 %v3672
  %5622 = vmatpush.bf16.msra.mxu0 %v3668
  %5623 = vmatpush.bf16.msra.mxu0 %v3664
  %5624 = vmatpush.bf16.msra.mxu0 %v3660
  %5625 = vmatpush.bf16.msra.mxu0 %v3656
  %5626 = vmatpush.bf16.msra.mxu0 %v3652
  %5627 = vmatpush.bf16.msra.mxu0 %v3648
  %5628 = vmatmul.bf16.gmra.mxu0 %v838
  %v5629 = vpop.f32.mrf.mxu0
  %v5630 = vadd.f32 %v5617, %v5629
  %v5631 = vpop.f32.mrf.mxu0
  %5632 = vdwg.mxu0
  %5633 = vmatpush.bf16.msra.mxu0 %v3708
  %5634 = vmatpush.bf16.msra.mxu0 %v3704
  %5635 = vmatpush.bf16.msra.mxu0 %v3700
  %5636 = vmatpush.bf16.msra.mxu0 %v3696
  %5637 = vmatpush.bf16.msra.mxu0 %v3692
  %5638 = vmatpush.bf16.msra.mxu0 %v3688
  %5639 = vmatpush.bf16.msra.mxu0 %v3684
  %5640 = vmatpush.bf16.msra.mxu0 %v3680
  %5641 = vmatmul.bf16.gmra.mxu0 %v839
  %v5642 = vpop.f32.mrf.mxu0
  %v5643 = vadd.f32 %v5630, %v5642
  %v5644 = vpop.f32.mrf.mxu0
  %5645 = vdwg.mxu0
  %5646 = vmatpush.bf16.msra.mxu0 %v3740
  %5647 = vmatpush.bf16.msra.mxu0 %v3736
  %5648 = vmatpush.bf16.msra.mxu0 %v3732
  %5649 = vmatpush.bf16.msra.mxu0 %v3728
  %5650 = vmatpush.bf16.msra.mxu0 %v3724
  %5651 = vmatpush.bf16.msra.mxu0 %v3720
  %5652 = vmatpush.bf16.msra.mxu0 %v3716
  %5653 = vmatpush.bf16.msra.mxu0 %v3712
  %5654 = vmatmul.bf16.gmra.mxu0 %v840
  %v5655 = vpop.f32.mrf.mxu0
  %v5656 = vadd.f32 %v5643, %v5655
  %v5657 = vpop.f32.mrf.mxu0
  %5658 = vdwg.mxu0
  %5659 = vmatpush.bf16.msra.mxu0 %v3772
  %5660 = vmatpush.bf16.msra.mxu0 %v3768
  %5661 = vmatpush.bf16.msra.mxu0 %v3764
  %5662 = vmatpush.bf16.msra.mxu0 %v3760
  %5663 = vmatpush.bf16.msra.mxu0 %v3756
  %5664 = vmatpush.bf16.msra.mxu0 %v3752
  %5665 = vmatpush.bf16.msra.mxu0 %v3748
  %5666 = vmatpush.bf16.msra.mxu0 %v3744
  %5667 = vmatmul.bf16.gmra.mxu0 %v843
  %v5668 = vpop.f32.mrf.mxu0
  %v5669 = vadd.f32 %v5656, %v5668
  %v5670 = vpop.f32.mrf.mxu0
  %5671 = vdwg.mxu0
  %5672 = vmatpush.bf16.msra.mxu0 %v3804
  %5673 = vmatpush.bf16.msra.mxu0 %v3800
  %5674 = vmatpush.bf16.msra.mxu0 %v3796
  %5675 = vmatpush.bf16.msra.mxu0 %v3792
  %5676 = vmatpush.bf16.msra.mxu0 %v3788
  %5677 = vmatpush.bf16.msra.mxu0 %v3784
  %5678 = vmatpush.bf16.msra.mxu0 %v3780
  %5679 = vmatpush.bf16.msra.mxu0 %v3776
  %5680 = vmatmul.bf16.gmra.mxu0 %v844
  %v5681 = vpop.f32.mrf.mxu0
  %v5682 = vadd.f32 %v5669, %v5681
  %v5683 = vpop.f32.mrf.mxu0
  %5684 = vdwg.mxu0
  %5685 = vmatpush.bf16.msra.mxu0 %v3836
  %5686 = vmatpush.bf16.msra.mxu0 %v3832
  %5687 = vmatpush.bf16.msra.mxu0 %v3828
  %5688 = vmatpush.bf16.msra.mxu0 %v3824
  %5689 = vmatpush.bf16.msra.mxu0 %v3820
  %5690 = vmatpush.bf16.msra.mxu0 %v3816
  %5691 = vmatpush.bf16.msra.mxu0 %v3812
  %5692 = vmatpush.bf16.msra.mxu0 %v3808
  %5693 = vmatmul.bf16.gmra.mxu0 %v845
  %v5694 = vpop.f32.mrf.mxu0
  %v5695 = vadd.f32 %v5682, %v5694
  %v5696 = vpop.f32.mrf.mxu0
  %5697 = vdwg.mxu0
  %5698 = vmatpush.bf16.msra.mxu0 %v3868
  %5699 = vmatpush.bf16.msra.mxu0 %v3864
  %5700 = vmatpush.bf16.msra.mxu0 %v3860
  %5701 = vmatpush.bf16.msra.mxu0 %v3856
  %5702 = vmatpush.bf16.msra.mxu0 %v3852
  %5703 = vmatpush.bf16.msra.mxu0 %v3848
  %5704 = vmatpush.bf16.msra.mxu0 %v3844
  %5705 = vmatpush.bf16.msra.mxu0 %v3840
  %5706 = vmatmul.bf16.gmra.mxu0 %v846
  %v5707 = vpop.f32.mrf.mxu0
  %v5708 = vadd.f32 %v5695, %v5707
  %v5709 = vpop.f32.mrf.mxu0
  %5710 = vdwg.mxu0
  %5711 = vmatpush.bf16.msra.mxu0 %v3900
  %5712 = vmatpush.bf16.msra.mxu0 %v3896
  %5713 = vmatpush.bf16.msra.mxu0 %v3892
  %5714 = vmatpush.bf16.msra.mxu0 %v3888
  %5715 = vmatpush.bf16.msra.mxu0 %v3884
  %5716 = vmatpush.bf16.msra.mxu0 %v3880
  %5717 = vmatpush.bf16.msra.mxu0 %v3876
  %5718 = vmatpush.bf16.msra.mxu0 %v3872
  %5719 = vmatmul.bf16.gmra.mxu0 %v847
  %v5720 = vpop.f32.mrf.mxu0
  %v5721 = vadd.f32 %v5708, %v5720
  %v5722 = vpop.f32.mrf.mxu0
  %5723 = vdwg.mxu0
  %5724 = vmatpush.bf16.msra.mxu0 %v3932
  %5725 = vmatpush.bf16.msra.mxu0 %v3928
  %5726 = vmatpush.bf16.msra.mxu0 %v3924
  %5727 = vmatpush.bf16.msra.mxu0 %v3920
  %5728 = vmatpush.bf16.msra.mxu0 %v3916
  %5729 = vmatpush.bf16.msra.mxu0 %v3912
  %5730 = vmatpush.bf16.msra.mxu0 %v3908
  %5731 = vmatpush.bf16.msra.mxu0 %v3904
  %5732 = vmatmul.bf16.gmra.mxu0 %v848
  %v5733 = vpop.f32.mrf.mxu0
  %v5734 = vadd.f32 %v5721, %v5733
  %v5735 = vpop.f32.mrf.mxu0
  %5736 = vdwg.mxu0
  %5737 = vmatpush.bf16.msra.mxu0 %v3964
  %5738 = vmatpush.bf16.msra.mxu0 %v3960
  %5739 = vmatpush.bf16.msra.mxu0 %v3956
  %5740 = vmatpush.bf16.msra.mxu0 %v3952
  %5741 = vmatpush.bf16.msra.mxu0 %v3948
  %5742 = vmatpush.bf16.msra.mxu0 %v3944
  %5743 = vmatpush.bf16.msra.mxu0 %v3940
  %5744 = vmatpush.bf16.msra.mxu0 %v3936
  %5745 = vmatmul.bf16.gmra.mxu0 %v849
  %v5746 = vpop.f32.mrf.mxu0
  %v5747 = vadd.f32 %v5734, %v5746
  %v5748 = vpop.f32.mrf.mxu0
  %5749 = vdwg.mxu0
  %5750 = vmatpush.bf16.msra.mxu0 %v3996
  %5751 = vmatpush.bf16.msra.mxu0 %v3992
  %5752 = vmatpush.bf16.msra.mxu0 %v3988
  %5753 = vmatpush.bf16.msra.mxu0 %v3984
  %5754 = vmatpush.bf16.msra.mxu0 %v3980
  %5755 = vmatpush.bf16.msra.mxu0 %v3976
  %5756 = vmatpush.bf16.msra.mxu0 %v3972
  %5757 = vmatpush.bf16.msra.mxu0 %v3968
  %5758 = vmatmul.bf16.gmra.mxu0 %v850
  %v5759 = vpop.f32.mrf.mxu0
  %v5760 = vadd.f32 %v5747, %v5759
  %v5761 = vpop.f32.mrf.mxu0
  %5762 = vdwg.mxu0
  %5763 = vmatpush.bf16.msra.mxu0 0
  %5764 = vmatpush.bf16.msra.mxu0 0
  %5765 = vmatpush.bf16.msra.mxu0 0
  %5766 = vmatpush.bf16.msra.mxu0 0
  %5767 = vmatpush.bf16.msra.mxu0 %v4012
  %5768 = vmatpush.bf16.msra.mxu0 %v4008
  %5769 = vmatpush.bf16.msra.mxu0 %v4004
  %5770 = vmatpush.bf16.msra.mxu0 %v4000
  %5771 = vmatmul.bf16.gmra.mxu0 %v4799
  %v5772 = vpop.f32.mrf.mxu0
  %v5773 = vadd.f32 %v5760, %v5772
  %v5774 = vpop.f32.mrf.mxu0
  %5775 = vdwg.mxu0
  %5776 = vmatpush.bf16.msra.mxu0 %v3261
  %5777 = vmatpush.bf16.msra.mxu0 %v3257
  %5778 = vmatpush.bf16.msra.mxu0 %v3253
  %5779 = vmatpush.bf16.msra.mxu0 %v3249
  %5780 = vmatpush.bf16.msra.mxu0 %v3245
  %5781 = vmatpush.bf16.msra.mxu0 %v3241
  %5782 = vmatpush.bf16.msra.mxu0 %v3237
  %5783 = vmatpush.bf16.msra.mxu0 %v3233
  %5784 = vmatmul.bf16.gmra.mxu0 %v823
  %v5785 = vpop.f32.mrf.mxu0
  %v5786 = vadd.f32 %v816, %v5785
  %v5787 = vpop.f32.mrf.mxu0
  %5788 = vdwg.mxu0
  %5789 = vmatpush.bf16.msra.mxu0 %v3293
  %5790 = vmatpush.bf16.msra.mxu0 %v3289
  %5791 = vmatpush.bf16.msra.mxu0 %v3285
  %5792 = vmatpush.bf16.msra.mxu0 %v3281
  %5793 = vmatpush.bf16.msra.mxu0 %v3277
  %5794 = vmatpush.bf16.msra.mxu0 %v3273
  %5795 = vmatpush.bf16.msra.mxu0 %v3269
  %5796 = vmatpush.bf16.msra.mxu0 %v3265
  %5797 = vmatmul.bf16.gmra.mxu0 %v824
  %v5798 = vpop.f32.mrf.mxu0
  %v5799 = vadd.f32 %v5786, %v5798
  %v5800 = vpop.f32.mrf.mxu0
  %5801 = vdwg.mxu0
  %5802 = vmatpush.bf16.msra.mxu0 %v3325
  %5803 = vmatpush.bf16.msra.mxu0 %v3321
  %5804 = vmatpush.bf16.msra.mxu0 %v3317
  %5805 = vmatpush.bf16.msra.mxu0 %v3313
  %5806 = vmatpush.bf16.msra.mxu0 %v3309
  %5807 = vmatpush.bf16.msra.mxu0 %v3305
  %5808 = vmatpush.bf16.msra.mxu0 %v3301
  %5809 = vmatpush.bf16.msra.mxu0 %v3297
  %5810 = vmatmul.bf16.gmra.mxu0 %v825
  %v5811 = vpop.f32.mrf.mxu0
  %v5812 = vadd.f32 %v5799, %v5811
  %v5813 = vpop.f32.mrf.mxu0
  %5814 = vdwg.mxu0
  %5815 = vmatpush.bf16.msra.mxu0 %v3357
  %5816 = vmatpush.bf16.msra.mxu0 %v3353
  %5817 = vmatpush.bf16.msra.mxu0 %v3349
  %5818 = vmatpush.bf16.msra.mxu0 %v3345
  %5819 = vmatpush.bf16.msra.mxu0 %v3341
  %5820 = vmatpush.bf16.msra.mxu0 %v3337
  %5821 = vmatpush.bf16.msra.mxu0 %v3333
  %5822 = vmatpush.bf16.msra.mxu0 %v3329
  %5823 = vmatmul.bf16.gmra.mxu0 %v826
  %v5824 = vpop.f32.mrf.mxu0
  %v5825 = vadd.f32 %v5812, %v5824
  %v5826 = vpop.f32.mrf.mxu0
  %5827 = vdwg.mxu0
  %5828 = vmatpush.bf16.msra.mxu0 %v3389
  %5829 = vmatpush.bf16.msra.mxu0 %v3385
  %5830 = vmatpush.bf16.msra.mxu0 %v3381
  %5831 = vmatpush.bf16.msra.mxu0 %v3377
  %5832 = vmatpush.bf16.msra.mxu0 %v3373
  %5833 = vmatpush.bf16.msra.mxu0 %v3369
  %5834 = vmatpush.bf16.msra.mxu0 %v3365
  %5835 = vmatpush.bf16.msra.mxu0 %v3361
  %5836 = vmatmul.bf16.gmra.mxu0 %v827
  %v5837 = vpop.f32.mrf.mxu0
  %v5838 = vadd.f32 %v5825, %v5837
  %v5839 = vpop.f32.mrf.mxu0
  %5840 = vdwg.mxu0
  %5841 = vmatpush.bf16.msra.mxu0 %v3421
  %5842 = vmatpush.bf16.msra.mxu0 %v3417
  %5843 = vmatpush.bf16.msra.mxu0 %v3413
  %5844 = vmatpush.bf16.msra.mxu0 %v3409
  %5845 = vmatpush.bf16.msra.mxu0 %v3405
  %5846 = vmatpush.bf16.msra.mxu0 %v3401
  %5847 = vmatpush.bf16.msra.mxu0 %v3397
  %5848 = vmatpush.bf16.msra.mxu0 %v3393
  %5849 = vmatmul.bf16.gmra.mxu0 %v828
  %v5850 = vpop.f32.mrf.mxu0
  %v5851 = vadd.f32 %v5838, %v5850
  %v5852 = vpop.f32.mrf.mxu0
  %5853 = vdwg.mxu0
  %5854 = vmatpush.bf16.msra.mxu0 %v3453
  %5855 = vmatpush.bf16.msra.mxu0 %v3449
  %5856 = vmatpush.bf16.msra.mxu0 %v3445
  %5857 = vmatpush.bf16.msra.mxu0 %v3441
  %5858 = vmatpush.bf16.msra.mxu0 %v3437
  %5859 = vmatpush.bf16.msra.mxu0 %v3433
  %5860 = vmatpush.bf16.msra.mxu0 %v3429
  %5861 = vmatpush.bf16.msra.mxu0 %v3425
  %5862 = vmatmul.bf16.gmra.mxu0 %v829
  %v5863 = vpop.f32.mrf.mxu0
  %v5864 = vadd.f32 %v5851, %v5863
  %v5865 = vpop.f32.mrf.mxu0
  %5866 = vdwg.mxu0
  %5867 = vmatpush.bf16.msra.mxu0 %v3485
  %5868 = vmatpush.bf16.msra.mxu0 %v3481
  %5869 = vmatpush.bf16.msra.mxu0 %v3477
  %5870 = vmatpush.bf16.msra.mxu0 %v3473
  %5871 = vmatpush.bf16.msra.mxu0 %v3469
  %5872 = vmatpush.bf16.msra.mxu0 %v3465
  %5873 = vmatpush.bf16.msra.mxu0 %v3461
  %5874 = vmatpush.bf16.msra.mxu0 %v3457
  %5875 = vmatmul.bf16.gmra.mxu0 %v830
  %v5876 = vpop.f32.mrf.mxu0
  %v5877 = vadd.f32 %v5864, %v5876
  %v5878 = vpop.f32.mrf.mxu0
  %5879 = vdwg.mxu0
  %5880 = vmatpush.bf16.msra.mxu0 %v3517
  %5881 = vmatpush.bf16.msra.mxu0 %v3513
  %5882 = vmatpush.bf16.msra.mxu0 %v3509
  %5883 = vmatpush.bf16.msra.mxu0 %v3505
  %5884 = vmatpush.bf16.msra.mxu0 %v3501
  %5885 = vmatpush.bf16.msra.mxu0 %v3497
  %5886 = vmatpush.bf16.msra.mxu0 %v3493
  %5887 = vmatpush.bf16.msra.mxu0 %v3489
  %5888 = vmatmul.bf16.gmra.mxu0 %v833
  %v5889 = vpop.f32.mrf.mxu0
  %v5890 = vadd.f32 %v5877, %v5889
  %v5891 = vpop.f32.mrf.mxu0
  %5892 = vdwg.mxu0
  %5893 = vmatpush.bf16.msra.mxu0 %v3549
  %5894 = vmatpush.bf16.msra.mxu0 %v3545
  %5895 = vmatpush.bf16.msra.mxu0 %v3541
  %5896 = vmatpush.bf16.msra.mxu0 %v3537
  %5897 = vmatpush.bf16.msra.mxu0 %v3533
  %5898 = vmatpush.bf16.msra.mxu0 %v3529
  %5899 = vmatpush.bf16.msra.mxu0 %v3525
  %5900 = vmatpush.bf16.msra.mxu0 %v3521
  %5901 = vmatmul.bf16.gmra.mxu0 %v834
  %v5902 = vpop.f32.mrf.mxu0
  %v5903 = vadd.f32 %v5890, %v5902
  %v5904 = vpop.f32.mrf.mxu0
  %5905 = vdwg.mxu0
  %5906 = vmatpush.bf16.msra.mxu0 %v3581
  %5907 = vmatpush.bf16.msra.mxu0 %v3577
  %5908 = vmatpush.bf16.msra.mxu0 %v3573
  %5909 = vmatpush.bf16.msra.mxu0 %v3569
  %5910 = vmatpush.bf16.msra.mxu0 %v3565
  %5911 = vmatpush.bf16.msra.mxu0 %v3561
  %5912 = vmatpush.bf16.msra.mxu0 %v3557
  %5913 = vmatpush.bf16.msra.mxu0 %v3553
  %5914 = vmatmul.bf16.gmra.mxu0 %v835
  %v5915 = vpop.f32.mrf.mxu0
  %v5916 = vadd.f32 %v5903, %v5915
  %v5917 = vpop.f32.mrf.mxu0
  %5918 = vdwg.mxu0
  %5919 = vmatpush.bf16.msra.mxu0 %v3613
  %5920 = vmatpush.bf16.msra.mxu0 %v3609
  %5921 = vmatpush.bf16.msra.mxu0 %v3605
  %5922 = vmatpush.bf16.msra.mxu0 %v3601
  %5923 = vmatpush.bf16.msra.mxu0 %v3597
  %5924 = vmatpush.bf16.msra.mxu0 %v3593
  %5925 = vmatpush.bf16.msra.mxu0 %v3589
  %5926 = vmatpush.bf16.msra.mxu0 %v3585
  %5927 = vmatmul.bf16.gmra.mxu0 %v836
  %v5928 = vpop.f32.mrf.mxu0
  %v5929 = vadd.f32 %v5916, %v5928
  %v5930 = vpop.f32.mrf.mxu0
  %5931 = vdwg.mxu0
  %5932 = vmatpush.bf16.msra.mxu0 %v3645
  %5933 = vmatpush.bf16.msra.mxu0 %v3641
  %5934 = vmatpush.bf16.msra.mxu0 %v3637
  %5935 = vmatpush.bf16.msra.mxu0 %v3633
  %5936 = vmatpush.bf16.msra.mxu0 %v3629
  %5937 = vmatpush.bf16.msra.mxu0 %v3625
  %5938 = vmatpush.bf16.msra.mxu0 %v3621
  %5939 = vmatpush.bf16.msra.mxu0 %v3617
  %5940 = vmatmul.bf16.gmra.mxu0 %v837
  %v5941 = vpop.f32.mrf.mxu0
  %v5942 = vadd.f32 %v5929, %v5941
  %v5943 = vpop.f32.mrf.mxu0
  %5944 = vdwg.mxu0
  %5945 = vmatpush.bf16.msra.mxu0 %v3677
  %5946 = vmatpush.bf16.msra.mxu0 %v3673
  %5947 = vmatpush.bf16.msra.mxu0 %v3669
  %5948 = vmatpush.bf16.msra.mxu0 %v3665
  %5949 = vmatpush.bf16.msra.mxu0 %v3661
  %5950 = vmatpush.bf16.msra.mxu0 %v3657
  %5951 = vmatpush.bf16.msra.mxu0 %v3653
  %5952 = vmatpush.bf16.msra.mxu0 %v3649
  %5953 = vmatmul.bf16.gmra.mxu0 %v838
  %v5954 = vpop.f32.mrf.mxu0
  %v5955 = vadd.f32 %v5942, %v5954
  %v5956 = vpop.f32.mrf.mxu0
  %5957 = vdwg.mxu0
  %5958 = vmatpush.bf16.msra.mxu0 %v3709
  %5959 = vmatpush.bf16.msra.mxu0 %v3705
  %5960 = vmatpush.bf16.msra.mxu0 %v3701
  %5961 = vmatpush.bf16.msra.mxu0 %v3697
  %5962 = vmatpush.bf16.msra.mxu0 %v3693
  %5963 = vmatpush.bf16.msra.mxu0 %v3689
  %5964 = vmatpush.bf16.msra.mxu0 %v3685
  %5965 = vmatpush.bf16.msra.mxu0 %v3681
  %5966 = vmatmul.bf16.gmra.mxu0 %v839
  %v5967 = vpop.f32.mrf.mxu0
  %v5968 = vadd.f32 %v5955, %v5967
  %v5969 = vpop.f32.mrf.mxu0
  %5970 = vdwg.mxu0
  %5971 = vmatpush.bf16.msra.mxu0 %v3741
  %5972 = vmatpush.bf16.msra.mxu0 %v3737
  %5973 = vmatpush.bf16.msra.mxu0 %v3733
  %5974 = vmatpush.bf16.msra.mxu0 %v3729
  %5975 = vmatpush.bf16.msra.mxu0 %v3725
  %5976 = vmatpush.bf16.msra.mxu0 %v3721
  %5977 = vmatpush.bf16.msra.mxu0 %v3717
  %5978 = vmatpush.bf16.msra.mxu0 %v3713
  %5979 = vmatmul.bf16.gmra.mxu0 %v840
  %v5980 = vpop.f32.mrf.mxu0
  %v5981 = vadd.f32 %v5968, %v5980
  %v5982 = vpop.f32.mrf.mxu0
  %5983 = vdwg.mxu0
  %5984 = vmatpush.bf16.msra.mxu0 %v3773
  %5985 = vmatpush.bf16.msra.mxu0 %v3769
  %5986 = vmatpush.bf16.msra.mxu0 %v3765
  %5987 = vmatpush.bf16.msra.mxu0 %v3761
  %5988 = vmatpush.bf16.msra.mxu0 %v3757
  %5989 = vmatpush.bf16.msra.mxu0 %v3753
  %5990 = vmatpush.bf16.msra.mxu0 %v3749
  %5991 = vmatpush.bf16.msra.mxu0 %v3745
  %5992 = vmatmul.bf16.gmra.mxu0 %v843
  %v5993 = vpop.f32.mrf.mxu0
  %v5994 = vadd.f32 %v5981, %v5993
  %v5995 = vpop.f32.mrf.mxu0
  %5996 = vdwg.mxu0
  %5997 = vmatpush.bf16.msra.mxu0 %v3805
  %5998 = vmatpush.bf16.msra.mxu0 %v3801
  %5999 = vmatpush.bf16.msra.mxu0 %v3797
  %6000 = vmatpush.bf16.msra.mxu0 %v3793
  %6001 = vmatpush.bf16.msra.mxu0 %v3789
  %6002 = vmatpush.bf16.msra.mxu0 %v3785
  %6003 = vmatpush.bf16.msra.mxu0 %v3781
  %6004 = vmatpush.bf16.msra.mxu0 %v3777
  %6005 = vmatmul.bf16.gmra.mxu0 %v844
  %v6006 = vpop.f32.mrf.mxu0
  %v6007 = vadd.f32 %v5994, %v6006
  %v6008 = vpop.f32.mrf.mxu0
  %6009 = vdwg.mxu0
  %6010 = vmatpush.bf16.msra.mxu0 %v3837
  %6011 = vmatpush.bf16.msra.mxu0 %v3833
  %6012 = vmatpush.bf16.msra.mxu0 %v3829
  %6013 = vmatpush.bf16.msra.mxu0 %v3825
  %6014 = vmatpush.bf16.msra.mxu0 %v3821
  %6015 = vmatpush.bf16.msra.mxu0 %v3817
  %6016 = vmatpush.bf16.msra.mxu0 %v3813
  %6017 = vmatpush.bf16.msra.mxu0 %v3809
  %6018 = vmatmul.bf16.gmra.mxu0 %v845
  %v6019 = vpop.f32.mrf.mxu0
  %v6020 = vadd.f32 %v6007, %v6019
  %v6021 = vpop.f32.mrf.mxu0
  %6022 = vdwg.mxu0
  %6023 = vmatpush.bf16.msra.mxu0 %v3869
  %6024 = vmatpush.bf16.msra.mxu0 %v3865
  %6025 = vmatpush.bf16.msra.mxu0 %v3861
  %6026 = vmatpush.bf16.msra.mxu0 %v3857
  %6027 = vmatpush.bf16.msra.mxu0 %v3853
  %6028 = vmatpush.bf16.msra.mxu0 %v3849
  %6029 = vmatpush.bf16.msra.mxu0 %v3845
  %6030 = vmatpush.bf16.msra.mxu0 %v3841
  %6031 = vmatmul.bf16.gmra.mxu0 %v846
  %v6032 = vpop.f32.mrf.mxu0
  %v6033 = vadd.f32 %v6020, %v6032
  %v6034 = vpop.f32.mrf.mxu0
  %6035 = vdwg.mxu0
  %6036 = vmatpush.bf16.msra.mxu0 %v3901
  %6037 = vmatpush.bf16.msra.mxu0 %v3897
  %6038 = vmatpush.bf16.msra.mxu0 %v3893
  %6039 = vmatpush.bf16.msra.mxu0 %v3889
  %6040 = vmatpush.bf16.msra.mxu0 %v3885
  %6041 = vmatpush.bf16.msra.mxu0 %v3881
  %6042 = vmatpush.bf16.msra.mxu0 %v3877
  %6043 = vmatpush.bf16.msra.mxu0 %v3873
  %6044 = vmatmul.bf16.gmra.mxu0 %v847
  %v6045 = vpop.f32.mrf.mxu0
  %v6046 = vadd.f32 %v6033, %v6045
  %v6047 = vpop.f32.mrf.mxu0
  %6048 = vdwg.mxu0
  %6049 = vmatpush.bf16.msra.mxu0 %v3933
  %6050 = vmatpush.bf16.msra.mxu0 %v3929
  %6051 = vmatpush.bf16.msra.mxu0 %v3925
  %6052 = vmatpush.bf16.msra.mxu0 %v3921
  %6053 = vmatpush.bf16.msra.mxu0 %v3917
  %6054 = vmatpush.bf16.msra.mxu0 %v3913
  %6055 = vmatpush.bf16.msra.mxu0 %v3909
  %6056 = vmatpush.bf16.msra.mxu0 %v3905
  %6057 = vmatmul.bf16.gmra.mxu0 %v848
  %v6058 = vpop.f32.mrf.mxu0
  %v6059 = vadd.f32 %v6046, %v6058
  %v6060 = vpop.f32.mrf.mxu0
  %6061 = vdwg.mxu0
  %6062 = vmatpush.bf16.msra.mxu0 %v3965
  %6063 = vmatpush.bf16.msra.mxu0 %v3961
  %6064 = vmatpush.bf16.msra.mxu0 %v3957
  %6065 = vmatpush.bf16.msra.mxu0 %v3953
  %6066 = vmatpush.bf16.msra.mxu0 %v3949
  %6067 = vmatpush.bf16.msra.mxu0 %v3945
  %6068 = vmatpush.bf16.msra.mxu0 %v3941
  %6069 = vmatpush.bf16.msra.mxu0 %v3937
  %6070 = vmatmul.bf16.gmra.mxu0 %v849
  %v6071 = vpop.f32.mrf.mxu0
  %v6072 = vadd.f32 %v6059, %v6071
  %v6073 = vpop.f32.mrf.mxu0
  %6074 = vdwg.mxu0
  %6075 = vmatpush.bf16.msra.mxu0 %v3997
  %6076 = vmatpush.bf16.msra.mxu0 %v3993
  %6077 = vmatpush.bf16.msra.mxu0 %v3989
  %6078 = vmatpush.bf16.msra.mxu0 %v3985
  %6079 = vmatpush.bf16.msra.mxu0 %v3981
  %6080 = vmatpush.bf16.msra.mxu0 %v3977
  %6081 = vmatpush.bf16.msra.mxu0 %v3973
  %6082 = vmatpush.bf16.msra.mxu0 %v3969
  %6083 = vmatmul.bf16.gmra.mxu0 %v850
  %v6084 = vpop.f32.mrf.mxu0
  %v6085 = vadd.f32 %v6072, %v6084
  %v6086 = vpop.f32.mrf.mxu0
  %6087 = vdwg.mxu0
  %6088 = vmatpush.bf16.msra.mxu0 0
  %6089 = vmatpush.bf16.msra.mxu0 0
  %6090 = vmatpush.bf16.msra.mxu0 0
  %6091 = vmatpush.bf16.msra.mxu0 0
  %6092 = vmatpush.bf16.msra.mxu0 %v4013
  %6093 = vmatpush.bf16.msra.mxu0 %v4009
  %6094 = vmatpush.bf16.msra.mxu0 %v4005
  %6095 = vmatpush.bf16.msra.mxu0 %v4001
  %6096 = vmatmul.bf16.gmra.mxu0 %v4799
  %v6097 = vpop.f32.mrf.mxu0
  %v6098 = vadd.f32 %v6085, %v6097
  %v6099 = vpop.f32.mrf.mxu0
  %6100 = vdwg.mxu0
  %v6101 = vmax.f32 %v5123, 0.0
  %v6102 = vmax.f32 %v5448, 0.0
  %v6103 = vmax.f32 %v5773, 0.0
  %v6104 = vmax.f32 %v6098, 0.0
  %v6105 = vld [vmem:[%s3] sm:$0xf]
  %v6107 = vperm.slane %v6105, 0
  %v6108 = vperm.slane %v6105, 1
  %v6109 = vperm.slane %v6105, 2
  %v6110 = vperm.slane %v6105, 3
  %v6115 = vmul.f32 %v6101, %v6107
  %v6116 = vmul.f32 %v6102, %v6108
  %v6117 = vmul.f32 %v6103, %v6109
  %v6118 = vmul.f32 %v6104, %v6110
  %vm6119 = vcmask 1041408
  %v6120 = vsel %vm6119, %v6115, 0.0
  %v6121 = vsel %vm6119, %v6116, 0.0
  %v6122 = vadd.f32 %v6120, %v6121
  %v6123 = vsel %vm6119, %v6117, 0.0
  %v6124 = vadd.f32 %v6122, %v6123
  %v6125 = vsel %vm6119, %v6118, 0.0
  %v6126 = vadd.f32 %v6124, %v6125
  %6127 = vadd.xlane.f32.xlu0 %v6126
  %v6128 = vpop.xlane.xlu0 %6127
  %v6129 = vld [vmem:[#allocation2] sm:$0x1]
  %v6131 = vperm.slane %v6129, 0
  %v6133 = vadd.f32 %v6128, %v6131
  %vm6134 = vcmask 1024
  %6135 = vst.msk [vmem:[%s5] sm:$0x3] %vm6134, %v6133
  // Predicated region
  $region22: #{value_net_forward.7} parent=0 // pred_check
    _
  $region23: #{value_net_forward.7} parent=0 // pred_check_branch
    %6137 = sbr.rel (0) target = $region25
  $region24: #{value_net_forward.7} parent=0 // pred_region
    _
  $region25: #{value_net_forward.7} parent=0 // pred_fallthru
    _
  // Predicated region
  $region26: #{value_net_forward.7} parent=0 // pred_check
    _
  $region27: #{value_net_forward.7} parent=0 // pred_check_branch
    %6139 = sbr.rel (0) target = $region29
  $region28: #{value_net_forward.7} parent=0 // pred_region
    _
  $region29: #{value_net_forward.7} parent=0 // pred_fallthru
    _

</llo_original>
